<compile_context>
chip_gen: v6e
topology: v6e:2x2x1
jax: 0.10.0
libtpu: 0.0.40
codegen_flags: <defaults>
</compile_context>

<pallas_src>
import functools
import math

import jax
import jax.numpy as jnp
from jax import lax
from jax.experimental import pallas as pl
from jax.experimental.pallas import tpu as pltpu


# ------------------------------ fused kernel --------------------------------

def _fused_forward_kernel(
    x_ref,                                    # (B*T, Dp) f32, lane-dense
    enc_w_ref, enc_b_ref, enc_g_ref, enc_beta_ref,
    wq_ref, wk_ref, wv_ref, bq_ref, bk_ref, bv_ref,
    wo_ref, bo_ref,
    l1w_ref, l1b_ref, l2w_ref, l2b_ref,
    n1g_ref, n1b_ref, n2g_ref, n2b_ref,
    o_ref,                                    # (B*T, Ep) f32, lane-dense
    *, n_layers, n_heads, n_units, batch, seq_len, eps):
  E = n_units                       # true model dim (32)
  H = n_heads
  B, T = batch, seq_len
  Ep = o_ref.shape[-1]              # padded model dim (128)

  # Channel mask over the padded lane dim: 1.0 for the true E channels.
  # Hoisted once (broadcasts are not CSE'd if left inside the layer loop).
  ch_mask = (lax.broadcasted_iota(jnp.int32, (1, Ep), 1) < E).astype(jnp.float32)
  inv_e = 1.0 / E

  def layernorm(x, g, b):
    # torch.nn.LayerNorm over the true E channels (biased variance).
    # Padded channels: gamma/beta are zero there, so they come out exactly 0.
    xm = x * ch_mask
    mean = jnp.sum(xm, axis=-1, keepdims=True) * inv_e
    d = (x - mean) * ch_mask
    var = jnp.sum(d * d, axis=-1, keepdims=True) * inv_e
    return d * lax.rsqrt(var + eps) * g + b

  def mm(a_bf16, w_ref_slice):
    # bf16 x bf16 MXU matmul, f32 accumulation
    return jnp.dot(a_bf16, w_ref_slice, preferred_element_type=jnp.float32)

  # ----- self.encoder (Linear) + self.encoder_norm (LayerNorm), no residual
  x_bf = x_ref[...].astype(jnp.bfloat16)                         # one cast
  h = mm(x_bf, enc_w_ref[...]) + enc_b_ref[...]                  # (BT, Ep)
  h = layernorm(h, enc_g_ref[...], enc_beta_ref[...])

  # has_pos=False -> no PositionalEncoding; dropout == identity (eval mode)

  for l in range(n_layers):                # static unroll over encoder layers
    # ---------------- multi-head self-attention (post-norm) ----------------
    h_bf = h.astype(jnp.bfloat16)          # single cast feeding all QKV mms
    ctxs = []
    for hd in range(H):                    # leading-dim indexing only: no lane slicing
      # softmax scale 1/sqrt(dh) is pre-folded into wq at init
      q = mm(h_bf, wq_ref[l, hd]) + bq_ref[l, hd]                # (BT, dhp)
      k = mm(h_bf, wk_ref[l, hd]) + bk_ref[l, hd]
      v = mm(h_bf, wv_ref[l, hd]) + bv_ref[l, hd]
      q = q.reshape(B, T, -1)                                    # (B, T, dhp)
      k = k.reshape(B, T, -1)
      v = v.reshape(B, T, -1)
      s = jnp.einsum('bqd,bkd->bqk', q, k,
                     preferred_element_type=jnp.float32)         # (B, T, T)
      m = jnp.max(s, axis=-1, keepdims=True)
      p = jnp.exp(s - m)
      p = p * pl.reciprocal(jnp.sum(p, axis=-1, keepdims=True), approx=True)
      ctxs.append(jnp.einsum('bqk,bkd->bqd', p, v,
                             preferred_element_type=jnp.float32))  # (B, T, dhp)
    # 128-aligned lane concat of the heads, then ONE out-projection matmul
    # so the head reduction stays inside the MXU accumulator.
    ctx_cat = jnp.concatenate(ctxs, axis=-1).reshape(B * T, -1)  # (BT, H*dhp)
    attn = mm(ctx_cat.astype(jnp.bfloat16), wo_ref[l]) + bo_ref[l]
    h = layernorm(h + attn, n1g_ref[l], n1b_ref[l])              # norm1(src+sa)

    # ------------------------- feed-forward (ReLU) --------------------------
    h_bf = h.astype(jnp.bfloat16)
    ff = jnp.maximum(mm(h_bf, l1w_ref[l]) + l1b_ref[l], 0.0)     # (BT, Fp)
    ff = mm(ff.astype(jnp.bfloat16), l2w_ref[l]) + l2b_ref[l]    # (BT, Ep)
    h = layernorm(h + ff, n2g_ref[l], n2b_ref[l])                # norm2(src+ff)

  o_ref[...] = h                                                 # lane-dense store


# ----------------------------- parameter setup ------------------------------

def init_params(key, in_size, n_heads, n_units, n_layers, dim_ff,
                d_pad=128, e_pad=128, f_pad=128, dh_pad=128):
  """Weights stored pre-transposed (K, N), head-major, zero-padded to full
  128-lane widths, matmul weights in bf16.  Zero padding keeps the math
  exactly equal to the unpadded model."""
  E, F, L, H = n_units, dim_ff, n_layers, n_heads
  dh = E // H
  scale = 1.0 / math.sqrt(dh)
  keys = jax.random.split(key, 4)

  def rnd(k, shape, s=0.05):
    # TODO(synk): PyTorch uses xavier/kaiming defaults here; scale-only init
    # (does not affect kernel behaviour).
    return jax.random.normal(k, shape, jnp.float32) * s

  def pad2(a, rows, cols):
    out = jnp.zeros((rows, cols), jnp.float32)
    return out.at[:a.shape[0], :a.shape[1]].set(a)

  # init_weights(): encoder.weight ~ U(-0.1, 0.1), encoder.bias = 0
  enc_w = jax.random.uniform(keys[0], (in_size, E), jnp.float32, -0.1, 0.1)
  enc_w = pad2(enc_w, d_pad, e_pad).astype(jnp.bfloat16)

  ch_ones = jnp.zeros((1, e_pad), jnp.float32).at[:, :E].set(1.0)
  zeros = lambda shape: jnp.zeros(shape, jnp.float32)

  kq, kk, kv, ko = jax.random.split(keys[1], 4)

  def head_stack(k, fold):
    layers = []
    for l in range(L):
      kl = jax.random.fold_in(k, l)
      heads = [pad2(rnd(jax.random.fold_in(kl, h), (E, dh)) * fold,
                    e_pad, dh_pad) for h in range(H)]
      layers.append(jnp.stack(heads, 0))
    return jnp.stack(layers, 0).astype(jnp.bfloat16)   # (L, H, e_pad, dh_pad)

  # softmax scale folded into W_q (biases are zero, nothing else to scale)
  wq = head_stack(kq, scale)
  wk = head_stack(kk, 1.0)
  wv = head_stack(kv, 1.0)

  # out_proj: per-head (dh, E) blocks, padded then concatenated along rows
  wo_layers = []
  for l in range(L):
    kl = jax.random.fold_in(ko, l)
    blocks = [pad2(rnd(jax.random.fold_in(kl, h), (dh, E)), dh_pad, e_pad)
              for h in range(H)]
    wo_layers.append(jnp.concatenate(blocks, 0))       # (H*dh_pad, e_pad)
  wo = jnp.stack(wo_layers, 0).astype(jnp.bfloat16)

  k1, k2 = jax.random.split(keys[2], 2)
  l1w = jnp.stack([pad2(rnd(jax.random.fold_in(k1, l), (E, F)), e_pad, f_pad)
                   for l in range(L)], 0).astype(jnp.bfloat16)
  l2w = jnp.stack([pad2(rnd(jax.random.fold_in(k2, l), (F, E)), f_pad, e_pad)
                   for l in range(L)], 0).astype(jnp.bfloat16)

  ln_g = jnp.tile(ch_ones[None, :, :], (L, 1, 1))      # ones on true channels

  return {
      "enc_w": enc_w, "enc_b": zeros((1, e_pad)),
      "enc_ln_g": ch_ones, "enc_ln_b": zeros((1, e_pad)),
      "wq": wq, "wk": wk, "wv": wv,
      "bq": zeros((L, H, 1, dh_pad)),
      "bk": zeros((L, H, 1, dh_pad)),
      "bv": zeros((L, H, 1, dh_pad)),
      "wo": wo, "bo": zeros((L, 1, e_pad)),
      "lin1_w": l1w, "lin1_b": zeros((L, 1, f_pad)),
      "lin2_w": l2w, "lin2_b": zeros((L, 1, e_pad)),
      "norm1_g": ln_g, "norm1_b": zeros((L, 1, e_pad)),
      "norm2_g": ln_g, "norm2_b": zeros((L, 1, e_pad)),
  }


# ------------------------------ forward pass --------------------------------

def transformer_model_forward(params, src_list, n_heads, n_units, n_layers):
  # nn.utils.rnn.pad_sequence(src, padding_value=-1, batch_first=True)
  T = max(int(s.shape[0]) for s in src_list)
  in_size = int(src_list[0].shape[1])
  B = len(src_list)
  d_pad = params["enc_w"].shape[0]
  e_pad = params["enc_b"].shape[-1]

  padded = [jnp.pad(s, ((0, T - s.shape[0]), (0, 0)), constant_values=-1.0)
            for s in src_list]
  x = jnp.stack(padded, axis=0).astype(jnp.float32)       # (B, T, in_size)
  # lane-dense input: zero-pad the feature dim to 128 (enc_w pad rows are
  # zero, so this is exact), then flatten batch*time into the matmul M dim.
  x = jnp.pad(x, ((0, 0), (0, 0), (0, d_pad - in_size)))
  x = x.reshape(B * T, d_pad)

  kernel = functools.partial(
      _fused_forward_kernel, n_layers=n_layers, n_heads=n_heads,
      n_units=n_units, batch=B, seq_len=T, eps=1e-5)

  weight_args = [
      params["enc_w"], params["enc_b"], params["enc_ln_g"], params["enc_ln_b"],
      params["wq"], params["wk"], params["wv"],
      params["bq"], params["bk"], params["bv"],
      params["wo"], params["bo"],
      params["lin1_w"], params["lin1_b"], params["lin2_w"], params["lin2_b"],
      params["norm1_g"], params["norm1_b"], params["norm2_g"], params["norm2_b"],
  ]

  in_specs = [pl.BlockSpec((B * T, d_pad), lambda i: (0, 0))]
  for w in weight_args:
    # full-array block, constant index -> weights stay resident in VMEM
    in_specs.append(pl.BlockSpec(w.shape, lambda i, _nd=w.ndim: (0,) * _nd))

  out = pl.pallas_call(
      kernel,
      out_shape=jax.ShapeDtypeStruct((B * T, e_pad), jnp.float32),
      grid=(1,),                       # single step: per-step work >> grid overhead
      in_specs=in_specs,
      out_specs=pl.BlockSpec((B * T, e_pad), lambda i: (0, 0)),
      compiler_params=pltpu.CompilerParams(
          dimension_semantics=("arbitrary",)),
  )(x, *weight_args)

  # activation=None -> return as-is, (B, T, n_units) batch-first.
  # Slice the padded model dim back to the true n_units outside the kernel.
  return out.reshape(B, T, e_pad)[:, :, :n_units]


# ---------------------------------- main -------------------------------------

if __name__ == "__main__":
  in_size = 16
  n_heads = 4
  n_units = 32
  n_layers = 2
  dim_ff = 64

  key = jax.random.PRNGKey(0)
  k_par, k_x0, k_x1 = jax.random.split(key, 3)

  params = init_params(k_par, in_size, n_heads, n_units, n_layers, dim_ff)

  # Two ragged sequences (lengths 8 and 6), like the list input `src`.
  src_list = [
      jax.random.normal(k_x0, (8, in_size), jnp.float32),
      jax.random.normal(k_x1, (6, in_size), jnp.float32),
  ]

  out = transformer_model_forward(params, src_list, n_heads, n_units, n_layers)
  out = jax.block_until_ready(out)
  assert out.shape == (2, 8, n_units), out.shape
  assert bool(jnp.all(jnp.isfinite(out)))
  print("KERNEL_OK")
</pallas_src>

<mosaic_0001>
module attributes {stable_mosaic.version = 11 : i64} {
  func.func @_fused_forward_kernel(%arg0: i32, %arg1: memref<16x128xf32, #tpu.memory_space<vmem>>, %arg2: memref<128x128xbf16, #tpu.memory_space<vmem>>, %arg3: memref<1x128xf32, #tpu.memory_space<vmem>>, %arg4: memref<1x128xf32, #tpu.memory_space<vmem>>, %arg5: memref<1x128xf32, #tpu.memory_space<vmem>>, %arg6: memref<2x4x128x128xbf16, #tpu.memory_space<vmem>>, %arg7: memref<2x4x128x128xbf16, #tpu.memory_space<vmem>>, %arg8: memref<2x4x128x128xbf16, #tpu.memory_space<vmem>>, %arg9: memref<2x4x1x128xf32, #tpu.memory_space<vmem>>, %arg10: memref<2x4x1x128xf32, #tpu.memory_space<vmem>>, %arg11: memref<2x4x1x128xf32, #tpu.memory_space<vmem>>, %arg12: memref<2x512x128xbf16, #tpu.memory_space<vmem>>, %arg13: memref<2x1x128xf32, #tpu.memory_space<vmem>>, %arg14: memref<2x128x128xbf16, #tpu.memory_space<vmem>>, %arg15: memref<2x1x128xf32, #tpu.memory_space<vmem>>, %arg16: memref<2x128x128xbf16, #tpu.memory_space<vmem>>, %arg17: memref<2x1x128xf32, #tpu.memory_space<vmem>>, %arg18: memref<2x1x128xf32, #tpu.memory_space<vmem>>, %arg19: memref<2x1x128xf32, #tpu.memory_space<vmem>>, %arg20: memref<2x1x128xf32, #tpu.memory_space<vmem>>, %arg21: memref<2x1x128xf32, #tpu.memory_space<vmem>>, %arg22: memref<16x128xf32, #tpu.memory_space<vmem>>) attributes {dimension_semantics = [#tpu.dimension_semantics<arbitrary>], iteration_bounds = array<i64: 1>, scalar_prefetch = 0 : i64, scratch_operands = 0 : i64, tpu.core_type = #tpu.core_type<tc>, window_params = [{pipeline_mode = #tpu.pipeline_mode<synchronous>, transform_indices = @transform_0, window_bounds = array<i64: 16, 128>}, {pipeline_mode = #tpu.pipeline_mode<synchronous>, transform_indices = @transform_1, window_bounds = array<i64: 128, 128>}, {pipeline_mode = #tpu.pipeline_mode<synchronous>, transform_indices = @transform_2, window_bounds = array<i64: 1, 128>}, {pipeline_mode = #tpu.pipeline_mode<synchronous>, transform_indices = @transform_3, window_bounds = array<i64: 1, 128>}, {pipeline_mode = #tpu.pipeline_mode<synchronous>, transform_indices = @transform_4, window_bounds = array<i64: 1, 128>}, {pipeline_mode = #tpu.pipeline_mode<synchronous>, transform_indices = @transform_5, window_bounds = array<i64: 2, 4, 128, 128>}, {pipeline_mode = #tpu.pipeline_mode<synchronous>, transform_indices = @transform_6, window_bounds = array<i64: 2, 4, 128, 128>}, {pipeline_mode = #tpu.pipeline_mode<synchronous>, transform_indices = @transform_7, window_bounds = array<i64: 2, 4, 128, 128>}, {pipeline_mode = #tpu.pipeline_mode<synchronous>, transform_indices = @transform_8, window_bounds = array<i64: 2, 4, 1, 128>}, {pipeline_mode = #tpu.pipeline_mode<synchronous>, transform_indices = @transform_9, window_bounds = array<i64: 2, 4, 1, 128>}, {pipeline_mode = #tpu.pipeline_mode<synchronous>, transform_indices = @transform_10, window_bounds = array<i64: 2, 4, 1, 128>}, {pipeline_mode = #tpu.pipeline_mode<synchronous>, transform_indices = @transform_11, window_bounds = array<i64: 2, 512, 128>}, {pipeline_mode = #tpu.pipeline_mode<synchronous>, transform_indices = @transform_12, window_bounds = array<i64: 2, 1, 128>}, {pipeline_mode = #tpu.pipeline_mode<synchronous>, transform_indices = @transform_13, window_bounds = array<i64: 2, 128, 128>}, {pipeline_mode = #tpu.pipeline_mode<synchronous>, transform_indices = @transform_14, window_bounds = array<i64: 2, 1, 128>}, {pipeline_mode = #tpu.pipeline_mode<synchronous>, transform_indices = @transform_15, window_bounds = array<i64: 2, 128, 128>}, {pipeline_mode = #tpu.pipeline_mode<synchronous>, transform_indices = @transform_16, window_bounds = array<i64: 2, 1, 128>}, {pipeline_mode = #tpu.pipeline_mode<synchronous>, transform_indices = @transform_17, window_bounds = array<i64: 2, 1, 128>}, {pipeline_mode = #tpu.pipeline_mode<synchronous>, transform_indices = @transform_18, window_bounds = array<i64: 2, 1, 128>}, {pipeline_mode = #tpu.pipeline_mode<synchronous>, transform_indices = @transform_19, window_bounds = array<i64: 2, 1, 128>}, {pipeline_mode = #tpu.pipeline_mode<synchronous>, transform_indices = @transform_20, window_bounds = array<i64: 2, 1, 128>}, {pipeline_mode = #tpu.pipeline_mode<synchronous>, transform_indices = @transform_21, window_bounds = array<i64: 16, 128>}]} {
    %0 = tpu.iota {dimensions = array<i32: 1>} : vector<1x128xi32>
    %c32_i32 = arith.constant 32 : i32
    %1 = vector.broadcast %c32_i32 : i32 to vector<1x128xi32>
    %2 = arith.cmpi slt, %0, %1 : vector<1x128xi32>
    %3 = arith.extui %2 : vector<1x128xi1> to vector<1x128xi32>
    %4 = arith.sitofp %3 : vector<1x128xi32> to vector<1x128xf32>
    %c0 = arith.constant 0 : index
    %c0_0 = arith.constant 0 : index
    %5 = vector.load %arg1[%c0, %c0_0] : memref<16x128xf32, #tpu.memory_space<vmem>>, vector<16x128xf32>
    %6 = arith.truncf %5 : vector<16x128xf32> to vector<16x128xbf16>
    %c0_1 = arith.constant 0 : index
    %c0_2 = arith.constant 0 : index
    %7 = vector.load %arg2[%c0_1, %c0_2] : memref<128x128xbf16, #tpu.memory_space<vmem>>, vector<128x128xbf16>
    %cst = arith.constant dense<0.000000e+00> : vector<16x128xf32>
    %8 = tpu.matmul %6, %7, %cst {dimension_numbers = #tpu.dot_dimension_numbers<[1], [0], [0], [1], [0, 0, 1, 1], [], []>} : vector<16x128xbf16>, vector<128x128xbf16>, vector<16x128xf32> -> vector<16x128xf32>
    %c0_3 = arith.constant 0 : index
    %c0_4 = arith.constant 0 : index
    %9 = vector.load %arg3[%c0_3, %c0_4] : memref<1x128xf32, #tpu.memory_space<vmem>>, vector<1x128xf32>
    %10 = vector.broadcast %9 : vector<1x128xf32> to vector<16x128xf32>
    %11 = arith.addf %8, %10 : vector<16x128xf32>
    %c0_5 = arith.constant 0 : index
    %c0_6 = arith.constant 0 : index
    %12 = vector.load %arg4[%c0_5, %c0_6] : memref<1x128xf32, #tpu.memory_space<vmem>>, vector<1x128xf32>
    %c0_7 = arith.constant 0 : index
    %c0_8 = arith.constant 0 : index
    %13 = vector.load %arg5[%c0_7, %c0_8] : memref<1x128xf32, #tpu.memory_space<vmem>>, vector<1x128xf32>
    %14 = vector.broadcast %4 : vector<1x128xf32> to vector<16x128xf32>
    %15 = arith.mulf %11, %14 : vector<16x128xf32>
    %cst_9 = arith.constant dense<0.000000e+00> : vector<16xf32>
    %16 = vector.multi_reduction <add>, %15, %cst_9 [1] : vector<16x128xf32> to vector<16xf32>
    %17 = vector.shape_cast %16 : vector<16xf32> to vector<16x1xf32>
    %cst_10 = arith.constant 3.125000e-02 : f32
    %18 = vector.broadcast %cst_10 : f32 to vector<16x1xf32>
    %19 = arith.mulf %17, %18 : vector<16x1xf32>
    %20 = vector.broadcast %19 : vector<16x1xf32> to vector<16x128xf32>
    %21 = arith.subf %11, %20 : vector<16x128xf32>
    %22 = vector.broadcast %4 : vector<1x128xf32> to vector<16x128xf32>
    %23 = arith.mulf %21, %22 : vector<16x128xf32>
    %24 = arith.mulf %23, %23 : vector<16x128xf32>
    %cst_11 = arith.constant dense<0.000000e+00> : vector<16xf32>
    %25 = vector.multi_reduction <add>, %24, %cst_11 [1] : vector<16x128xf32> to vector<16xf32>
    %26 = vector.shape_cast %25 : vector<16xf32> to vector<16x1xf32>
    %cst_12 = arith.constant 3.125000e-02 : f32
    %27 = vector.broadcast %cst_12 : f32 to vector<16x1xf32>
    %28 = arith.mulf %26, %27 : vector<16x1xf32>
    %cst_13 = arith.constant 9.99999974E-6 : f32
    %29 = vector.broadcast %cst_13 : f32 to vector<16x1xf32>
    %30 = arith.addf %28, %29 : vector<16x1xf32>
    %31 = math.rsqrt %30 : vector<16x1xf32>
    %32 = vector.broadcast %31 : vector<16x1xf32> to vector<16x128xf32>
    %33 = arith.mulf %23, %32 : vector<16x128xf32>
    %34 = vector.broadcast %12 : vector<1x128xf32> to vector<16x128xf32>
    %35 = arith.mulf %33, %34 : vector<16x128xf32>
    %36 = vector.broadcast %13 : vector<1x128xf32> to vector<16x128xf32>
    %37 = arith.addf %35, %36 : vector<16x128xf32>
    %38 = arith.truncf %37 : vector<16x128xf32> to vector<16x128xbf16>
    %c0_14 = arith.constant 0 : index
    %c0_15 = arith.constant 0 : index
    %c0_16 = arith.constant 0 : index
    %c0_17 = arith.constant 0 : index
    %39 = vector.load %arg6[%c0_14, %c0_15, %c0_16, %c0_17] : memref<2x4x128x128xbf16, #tpu.memory_space<vmem>>, vector<1x1x128x128xbf16>
    %40 = vector.shape_cast %39 : vector<1x1x128x128xbf16> to vector<128x128xbf16>
    %cst_18 = arith.constant dense<0.000000e+00> : vector<16x128xf32>
    %41 = tpu.matmul %38, %40, %cst_18 {dimension_numbers = #tpu.dot_dimension_numbers<[1], [0], [0], [1], [0, 0, 1, 1], [], []>} : vector<16x128xbf16>, vector<128x128xbf16>, vector<16x128xf32> -> vector<16x128xf32>
    %c0_19 = arith.constant 0 : index
    %c0_20 = arith.constant 0 : index
    %c0_21 = arith.constant 0 : index
    %c0_22 = arith.constant 0 : index
    %42 = vector.load %arg9[%c0_19, %c0_20, %c0_21, %c0_22] : memref<2x4x1x128xf32, #tpu.memory_space<vmem>>, vector<1x1x1x128xf32>
    %43 = vector.shape_cast %42 : vector<1x1x1x128xf32> to vector<1x128xf32>
    %44 = vector.broadcast %43 : vector<1x128xf32> to vector<16x128xf32>
    %45 = arith.addf %41, %44 : vector<16x128xf32>
    %c0_23 = arith.constant 0 : index
    %c0_24 = arith.constant 0 : index
    %c0_25 = arith.constant 0 : index
    %c0_26 = arith.constant 0 : index
    %46 = vector.load %arg7[%c0_23, %c0_24, %c0_25, %c0_26] : memref<2x4x128x128xbf16, #tpu.memory_space<vmem>>, vector<1x1x128x128xbf16>
    %47 = vector.shape_cast %46 : vector<1x1x128x128xbf16> to vector<128x128xbf16>
    %cst_27 = arith.constant dense<0.000000e+00> : vector<16x128xf32>
    %48 = tpu.matmul %38, %47, %cst_27 {dimension_numbers = #tpu.dot_dimension_numbers<[1], [0], [0], [1], [0, 0, 1, 1], [], []>} : vector<16x128xbf16>, vector<128x128xbf16>, vector<16x128xf32> -> vector<16x128xf32>
    %c0_28 = arith.constant 0 : index
    %c0_29 = arith.constant 0 : index
    %c0_30 = arith.constant 0 : index
    %c0_31 = arith.constant 0 : index
    %49 = vector.load %arg10[%c0_28, %c0_29, %c0_30, %c0_31] : memref<2x4x1x128xf32, #tpu.memory_space<vmem>>, vector<1x1x1x128xf32>
    %50 = vector.shape_cast %49 : vector<1x1x1x128xf32> to vector<1x128xf32>
    %51 = vector.broadcast %50 : vector<1x128xf32> to vector<16x128xf32>
    %52 = arith.addf %48, %51 : vector<16x128xf32>
    %c0_32 = arith.constant 0 : index
    %c0_33 = arith.constant 0 : index
    %c0_34 = arith.constant 0 : index
    %c0_35 = arith.constant 0 : index
    %53 = vector.load %arg8[%c0_32, %c0_33, %c0_34, %c0_35] : memref<2x4x128x128xbf16, #tpu.memory_space<vmem>>, vector<1x1x128x128xbf16>
    %54 = vector.shape_cast %53 : vector<1x1x128x128xbf16> to vector<128x128xbf16>
    %cst_36 = arith.constant dense<0.000000e+00> : vector<16x128xf32>
    %55 = tpu.matmul %38, %54, %cst_36 {dimension_numbers = #tpu.dot_dimension_numbers<[1], [0], [0], [1], [0, 0, 1, 1], [], []>} : vector<16x128xbf16>, vector<128x128xbf16>, vector<16x128xf32> -> vector<16x128xf32>
    %c0_37 = arith.constant 0 : index
    %c0_38 = arith.constant 0 : index
    %c0_39 = arith.constant 0 : index
    %c0_40 = arith.constant 0 : index
    %56 = vector.load %arg11[%c0_37, %c0_38, %c0_39, %c0_40] : memref<2x4x1x128xf32, #tpu.memory_space<vmem>>, vector<1x1x1x128xf32>
    %57 = vector.shape_cast %56 : vector<1x1x1x128xf32> to vector<1x128xf32>
    %58 = vector.broadcast %57 : vector<1x128xf32> to vector<16x128xf32>
    %59 = arith.addf %55, %58 : vector<16x128xf32>
    %60 = vector.shape_cast %45 : vector<16x128xf32> to vector<2x8x128xf32>
    %61 = vector.shape_cast %52 : vector<16x128xf32> to vector<2x8x128xf32>
    %62 = vector.shape_cast %59 : vector<16x128xf32> to vector<2x8x128xf32>
    "tpu.trace_start"() <{level = 10 : i32, message = "bqd,bkd->bqk"}> : () -> ()
    %cst_41 = arith.constant dense<0.000000e+00> : vector<2x8x8xf32>
    %63 = tpu.matmul %60, %61, %cst_41 {dimension_numbers = #tpu.dot_dimension_numbers<[2], [2], [1], [1], [0, 0, 0, 1, 1, 1], [0], [0]>} : vector<2x8x128xf32>, vector<2x8x128xf32>, vector<2x8x8xf32> -> vector<2x8x8xf32>
    "tpu.trace_stop"() : () -> ()
    %cst_42 = arith.constant dense<0xFF800000> : vector<2x8xf32>
    %64 = vector.multi_reduction <maximumf>, %63, %cst_42 [2] : vector<2x8x8xf32> to vector<2x8xf32>
    %65 = vector.shape_cast %64 : vector<2x8xf32> to vector<2x8x1xf32>
    %66 = vector.broadcast %65 : vector<2x8x1xf32> to vector<2x8x8xf32>
    %67 = arith.subf %63, %66 : vector<2x8x8xf32>
    %68 = math.exp %67 : vector<2x8x8xf32>
    %cst_43 = arith.constant dense<0.000000e+00> : vector<2x8xf32>
    %69 = vector.multi_reduction <add>, %68, %cst_43 [2] : vector<2x8x8xf32> to vector<2x8xf32>
    %70 = vector.shape_cast %69 : vector<2x8xf32> to vector<2x8x1xf32>
    %71 = tpu.reciprocal %70 {approx = true} : vector<2x8x1xf32> -> vector<2x8x1xf32>
    %72 = vector.broadcast %71 : vector<2x8x1xf32> to vector<2x8x8xf32>
    %73 = arith.mulf %68, %72 : vector<2x8x8xf32>
    "tpu.trace_start"() <{level = 10 : i32, message = "bqk,bkd->bqd"}> : () -> ()
    %cst_44 = arith.constant dense<0.000000e+00> : vector<2x8x128xf32>
    %74 = tpu.matmul %73, %62, %cst_44 {dimension_numbers = #tpu.dot_dimension_numbers<[2], [1], [1], [2], [0, 0, 0, 1, 1, 2], [0], [0]>} : vector<2x8x8xf32>, vector<2x8x128xf32>, vector<2x8x128xf32> -> vector<2x8x128xf32>
    "tpu.trace_stop"() : () -> ()
    %c0_45 = arith.constant 0 : index
    %c1 = arith.constant 1 : index
    %c0_46 = arith.constant 0 : index
    %c0_47 = arith.constant 0 : index
    %75 = vector.load %arg6[%c0_45, %c1, %c0_46, %c0_47] : memref<2x4x128x128xbf16, #tpu.memory_space<vmem>>, vector<1x1x128x128xbf16>
    %76 = vector.shape_cast %75 : vector<1x1x128x128xbf16> to vector<128x128xbf16>
    %cst_48 = arith.constant dense<0.000000e+00> : vector<16x128xf32>
    %77 = tpu.matmul %38, %76, %cst_48 {dimension_numbers = #tpu.dot_dimension_numbers<[1], [0], [0], [1], [0, 0, 1, 1], [], []>} : vector<16x128xbf16>, vector<128x128xbf16>, vector<16x128xf32> -> vector<16x128xf32>
    %c0_49 = arith.constant 0 : index
    %c1_50 = arith.constant 1 : index
    %c0_51 = arith.constant 0 : index
    %c0_52 = arith.constant 0 : index
    %78 = vector.load %arg9[%c0_49, %c1_50, %c0_51, %c0_52] : memref<2x4x1x128xf32, #tpu.memory_space<vmem>>, vector<1x1x1x128xf32>
    %79 = vector.shape_cast %78 : vector<1x1x1x128xf32> to vector<1x128xf32>
    %80 = vector.broadcast %79 : vector<1x128xf32> to vector<16x128xf32>
    %81 = arith.addf %77, %80 : vector<16x128xf32>
    %c0_53 = arith.constant 0 : index
    %c1_54 = arith.constant 1 : index
    %c0_55 = arith.constant 0 : index
    %c0_56 = arith.constant 0 : index
    %82 = vector.load %arg7[%c0_53, %c1_54, %c0_55, %c0_56] : memref<2x4x128x128xbf16, #tpu.memory_space<vmem>>, vector<1x1x128x128xbf16>
    %83 = vector.shape_cast %82 : vector<1x1x128x128xbf16> to vector<128x128xbf16>
    %cst_57 = arith.constant dense<0.000000e+00> : vector<16x128xf32>
    %84 = tpu.matmul %38, %83, %cst_57 {dimension_numbers = #tpu.dot_dimension_numbers<[1], [0], [0], [1], [0, 0, 1, 1], [], []>} : vector<16x128xbf16>, vector<128x128xbf16>, vector<16x128xf32> -> vector<16x128xf32>
    %c0_58 = arith.constant 0 : index
    %c1_59 = arith.constant 1 : index
    %c0_60 = arith.constant 0 : index
    %c0_61 = arith.constant 0 : index
    %85 = vector.load %arg10[%c0_58, %c1_59, %c0_60, %c0_61] : memref<2x4x1x128xf32, #tpu.memory_space<vmem>>, vector<1x1x1x128xf32>
    %86 = vector.shape_cast %85 : vector<1x1x1x128xf32> to vector<1x128xf32>
    %87 = vector.broadcast %86 : vector<1x128xf32> to vector<16x128xf32>
    %88 = arith.addf %84, %87 : vector<16x128xf32>
    %c0_62 = arith.constant 0 : index
    %c1_63 = arith.constant 1 : index
    %c0_64 = arith.constant 0 : index
    %c0_65 = arith.constant 0 : index
    %89 = vector.load %arg8[%c0_62, %c1_63, %c0_64, %c0_65] : memref<2x4x128x128xbf16, #tpu.memory_space<vmem>>, vector<1x1x128x128xbf16>
    %90 = vector.shape_cast %89 : vector<1x1x128x128xbf16> to vector<128x128xbf16>
    %cst_66 = arith.constant dense<0.000000e+00> : vector<16x128xf32>
    %91 = tpu.matmul %38, %90, %cst_66 {dimension_numbers = #tpu.dot_dimension_numbers<[1], [0], [0], [1], [0, 0, 1, 1], [], []>} : vector<16x128xbf16>, vector<128x128xbf16>, vector<16x128xf32> -> vector<16x128xf32>
    %c0_67 = arith.constant 0 : index
    %c1_68 = arith.constant 1 : index
    %c0_69 = arith.constant 0 : index
    %c0_70 = arith.constant 0 : index
    %92 = vector.load %arg11[%c0_67, %c1_68, %c0_69, %c0_70] : memref<2x4x1x128xf32, #tpu.memory_space<vmem>>, vector<1x1x1x128xf32>
    %93 = vector.shape_cast %92 : vector<1x1x1x128xf32> to vector<1x128xf32>
    %94 = vector.broadcast %93 : vector<1x128xf32> to vector<16x128xf32>
    %95 = arith.addf %91, %94 : vector<16x128xf32>
    %96 = vector.shape_cast %81 : vector<16x128xf32> to vector<2x8x128xf32>
    %97 = vector.shape_cast %88 : vector<16x128xf32> to vector<2x8x128xf32>
    %98 = vector.shape_cast %95 : vector<16x128xf32> to vector<2x8x128xf32>
    "tpu.trace_start"() <{level = 10 : i32, message = "bqd,bkd->bqk"}> : () -> ()
    %cst_71 = arith.constant dense<0.000000e+00> : vector<2x8x8xf32>
    %99 = tpu.matmul %96, %97, %cst_71 {dimension_numbers = #tpu.dot_dimension_numbers<[2], [2], [1], [1], [0, 0, 0, 1, 1, 1], [0], [0]>} : vector<2x8x128xf32>, vector<2x8x128xf32>, vector<2x8x8xf32> -> vector<2x8x8xf32>
    "tpu.trace_stop"() : () -> ()
    %cst_72 = arith.constant dense<0xFF800000> : vector<2x8xf32>
    %100 = vector.multi_reduction <maximumf>, %99, %cst_72 [2] : vector<2x8x8xf32> to vector<2x8xf32>
    %101 = vector.shape_cast %100 : vector<2x8xf32> to vector<2x8x1xf32>
    %102 = vector.broadcast %101 : vector<2x8x1xf32> to vector<2x8x8xf32>
    %103 = arith.subf %99, %102 : vector<2x8x8xf32>
    %104 = math.exp %103 : vector<2x8x8xf32>
    %cst_73 = arith.constant dense<0.000000e+00> : vector<2x8xf32>
    %105 = vector.multi_reduction <add>, %104, %cst_73 [2] : vector<2x8x8xf32> to vector<2x8xf32>
    %106 = vector.shape_cast %105 : vector<2x8xf32> to vector<2x8x1xf32>
    %107 = tpu.reciprocal %106 {approx = true} : vector<2x8x1xf32> -> vector<2x8x1xf32>
    %108 = vector.broadcast %107 : vector<2x8x1xf32> to vector<2x8x8xf32>
    %109 = arith.mulf %104, %108 : vector<2x8x8xf32>
    "tpu.trace_start"() <{level = 10 : i32, message = "bqk,bkd->bqd"}> : () -> ()
    %cst_74 = arith.constant dense<0.000000e+00> : vector<2x8x128xf32>
    %110 = tpu.matmul %109, %98, %cst_74 {dimension_numbers = #tpu.dot_dimension_numbers<[2], [1], [1], [2], [0, 0, 0, 1, 1, 2], [0], [0]>} : vector<2x8x8xf32>, vector<2x8x128xf32>, vector<2x8x128xf32> -> vector<2x8x128xf32>
    "tpu.trace_stop"() : () -> ()
    %c0_75 = arith.constant 0 : index
    %c2 = arith.constant 2 : index
    %c0_76 = arith.constant 0 : index
    %c0_77 = arith.constant 0 : index
    %111 = vector.load %arg6[%c0_75, %c2, %c0_76, %c0_77] : memref<2x4x128x128xbf16, #tpu.memory_space<vmem>>, vector<1x1x128x128xbf16>
    %112 = vector.shape_cast %111 : vector<1x1x128x128xbf16> to vector<128x128xbf16>
    %cst_78 = arith.constant dense<0.000000e+00> : vector<16x128xf32>
    %113 = tpu.matmul %38, %112, %cst_78 {dimension_numbers = #tpu.dot_dimension_numbers<[1], [0], [0], [1], [0, 0, 1, 1], [], []>} : vector<16x128xbf16>, vector<128x128xbf16>, vector<16x128xf32> -> vector<16x128xf32>
    %c0_79 = arith.constant 0 : index
    %c2_80 = arith.constant 2 : index
    %c0_81 = arith.constant 0 : index
    %c0_82 = arith.constant 0 : index
    %114 = vector.load %arg9[%c0_79, %c2_80, %c0_81, %c0_82] : memref<2x4x1x128xf32, #tpu.memory_space<vmem>>, vector<1x1x1x128xf32>
    %115 = vector.shape_cast %114 : vector<1x1x1x128xf32> to vector<1x128xf32>
    %116 = vector.broadcast %115 : vector<1x128xf32> to vector<16x128xf32>
    %117 = arith.addf %113, %116 : vector<16x128xf32>
    %c0_83 = arith.constant 0 : index
    %c2_84 = arith.constant 2 : index
    %c0_85 = arith.constant 0 : index
    %c0_86 = arith.constant 0 : index
    %118 = vector.load %arg7[%c0_83, %c2_84, %c0_85, %c0_86] : memref<2x4x128x128xbf16, #tpu.memory_space<vmem>>, vector<1x1x128x128xbf16>
    %119 = vector.shape_cast %118 : vector<1x1x128x128xbf16> to vector<128x128xbf16>
    %cst_87 = arith.constant dense<0.000000e+00> : vector<16x128xf32>
    %120 = tpu.matmul %38, %119, %cst_87 {dimension_numbers = #tpu.dot_dimension_numbers<[1], [0], [0], [1], [0, 0, 1, 1], [], []>} : vector<16x128xbf16>, vector<128x128xbf16>, vector<16x128xf32> -> vector<16x128xf32>
    %c0_88 = arith.constant 0 : index
    %c2_89 = arith.constant 2 : index
    %c0_90 = arith.constant 0 : index
    %c0_91 = arith.constant 0 : index
    %121 = vector.load %arg10[%c0_88, %c2_89, %c0_90, %c0_91] : memref<2x4x1x128xf32, #tpu.memory_space<vmem>>, vector<1x1x1x128xf32>
    %122 = vector.shape_cast %121 : vector<1x1x1x128xf32> to vector<1x128xf32>
    %123 = vector.broadcast %122 : vector<1x128xf32> to vector<16x128xf32>
    %124 = arith.addf %120, %123 : vector<16x128xf32>
    %c0_92 = arith.constant 0 : index
    %c2_93 = arith.constant 2 : index
    %c0_94 = arith.constant 0 : index
    %c0_95 = arith.constant 0 : index
    %125 = vector.load %arg8[%c0_92, %c2_93, %c0_94, %c0_95] : memref<2x4x128x128xbf16, #tpu.memory_space<vmem>>, vector<1x1x128x128xbf16>
    %126 = vector.shape_cast %125 : vector<1x1x128x128xbf16> to vector<128x128xbf16>
    %cst_96 = arith.constant dense<0.000000e+00> : vector<16x128xf32>
    %127 = tpu.matmul %38, %126, %cst_96 {dimension_numbers = #tpu.dot_dimension_numbers<[1], [0], [0], [1], [0, 0, 1, 1], [], []>} : vector<16x128xbf16>, vector<128x128xbf16>, vector<16x128xf32> -> vector<16x128xf32>
    %c0_97 = arith.constant 0 : index
    %c2_98 = arith.constant 2 : index
    %c0_99 = arith.constant 0 : index
    %c0_100 = arith.constant 0 : index
    %128 = vector.load %arg11[%c0_97, %c2_98, %c0_99, %c0_100] : memref<2x4x1x128xf32, #tpu.memory_space<vmem>>, vector<1x1x1x128xf32>
    %129 = vector.shape_cast %128 : vector<1x1x1x128xf32> to vector<1x128xf32>
    %130 = vector.broadcast %129 : vector<1x128xf32> to vector<16x128xf32>
    %131 = arith.addf %127, %130 : vector<16x128xf32>
    %132 = vector.shape_cast %117 : vector<16x128xf32> to vector<2x8x128xf32>
    %133 = vector.shape_cast %124 : vector<16x128xf32> to vector<2x8x128xf32>
    %134 = vector.shape_cast %131 : vector<16x128xf32> to vector<2x8x128xf32>
    "tpu.trace_start"() <{level = 10 : i32, message = "bqd,bkd->bqk"}> : () -> ()
    %cst_101 = arith.constant dense<0.000000e+00> : vector<2x8x8xf32>
    %135 = tpu.matmul %132, %133, %cst_101 {dimension_numbers = #tpu.dot_dimension_numbers<[2], [2], [1], [1], [0, 0, 0, 1, 1, 1], [0], [0]>} : vector<2x8x128xf32>, vector<2x8x128xf32>, vector<2x8x8xf32> -> vector<2x8x8xf32>
    "tpu.trace_stop"() : () -> ()
    %cst_102 = arith.constant dense<0xFF800000> : vector<2x8xf32>
    %136 = vector.multi_reduction <maximumf>, %135, %cst_102 [2] : vector<2x8x8xf32> to vector<2x8xf32>
    %137 = vector.shape_cast %136 : vector<2x8xf32> to vector<2x8x1xf32>
    %138 = vector.broadcast %137 : vector<2x8x1xf32> to vector<2x8x8xf32>
    %139 = arith.subf %135, %138 : vector<2x8x8xf32>
    %140 = math.exp %139 : vector<2x8x8xf32>
    %cst_103 = arith.constant dense<0.000000e+00> : vector<2x8xf32>
    %141 = vector.multi_reduction <add>, %140, %cst_103 [2] : vector<2x8x8xf32> to vector<2x8xf32>
    %142 = vector.shape_cast %141 : vector<2x8xf32> to vector<2x8x1xf32>
    %143 = tpu.reciprocal %142 {approx = true} : vector<2x8x1xf32> -> vector<2x8x1xf32>
    %144 = vector.broadcast %143 : vector<2x8x1xf32> to vector<2x8x8xf32>
    %145 = arith.mulf %140, %144 : vector<2x8x8xf32>
    "tpu.trace_start"() <{level = 10 : i32, message = "bqk,bkd->bqd"}> : () -> ()
    %cst_104 = arith.constant dense<0.000000e+00> : vector<2x8x128xf32>
    %146 = tpu.matmul %145, %134, %cst_104 {dimension_numbers = #tpu.dot_dimension_numbers<[2], [1], [1], [2], [0, 0, 0, 1, 1, 2], [0], [0]>} : vector<2x8x8xf32>, vector<2x8x128xf32>, vector<2x8x128xf32> -> vector<2x8x128xf32>
    "tpu.trace_stop"() : () -> ()
    %c0_105 = arith.constant 0 : index
    %c3 = arith.constant 3 : index
    %c0_106 = arith.constant 0 : index
    %c0_107 = arith.constant 0 : index
    %147 = vector.load %arg6[%c0_105, %c3, %c0_106, %c0_107] : memref<2x4x128x128xbf16, #tpu.memory_space<vmem>>, vector<1x1x128x128xbf16>
    %148 = vector.shape_cast %147 : vector<1x1x128x128xbf16> to vector<128x128xbf16>
    %cst_108 = arith.constant dense<0.000000e+00> : vector<16x128xf32>
    %149 = tpu.matmul %38, %148, %cst_108 {dimension_numbers = #tpu.dot_dimension_numbers<[1], [0], [0], [1], [0, 0, 1, 1], [], []>} : vector<16x128xbf16>, vector<128x128xbf16>, vector<16x128xf32> -> vector<16x128xf32>
    %c0_109 = arith.constant 0 : index
    %c3_110 = arith.constant 3 : index
    %c0_111 = arith.constant 0 : index
    %c0_112 = arith.constant 0 : index
    %150 = vector.load %arg9[%c0_109, %c3_110, %c0_111, %c0_112] : memref<2x4x1x128xf32, #tpu.memory_space<vmem>>, vector<1x1x1x128xf32>
    %151 = vector.shape_cast %150 : vector<1x1x1x128xf32> to vector<1x128xf32>
    %152 = vector.broadcast %151 : vector<1x128xf32> to vector<16x128xf32>
    %153 = arith.addf %149, %152 : vector<16x128xf32>
    %c0_113 = arith.constant 0 : index
    %c3_114 = arith.constant 3 : index
    %c0_115 = arith.constant 0 : index
    %c0_116 = arith.constant 0 : index
    %154 = vector.load %arg7[%c0_113, %c3_114, %c0_115, %c0_116] : memref<2x4x128x128xbf16, #tpu.memory_space<vmem>>, vector<1x1x128x128xbf16>
    %155 = vector.shape_cast %154 : vector<1x1x128x128xbf16> to vector<128x128xbf16>
    %cst_117 = arith.constant dense<0.000000e+00> : vector<16x128xf32>
    %156 = tpu.matmul %38, %155, %cst_117 {dimension_numbers = #tpu.dot_dimension_numbers<[1], [0], [0], [1], [0, 0, 1, 1], [], []>} : vector<16x128xbf16>, vector<128x128xbf16>, vector<16x128xf32> -> vector<16x128xf32>
    %c0_118 = arith.constant 0 : index
    %c3_119 = arith.constant 3 : index
    %c0_120 = arith.constant 0 : index
    %c0_121 = arith.constant 0 : index
    %157 = vector.load %arg10[%c0_118, %c3_119, %c0_120, %c0_121] : memref<2x4x1x128xf32, #tpu.memory_space<vmem>>, vector<1x1x1x128xf32>
    %158 = vector.shape_cast %157 : vector<1x1x1x128xf32> to vector<1x128xf32>
    %159 = vector.broadcast %158 : vector<1x128xf32> to vector<16x128xf32>
    %160 = arith.addf %156, %159 : vector<16x128xf32>
    %c0_122 = arith.constant 0 : index
    %c3_123 = arith.constant 3 : index
    %c0_124 = arith.constant 0 : index
    %c0_125 = arith.constant 0 : index
    %161 = vector.load %arg8[%c0_122, %c3_123, %c0_124, %c0_125] : memref<2x4x128x128xbf16, #tpu.memory_space<vmem>>, vector<1x1x128x128xbf16>
    %162 = vector.shape_cast %161 : vector<1x1x128x128xbf16> to vector<128x128xbf16>
    %cst_126 = arith.constant dense<0.000000e+00> : vector<16x128xf32>
    %163 = tpu.matmul %38, %162, %cst_126 {dimension_numbers = #tpu.dot_dimension_numbers<[1], [0], [0], [1], [0, 0, 1, 1], [], []>} : vector<16x128xbf16>, vector<128x128xbf16>, vector<16x128xf32> -> vector<16x128xf32>
    %c0_127 = arith.constant 0 : index
    %c3_128 = arith.constant 3 : index
    %c0_129 = arith.constant 0 : index
    %c0_130 = arith.constant 0 : index
    %164 = vector.load %arg11[%c0_127, %c3_128, %c0_129, %c0_130] : memref<2x4x1x128xf32, #tpu.memory_space<vmem>>, vector<1x1x1x128xf32>
    %165 = vector.shape_cast %164 : vector<1x1x1x128xf32> to vector<1x128xf32>
    %166 = vector.broadcast %165 : vector<1x128xf32> to vector<16x128xf32>
    %167 = arith.addf %163, %166 : vector<16x128xf32>
    %168 = vector.shape_cast %153 : vector<16x128xf32> to vector<2x8x128xf32>
    %169 = vector.shape_cast %160 : vector<16x128xf32> to vector<2x8x128xf32>
    %170 = vector.shape_cast %167 : vector<16x128xf32> to vector<2x8x128xf32>
    "tpu.trace_start"() <{level = 10 : i32, message = "bqd,bkd->bqk"}> : () -> ()
    %cst_131 = arith.constant dense<0.000000e+00> : vector<2x8x8xf32>
    %171 = tpu.matmul %168, %169, %cst_131 {dimension_numbers = #tpu.dot_dimension_numbers<[2], [2], [1], [1], [0, 0, 0, 1, 1, 1], [0], [0]>} : vector<2x8x128xf32>, vector<2x8x128xf32>, vector<2x8x8xf32> -> vector<2x8x8xf32>
    "tpu.trace_stop"() : () -> ()
    %cst_132 = arith.constant dense<0xFF800000> : vector<2x8xf32>
    %172 = vector.multi_reduction <maximumf>, %171, %cst_132 [2] : vector<2x8x8xf32> to vector<2x8xf32>
    %173 = vector.shape_cast %172 : vector<2x8xf32> to vector<2x8x1xf32>
    %174 = vector.broadcast %173 : vector<2x8x1xf32> to vector<2x8x8xf32>
    %175 = arith.subf %171, %174 : vector<2x8x8xf32>
    %176 = math.exp %175 : vector<2x8x8xf32>
    %cst_133 = arith.constant dense<0.000000e+00> : vector<2x8xf32>
    %177 = vector.multi_reduction <add>, %176, %cst_133 [2] : vector<2x8x8xf32> to vector<2x8xf32>
    %178 = vector.shape_cast %177 : vector<2x8xf32> to vector<2x8x1xf32>
    %179 = tpu.reciprocal %178 {approx = true} : vector<2x8x1xf32> -> vector<2x8x1xf32>
    %180 = vector.broadcast %179 : vector<2x8x1xf32> to vector<2x8x8xf32>
    %181 = arith.mulf %176, %180 : vector<2x8x8xf32>
    "tpu.trace_start"() <{level = 10 : i32, message = "bqk,bkd->bqd"}> : () -> ()
    %cst_134 = arith.constant dense<0.000000e+00> : vector<2x8x128xf32>
    %182 = tpu.matmul %181, %170, %cst_134 {dimension_numbers = #tpu.dot_dimension_numbers<[2], [1], [1], [2], [0, 0, 0, 1, 1, 2], [0], [0]>} : vector<2x8x8xf32>, vector<2x8x128xf32>, vector<2x8x128xf32> -> vector<2x8x128xf32>
    "tpu.trace_stop"() : () -> ()
    %183 = tpu.concatenate %74, %110, %146, %182 in 2 : vector<2x8x128xf32>, vector<2x8x128xf32>, vector<2x8x128xf32>, vector<2x8x128xf32> -> vector<2x8x512xf32>
    %184 = vector.shape_cast %183 : vector<2x8x512xf32> to vector<16x512xf32>
    %185 = arith.truncf %184 : vector<16x512xf32> to vector<16x512xbf16>
    %c0_135 = arith.constant 0 : index
    %c0_136 = arith.constant 0 : index
    %c0_137 = arith.constant 0 : index
    %186 = vector.load %arg12[%c0_135, %c0_136, %c0_137] : memref<2x512x128xbf16, #tpu.memory_space<vmem>>, vector<1x512x128xbf16>
    %187 = vector.shape_cast %186 : vector<1x512x128xbf16> to vector<512x128xbf16>
    %cst_138 = arith.constant dense<0.000000e+00> : vector<16x128xf32>
    %188 = tpu.matmul %185, %187, %cst_138 {dimension_numbers = #tpu.dot_dimension_numbers<[1], [0], [0], [1], [0, 0, 1, 1], [], []>} : vector<16x512xbf16>, vector<512x128xbf16>, vector<16x128xf32> -> vector<16x128xf32>
    %c0_139 = arith.constant 0 : index
    %c0_140 = arith.constant 0 : index
    %c0_141 = arith.constant 0 : index
    %189 = vector.load %arg13[%c0_139, %c0_140, %c0_141] : memref<2x1x128xf32, #tpu.memory_space<vmem>>, vector<1x1x128xf32>
    %190 = vector.shape_cast %189 : vector<1x1x128xf32> to vector<1x128xf32>
    %191 = vector.broadcast %190 : vector<1x128xf32> to vector<16x128xf32>
    %192 = arith.addf %188, %191 : vector<16x128xf32>
    %193 = arith.addf %37, %192 : vector<16x128xf32>
    %c0_142 = arith.constant 0 : index
    %c0_143 = arith.constant 0 : index
    %c0_144 = arith.constant 0 : index
    %194 = vector.load %arg18[%c0_142, %c0_143, %c0_144] : memref<2x1x128xf32, #tpu.memory_space<vmem>>, vector<1x1x128xf32>
    %195 = vector.shape_cast %194 : vector<1x1x128xf32> to vector<1x128xf32>
    %c0_145 = arith.constant 0 : index
    %c0_146 = arith.constant 0 : index
    %c0_147 = arith.constant 0 : index
    %196 = vector.load %arg19[%c0_145, %c0_146, %c0_147] : memref<2x1x128xf32, #tpu.memory_space<vmem>>, vector<1x1x128xf32>
    %197 = vector.shape_cast %196 : vector<1x1x128xf32> to vector<1x128xf32>
    %198 = vector.broadcast %4 : vector<1x128xf32> to vector<16x128xf32>
    %199 = arith.mulf %193, %198 : vector<16x128xf32>
    %cst_148 = arith.constant dense<0.000000e+00> : vector<16xf32>
    %200 = vector.multi_reduction <add>, %199, %cst_148 [1] : vector<16x128xf32> to vector<16xf32>
    %201 = vector.shape_cast %200 : vector<16xf32> to vector<16x1xf32>
    %cst_149 = arith.constant 3.125000e-02 : f32
    %202 = vector.broadcast %cst_149 : f32 to vector<16x1xf32>
    %203 = arith.mulf %201, %202 : vector<16x1xf32>
    %204 = vector.broadcast %203 : vector<16x1xf32> to vector<16x128xf32>
    %205 = arith.subf %193, %204 : vector<16x128xf32>
    %206 = vector.broadcast %4 : vector<1x128xf32> to vector<16x128xf32>
    %207 = arith.mulf %205, %206 : vector<16x128xf32>
    %208 = arith.mulf %207, %207 : vector<16x128xf32>
    %cst_150 = arith.constant dense<0.000000e+00> : vector<16xf32>
    %209 = vector.multi_reduction <add>, %208, %cst_150 [1] : vector<16x128xf32> to vector<16xf32>
    %210 = vector.shape_cast %209 : vector<16xf32> to vector<16x1xf32>
    %cst_151 = arith.constant 3.125000e-02 : f32
    %211 = vector.broadcast %cst_151 : f32 to vector<16x1xf32>
    %212 = arith.mulf %210, %211 : vector<16x1xf32>
    %cst_152 = arith.constant 9.99999974E-6 : f32
    %213 = vector.broadcast %cst_152 : f32 to vector<16x1xf32>
    %214 = arith.addf %212, %213 : vector<16x1xf32>
    %215 = math.rsqrt %214 : vector<16x1xf32>
    %216 = vector.broadcast %215 : vector<16x1xf32> to vector<16x128xf32>
    %217 = arith.mulf %207, %216 : vector<16x128xf32>
    %218 = vector.broadcast %195 : vector<1x128xf32> to vector<16x128xf32>
    %219 = arith.mulf %217, %218 : vector<16x128xf32>
    %220 = vector.broadcast %197 : vector<1x128xf32> to vector<16x128xf32>
    %221 = arith.addf %219, %220 : vector<16x128xf32>
    %222 = arith.truncf %221 : vector<16x128xf32> to vector<16x128xbf16>
    %c0_153 = arith.constant 0 : index
    %c0_154 = arith.constant 0 : index
    %c0_155 = arith.constant 0 : index
    %223 = vector.load %arg14[%c0_153, %c0_154, %c0_155] : memref<2x128x128xbf16, #tpu.memory_space<vmem>>, vector<1x128x128xbf16>
    %224 = vector.shape_cast %223 : vector<1x128x128xbf16> to vector<128x128xbf16>
    %cst_156 = arith.constant dense<0.000000e+00> : vector<16x128xf32>
    %225 = tpu.matmul %222, %224, %cst_156 {dimension_numbers = #tpu.dot_dimension_numbers<[1], [0], [0], [1], [0, 0, 1, 1], [], []>} : vector<16x128xbf16>, vector<128x128xbf16>, vector<16x128xf32> -> vector<16x128xf32>
    %c0_157 = arith.constant 0 : index
    %c0_158 = arith.constant 0 : index
    %c0_159 = arith.constant 0 : index
    %226 = vector.load %arg15[%c0_157, %c0_158, %c0_159] : memref<2x1x128xf32, #tpu.memory_space<vmem>>, vector<1x1x128xf32>
    %227 = vector.shape_cast %226 : vector<1x1x128xf32> to vector<1x128xf32>
    %228 = vector.broadcast %227 : vector<1x128xf32> to vector<16x128xf32>
    %229 = arith.addf %225, %228 : vector<16x128xf32>
    %cst_160 = arith.constant 0.000000e+00 : f32
    %230 = vector.broadcast %cst_160 : f32 to vector<16x128xf32>
    %231 = arith.maximumf %229, %230 : vector<16x128xf32>
    %232 = arith.truncf %231 : vector<16x128xf32> to vector<16x128xbf16>
    %c0_161 = arith.constant 0 : index
    %c0_162 = arith.constant 0 : index
    %c0_163 = arith.constant 0 : index
    %233 = vector.load %arg16[%c0_161, %c0_162, %c0_163] : memref<2x128x128xbf16, #tpu.memory_space<vmem>>, vector<1x128x128xbf16>
    %234 = vector.shape_cast %233 : vector<1x128x128xbf16> to vector<128x128xbf16>
    %cst_164 = arith.constant dense<0.000000e+00> : vector<16x128xf32>
    %235 = tpu.matmul %232, %234, %cst_164 {dimension_numbers = #tpu.dot_dimension_numbers<[1], [0], [0], [1], [0, 0, 1, 1], [], []>} : vector<16x128xbf16>, vector<128x128xbf16>, vector<16x128xf32> -> vector<16x128xf32>
    %c0_165 = arith.constant 0 : index
    %c0_166 = arith.constant 0 : index
    %c0_167 = arith.constant 0 : index
    %236 = vector.load %arg17[%c0_165, %c0_166, %c0_167] : memref<2x1x128xf32, #tpu.memory_space<vmem>>, vector<1x1x128xf32>
    %237 = vector.shape_cast %236 : vector<1x1x128xf32> to vector<1x128xf32>
    %238 = vector.broadcast %237 : vector<1x128xf32> to vector<16x128xf32>
    %239 = arith.addf %235, %238 : vector<16x128xf32>
    %240 = arith.addf %221, %239 : vector<16x128xf32>
    %c0_168 = arith.constant 0 : index
    %c0_169 = arith.constant 0 : index
    %c0_170 = arith.constant 0 : index
    %241 = vector.load %arg20[%c0_168, %c0_169, %c0_170] : memref<2x1x128xf32, #tpu.memory_space<vmem>>, vector<1x1x128xf32>
    %242 = vector.shape_cast %241 : vector<1x1x128xf32> to vector<1x128xf32>
    %c0_171 = arith.constant 0 : index
    %c0_172 = arith.constant 0 : index
    %c0_173 = arith.constant 0 : index
    %243 = vector.load %arg21[%c0_171, %c0_172, %c0_173] : memref<2x1x128xf32, #tpu.memory_space<vmem>>, vector<1x1x128xf32>
    %244 = vector.shape_cast %243 : vector<1x1x128xf32> to vector<1x128xf32>
    %245 = vector.broadcast %4 : vector<1x128xf32> to vector<16x128xf32>
    %246 = arith.mulf %240, %245 : vector<16x128xf32>
    %cst_174 = arith.constant dense<0.000000e+00> : vector<16xf32>
    %247 = vector.multi_reduction <add>, %246, %cst_174 [1] : vector<16x128xf32> to vector<16xf32>
    %248 = vector.shape_cast %247 : vector<16xf32> to vector<16x1xf32>
    %cst_175 = arith.constant 3.125000e-02 : f32
    %249 = vector.broadcast %cst_175 : f32 to vector<16x1xf32>
    %250 = arith.mulf %248, %249 : vector<16x1xf32>
    %251 = vector.broadcast %250 : vector<16x1xf32> to vector<16x128xf32>
    %252 = arith.subf %240, %251 : vector<16x128xf32>
    %253 = vector.broadcast %4 : vector<1x128xf32> to vector<16x128xf32>
    %254 = arith.mulf %252, %253 : vector<16x128xf32>
    %255 = arith.mulf %254, %254 : vector<16x128xf32>
    %cst_176 = arith.constant dense<0.000000e+00> : vector<16xf32>
    %256 = vector.multi_reduction <add>, %255, %cst_176 [1] : vector<16x128xf32> to vector<16xf32>
    %257 = vector.shape_cast %256 : vector<16xf32> to vector<16x1xf32>
    %cst_177 = arith.constant 3.125000e-02 : f32
    %258 = vector.broadcast %cst_177 : f32 to vector<16x1xf32>
    %259 = arith.mulf %257, %258 : vector<16x1xf32>
    %cst_178 = arith.constant 9.99999974E-6 : f32
    %260 = vector.broadcast %cst_178 : f32 to vector<16x1xf32>
    %261 = arith.addf %259, %260 : vector<16x1xf32>
    %262 = math.rsqrt %261 : vector<16x1xf32>
    %263 = vector.broadcast %262 : vector<16x1xf32> to vector<16x128xf32>
    %264 = arith.mulf %254, %263 : vector<16x128xf32>
    %265 = vector.broadcast %242 : vector<1x128xf32> to vector<16x128xf32>
    %266 = arith.mulf %264, %265 : vector<16x128xf32>
    %267 = vector.broadcast %244 : vector<1x128xf32> to vector<16x128xf32>
    %268 = arith.addf %266, %267 : vector<16x128xf32>
    %269 = arith.truncf %268 : vector<16x128xf32> to vector<16x128xbf16>
    %c1_179 = arith.constant 1 : index
    %c0_180 = arith.constant 0 : index
    %c0_181 = arith.constant 0 : index
    %c0_182 = arith.constant 0 : index
    %270 = vector.load %arg6[%c1_179, %c0_180, %c0_181, %c0_182] : memref<2x4x128x128xbf16, #tpu.memory_space<vmem>>, vector<1x1x128x128xbf16>
    %271 = vector.shape_cast %270 : vector<1x1x128x128xbf16> to vector<128x128xbf16>
    %cst_183 = arith.constant dense<0.000000e+00> : vector<16x128xf32>
    %272 = tpu.matmul %269, %271, %cst_183 {dimension_numbers = #tpu.dot_dimension_numbers<[1], [0], [0], [1], [0, 0, 1, 1], [], []>} : vector<16x128xbf16>, vector<128x128xbf16>, vector<16x128xf32> -> vector<16x128xf32>
    %c1_184 = arith.constant 1 : index
    %c0_185 = arith.constant 0 : index
    %c0_186 = arith.constant 0 : index
    %c0_187 = arith.constant 0 : index
    %273 = vector.load %arg9[%c1_184, %c0_185, %c0_186, %c0_187] : memref<2x4x1x128xf32, #tpu.memory_space<vmem>>, vector<1x1x1x128xf32>
    %274 = vector.shape_cast %273 : vector<1x1x1x128xf32> to vector<1x128xf32>
    %275 = vector.broadcast %274 : vector<1x128xf32> to vector<16x128xf32>
    %276 = arith.addf %272, %275 : vector<16x128xf32>
    %c1_188 = arith.constant 1 : index
    %c0_189 = arith.constant 0 : index
    %c0_190 = arith.constant 0 : index
    %c0_191 = arith.constant 0 : index
    %277 = vector.load %arg7[%c1_188, %c0_189, %c0_190, %c0_191] : memref<2x4x128x128xbf16, #tpu.memory_space<vmem>>, vector<1x1x128x128xbf16>
    %278 = vector.shape_cast %277 : vector<1x1x128x128xbf16> to vector<128x128xbf16>
    %cst_192 = arith.constant dense<0.000000e+00> : vector<16x128xf32>
    %279 = tpu.matmul %269, %278, %cst_192 {dimension_numbers = #tpu.dot_dimension_numbers<[1], [0], [0], [1], [0, 0, 1, 1], [], []>} : vector<16x128xbf16>, vector<128x128xbf16>, vector<16x128xf32> -> vector<16x128xf32>
    %c1_193 = arith.constant 1 : index
    %c0_194 = arith.constant 0 : index
    %c0_195 = arith.constant 0 : index
    %c0_196 = arith.constant 0 : index
    %280 = vector.load %arg10[%c1_193, %c0_194, %c0_195, %c0_196] : memref<2x4x1x128xf32, #tpu.memory_space<vmem>>, vector<1x1x1x128xf32>
    %281 = vector.shape_cast %280 : vector<1x1x1x128xf32> to vector<1x128xf32>
    %282 = vector.broadcast %281 : vector<1x128xf32> to vector<16x128xf32>
    %283 = arith.addf %279, %282 : vector<16x128xf32>
    %c1_197 = arith.constant 1 : index
    %c0_198 = arith.constant 0 : index
    %c0_199 = arith.constant 0 : index
    %c0_200 = arith.constant 0 : index
    %284 = vector.load %arg8[%c1_197, %c0_198, %c0_199, %c0_200] : memref<2x4x128x128xbf16, #tpu.memory_space<vmem>>, vector<1x1x128x128xbf16>
    %285 = vector.shape_cast %284 : vector<1x1x128x128xbf16> to vector<128x128xbf16>
    %cst_201 = arith.constant dense<0.000000e+00> : vector<16x128xf32>
    %286 = tpu.matmul %269, %285, %cst_201 {dimension_numbers = #tpu.dot_dimension_numbers<[1], [0], [0], [1], [0, 0, 1, 1], [], []>} : vector<16x128xbf16>, vector<128x128xbf16>, vector<16x128xf32> -> vector<16x128xf32>
    %c1_202 = arith.constant 1 : index
    %c0_203 = arith.constant 0 : index
    %c0_204 = arith.constant 0 : index
    %c0_205 = arith.constant 0 : index
    %287 = vector.load %arg11[%c1_202, %c0_203, %c0_204, %c0_205] : memref<2x4x1x128xf32, #tpu.memory_space<vmem>>, vector<1x1x1x128xf32>
    %288 = vector.shape_cast %287 : vector<1x1x1x128xf32> to vector<1x128xf32>
    %289 = vector.broadcast %288 : vector<1x128xf32> to vector<16x128xf32>
    %290 = arith.addf %286, %289 : vector<16x128xf32>
    %291 = vector.shape_cast %276 : vector<16x128xf32> to vector<2x8x128xf32>
    %292 = vector.shape_cast %283 : vector<16x128xf32> to vector<2x8x128xf32>
    %293 = vector.shape_cast %290 : vector<16x128xf32> to vector<2x8x128xf32>
    "tpu.trace_start"() <{level = 10 : i32, message = "bqd,bkd->bqk"}> : () -> ()
    %cst_206 = arith.constant dense<0.000000e+00> : vector<2x8x8xf32>
    %294 = tpu.matmul %291, %292, %cst_206 {dimension_numbers = #tpu.dot_dimension_numbers<[2], [2], [1], [1], [0, 0, 0, 1, 1, 1], [0], [0]>} : vector<2x8x128xf32>, vector<2x8x128xf32>, vector<2x8x8xf32> -> vector<2x8x8xf32>
    "tpu.trace_stop"() : () -> ()
    %cst_207 = arith.constant dense<0xFF800000> : vector<2x8xf32>
    %295 = vector.multi_reduction <maximumf>, %294, %cst_207 [2] : vector<2x8x8xf32> to vector<2x8xf32>
    %296 = vector.shape_cast %295 : vector<2x8xf32> to vector<2x8x1xf32>
    %297 = vector.broadcast %296 : vector<2x8x1xf32> to vector<2x8x8xf32>
    %298 = arith.subf %294, %297 : vector<2x8x8xf32>
    %299 = math.exp %298 : vector<2x8x8xf32>
    %cst_208 = arith.constant dense<0.000000e+00> : vector<2x8xf32>
    %300 = vector.multi_reduction <add>, %299, %cst_208 [2] : vector<2x8x8xf32> to vector<2x8xf32>
    %301 = vector.shape_cast %300 : vector<2x8xf32> to vector<2x8x1xf32>
    %302 = tpu.reciprocal %301 {approx = true} : vector<2x8x1xf32> -> vector<2x8x1xf32>
    %303 = vector.broadcast %302 : vector<2x8x1xf32> to vector<2x8x8xf32>
    %304 = arith.mulf %299, %303 : vector<2x8x8xf32>
    "tpu.trace_start"() <{level = 10 : i32, message = "bqk,bkd->bqd"}> : () -> ()
    %cst_209 = arith.constant dense<0.000000e+00> : vector<2x8x128xf32>
    %305 = tpu.matmul %304, %293, %cst_209 {dimension_numbers = #tpu.dot_dimension_numbers<[2], [1], [1], [2], [0, 0, 0, 1, 1, 2], [0], [0]>} : vector<2x8x8xf32>, vector<2x8x128xf32>, vector<2x8x128xf32> -> vector<2x8x128xf32>
    "tpu.trace_stop"() : () -> ()
    %c1_210 = arith.constant 1 : index
    %c1_211 = arith.constant 1 : index
    %c0_212 = arith.constant 0 : index
    %c0_213 = arith.constant 0 : index
    %306 = vector.load %arg6[%c1_210, %c1_211, %c0_212, %c0_213] : memref<2x4x128x128xbf16, #tpu.memory_space<vmem>>, vector<1x1x128x128xbf16>
    %307 = vector.shape_cast %306 : vector<1x1x128x128xbf16> to vector<128x128xbf16>
    %cst_214 = arith.constant dense<0.000000e+00> : vector<16x128xf32>
    %308 = tpu.matmul %269, %307, %cst_214 {dimension_numbers = #tpu.dot_dimension_numbers<[1], [0], [0], [1], [0, 0, 1, 1], [], []>} : vector<16x128xbf16>, vector<128x128xbf16>, vector<16x128xf32> -> vector<16x128xf32>
    %c1_215 = arith.constant 1 : index
    %c1_216 = arith.constant 1 : index
    %c0_217 = arith.constant 0 : index
    %c0_218 = arith.constant 0 : index
    %309 = vector.load %arg9[%c1_215, %c1_216, %c0_217, %c0_218] : memref<2x4x1x128xf32, #tpu.memory_space<vmem>>, vector<1x1x1x128xf32>
    %310 = vector.shape_cast %309 : vector<1x1x1x128xf32> to vector<1x128xf32>
    %311 = vector.broadcast %310 : vector<1x128xf32> to vector<16x128xf32>
    %312 = arith.addf %308, %311 : vector<16x128xf32>
    %c1_219 = arith.constant 1 : index
    %c1_220 = arith.constant 1 : index
    %c0_221 = arith.constant 0 : index
    %c0_222 = arith.constant 0 : index
    %313 = vector.load %arg7[%c1_219, %c1_220, %c0_221, %c0_222] : memref<2x4x128x128xbf16, #tpu.memory_space<vmem>>, vector<1x1x128x128xbf16>
    %314 = vector.shape_cast %313 : vector<1x1x128x128xbf16> to vector<128x128xbf16>
    %cst_223 = arith.constant dense<0.000000e+00> : vector<16x128xf32>
    %315 = tpu.matmul %269, %314, %cst_223 {dimension_numbers = #tpu.dot_dimension_numbers<[1], [0], [0], [1], [0, 0, 1, 1], [], []>} : vector<16x128xbf16>, vector<128x128xbf16>, vector<16x128xf32> -> vector<16x128xf32>
    %c1_224 = arith.constant 1 : index
    %c1_225 = arith.constant 1 : index
    %c0_226 = arith.constant 0 : index
    %c0_227 = arith.constant 0 : index
    %316 = vector.load %arg10[%c1_224, %c1_225, %c0_226, %c0_227] : memref<2x4x1x128xf32, #tpu.memory_space<vmem>>, vector<1x1x1x128xf32>
    %317 = vector.shape_cast %316 : vector<1x1x1x128xf32> to vector<1x128xf32>
    %318 = vector.broadcast %317 : vector<1x128xf32> to vector<16x128xf32>
    %319 = arith.addf %315, %318 : vector<16x128xf32>
    %c1_228 = arith.constant 1 : index
    %c1_229 = arith.constant 1 : index
    %c0_230 = arith.constant 0 : index
    %c0_231 = arith.constant 0 : index
    %320 = vector.load %arg8[%c1_228, %c1_229, %c0_230, %c0_231] : memref<2x4x128x128xbf16, #tpu.memory_space<vmem>>, vector<1x1x128x128xbf16>
    %321 = vector.shape_cast %320 : vector<1x1x128x128xbf16> to vector<128x128xbf16>
    %cst_232 = arith.constant dense<0.000000e+00> : vector<16x128xf32>
    %322 = tpu.matmul %269, %321, %cst_232 {dimension_numbers = #tpu.dot_dimension_numbers<[1], [0], [0], [1], [0, 0, 1, 1], [], []>} : vector<16x128xbf16>, vector<128x128xbf16>, vector<16x128xf32> -> vector<16x128xf32>
    %c1_233 = arith.constant 1 : index
    %c1_234 = arith.constant 1 : index
    %c0_235 = arith.constant 0 : index
    %c0_236 = arith.constant 0 : index
    %323 = vector.load %arg11[%c1_233, %c1_234, %c0_235, %c0_236] : memref<2x4x1x128xf32, #tpu.memory_space<vmem>>, vector<1x1x1x128xf32>
    %324 = vector.shape_cast %323 : vector<1x1x1x128xf32> to vector<1x128xf32>
    %325 = vector.broadcast %324 : vector<1x128xf32> to vector<16x128xf32>
    %326 = arith.addf %322, %325 : vector<16x128xf32>
    %327 = vector.shape_cast %312 : vector<16x128xf32> to vector<2x8x128xf32>
    %328 = vector.shape_cast %319 : vector<16x128xf32> to vector<2x8x128xf32>
    %329 = vector.shape_cast %326 : vector<16x128xf32> to vector<2x8x128xf32>
    "tpu.trace_start"() <{level = 10 : i32, message = "bqd,bkd->bqk"}> : () -> ()
    %cst_237 = arith.constant dense<0.000000e+00> : vector<2x8x8xf32>
    %330 = tpu.matmul %327, %328, %cst_237 {dimension_numbers = #tpu.dot_dimension_numbers<[2], [2], [1], [1], [0, 0, 0, 1, 1, 1], [0], [0]>} : vector<2x8x128xf32>, vector<2x8x128xf32>, vector<2x8x8xf32> -> vector<2x8x8xf32>
    "tpu.trace_stop"() : () -> ()
    %cst_238 = arith.constant dense<0xFF800000> : vector<2x8xf32>
    %331 = vector.multi_reduction <maximumf>, %330, %cst_238 [2] : vector<2x8x8xf32> to vector<2x8xf32>
    %332 = vector.shape_cast %331 : vector<2x8xf32> to vector<2x8x1xf32>
    %333 = vector.broadcast %332 : vector<2x8x1xf32> to vector<2x8x8xf32>
    %334 = arith.subf %330, %333 : vector<2x8x8xf32>
    %335 = math.exp %334 : vector<2x8x8xf32>
    %cst_239 = arith.constant dense<0.000000e+00> : vector<2x8xf32>
    %336 = vector.multi_reduction <add>, %335, %cst_239 [2] : vector<2x8x8xf32> to vector<2x8xf32>
    %337 = vector.shape_cast %336 : vector<2x8xf32> to vector<2x8x1xf32>
    %338 = tpu.reciprocal %337 {approx = true} : vector<2x8x1xf32> -> vector<2x8x1xf32>
    %339 = vector.broadcast %338 : vector<2x8x1xf32> to vector<2x8x8xf32>
    %340 = arith.mulf %335, %339 : vector<2x8x8xf32>
    "tpu.trace_start"() <{level = 10 : i32, message = "bqk,bkd->bqd"}> : () -> ()
    %cst_240 = arith.constant dense<0.000000e+00> : vector<2x8x128xf32>
    %341 = tpu.matmul %340, %329, %cst_240 {dimension_numbers = #tpu.dot_dimension_numbers<[2], [1], [1], [2], [0, 0, 0, 1, 1, 2], [0], [0]>} : vector<2x8x8xf32>, vector<2x8x128xf32>, vector<2x8x128xf32> -> vector<2x8x128xf32>
    "tpu.trace_stop"() : () -> ()
    %c1_241 = arith.constant 1 : index
    %c2_242 = arith.constant 2 : index
    %c0_243 = arith.constant 0 : index
    %c0_244 = arith.constant 0 : index
    %342 = vector.load %arg6[%c1_241, %c2_242, %c0_243, %c0_244] : memref<2x4x128x128xbf16, #tpu.memory_space<vmem>>, vector<1x1x128x128xbf16>
    %343 = vector.shape_cast %342 : vector<1x1x128x128xbf16> to vector<128x128xbf16>
    %cst_245 = arith.constant dense<0.000000e+00> : vector<16x128xf32>
    %344 = tpu.matmul %269, %343, %cst_245 {dimension_numbers = #tpu.dot_dimension_numbers<[1], [0], [0], [1], [0, 0, 1, 1], [], []>} : vector<16x128xbf16>, vector<128x128xbf16>, vector<16x128xf32> -> vector<16x128xf32>
    %c1_246 = arith.constant 1 : index
    %c2_247 = arith.constant 2 : index
    %c0_248 = arith.constant 0 : index
    %c0_249 = arith.constant 0 : index
    %345 = vector.load %arg9[%c1_246, %c2_247, %c0_248, %c0_249] : memref<2x4x1x128xf32, #tpu.memory_space<vmem>>, vector<1x1x1x128xf32>
    %346 = vector.shape_cast %345 : vector<1x1x1x128xf32> to vector<1x128xf32>
    %347 = vector.broadcast %346 : vector<1x128xf32> to vector<16x128xf32>
    %348 = arith.addf %344, %347 : vector<16x128xf32>
    %c1_250 = arith.constant 1 : index
    %c2_251 = arith.constant 2 : index
    %c0_252 = arith.constant 0 : index
    %c0_253 = arith.constant 0 : index
    %349 = vector.load %arg7[%c1_250, %c2_251, %c0_252, %c0_253] : memref<2x4x128x128xbf16, #tpu.memory_space<vmem>>, vector<1x1x128x128xbf16>
    %350 = vector.shape_cast %349 : vector<1x1x128x128xbf16> to vector<128x128xbf16>
    %cst_254 = arith.constant dense<0.000000e+00> : vector<16x128xf32>
    %351 = tpu.matmul %269, %350, %cst_254 {dimension_numbers = #tpu.dot_dimension_numbers<[1], [0], [0], [1], [0, 0, 1, 1], [], []>} : vector<16x128xbf16>, vector<128x128xbf16>, vector<16x128xf32> -> vector<16x128xf32>
    %c1_255 = arith.constant 1 : index
    %c2_256 = arith.constant 2 : index
    %c0_257 = arith.constant 0 : index
    %c0_258 = arith.constant 0 : index
    %352 = vector.load %arg10[%c1_255, %c2_256, %c0_257, %c0_258] : memref<2x4x1x128xf32, #tpu.memory_space<vmem>>, vector<1x1x1x128xf32>
    %353 = vector.shape_cast %352 : vector<1x1x1x128xf32> to vector<1x128xf32>
    %354 = vector.broadcast %353 : vector<1x128xf32> to vector<16x128xf32>
    %355 = arith.addf %351, %354 : vector<16x128xf32>
    %c1_259 = arith.constant 1 : index
    %c2_260 = arith.constant 2 : index
    %c0_261 = arith.constant 0 : index
    %c0_262 = arith.constant 0 : index
    %356 = vector.load %arg8[%c1_259, %c2_260, %c0_261, %c0_262] : memref<2x4x128x128xbf16, #tpu.memory_space<vmem>>, vector<1x1x128x128xbf16>
    %357 = vector.shape_cast %356 : vector<1x1x128x128xbf16> to vector<128x128xbf16>
    %cst_263 = arith.constant dense<0.000000e+00> : vector<16x128xf32>
    %358 = tpu.matmul %269, %357, %cst_263 {dimension_numbers = #tpu.dot_dimension_numbers<[1], [0], [0], [1], [0, 0, 1, 1], [], []>} : vector<16x128xbf16>, vector<128x128xbf16>, vector<16x128xf32> -> vector<16x128xf32>
    %c1_264 = arith.constant 1 : index
    %c2_265 = arith.constant 2 : index
    %c0_266 = arith.constant 0 : index
    %c0_267 = arith.constant 0 : index
    %359 = vector.load %arg11[%c1_264, %c2_265, %c0_266, %c0_267] : memref<2x4x1x128xf32, #tpu.memory_space<vmem>>, vector<1x1x1x128xf32>
    %360 = vector.shape_cast %359 : vector<1x1x1x128xf32> to vector<1x128xf32>
    %361 = vector.broadcast %360 : vector<1x128xf32> to vector<16x128xf32>
    %362 = arith.addf %358, %361 : vector<16x128xf32>
    %363 = vector.shape_cast %348 : vector<16x128xf32> to vector<2x8x128xf32>
    %364 = vector.shape_cast %355 : vector<16x128xf32> to vector<2x8x128xf32>
    %365 = vector.shape_cast %362 : vector<16x128xf32> to vector<2x8x128xf32>
    "tpu.trace_start"() <{level = 10 : i32, message = "bqd,bkd->bqk"}> : () -> ()
    %cst_268 = arith.constant dense<0.000000e+00> : vector<2x8x8xf32>
    %366 = tpu.matmul %363, %364, %cst_268 {dimension_numbers = #tpu.dot_dimension_numbers<[2], [2], [1], [1], [0, 0, 0, 1, 1, 1], [0], [0]>} : vector<2x8x128xf32>, vector<2x8x128xf32>, vector<2x8x8xf32> -> vector<2x8x8xf32>
    "tpu.trace_stop"() : () -> ()
    %cst_269 = arith.constant dense<0xFF800000> : vector<2x8xf32>
    %367 = vector.multi_reduction <maximumf>, %366, %cst_269 [2] : vector<2x8x8xf32> to vector<2x8xf32>
    %368 = vector.shape_cast %367 : vector<2x8xf32> to vector<2x8x1xf32>
    %369 = vector.broadcast %368 : vector<2x8x1xf32> to vector<2x8x8xf32>
    %370 = arith.subf %366, %369 : vector<2x8x8xf32>
    %371 = math.exp %370 : vector<2x8x8xf32>
    %cst_270 = arith.constant dense<0.000000e+00> : vector<2x8xf32>
    %372 = vector.multi_reduction <add>, %371, %cst_270 [2] : vector<2x8x8xf32> to vector<2x8xf32>
    %373 = vector.shape_cast %372 : vector<2x8xf32> to vector<2x8x1xf32>
    %374 = tpu.reciprocal %373 {approx = true} : vector<2x8x1xf32> -> vector<2x8x1xf32>
    %375 = vector.broadcast %374 : vector<2x8x1xf32> to vector<2x8x8xf32>
    %376 = arith.mulf %371, %375 : vector<2x8x8xf32>
    "tpu.trace_start"() <{level = 10 : i32, message = "bqk,bkd->bqd"}> : () -> ()
    %cst_271 = arith.constant dense<0.000000e+00> : vector<2x8x128xf32>
    %377 = tpu.matmul %376, %365, %cst_271 {dimension_numbers = #tpu.dot_dimension_numbers<[2], [1], [1], [2], [0, 0, 0, 1, 1, 2], [0], [0]>} : vector<2x8x8xf32>, vector<2x8x128xf32>, vector<2x8x128xf32> -> vector<2x8x128xf32>
    "tpu.trace_stop"() : () -> ()
    %c1_272 = arith.constant 1 : index
    %c3_273 = arith.constant 3 : index
    %c0_274 = arith.constant 0 : index
    %c0_275 = arith.constant 0 : index
    %378 = vector.load %arg6[%c1_272, %c3_273, %c0_274, %c0_275] : memref<2x4x128x128xbf16, #tpu.memory_space<vmem>>, vector<1x1x128x128xbf16>
    %379 = vector.shape_cast %378 : vector<1x1x128x128xbf16> to vector<128x128xbf16>
    %cst_276 = arith.constant dense<0.000000e+00> : vector<16x128xf32>
    %380 = tpu.matmul %269, %379, %cst_276 {dimension_numbers = #tpu.dot_dimension_numbers<[1], [0], [0], [1], [0, 0, 1, 1], [], []>} : vector<16x128xbf16>, vector<128x128xbf16>, vector<16x128xf32> -> vector<16x128xf32>
    %c1_277 = arith.constant 1 : index
    %c3_278 = arith.constant 3 : index
    %c0_279 = arith.constant 0 : index
    %c0_280 = arith.constant 0 : index
    %381 = vector.load %arg9[%c1_277, %c3_278, %c0_279, %c0_280] : memref<2x4x1x128xf32, #tpu.memory_space<vmem>>, vector<1x1x1x128xf32>
    %382 = vector.shape_cast %381 : vector<1x1x1x128xf32> to vector<1x128xf32>
    %383 = vector.broadcast %382 : vector<1x128xf32> to vector<16x128xf32>
    %384 = arith.addf %380, %383 : vector<16x128xf32>
    %c1_281 = arith.constant 1 : index
    %c3_282 = arith.constant 3 : index
    %c0_283 = arith.constant 0 : index
    %c0_284 = arith.constant 0 : index
    %385 = vector.load %arg7[%c1_281, %c3_282, %c0_283, %c0_284] : memref<2x4x128x128xbf16, #tpu.memory_space<vmem>>, vector<1x1x128x128xbf16>
    %386 = vector.shape_cast %385 : vector<1x1x128x128xbf16> to vector<128x128xbf16>
    %cst_285 = arith.constant dense<0.000000e+00> : vector<16x128xf32>
    %387 = tpu.matmul %269, %386, %cst_285 {dimension_numbers = #tpu.dot_dimension_numbers<[1], [0], [0], [1], [0, 0, 1, 1], [], []>} : vector<16x128xbf16>, vector<128x128xbf16>, vector<16x128xf32> -> vector<16x128xf32>
    %c1_286 = arith.constant 1 : index
    %c3_287 = arith.constant 3 : index
    %c0_288 = arith.constant 0 : index
    %c0_289 = arith.constant 0 : index
    %388 = vector.load %arg10[%c1_286, %c3_287, %c0_288, %c0_289] : memref<2x4x1x128xf32, #tpu.memory_space<vmem>>, vector<1x1x1x128xf32>
    %389 = vector.shape_cast %388 : vector<1x1x1x128xf32> to vector<1x128xf32>
    %390 = vector.broadcast %389 : vector<1x128xf32> to vector<16x128xf32>
    %391 = arith.addf %387, %390 : vector<16x128xf32>
    %c1_290 = arith.constant 1 : index
    %c3_291 = arith.constant 3 : index
    %c0_292 = arith.constant 0 : index
    %c0_293 = arith.constant 0 : index
    %392 = vector.load %arg8[%c1_290, %c3_291, %c0_292, %c0_293] : memref<2x4x128x128xbf16, #tpu.memory_space<vmem>>, vector<1x1x128x128xbf16>
    %393 = vector.shape_cast %392 : vector<1x1x128x128xbf16> to vector<128x128xbf16>
    %cst_294 = arith.constant dense<0.000000e+00> : vector<16x128xf32>
    %394 = tpu.matmul %269, %393, %cst_294 {dimension_numbers = #tpu.dot_dimension_numbers<[1], [0], [0], [1], [0, 0, 1, 1], [], []>} : vector<16x128xbf16>, vector<128x128xbf16>, vector<16x128xf32> -> vector<16x128xf32>
    %c1_295 = arith.constant 1 : index
    %c3_296 = arith.constant 3 : index
    %c0_297 = arith.constant 0 : index
    %c0_298 = arith.constant 0 : index
    %395 = vector.load %arg11[%c1_295, %c3_296, %c0_297, %c0_298] : memref<2x4x1x128xf32, #tpu.memory_space<vmem>>, vector<1x1x1x128xf32>
    %396 = vector.shape_cast %395 : vector<1x1x1x128xf32> to vector<1x128xf32>
    %397 = vector.broadcast %396 : vector<1x128xf32> to vector<16x128xf32>
    %398 = arith.addf %394, %397 : vector<16x128xf32>
    %399 = vector.shape_cast %384 : vector<16x128xf32> to vector<2x8x128xf32>
    %400 = vector.shape_cast %391 : vector<16x128xf32> to vector<2x8x128xf32>
    %401 = vector.shape_cast %398 : vector<16x128xf32> to vector<2x8x128xf32>
    "tpu.trace_start"() <{level = 10 : i32, message = "bqd,bkd->bqk"}> : () -> ()
    %cst_299 = arith.constant dense<0.000000e+00> : vector<2x8x8xf32>
    %402 = tpu.matmul %399, %400, %cst_299 {dimension_numbers = #tpu.dot_dimension_numbers<[2], [2], [1], [1], [0, 0, 0, 1, 1, 1], [0], [0]>} : vector<2x8x128xf32>, vector<2x8x128xf32>, vector<2x8x8xf32> -> vector<2x8x8xf32>
    "tpu.trace_stop"() : () -> ()
    %cst_300 = arith.constant dense<0xFF800000> : vector<2x8xf32>
    %403 = vector.multi_reduction <maximumf>, %402, %cst_300 [2] : vector<2x8x8xf32> to vector<2x8xf32>
    %404 = vector.shape_cast %403 : vector<2x8xf32> to vector<2x8x1xf32>
    %405 = vector.broadcast %404 : vector<2x8x1xf32> to vector<2x8x8xf32>
    %406 = arith.subf %402, %405 : vector<2x8x8xf32>
    %407 = math.exp %406 : vector<2x8x8xf32>
    %cst_301 = arith.constant dense<0.000000e+00> : vector<2x8xf32>
    %408 = vector.multi_reduction <add>, %407, %cst_301 [2] : vector<2x8x8xf32> to vector<2x8xf32>
    %409 = vector.shape_cast %408 : vector<2x8xf32> to vector<2x8x1xf32>
    %410 = tpu.reciprocal %409 {approx = true} : vector<2x8x1xf32> -> vector<2x8x1xf32>
    %411 = vector.broadcast %410 : vector<2x8x1xf32> to vector<2x8x8xf32>
    %412 = arith.mulf %407, %411 : vector<2x8x8xf32>
    "tpu.trace_start"() <{level = 10 : i32, message = "bqk,bkd->bqd"}> : () -> ()
    %cst_302 = arith.constant dense<0.000000e+00> : vector<2x8x128xf32>
    %413 = tpu.matmul %412, %401, %cst_302 {dimension_numbers = #tpu.dot_dimension_numbers<[2], [1], [1], [2], [0, 0, 0, 1, 1, 2], [0], [0]>} : vector<2x8x8xf32>, vector<2x8x128xf32>, vector<2x8x128xf32> -> vector<2x8x128xf32>
    "tpu.trace_stop"() : () -> ()
    %414 = tpu.concatenate %305, %341, %377, %413 in 2 : vector<2x8x128xf32>, vector<2x8x128xf32>, vector<2x8x128xf32>, vector<2x8x128xf32> -> vector<2x8x512xf32>
    %415 = vector.shape_cast %414 : vector<2x8x512xf32> to vector<16x512xf32>
    %416 = arith.truncf %415 : vector<16x512xf32> to vector<16x512xbf16>
    %c1_303 = arith.constant 1 : index
    %c0_304 = arith.constant 0 : index
    %c0_305 = arith.constant 0 : index
    %417 = vector.load %arg12[%c1_303, %c0_304, %c0_305] : memref<2x512x128xbf16, #tpu.memory_space<vmem>>, vector<1x512x128xbf16>
    %418 = vector.shape_cast %417 : vector<1x512x128xbf16> to vector<512x128xbf16>
    %cst_306 = arith.constant dense<0.000000e+00> : vector<16x128xf32>
    %419 = tpu.matmul %416, %418, %cst_306 {dimension_numbers = #tpu.dot_dimension_numbers<[1], [0], [0], [1], [0, 0, 1, 1], [], []>} : vector<16x512xbf16>, vector<512x128xbf16>, vector<16x128xf32> -> vector<16x128xf32>
    %c1_307 = arith.constant 1 : index
    %c0_308 = arith.constant 0 : index
    %c0_309 = arith.constant 0 : index
    %420 = vector.load %arg13[%c1_307, %c0_308, %c0_309] : memref<2x1x128xf32, #tpu.memory_space<vmem>>, vector<1x1x128xf32>
    %421 = vector.shape_cast %420 : vector<1x1x128xf32> to vector<1x128xf32>
    %422 = vector.broadcast %421 : vector<1x128xf32> to vector<16x128xf32>
    %423 = arith.addf %419, %422 : vector<16x128xf32>
    %424 = arith.addf %268, %423 : vector<16x128xf32>
    %c1_310 = arith.constant 1 : index
    %c0_311 = arith.constant 0 : index
    %c0_312 = arith.constant 0 : index
    %425 = vector.load %arg18[%c1_310, %c0_311, %c0_312] : memref<2x1x128xf32, #tpu.memory_space<vmem>>, vector<1x1x128xf32>
    %426 = vector.shape_cast %425 : vector<1x1x128xf32> to vector<1x128xf32>
    %c1_313 = arith.constant 1 : index
    %c0_314 = arith.constant 0 : index
    %c0_315 = arith.constant 0 : index
    %427 = vector.load %arg19[%c1_313, %c0_314, %c0_315] : memref<2x1x128xf32, #tpu.memory_space<vmem>>, vector<1x1x128xf32>
    %428 = vector.shape_cast %427 : vector<1x1x128xf32> to vector<1x128xf32>
    %429 = vector.broadcast %4 : vector<1x128xf32> to vector<16x128xf32>
    %430 = arith.mulf %424, %429 : vector<16x128xf32>
    %cst_316 = arith.constant dense<0.000000e+00> : vector<16xf32>
    %431 = vector.multi_reduction <add>, %430, %cst_316 [1] : vector<16x128xf32> to vector<16xf32>
    %432 = vector.shape_cast %431 : vector<16xf32> to vector<16x1xf32>
    %cst_317 = arith.constant 3.125000e-02 : f32
    %433 = vector.broadcast %cst_317 : f32 to vector<16x1xf32>
    %434 = arith.mulf %432, %433 : vector<16x1xf32>
    %435 = vector.broadcast %434 : vector<16x1xf32> to vector<16x128xf32>
    %436 = arith.subf %424, %435 : vector<16x128xf32>
    %437 = vector.broadcast %4 : vector<1x128xf32> to vector<16x128xf32>
    %438 = arith.mulf %436, %437 : vector<16x128xf32>
    %439 = arith.mulf %438, %438 : vector<16x128xf32>
    %cst_318 = arith.constant dense<0.000000e+00> : vector<16xf32>
    %440 = vector.multi_reduction <add>, %439, %cst_318 [1] : vector<16x128xf32> to vector<16xf32>
    %441 = vector.shape_cast %440 : vector<16xf32> to vector<16x1xf32>
    %cst_319 = arith.constant 3.125000e-02 : f32
    %442 = vector.broadcast %cst_319 : f32 to vector<16x1xf32>
    %443 = arith.mulf %441, %442 : vector<16x1xf32>
    %cst_320 = arith.constant 9.99999974E-6 : f32
    %444 = vector.broadcast %cst_320 : f32 to vector<16x1xf32>
    %445 = arith.addf %443, %444 : vector<16x1xf32>
    %446 = math.rsqrt %445 : vector<16x1xf32>
    %447 = vector.broadcast %446 : vector<16x1xf32> to vector<16x128xf32>
    %448 = arith.mulf %438, %447 : vector<16x128xf32>
    %449 = vector.broadcast %426 : vector<1x128xf32> to vector<16x128xf32>
    %450 = arith.mulf %448, %449 : vector<16x128xf32>
    %451 = vector.broadcast %428 : vector<1x128xf32> to vector<16x128xf32>
    %452 = arith.addf %450, %451 : vector<16x128xf32>
    %453 = arith.truncf %452 : vector<16x128xf32> to vector<16x128xbf16>
    %c1_321 = arith.constant 1 : index
    %c0_322 = arith.constant 0 : index
    %c0_323 = arith.constant 0 : index
    %454 = vector.load %arg14[%c1_321, %c0_322, %c0_323] : memref<2x128x128xbf16, #tpu.memory_space<vmem>>, vector<1x128x128xbf16>
    %455 = vector.shape_cast %454 : vector<1x128x128xbf16> to vector<128x128xbf16>
    %cst_324 = arith.constant dense<0.000000e+00> : vector<16x128xf32>
    %456 = tpu.matmul %453, %455, %cst_324 {dimension_numbers = #tpu.dot_dimension_numbers<[1], [0], [0], [1], [0, 0, 1, 1], [], []>} : vector<16x128xbf16>, vector<128x128xbf16>, vector<16x128xf32> -> vector<16x128xf32>
    %c1_325 = arith.constant 1 : index
    %c0_326 = arith.constant 0 : index
    %c0_327 = arith.constant 0 : index
    %457 = vector.load %arg15[%c1_325, %c0_326, %c0_327] : memref<2x1x128xf32, #tpu.memory_space<vmem>>, vector<1x1x128xf32>
    %458 = vector.shape_cast %457 : vector<1x1x128xf32> to vector<1x128xf32>
    %459 = vector.broadcast %458 : vector<1x128xf32> to vector<16x128xf32>
    %460 = arith.addf %456, %459 : vector<16x128xf32>
    %cst_328 = arith.constant 0.000000e+00 : f32
    %461 = vector.broadcast %cst_328 : f32 to vector<16x128xf32>
    %462 = arith.maximumf %460, %461 : vector<16x128xf32>
    %463 = arith.truncf %462 : vector<16x128xf32> to vector<16x128xbf16>
    %c1_329 = arith.constant 1 : index
    %c0_330 = arith.constant 0 : index
    %c0_331 = arith.constant 0 : index
    %464 = vector.load %arg16[%c1_329, %c0_330, %c0_331] : memref<2x128x128xbf16, #tpu.memory_space<vmem>>, vector<1x128x128xbf16>
    %465 = vector.shape_cast %464 : vector<1x128x128xbf16> to vector<128x128xbf16>
    %cst_332 = arith.constant dense<0.000000e+00> : vector<16x128xf32>
    %466 = tpu.matmul %463, %465, %cst_332 {dimension_numbers = #tpu.dot_dimension_numbers<[1], [0], [0], [1], [0, 0, 1, 1], [], []>} : vector<16x128xbf16>, vector<128x128xbf16>, vector<16x128xf32> -> vector<16x128xf32>
    %c1_333 = arith.constant 1 : index
    %c0_334 = arith.constant 0 : index
    %c0_335 = arith.constant 0 : index
    %467 = vector.load %arg17[%c1_333, %c0_334, %c0_335] : memref<2x1x128xf32, #tpu.memory_space<vmem>>, vector<1x1x128xf32>
    %468 = vector.shape_cast %467 : vector<1x1x128xf32> to vector<1x128xf32>
    %469 = vector.broadcast %468 : vector<1x128xf32> to vector<16x128xf32>
    %470 = arith.addf %466, %469 : vector<16x128xf32>
    %471 = arith.addf %452, %470 : vector<16x128xf32>
    %c1_336 = arith.constant 1 : index
    %c0_337 = arith.constant 0 : index
    %c0_338 = arith.constant 0 : index
    %472 = vector.load %arg20[%c1_336, %c0_337, %c0_338] : memref<2x1x128xf32, #tpu.memory_space<vmem>>, vector<1x1x128xf32>
    %473 = vector.shape_cast %472 : vector<1x1x128xf32> to vector<1x128xf32>
    %c1_339 = arith.constant 1 : index
    %c0_340 = arith.constant 0 : index
    %c0_341 = arith.constant 0 : index
    %474 = vector.load %arg21[%c1_339, %c0_340, %c0_341] : memref<2x1x128xf32, #tpu.memory_space<vmem>>, vector<1x1x128xf32>
    %475 = vector.shape_cast %474 : vector<1x1x128xf32> to vector<1x128xf32>
    %476 = vector.broadcast %4 : vector<1x128xf32> to vector<16x128xf32>
    %477 = arith.mulf %471, %476 : vector<16x128xf32>
    %cst_342 = arith.constant dense<0.000000e+00> : vector<16xf32>
    %478 = vector.multi_reduction <add>, %477, %cst_342 [1] : vector<16x128xf32> to vector<16xf32>
    %479 = vector.shape_cast %478 : vector<16xf32> to vector<16x1xf32>
    %cst_343 = arith.constant 3.125000e-02 : f32
    %480 = vector.broadcast %cst_343 : f32 to vector<16x1xf32>
    %481 = arith.mulf %479, %480 : vector<16x1xf32>
    %482 = vector.broadcast %481 : vector<16x1xf32> to vector<16x128xf32>
    %483 = arith.subf %471, %482 : vector<16x128xf32>
    %484 = vector.broadcast %4 : vector<1x128xf32> to vector<16x128xf32>
    %485 = arith.mulf %483, %484 : vector<16x128xf32>
    %486 = arith.mulf %485, %485 : vector<16x128xf32>
    %cst_344 = arith.constant dense<0.000000e+00> : vector<16xf32>
    %487 = vector.multi_reduction <add>, %486, %cst_344 [1] : vector<16x128xf32> to vector<16xf32>
    %488 = vector.shape_cast %487 : vector<16xf32> to vector<16x1xf32>
    %cst_345 = arith.constant 3.125000e-02 : f32
    %489 = vector.broadcast %cst_345 : f32 to vector<16x1xf32>
    %490 = arith.mulf %488, %489 : vector<16x1xf32>
    %cst_346 = arith.constant 9.99999974E-6 : f32
    %491 = vector.broadcast %cst_346 : f32 to vector<16x1xf32>
    %492 = arith.addf %490, %491 : vector<16x1xf32>
    %493 = math.rsqrt %492 : vector<16x1xf32>
    %494 = vector.broadcast %493 : vector<16x1xf32> to vector<16x128xf32>
    %495 = arith.mulf %485, %494 : vector<16x128xf32>
    %496 = vector.broadcast %473 : vector<1x128xf32> to vector<16x128xf32>
    %497 = arith.mulf %495, %496 : vector<16x128xf32>
    %498 = vector.broadcast %475 : vector<1x128xf32> to vector<16x128xf32>
    %499 = arith.addf %497, %498 : vector<16x128xf32>
    %c0_347 = arith.constant 0 : index
    %c0_348 = arith.constant 0 : index
    %500 = vector.load %arg22[%c0_347, %c0_348] : memref<16x128xf32, #tpu.memory_space<vmem>>, vector<16x128xf32>
    tpu.vector_store %arg22[%c0_347, %c0_348], %499 {strides = array<i32>} : memref<16x128xf32, #tpu.memory_space<vmem>>, vector<16x128xf32>,
    return
  }
  func.func @transform_0(%arg0: i32) -> (i32, i32) {
    %c0_i32 = arith.constant 0 : i32
    %c0_i32_0 = arith.constant 0 : i32
    %c0_i32_1 = arith.constant 0 : i32
    return %c0_i32, %c0_i32_0 : i32, i32
  }
  func.func @transform_1(%arg0: i32) -> (i32, i32) {
    %c0_i32 = arith.constant 0 : i32
    %c0_i32_0 = arith.constant 0 : i32
    %c0_i32_1 = arith.constant 0 : i32
    return %c0_i32, %c0_i32_0 : i32, i32
  }
  func.func @transform_2(%arg0: i32) -> (i32, i32) {
    %c0_i32 = arith.constant 0 : i32
    %c0_i32_0 = arith.constant 0 : i32
    %c0_i32_1 = arith.constant 0 : i32
    return %c0_i32, %c0_i32_0 : i32, i32
  }
  func.func @transform_3(%arg0: i32) -> (i32, i32) {
    %c0_i32 = arith.constant 0 : i32
    %c0_i32_0 = arith.constant 0 : i32
    %c0_i32_1 = arith.constant 0 : i32
    return %c0_i32, %c0_i32_0 : i32, i32
  }
  func.func @transform_4(%arg0: i32) -> (i32, i32) {
    %c0_i32 = arith.constant 0 : i32
    %c0_i32_0 = arith.constant 0 : i32
    %c0_i32_1 = arith.constant 0 : i32
    return %c0_i32, %c0_i32_0 : i32, i32
  }
  func.func @transform_5(%arg0: i32) -> (i32, i32, i32, i32) {
    %c0_i32 = arith.constant 0 : i32
    %c0_i32_0 = arith.constant 0 : i32
    %c0_i32_1 = arith.constant 0 : i32
    %c0_i32_2 = arith.constant 0 : i32
    %c0_i32_3 = arith.constant 0 : i32
    return %c0_i32, %c0_i32_0, %c0_i32_1, %c0_i32_2 : i32, i32, i32, i32
  }
  func.func @transform_6(%arg0: i32) -> (i32, i32, i32, i32) {
    %c0_i32 = arith.constant 0 : i32
    %c0_i32_0 = arith.constant 0 : i32
    %c0_i32_1 = arith.constant 0 : i32
    %c0_i32_2 = arith.constant 0 : i32
    %c0_i32_3 = arith.constant 0 : i32
    return %c0_i32, %c0_i32_0, %c0_i32_1, %c0_i32_2 : i32, i32, i32, i32
  }
  func.func @transform_7(%arg0: i32) -> (i32, i32, i32, i32) {
    %c0_i32 = arith.constant 0 : i32
    %c0_i32_0 = arith.constant 0 : i32
    %c0_i32_1 = arith.constant 0 : i32
    %c0_i32_2 = arith.constant 0 : i32
    %c0_i32_3 = arith.constant 0 : i32
    return %c0_i32, %c0_i32_0, %c0_i32_1, %c0_i32_2 : i32, i32, i32, i32
  }
  func.func @transform_8(%arg0: i32) -> (i32, i32, i32, i32) {
    %c0_i32 = arith.constant 0 : i32
    %c0_i32_0 = arith.constant 0 : i32
    %c0_i32_1 = arith.constant 0 : i32
    %c0_i32_2 = arith.constant 0 : i32
    %c0_i32_3 = arith.constant 0 : i32
    return %c0_i32, %c0_i32_0, %c0_i32_1, %c0_i32_2 : i32, i32, i32, i32
  }
  func.func @transform_9(%arg0: i32) -> (i32, i32, i32, i32) {
    %c0_i32 = arith.constant 0 : i32
    %c0_i32_0 = arith.constant 0 : i32
    %c0_i32_1 = arith.constant 0 : i32
    %c0_i32_2 = arith.constant 0 : i32
    %c0_i32_3 = arith.constant 0 : i32
    return %c0_i32, %c0_i32_0, %c0_i32_1, %c0_i32_2 : i32, i32, i32, i32
  }
  func.func @transform_10(%arg0: i32) -> (i32, i32, i32, i32) {
    %c0_i32 = arith.constant 0 : i32
    %c0_i32_0 = arith.constant 0 : i32
    %c0_i32_1 = arith.constant 0 : i32
    %c0_i32_2 = arith.constant 0 : i32
    %c0_i32_3 = arith.constant 0 : i32
    return %c0_i32, %c0_i32_0, %c0_i32_1, %c0_i32_2 : i32, i32, i32, i32
  }
  func.func @transform_11(%arg0: i32) -> (i32, i32, i32) {
    %c0_i32 = arith.constant 0 : i32
    %c0_i32_0 = arith.constant 0 : i32
    %c0_i32_1 = arith.constant 0 : i32
    %c0_i32_2 = arith.constant 0 : i32
    return %c0_i32, %c0_i32_0, %c0_i32_1 : i32, i32, i32
  }
  func.func @transform_12(%arg0: i32) -> (i32, i32, i32) {
    %c0_i32 = arith.constant 0 : i32
    %c0_i32_0 = arith.constant 0 : i32
    %c0_i32_1 = arith.constant 0 : i32
    %c0_i32_2 = arith.constant 0 : i32
    return %c0_i32, %c0_i32_0, %c0_i32_1 : i32, i32, i32
  }
  func.func @transform_13(%arg0: i32) -> (i32, i32, i32) {
    %c0_i32 = arith.constant 0 : i32
    %c0_i32_0 = arith.constant 0 : i32
    %c0_i32_1 = arith.constant 0 : i32
    %c0_i32_2 = arith.constant 0 : i32
    return %c0_i32, %c0_i32_0, %c0_i32_1 : i32, i32, i32
  }
  func.func @transform_14(%arg0: i32) -> (i32, i32, i32) {
    %c0_i32 = arith.constant 0 : i32
    %c0_i32_0 = arith.constant 0 : i32
    %c0_i32_1 = arith.constant 0 : i32
    %c0_i32_2 = arith.constant 0 : i32
    return %c0_i32, %c0_i32_0, %c0_i32_1 : i32, i32, i32
  }
  func.func @transform_15(%arg0: i32) -> (i32, i32, i32) {
    %c0_i32 = arith.constant 0 : i32
    %c0_i32_0 = arith.constant 0 : i32
    %c0_i32_1 = arith.constant 0 : i32
    %c0_i32_2 = arith.constant 0 : i32
    return %c0_i32, %c0_i32_0, %c0_i32_1 : i32, i32, i32
  }
  func.func @transform_16(%arg0: i32) -> (i32, i32, i32) {
    %c0_i32 = arith.constant 0 : i32
    %c0_i32_0 = arith.constant 0 : i32
    %c0_i32_1 = arith.constant 0 : i32
    %c0_i32_2 = arith.constant 0 : i32
    return %c0_i32, %c0_i32_0, %c0_i32_1 : i32, i32, i32
  }
  func.func @transform_17(%arg0: i32) -> (i32, i32, i32) {
    %c0_i32 = arith.constant 0 : i32
    %c0_i32_0 = arith.constant 0 : i32
    %c0_i32_1 = arith.constant 0 : i32
    %c0_i32_2 = arith.constant 0 : i32
    return %c0_i32, %c0_i32_0, %c0_i32_1 : i32, i32, i32
  }
  func.func @transform_18(%arg0: i32) -> (i32, i32, i32) {
    %c0_i32 = arith.constant 0 : i32
    %c0_i32_0 = arith.constant 0 : i32
    %c0_i32_1 = arith.constant 0 : i32
    %c0_i32_2 = arith.constant 0 : i32
    return %c0_i32, %c0_i32_0, %c0_i32_1 : i32, i32, i32
  }
  func.func @transform_19(%arg0: i32) -> (i32, i32, i32) {
    %c0_i32 = arith.constant 0 : i32
    %c0_i32_0 = arith.constant 0 : i32
    %c0_i32_1 = arith.constant 0 : i32
    %c0_i32_2 = arith.constant 0 : i32
    return %c0_i32, %c0_i32_0, %c0_i32_1 : i32, i32, i32
  }
  func.func @transform_20(%arg0: i32) -> (i32, i32, i32) {
    %c0_i32 = arith.constant 0 : i32
    %c0_i32_0 = arith.constant 0 : i32
    %c0_i32_1 = arith.constant 0 : i32
    %c0_i32_2 = arith.constant 0 : i32
    return %c0_i32, %c0_i32_0, %c0_i32_1 : i32, i32, i32
  }
  func.func @transform_21(%arg0: i32) -> (i32, i32) {
    %c0_i32 = arith.constant 0 : i32
    %c0_i32_0 = arith.constant 0 : i32
    %c0_i32_1 = arith.constant 0 : i32
    return %c0_i32, %c0_i32_0 : i32, i32
  }
}

</mosaic_0001>

<llo_original>
// kernel: tpu_custom_call.1
$region0: #{tpu_custom_call.1}
  #allocation0 [shape = 'u32[]', space=smem, size = 0x4, offset = 0x4, fixed_abs, tag = 'smem constant byte address 0x4 - core index']
  #allocation1 [shape = 'u32[144,128]{1,0:T(1,128)}', space=vmem, size = 0x12000, scoped, tag = 'internal scratch']
  %s0 = inlined_call_operand.hbm [shape: f32[16,128], index: 0, kind: input, shape index: {}]
  %s1 = inlined_call_operand.hbm [shape: bf16[128,128], index: 1, kind: input, shape index: {}]
  %s2 = inlined_call_operand.hbm [shape: f32[1,128], index: 2, kind: input, shape index: {}]
  %s3 = inlined_call_operand.hbm [shape: f32[1,128], index: 3, kind: input, shape index: {}]
  %s4 = inlined_call_operand.hbm [shape: f32[1,128], index: 4, kind: input, shape index: {}]
  %s5 = inlined_call_operand.hbm [shape: bf16[2,4,128,128], index: 5, kind: input, shape index: {}]
  %s6 = inlined_call_operand.hbm [shape: bf16[2,4,128,128], index: 6, kind: input, shape index: {}]
  %s7 = inlined_call_operand.hbm [shape: bf16[2,4,128,128], index: 7, kind: input, shape index: {}]
  %s8 = inlined_call_operand.vmem [shape: f32[2,4,1,128], index: 8, kind: input, shape index: {}]
  %s9 = inlined_call_operand.vmem [shape: f32[2,4,1,128], index: 9, kind: input, shape index: {}]
  %s10 = inlined_call_operand.hbm [shape: f32[2,4,1,128], index: 10, kind: input, shape index: {}]
  %s11 = inlined_call_operand.hbm [shape: bf16[2,512,128], index: 11, kind: input, shape index: {}]
  %s12 = inlined_call_operand.vmem [shape: f32[2,1,128], index: 12, kind: input, shape index: {}]
  %s13 = inlined_call_operand.hbm [shape: bf16[2,128,128], index: 13, kind: input, shape index: {}]
  %s14 = inlined_call_operand.vmem [shape: f32[2,1,128], index: 14, kind: input, shape index: {}]
  %s15 = inlined_call_operand.hbm [shape: bf16[2,128,128], index: 15, kind: input, shape index: {}]
  %s16 = inlined_call_operand.vmem [shape: f32[2,1,128], index: 16, kind: input, shape index: {}]
  %s17 = inlined_call_operand.vmem [shape: f32[2,1,128], index: 17, kind: input, shape index: {}]
  %s18 = inlined_call_operand.vmem [shape: f32[2,1,128], index: 18, kind: input, shape index: {}]
  %s19 = inlined_call_operand.vmem [shape: f32[2,1,128], index: 19, kind: input, shape index: {}]
  %s20 = inlined_call_operand.vmem [shape: f32[2,1,128], index: 20, kind: input, shape index: {}]
  %s21 = inlined_call_operand.hbm [shape: f32[16,128], index: 21, kind: output, shape index: {}]
  %s22 = sld [smem:[#allocation0]]
  $region142: #{tpu_custom_call.1} parent=0
    _
  %s24 = ssub.s32 1, %s22
  %s25 = scalar_select 0, %s24, %s22
  $region1: #{tpu_custom_call.1} parent=0
    #allocation2 [shape = 'u8[8192]{0}', space=vmem, size = 0x2000, scoped, tag = 'input window, operand 0, single buffered']
    #allocation3 [shape = 's32[1]{0}', space=sflag, size = 0x4, scoped, tag = 'scoped memory for tpu_custom_call.1']
    #allocation4 [shape = 's32[1]{0}', space=sflag, size = 0x4, scoped, tag = 'scoped memory for tpu_custom_call.1']
    #allocation5 [shape = 'u8[32768]{0}', space=vmem, size = 0x8000, scoped, tag = 'input window, operand 1, single buffered']
    #allocation6 [shape = 's32[1]{0}', space=sflag, size = 0x4, scoped, tag = 'scoped memory for tpu_custom_call.1']
    #allocation7 [shape = 'u8[512]{0}', space=vmem, size = 0x400, scoped, tag = 'input window, operand 2, single buffered']
    #allocation8 [shape = 'u8[512]{0}', space=vmem, size = 0x400, scoped, tag = 'input window, operand 3, single buffered']
    #allocation9 [shape = 's32[1]{0}', space=sflag, size = 0x4, scoped, tag = 'scoped memory for tpu_custom_call.1']
    #allocation10 [shape = 'u8[512]{0}', space=vmem, size = 0x400, scoped, tag = 'input window, operand 4, single buffered']
    #allocation11 [shape = 'u8[262144]{0}', space=vmem, size = 0x40000, scoped, tag = 'input window, operand 5, single buffered']
    #allocation12 [shape = 's32[1]{0}', space=sflag, size = 0x4, scoped, tag = 'scoped memory for tpu_custom_call.1']
    #allocation13 [shape = 'u8[262144]{0}', space=vmem, size = 0x40000, scoped, tag = 'input window, operand 6, single buffered']
    #allocation14 [shape = 'u8[262144]{0}', space=vmem, size = 0x40000, scoped, tag = 'input window, operand 7, single buffered']
    #allocation15 [shape = 's32[1]{0}', space=sflag, size = 0x4, scoped, tag = 'scoped memory for tpu_custom_call.1']
    #allocation16 [shape = 'u8[4096]{0}', space=vmem, size = 0x1000, scoped, tag = 'input window, operand 10, single buffered']
    #allocation17 [shape = 'u8[262144]{0}', space=vmem, size = 0x40000, scoped, tag = 'input window, operand 11, single buffered']
    #allocation18 [shape = 's32[1]{0}', space=sflag, size = 0x4, scoped, tag = 'scoped memory for tpu_custom_call.1']
    #allocation19 [shape = 'u8[65536]{0}', space=vmem, size = 0x10000, scoped, tag = 'input window, operand 13, single buffered']
    #allocation20 [shape = 'u8[65536]{0}', space=vmem, size = 0x10000, scoped, tag = 'input window, operand 15, single buffered']
    #allocation21 [shape = 's32[1]{0}', space=sflag, size = 0x4, scoped, tag = 'scoped memory for tpu_custom_call.1']
    #allocation22 [shape = 'u8[8192]{0}', space=vmem, size = 0x2000, scoped, tag = 'output window, operand 0, single buffered']
    %26 = vsyncpa [#allocation3], 0
    %27 = vsyncpa [#allocation6], 0
    %28 = vsyncpa [#allocation9], 0
    %29 = vsyncpa [#allocation12], 0
    %30 = vsyncpa [#allocation15], 0
    %31 = vsyncpa [#allocation18], 0
    %32 = vsyncpa [#allocation21], 0
    %33 = vsyncpa [#allocation4], 0
    // Predicated region
    $region2: #{tpu_custom_call.1} parent=1 // pred_check
      _
    $region3: #{tpu_custom_call.1} parent=1 // pred_check_branch
      %35 = sbr.rel (0) target = $region5
    $region4: #{tpu_custom_call.1} parent=1 // pred_region
      %s37 = ssub.s32 256, 256
      %38 = vsyncadd [#allocation3], %s37
      %s39 = sshll.u32 [#allocation2], 4
      %s40 = int_to_ptr.vmem [resolvable:$true] %s39
      %45 = dma.hbm_to_vmem [thread:$0]  %s0, 256, %s40, [#allocation3], 128, 128, 8
    $region5: #{tpu_custom_call.1} parent=1 // pred_fallthru
      _
    // Predicated region
    $region6: #{tpu_custom_call.1} parent=1 // pred_check
      _
    $region7: #{tpu_custom_call.1} parent=1 // pred_check_branch
      %47 = sbr.rel (0) target = $region9
    $region8: #{tpu_custom_call.1} parent=1 // pred_region
      %s49 = ssub.s32 1024, 1024
      %50 = vsyncadd [#allocation6], %s49
      %s51 = sshll.u32 [#allocation5], 4
      %s52 = int_to_ptr.vmem [resolvable:$true] %s51
      %57 = dma.hbm_to_vmem [thread:$0]  %s1, 1024, %s52, [#allocation6], 64, 64, 4
    $region9: #{tpu_custom_call.1} parent=1 // pred_fallthru
      _
    // Predicated region
    $region10: #{tpu_custom_call.1} parent=1 // pred_check
      _
    $region11: #{tpu_custom_call.1} parent=1 // pred_check_branch
      %59 = sbr.rel (0) target = $region13
    $region12: #{tpu_custom_call.1} parent=1 // pred_region
      %s61 = ssub.s32 16, 16
      %62 = vsyncadd [#allocation6], %s61
      %s64 = sshll.u32 [#allocation7], 4
      %s65 = int_to_ptr.vmem [resolvable:$true] %s64
      %67 = dma.hbm_to_vmem [thread:$0]  %s2, 16, %s65, [#allocation6]
    $region13: #{tpu_custom_call.1} parent=1 // pred_fallthru
      _
    // Predicated region
    $region14: #{tpu_custom_call.1} parent=1 // pred_check
      _
    $region15: #{tpu_custom_call.1} parent=1 // pred_check_branch
      %69 = sbr.rel (0) target = $region17
    $region16: #{tpu_custom_call.1} parent=1 // pred_region
      %s71 = ssub.s32 16, 16
      %72 = vsyncadd [#allocation9], %s71
      %s74 = sshll.u32 [#allocation8], 4
      %s75 = int_to_ptr.vmem [resolvable:$true] %s74
      %77 = dma.hbm_to_vmem [thread:$0]  %s3, 16, %s75, [#allocation9]
    $region17: #{tpu_custom_call.1} parent=1 // pred_fallthru
      _
    // Predicated region
    $region18: #{tpu_custom_call.1} parent=1 // pred_check
      _
    $region19: #{tpu_custom_call.1} parent=1 // pred_check_branch
      %79 = sbr.rel (0) target = $region21
    $region20: #{tpu_custom_call.1} parent=1 // pred_region
      %s81 = ssub.s32 16, 16
      %82 = vsyncadd [#allocation9], %s81
      %s84 = sshll.u32 [#allocation10], 4
      %s85 = int_to_ptr.vmem [resolvable:$true] %s84
      %87 = dma.hbm_to_vmem [thread:$0]  %s4, 16, %s85, [#allocation9]
    $region21: #{tpu_custom_call.1} parent=1 // pred_fallthru
      _
    // Predicated region
    $region22: #{tpu_custom_call.1} parent=1 // pred_check
      _
    $region23: #{tpu_custom_call.1} parent=1 // pred_check_branch
      %89 = sbr.rel (0) target = $region25
    $region24: #{tpu_custom_call.1} parent=1 // pred_region
      %s91 = ssub.s32 8192, 8192
      %92 = vsyncadd [#allocation12], %s91
      %s93 = sshll.u32 [#allocation11], 4
      %s94 = int_to_ptr.vmem [resolvable:$true] %s93
      %99 = dma.hbm_to_vmem [thread:$0]  %s5, 8192, %s94, [#allocation12], 64, 64, 4
    $region25: #{tpu_custom_call.1} parent=1 // pred_fallthru
      _
    // Predicated region
    $region26: #{tpu_custom_call.1} parent=1 // pred_check
      _
    $region27: #{tpu_custom_call.1} parent=1 // pred_check_branch
      %101 = sbr.rel (0) target = $region29
    $region28: #{tpu_custom_call.1} parent=1 // pred_region
      %s103 = ssub.s32 8192, 8192
      %104 = vsyncadd [#allocation12], %s103
      %s105 = sshll.u32 [#allocation13], 4
      %s106 = int_to_ptr.vmem [resolvable:$true] %s105
      %111 = dma.hbm_to_vmem [thread:$0]  %s6, 8192, %s106, [#allocation12], 64, 64, 4
    $region29: #{tpu_custom_call.1} parent=1 // pred_fallthru
      _
    // Predicated region
    $region30: #{tpu_custom_call.1} parent=1 // pred_check
      _
    $region31: #{tpu_custom_call.1} parent=1 // pred_check_branch
      %113 = sbr.rel (0) target = $region33
    $region32: #{tpu_custom_call.1} parent=1 // pred_region
      %s115 = ssub.s32 8192, 8192
      %116 = vsyncadd [#allocation15], %s115
      %s117 = sshll.u32 [#allocation14], 4
      %s118 = int_to_ptr.vmem [resolvable:$true] %s117
      %123 = dma.hbm_to_vmem [thread:$0]  %s7, 8192, %s118, [#allocation15], 64, 64, 4
    $region33: #{tpu_custom_call.1} parent=1 // pred_fallthru
      _
    // Predicated region
    $region34: #{tpu_custom_call.1} parent=1 // pred_check
      _
    $region35: #{tpu_custom_call.1} parent=1 // pred_check_branch
      %125 = sbr.rel (0) target = $region37
    $region36: #{tpu_custom_call.1} parent=1 // pred_region
      _
    $region37: #{tpu_custom_call.1} parent=1 // pred_fallthru
      _
    // Predicated region
    $region38: #{tpu_custom_call.1} parent=1 // pred_check
      _
    $region39: #{tpu_custom_call.1} parent=1 // pred_check_branch
      %127 = sbr.rel (0) target = $region41
    $region40: #{tpu_custom_call.1} parent=1 // pred_region
      _
    $region41: #{tpu_custom_call.1} parent=1 // pred_fallthru
      _
    // Predicated region
    $region42: #{tpu_custom_call.1} parent=1 // pred_check
      _
    $region43: #{tpu_custom_call.1} parent=1 // pred_check_branch
      %129 = sbr.rel (0) target = $region45
    $region44: #{tpu_custom_call.1} parent=1 // pred_region
      %s131 = ssub.s32 128, 128
      %132 = vsyncadd [#allocation15], %s131
      %s133 = sshll.u32 [#allocation16], 4
      %s134 = int_to_ptr.vmem [resolvable:$true] %s133
      %139 = dma.hbm_to_vmem [thread:$0]  %s10, 128, %s134, [#allocation15], 16, 16, 1
    $region45: #{tpu_custom_call.1} parent=1 // pred_fallthru
      _
    // Predicated region
    $region46: #{tpu_custom_call.1} parent=1 // pred_check
      _
    $region47: #{tpu_custom_call.1} parent=1 // pred_check_branch
      %141 = sbr.rel (0) target = $region49
    $region48: #{tpu_custom_call.1} parent=1 // pred_region
      %s143 = ssub.s32 8192, 8192
      %144 = vsyncadd [#allocation18], %s143
      %s145 = sshll.u32 [#allocation17], 4
      %s146 = int_to_ptr.vmem [resolvable:$true] %s145
      %151 = dma.hbm_to_vmem [thread:$0]  %s11, 8192, %s146, [#allocation18], 64, 64, 4
    $region49: #{tpu_custom_call.1} parent=1 // pred_fallthru
      _
    // Predicated region
    $region50: #{tpu_custom_call.1} parent=1 // pred_check
      _
    $region51: #{tpu_custom_call.1} parent=1 // pred_check_branch
      %153 = sbr.rel (0) target = $region53
    $region52: #{tpu_custom_call.1} parent=1 // pred_region
      _
    $region53: #{tpu_custom_call.1} parent=1 // pred_fallthru
      _
    // Predicated region
    $region54: #{tpu_custom_call.1} parent=1 // pred_check
      _
    $region55: #{tpu_custom_call.1} parent=1 // pred_check_branch
      %155 = sbr.rel (0) target = $region57
    $region56: #{tpu_custom_call.1} parent=1 // pred_region
      %s157 = ssub.s32 2048, 2048
      %158 = vsyncadd [#allocation18], %s157
      %s159 = sshll.u32 [#allocation19], 4
      %s160 = int_to_ptr.vmem [resolvable:$true] %s159
      %165 = dma.hbm_to_vmem [thread:$0]  %s13, 2048, %s160, [#allocation18], 64, 64, 4
    $region57: #{tpu_custom_call.1} parent=1 // pred_fallthru
      _
    // Predicated region
    $region58: #{tpu_custom_call.1} parent=1 // pred_check
      _
    $region59: #{tpu_custom_call.1} parent=1 // pred_check_branch
      %167 = sbr.rel (0) target = $region61
    $region60: #{tpu_custom_call.1} parent=1 // pred_region
      _
    $region61: #{tpu_custom_call.1} parent=1 // pred_fallthru
      _
    // Predicated region
    $region62: #{tpu_custom_call.1} parent=1 // pred_check
      _
    $region63: #{tpu_custom_call.1} parent=1 // pred_check_branch
      %169 = sbr.rel (0) target = $region65
    $region64: #{tpu_custom_call.1} parent=1 // pred_region
      %s171 = ssub.s32 2048, 2048
      %172 = vsyncadd [#allocation21], %s171
      %s173 = sshll.u32 [#allocation20], 4
      %s174 = int_to_ptr.vmem [resolvable:$true] %s173
      %179 = dma.hbm_to_vmem [thread:$0]  %s15, 2048, %s174, [#allocation21], 64, 64, 4
    $region65: #{tpu_custom_call.1} parent=1 // pred_fallthru
      _
    // Predicated region
    $region66: #{tpu_custom_call.1} parent=1 // pred_check
      _
    $region67: #{tpu_custom_call.1} parent=1 // pred_check_branch
      %181 = sbr.rel (0) target = $region69
    $region68: #{tpu_custom_call.1} parent=1 // pred_region
      _
    $region69: #{tpu_custom_call.1} parent=1 // pred_fallthru
      _
    // Predicated region
    $region70: #{tpu_custom_call.1} parent=1 // pred_check
      _
    $region71: #{tpu_custom_call.1} parent=1 // pred_check_branch
      %183 = sbr.rel (0) target = $region73
    $region72: #{tpu_custom_call.1} parent=1 // pred_region
      _
    $region73: #{tpu_custom_call.1} parent=1 // pred_fallthru
      _
    // Predicated region
    $region74: #{tpu_custom_call.1} parent=1 // pred_check
      _
    $region75: #{tpu_custom_call.1} parent=1 // pred_check_branch
      %185 = sbr.rel (0) target = $region77
    $region76: #{tpu_custom_call.1} parent=1 // pred_region
      _
    $region77: #{tpu_custom_call.1} parent=1 // pred_fallthru
      _
    // Predicated region
    $region78: #{tpu_custom_call.1} parent=1 // pred_check
      _
    $region79: #{tpu_custom_call.1} parent=1 // pred_check_branch
      %187 = sbr.rel (0) target = $region81
    $region80: #{tpu_custom_call.1} parent=1 // pred_region
      _
    $region81: #{tpu_custom_call.1} parent=1 // pred_fallthru
      _
    // Predicated region
    $region82: #{tpu_custom_call.1} parent=1 // pred_check
      _
    $region83: #{tpu_custom_call.1} parent=1 // pred_check_branch
      %189 = sbr.rel (0) target = $region85
    $region84: #{tpu_custom_call.1} parent=1 // pred_region
      _
    $region85: #{tpu_custom_call.1} parent=1 // pred_fallthru
      _
    // Predicated region
    $region86: #{tpu_custom_call.1} parent=1 // pred_check
      _
    $region87: #{tpu_custom_call.1} parent=1 // pred_check_branch
      %191 = sbr.rel (0) target = $region89
    $region88: #{tpu_custom_call.1} parent=1 // pred_region
      %192 = dma.done [#allocation3], 256
    $region89: #{tpu_custom_call.1} parent=1 // pred_fallthru
      _
    // Predicated region
    $region90: #{tpu_custom_call.1} parent=1 // pred_check
      _
    $region91: #{tpu_custom_call.1} parent=1 // pred_check_branch
      %194 = sbr.rel (0) target = $region93
    $region92: #{tpu_custom_call.1} parent=1 // pred_region
      %195 = dma.done [#allocation6], 1024
    $region93: #{tpu_custom_call.1} parent=1 // pred_fallthru
      _
    // Predicated region
    $region94: #{tpu_custom_call.1} parent=1 // pred_check
      _
    $region95: #{tpu_custom_call.1} parent=1 // pred_check_branch
      %197 = sbr.rel (0) target = $region97
    $region96: #{tpu_custom_call.1} parent=1 // pred_region
      %198 = dma.done [#allocation6], 16
    $region97: #{tpu_custom_call.1} parent=1 // pred_fallthru
      _
    // Predicated region
    $region98: #{tpu_custom_call.1} parent=1 // pred_check
      _
    $region99: #{tpu_custom_call.1} parent=1 // pred_check_branch
      %200 = sbr.rel (0) target = $region101
    $region100: #{tpu_custom_call.1} parent=1 // pred_region
      %201 = dma.done [#allocation9], 16
    $region101: #{tpu_custom_call.1} parent=1 // pred_fallthru
      _
    // Predicated region
    $region102: #{tpu_custom_call.1} parent=1 // pred_check
      _
    $region103: #{tpu_custom_call.1} parent=1 // pred_check_branch
      %203 = sbr.rel (0) target = $region105
    $region104: #{tpu_custom_call.1} parent=1 // pred_region
      %204 = dma.done [#allocation9], 16
    $region105: #{tpu_custom_call.1} parent=1 // pred_fallthru
      _
    // Predicated region
    $region106: #{tpu_custom_call.1} parent=1 // pred_check
      _
    $region107: #{tpu_custom_call.1} parent=1 // pred_check_branch
      %206 = sbr.rel (0) target = $region109
    $region108: #{tpu_custom_call.1} parent=1 // pred_region
      %207 = dma.done [#allocation12], 8192
    $region109: #{tpu_custom_call.1} parent=1 // pred_fallthru
      _
    // Predicated region
    $region110: #{tpu_custom_call.1} parent=1 // pred_check
      _
    $region111: #{tpu_custom_call.1} parent=1 // pred_check_branch
      %209 = sbr.rel (0) target = $region113
    $region112: #{tpu_custom_call.1} parent=1 // pred_region
      %210 = dma.done [#allocation12], 8192
    $region113: #{tpu_custom_call.1} parent=1 // pred_fallthru
      _
    // Predicated region
    $region114: #{tpu_custom_call.1} parent=1 // pred_check
      _
    $region115: #{tpu_custom_call.1} parent=1 // pred_check_branch
      %212 = sbr.rel (0) target = $region117
    $region116: #{tpu_custom_call.1} parent=1 // pred_region
      %213 = dma.done [#allocation15], 8192
    $region117: #{tpu_custom_call.1} parent=1 // pred_fallthru
      _
    // Predicated region
    $region118: #{tpu_custom_call.1} parent=1 // pred_check
      _
    $region119: #{tpu_custom_call.1} parent=1 // pred_check_branch
      %215 = sbr.rel (0) target = $region121
    $region120: #{tpu_custom_call.1} parent=1 // pred_region
      %216 = dma.done [#allocation15], 128
    $region121: #{tpu_custom_call.1} parent=1 // pred_fallthru
      _
    // Predicated region
    $region122: #{tpu_custom_call.1} parent=1 // pred_check
      _
    $region123: #{tpu_custom_call.1} parent=1 // pred_check_branch
      %218 = sbr.rel (0) target = $region125
    $region124: #{tpu_custom_call.1} parent=1 // pred_region
      %219 = dma.done [#allocation18], 8192
    $region125: #{tpu_custom_call.1} parent=1 // pred_fallthru
      _
    // Predicated region
    $region126: #{tpu_custom_call.1} parent=1 // pred_check
      _
    $region127: #{tpu_custom_call.1} parent=1 // pred_check_branch
      %221 = sbr.rel (0) target = $region129
    $region128: #{tpu_custom_call.1} parent=1 // pred_region
      %222 = dma.done [#allocation18], 2048
    $region129: #{tpu_custom_call.1} parent=1 // pred_fallthru
      _
    // Predicated region
    $region130: #{tpu_custom_call.1} parent=1 // pred_check
      _
    $region131: #{tpu_custom_call.1} parent=1 // pred_check_branch
      %224 = sbr.rel (0) target = $region133
    $region132: #{tpu_custom_call.1} parent=1 // pred_region
      %225 = dma.done [#allocation21], 2048
    $region133: #{tpu_custom_call.1} parent=1 // pred_fallthru
      _
    %v227 = vlaneseq
    %v228 = vand.u32 %v227, 127
    %vm229 = vcmp.lt.s32.totalorder %v228, 32
    %v230 = vsel %vm229, 1, 0
    %v231 = vcvt.s32.f32 %v230
    %v232 = vld [vmem:[#allocation2] sm:$0xff]
    %v233 = vld [vmem:[#allocation2 + $0x8] sm:$0xff]
    %v234 = vpack.c.bf16 %v233, %v232
    %v235 = vld [vmem:[#allocation5] sm:$0xf]
    %v236 = vld [vmem:[#allocation5 + $0x4] sm:$0xf]
    %v237 = vld [vmem:[#allocation5 + $0x8] sm:$0xf]
    %v238 = vld [vmem:[#allocation5 + $0xc] sm:$0xf]
    %v239 = vld [vmem:[#allocation5 + $0x10] sm:$0xf]
    %v240 = vld [vmem:[#allocation5 + $0x14] sm:$0xf]
    %v241 = vld [vmem:[#allocation5 + $0x18] sm:$0xf]
    %v242 = vld [vmem:[#allocation5 + $0x1c] sm:$0xf]
    %v243 = vld [vmem:[#allocation5 + $0x20] sm:$0xf]
    %v244 = vld [vmem:[#allocation5 + $0x24] sm:$0xf]
    %v245 = vld [vmem:[#allocation5 + $0x28] sm:$0xf]
    %v246 = vld [vmem:[#allocation5 + $0x2c] sm:$0xf]
    %v247 = vld [vmem:[#allocation5 + $0x30] sm:$0xf]
    %v248 = vld [vmem:[#allocation5 + $0x34] sm:$0xf]
    %v249 = vld [vmem:[#allocation5 + $0x38] sm:$0xf]
    %v250 = vld [vmem:[#allocation5 + $0x3c] sm:$0xf]
    %v251 = vld [vmem:[#allocation7] sm:$0x1]
    %v253 = vlaneseq
    %v254 = vshrl.u32 %v253, 7
    %v255 = vsub.s32 0, %v254
    %v256 = vrot.slane %v251, %v255
    %v274 = vunpack.c.l.b16 %v235
    %v275 = vunpack.c.l.b16 %v236
    %v276 = vunpack.c.l.b16 %v237
    %v277 = vunpack.c.l.b16 %v238
    %v278 = vunpack.c.l.b16 %v239
    %v279 = vunpack.c.l.b16 %v240
    %v280 = vunpack.c.l.b16 %v241
    %v281 = vunpack.c.l.b16 %v242
    %v282 = vunpack.c.l.b16 %v243
    %v283 = vunpack.c.l.b16 %v244
    %v284 = vunpack.c.l.b16 %v245
    %v285 = vunpack.c.l.b16 %v246
    %v286 = vunpack.c.l.b16 %v247
    %v287 = vunpack.c.l.b16 %v248
    %v288 = vunpack.c.l.b16 %v249
    %v289 = vunpack.c.l.b16 %v250
    %v290 = vpack.c.b16 %v275, %v274
    %v291 = vpack.c.b16 %v277, %v276
    %v292 = vpack.c.b16 %v279, %v278
    %v293 = vpack.c.b16 %v281, %v280
    %v294 = vpack.c.b16 %v283, %v282
    %v295 = vpack.c.b16 %v285, %v284
    %v296 = vpack.c.b16 %v287, %v286
    %v297 = vpack.c.b16 %v289, %v288
    %306 = vmatprep.subr.bf16.mxu0 0
    %307 = vmatpush1.bf16.msra.mxu0 %v297
    %308 = vmatprep.subr.bf16.mxu0 0
    %309 = vmatpush1.bf16.msra.mxu0 %v296
    %310 = vmatprep.subr.bf16.mxu0 0
    %311 = vmatpush1.bf16.msra.mxu0 %v295
    %312 = vmatprep.subr.bf16.mxu0 0
    %313 = vmatpush1.bf16.msra.mxu0 %v294
    %314 = vmatprep.subr.bf16.mxu0 0
    %315 = vmatpush1.bf16.msra.mxu0 %v293
    %316 = vmatprep.subr.bf16.mxu0 0
    %317 = vmatpush1.bf16.msra.mxu0 %v292
    %318 = vmatprep.subr.bf16.mxu0 0
    %319 = vmatpush1.bf16.msra.mxu0 %v291
    %320 = vmatprep.subr.bf16.mxu0 0
    %321 = vmatpush1.bf16.msra.mxu0 %v290
    %322 = vmatprep.subr.bf16.mxu0 0
    %323 = vmatpush2.bf16.msra.mxu0 0
    %324 = vmatprep.subr.bf16.mxu0 0
    %325 = vmatpush2.bf16.msra.mxu0 0
    %326 = vmatprep.subr.bf16.mxu0 0
    %327 = vmatpush2.bf16.msra.mxu0 0
    %328 = vmatprep.subr.bf16.mxu0 0
    %329 = vmatpush2.bf16.msra.mxu0 0
    %330 = vmatprep.subr.bf16.mxu0 0
    %331 = vmatpush2.bf16.msra.mxu0 0
    %332 = vmatprep.subr.bf16.mxu0 0
    %333 = vmatpush2.bf16.msra.mxu0 0
    %334 = vmatprep.subr.bf16.mxu0 0
    %335 = vmatpush2.bf16.msra.mxu0 0
    %336 = vmatprep.subr.bf16.mxu0 0
    %337 = vmatpush2.bf16.msra.mxu0 0
    %338 = vmatprep.mubr.bf16.mxu0 0
    %339 = vmatmul.mubr.bf16.gmra.mxu0 %v234
    %v340 = vpop.f32.mrf.mxu0
    %v341 = vadd.f32 %v256, %v340
    %v342 = vpop.f32.mrf.mxu0
    %v343 = vpop.f32.mrf.mxu0
    %v344 = vadd.f32 %v256, %v343
    %v345 = vpop.f32.mrf.mxu0
    %346 = vdwg.mxu0
    %v347 = vld [vmem:[#allocation8] sm:$0x1]
    %v348 = vld [vmem:[#allocation10] sm:$0x1]
    %v349 = vmul.f32 %v341, %v231
    %v350 = vmul.f32 %v344, %v231
    %351 = vadd.xlane.f32.xlu0 %v349
    %v352 = vpop.xlane.xlu0 %351
    %353 = vadd.xlane.f32.xlu0 %v350
    %v354 = vpop.xlane.xlu0 %353
    %v355 = vmul.f32 %v352, 0.03125
    %v356 = vmul.f32 %v354, 0.03125
    %v357 = vsub.f32 %v341, %v355
    %v358 = vsub.f32 %v344, %v356
    %v359 = vmul.f32 %v357, %v231
    %v360 = vmul.f32 %v358, %v231
    %v361 = vmul.f32 %v359, %v359
    %v362 = vmul.f32 %v360, %v360
    %363 = vadd.xlane.f32.xlu0 %v361
    %v364 = vpop.xlane.xlu0 %363
    %365 = vadd.xlane.f32.xlu0 %v362
    %v366 = vpop.xlane.xlu0 %365
    %v367 = vmul.f32 %v364, 0.03125
    %v368 = vmul.f32 %v366, 0.03125
    %v369 = vadd.f32 %v367, 1e-05
    %v370 = vadd.f32 %v368, 1e-05
    %v371 = vrsqrt.pop %v369
    %v372 = vrsqrt.pop %v370
    %v373 = vmul.f32 %v359, %v371
    %v374 = vmul.f32 %v360, %v372
    %v376 = vlaneseq
    %v377 = vshrl.u32 %v376, 7
    %v378 = vsub.s32 0, %v377
    %v379 = vrot.slane %v347, %v378
    %v381 = vmul.f32 %v373, %v379
    %v382 = vmul.f32 %v374, %v379
    %v384 = vlaneseq
    %v385 = vshrl.u32 %v384, 7
    %v386 = vsub.s32 0, %v385
    %v387 = vrot.slane %v348, %v386
    %v389 = vadd.f32 %v381, %v387
    %v390 = vadd.f32 %v382, %v387
    %v391 = vpack.c.bf16 %v390, %v389
    %v392 = vld [vmem:[#allocation11] sm:$0xf]
    %v393 = vld [vmem:[#allocation11 + $0x4] sm:$0xf]
    %v394 = vld [vmem:[#allocation11 + $0x8] sm:$0xf]
    %v395 = vld [vmem:[#allocation11 + $0xc] sm:$0xf]
    %v396 = vld [vmem:[#allocation11 + $0x10] sm:$0xf]
    %v397 = vld [vmem:[#allocation11 + $0x14] sm:$0xf]
    %v398 = vld [vmem:[#allocation11 + $0x18] sm:$0xf]
    %v399 = vld [vmem:[#allocation11 + $0x1c] sm:$0xf]
    %v400 = vld [vmem:[#allocation11 + $0x20] sm:$0xf]
    %v401 = vld [vmem:[#allocation11 + $0x24] sm:$0xf]
    %v402 = vld [vmem:[#allocation11 + $0x28] sm:$0xf]
    %v403 = vld [vmem:[#allocation11 + $0x2c] sm:$0xf]
    %v404 = vld [vmem:[#allocation11 + $0x30] sm:$0xf]
    %v405 = vld [vmem:[#allocation11 + $0x34] sm:$0xf]
    %v406 = vld [vmem:[#allocation11 + $0x38] sm:$0xf]
    %v407 = vld [vmem:[#allocation11 + $0x3c] sm:$0xf]
    %v408 = vld [vmem:[%s8] sm:$0x1]
    %v410 = vlaneseq
    %v411 = vshrl.u32 %v410, 7
    %v412 = vsub.s32 0, %v411
    %v413 = vrot.slane %v408, %v412
    %v431 = vunpack.c.l.b16 %v392
    %v432 = vunpack.c.l.b16 %v393
    %v433 = vunpack.c.l.b16 %v394
    %v434 = vunpack.c.l.b16 %v395
    %v435 = vunpack.c.l.b16 %v396
    %v436 = vunpack.c.l.b16 %v397
    %v437 = vunpack.c.l.b16 %v398
    %v438 = vunpack.c.l.b16 %v399
    %v439 = vunpack.c.l.b16 %v400
    %v440 = vunpack.c.l.b16 %v401
    %v441 = vunpack.c.l.b16 %v402
    %v442 = vunpack.c.l.b16 %v403
    %v443 = vunpack.c.l.b16 %v404
    %v444 = vunpack.c.l.b16 %v405
    %v445 = vunpack.c.l.b16 %v406
    %v446 = vunpack.c.l.b16 %v407
    %v447 = vpack.c.b16 %v432, %v431
    %v448 = vpack.c.b16 %v434, %v433
    %v449 = vpack.c.b16 %v436, %v435
    %v450 = vpack.c.b16 %v438, %v437
    %v451 = vpack.c.b16 %v440, %v439
    %v452 = vpack.c.b16 %v442, %v441
    %v453 = vpack.c.b16 %v444, %v443
    %v454 = vpack.c.b16 %v446, %v445
    %463 = vmatprep.subr.bf16.mxu0 0
    %464 = vmatpush1.bf16.msra.mxu0 %v454
    %465 = vmatprep.subr.bf16.mxu0 0
    %466 = vmatpush1.bf16.msra.mxu0 %v453
    %467 = vmatprep.subr.bf16.mxu0 0
    %468 = vmatpush1.bf16.msra.mxu0 %v452
    %469 = vmatprep.subr.bf16.mxu0 0
    %470 = vmatpush1.bf16.msra.mxu0 %v451
    %471 = vmatprep.subr.bf16.mxu0 0
    %472 = vmatpush1.bf16.msra.mxu0 %v450
    %473 = vmatprep.subr.bf16.mxu0 0
    %474 = vmatpush1.bf16.msra.mxu0 %v449
    %475 = vmatprep.subr.bf16.mxu0 0
    %476 = vmatpush1.bf16.msra.mxu0 %v448
    %477 = vmatprep.subr.bf16.mxu0 0
    %478 = vmatpush1.bf16.msra.mxu0 %v447
    %479 = vmatprep.subr.bf16.mxu0 0
    %480 = vmatpush2.bf16.msra.mxu0 0
    %481 = vmatprep.subr.bf16.mxu0 0
    %482 = vmatpush2.bf16.msra.mxu0 0
    %483 = vmatprep.subr.bf16.mxu0 0
    %484 = vmatpush2.bf16.msra.mxu0 0
    %485 = vmatprep.subr.bf16.mxu0 0
    %486 = vmatpush2.bf16.msra.mxu0 0
    %487 = vmatprep.subr.bf16.mxu0 0
    %488 = vmatpush2.bf16.msra.mxu0 0
    %489 = vmatprep.subr.bf16.mxu0 0
    %490 = vmatpush2.bf16.msra.mxu0 0
    %491 = vmatprep.subr.bf16.mxu0 0
    %492 = vmatpush2.bf16.msra.mxu0 0
    %493 = vmatprep.subr.bf16.mxu0 0
    %494 = vmatpush2.bf16.msra.mxu0 0
    %495 = vmatprep.mubr.bf16.mxu0 0
    %496 = vmatmul.mubr.bf16.gmra.mxu0 %v391
    %v497 = vpop.f32.mrf.mxu0
    %v498 = vadd.f32 %v413, %v497
    %v499 = vpop.f32.mrf.mxu0
    %v500 = vpop.f32.mrf.mxu0
    %v501 = vadd.f32 %v413, %v500
    %v502 = vpop.f32.mrf.mxu0
    %503 = vdwg.mxu0
    %v504 = vld [vmem:[#allocation13] sm:$0xf]
    %v505 = vld [vmem:[#allocation13 + $0x4] sm:$0xf]
    %v506 = vld [vmem:[#allocation13 + $0x8] sm:$0xf]
    %v507 = vld [vmem:[#allocation13 + $0xc] sm:$0xf]
    %v508 = vld [vmem:[#allocation13 + $0x10] sm:$0xf]
    %v509 = vld [vmem:[#allocation13 + $0x14] sm:$0xf]
    %v510 = vld [vmem:[#allocation13 + $0x18] sm:$0xf]
    %v511 = vld [vmem:[#allocation13 + $0x1c] sm:$0xf]
    %v512 = vld [vmem:[#allocation13 + $0x20] sm:$0xf]
    %v513 = vld [vmem:[#allocation13 + $0x24] sm:$0xf]
    %v514 = vld [vmem:[#allocation13 + $0x28] sm:$0xf]
    %v515 = vld [vmem:[#allocation13 + $0x2c] sm:$0xf]
    %v516 = vld [vmem:[#allocation13 + $0x30] sm:$0xf]
    %v517 = vld [vmem:[#allocation13 + $0x34] sm:$0xf]
    %v518 = vld [vmem:[#allocation13 + $0x38] sm:$0xf]
    %v519 = vld [vmem:[#allocation13 + $0x3c] sm:$0xf]
    %v520 = vld [vmem:[%s9] sm:$0x1]
    %v522 = vlaneseq
    %v523 = vshrl.u32 %v522, 7
    %v524 = vsub.s32 0, %v523
    %v525 = vrot.slane %v520, %v524
    %v543 = vunpack.c.l.b16 %v504
    %v544 = vunpack.c.l.b16 %v505
    %v545 = vunpack.c.l.b16 %v506
    %v546 = vunpack.c.l.b16 %v507
    %v547 = vunpack.c.l.b16 %v508
    %v548 = vunpack.c.l.b16 %v509
    %v549 = vunpack.c.l.b16 %v510
    %v550 = vunpack.c.l.b16 %v511
    %v551 = vunpack.c.l.b16 %v512
    %v552 = vunpack.c.l.b16 %v513
    %v553 = vunpack.c.l.b16 %v514
    %v554 = vunpack.c.l.b16 %v515
    %v555 = vunpack.c.l.b16 %v516
    %v556 = vunpack.c.l.b16 %v517
    %v557 = vunpack.c.l.b16 %v518
    %v558 = vunpack.c.l.b16 %v519
    %v559 = vpack.c.b16 %v544, %v543
    %v560 = vpack.c.b16 %v546, %v545
    %v561 = vpack.c.b16 %v548, %v547
    %v562 = vpack.c.b16 %v550, %v549
    %v563 = vpack.c.b16 %v552, %v551
    %v564 = vpack.c.b16 %v554, %v553
    %v565 = vpack.c.b16 %v556, %v555
    %v566 = vpack.c.b16 %v558, %v557
    %575 = vmatprep.subr.bf16.mxu0 0
    %576 = vmatpush1.bf16.msra.mxu0 %v566
    %577 = vmatprep.subr.bf16.mxu0 0
    %578 = vmatpush1.bf16.msra.mxu0 %v565
    %579 = vmatprep.subr.bf16.mxu0 0
    %580 = vmatpush1.bf16.msra.mxu0 %v564
    %581 = vmatprep.subr.bf16.mxu0 0
    %582 = vmatpush1.bf16.msra.mxu0 %v563
    %583 = vmatprep.subr.bf16.mxu0 0
    %584 = vmatpush1.bf16.msra.mxu0 %v562
    %585 = vmatprep.subr.bf16.mxu0 0
    %586 = vmatpush1.bf16.msra.mxu0 %v561
    %587 = vmatprep.subr.bf16.mxu0 0
    %588 = vmatpush1.bf16.msra.mxu0 %v560
    %589 = vmatprep.subr.bf16.mxu0 0
    %590 = vmatpush1.bf16.msra.mxu0 %v559
    %591 = vmatprep.subr.bf16.mxu0 0
    %592 = vmatpush2.bf16.msra.mxu0 0
    %593 = vmatprep.subr.bf16.mxu0 0
    %594 = vmatpush2.bf16.msra.mxu0 0
    %595 = vmatprep.subr.bf16.mxu0 0
    %596 = vmatpush2.bf16.msra.mxu0 0
    %597 = vmatprep.subr.bf16.mxu0 0
    %598 = vmatpush2.bf16.msra.mxu0 0
    %599 = vmatprep.subr.bf16.mxu0 0
    %600 = vmatpush2.bf16.msra.mxu0 0
    %601 = vmatprep.subr.bf16.mxu0 0
    %602 = vmatpush2.bf16.msra.mxu0 0
    %603 = vmatprep.subr.bf16.mxu0 0
    %604 = vmatpush2.bf16.msra.mxu0 0
    %605 = vmatprep.subr.bf16.mxu0 0
    %606 = vmatpush2.bf16.msra.mxu0 0
    %607 = vmatprep.mubr.bf16.mxu0 0
    %608 = vmatmul.mubr.bf16.gmra.mxu0 %v391
    %v609 = vpop.f32.mrf.mxu0
    %v610 = vadd.f32 %v525, %v609
    %v611 = vpop.f32.mrf.mxu0
    %v612 = vpop.f32.mrf.mxu0
    %v613 = vadd.f32 %v525, %v612
    %v614 = vpop.f32.mrf.mxu0
    %615 = vdwg.mxu0
    %v616 = vld [vmem:[#allocation14] sm:$0xf]
    %v617 = vld [vmem:[#allocation14 + $0x4] sm:$0xf]
    %v618 = vld [vmem:[#allocation14 + $0x8] sm:$0xf]
    %v619 = vld [vmem:[#allocation14 + $0xc] sm:$0xf]
    %v620 = vld [vmem:[#allocation14 + $0x10] sm:$0xf]
    %v621 = vld [vmem:[#allocation14 + $0x14] sm:$0xf]
    %v622 = vld [vmem:[#allocation14 + $0x18] sm:$0xf]
    %v623 = vld [vmem:[#allocation14 + $0x1c] sm:$0xf]
    %v624 = vld [vmem:[#allocation14 + $0x20] sm:$0xf]
    %v625 = vld [vmem:[#allocation14 + $0x24] sm:$0xf]
    %v626 = vld [vmem:[#allocation14 + $0x28] sm:$0xf]
    %v627 = vld [vmem:[#allocation14 + $0x2c] sm:$0xf]
    %v628 = vld [vmem:[#allocation14 + $0x30] sm:$0xf]
    %v629 = vld [vmem:[#allocation14 + $0x34] sm:$0xf]
    %v630 = vld [vmem:[#allocation14 + $0x38] sm:$0xf]
    %v631 = vld [vmem:[#allocation14 + $0x3c] sm:$0xf]
    %v632 = vld [vmem:[#allocation16] sm:$0x1]
    %v634 = vlaneseq
    %v635 = vshrl.u32 %v634, 7
    %v636 = vsub.s32 0, %v635
    %v637 = vrot.slane %v632, %v636
    %v655 = vunpack.c.l.b16 %v616
    %v656 = vunpack.c.l.b16 %v617
    %v657 = vunpack.c.l.b16 %v618
    %v658 = vunpack.c.l.b16 %v619
    %v659 = vunpack.c.l.b16 %v620
    %v660 = vunpack.c.l.b16 %v621
    %v661 = vunpack.c.l.b16 %v622
    %v662 = vunpack.c.l.b16 %v623
    %v663 = vunpack.c.l.b16 %v624
    %v664 = vunpack.c.l.b16 %v625
    %v665 = vunpack.c.l.b16 %v626
    %v666 = vunpack.c.l.b16 %v627
    %v667 = vunpack.c.l.b16 %v628
    %v668 = vunpack.c.l.b16 %v629
    %v669 = vunpack.c.l.b16 %v630
    %v670 = vunpack.c.l.b16 %v631
    %v671 = vpack.c.b16 %v656, %v655
    %v672 = vpack.c.b16 %v658, %v657
    %v673 = vpack.c.b16 %v660, %v659
    %v674 = vpack.c.b16 %v662, %v661
    %v675 = vpack.c.b16 %v664, %v663
    %v676 = vpack.c.b16 %v666, %v665
    %v677 = vpack.c.b16 %v668, %v667
    %v678 = vpack.c.b16 %v670, %v669
    %687 = vmatprep.subr.bf16.mxu0 0
    %688 = vmatpush1.bf16.msra.mxu0 %v678
    %689 = vmatprep.subr.bf16.mxu0 0
    %690 = vmatpush1.bf16.msra.mxu0 %v677
    %691 = vmatprep.subr.bf16.mxu0 0
    %692 = vmatpush1.bf16.msra.mxu0 %v676
    %693 = vmatprep.subr.bf16.mxu0 0
    %694 = vmatpush1.bf16.msra.mxu0 %v675
    %695 = vmatprep.subr.bf16.mxu0 0
    %696 = vmatpush1.bf16.msra.mxu0 %v674
    %697 = vmatprep.subr.bf16.mxu0 0
    %698 = vmatpush1.bf16.msra.mxu0 %v673
    %699 = vmatprep.subr.bf16.mxu0 0
    %700 = vmatpush1.bf16.msra.mxu0 %v672
    %701 = vmatprep.subr.bf16.mxu0 0
    %702 = vmatpush1.bf16.msra.mxu0 %v671
    %703 = vmatprep.subr.bf16.mxu0 0
    %704 = vmatpush2.bf16.msra.mxu0 0
    %705 = vmatprep.subr.bf16.mxu0 0
    %706 = vmatpush2.bf16.msra.mxu0 0
    %707 = vmatprep.subr.bf16.mxu0 0
    %708 = vmatpush2.bf16.msra.mxu0 0
    %709 = vmatprep.subr.bf16.mxu0 0
    %710 = vmatpush2.bf16.msra.mxu0 0
    %711 = vmatprep.subr.bf16.mxu0 0
    %712 = vmatpush2.bf16.msra.mxu0 0
    %713 = vmatprep.subr.bf16.mxu0 0
    %714 = vmatpush2.bf16.msra.mxu0 0
    %715 = vmatprep.subr.bf16.mxu0 0
    %716 = vmatpush2.bf16.msra.mxu0 0
    %717 = vmatprep.subr.bf16.mxu0 0
    %718 = vmatpush2.bf16.msra.mxu0 0
    %719 = vmatprep.mubr.bf16.mxu0 0
    %720 = vmatmul.mubr.bf16.gmra.mxu0 %v391
    %v721 = vpop.f32.mrf.mxu0
    %v722 = vadd.f32 %v637, %v721
    %v723 = vpop.f32.mrf.mxu0
    %v724 = vpop.f32.mrf.mxu0
    %v725 = vadd.f32 %v637, %v724
    %v726 = vpop.f32.mrf.mxu0
    %727 = vdwg.mxu0
    %728 = vmatprep.subr.mxu0 0.0
    %729 = vmatpush1.xpose.msra.mxu0 0.0
    %730 = vmatprep.subr.mxu0 0.0
    %731 = vmatpush1.xpose.msra.mxu0 0.0
    %732 = vmatprep.subr.mxu0 0.0
    %733 = vmatpush1.xpose.msra.mxu0 0.0
    %734 = vmatprep.subr.mxu0 0.0
    %735 = vmatpush1.xpose.msra.mxu0 0.0
    %736 = vmatprep.subr.mxu0 0.0
    %737 = vmatpush1.xpose.msra.mxu0 0.0
    %738 = vmatprep.subr.mxu0 0.0
    %739 = vmatpush1.xpose.msra.mxu0 0.0
    %740 = vmatprep.subr.mxu0 0.0
    %741 = vmatpush1.xpose.msra.mxu0 0.0
    %742 = vmatprep.subr.mxu0 0.0
    %743 = vmatpush1.xpose.msra.mxu0 0.0
    %744 = vmatprep.subr.mxu0 0.0
    %745 = vmatpush1.xpose.msra.mxu0 0.0
    %746 = vmatprep.subr.mxu0 0.0
    %747 = vmatpush1.xpose.msra.mxu0 0.0
    %748 = vmatprep.subr.mxu0 0.0
    %749 = vmatpush1.xpose.msra.mxu0 0.0
    %750 = vmatprep.subr.mxu0 0.0
    %751 = vmatpush1.xpose.msra.mxu0 0.0
    %752 = vmatprep.subr.mxu0 0.0
    %753 = vmatpush1.xpose.msra.mxu0 0.0
    %754 = vmatprep.subr.mxu0 0.0
    %755 = vmatpush1.xpose.msra.mxu0 0.0
    %756 = vmatprep.subr.mxu0 0.0
    %757 = vmatpush1.xpose.msra.mxu0 0.0
    %758 = vmatprep.subr.mxu0 0.0
    %759 = vmatpush1.xpose.msra.mxu0 %v610
    %760 = vmatprep.subr.mxu0 0.0
    %761 = vmatpush2.xpose.msra.mxu0 0.0
    %762 = vmatprep.subr.mxu0 0.0
    %763 = vmatpush2.xpose.msra.mxu0 0.0
    %764 = vmatprep.subr.mxu0 0.0
    %765 = vmatpush2.xpose.msra.mxu0 0.0
    %766 = vmatprep.subr.mxu0 0.0
    %767 = vmatpush2.xpose.msra.mxu0 0.0
    %768 = vmatprep.subr.mxu0 0.0
    %769 = vmatpush2.xpose.msra.mxu0 0.0
    %770 = vmatprep.subr.mxu0 0.0
    %771 = vmatpush2.xpose.msra.mxu0 0.0
    %772 = vmatprep.subr.mxu0 0.0
    %773 = vmatpush2.xpose.msra.mxu0 0.0
    %774 = vmatprep.subr.mxu0 0.0
    %775 = vmatpush2.xpose.msra.mxu0 0.0
    %776 = vmatprep.subr.mxu0 0.0
    %777 = vmatpush2.xpose.msra.mxu0 0.0
    %778 = vmatprep.subr.mxu0 0.0
    %779 = vmatpush2.xpose.msra.mxu0 0.0
    %780 = vmatprep.subr.mxu0 0.0
    %781 = vmatpush2.xpose.msra.mxu0 0.0
    %782 = vmatprep.subr.mxu0 0.0
    %783 = vmatpush2.xpose.msra.mxu0 0.0
    %784 = vmatprep.subr.mxu0 0.0
    %785 = vmatpush2.xpose.msra.mxu0 0.0
    %786 = vmatprep.subr.mxu0 0.0
    %787 = vmatpush2.xpose.msra.mxu0 0.0
    %788 = vmatprep.subr.mxu0 0.0
    %789 = vmatpush2.xpose.msra.mxu0 0.0
    %790 = vmatprep.subr.mxu0 0.0
    %791 = vmatpush2.xpose.msra.mxu0 0.0
    %792 = vmatprep.mubr.f32.mxu0 0.0
    %793 = vmatmul.mubr.f32.gmra.mxu0 %v498
    %v794 = vpop.f32.mrf.mxu0
    %v795 = vadd.f32 0.0, %v794
    %v796 = vpop.f32.mrf.mxu0
    %797 = vdwg.mxu0
    %798 = vmatprep.subr.mxu0 0.0
    %799 = vmatpush1.xpose.msra.mxu0 0.0
    %800 = vmatprep.subr.mxu0 0.0
    %801 = vmatpush1.xpose.msra.mxu0 0.0
    %802 = vmatprep.subr.mxu0 0.0
    %803 = vmatpush1.xpose.msra.mxu0 0.0
    %804 = vmatprep.subr.mxu0 0.0
    %805 = vmatpush1.xpose.msra.mxu0 0.0
    %806 = vmatprep.subr.mxu0 0.0
    %807 = vmatpush1.xpose.msra.mxu0 0.0
    %808 = vmatprep.subr.mxu0 0.0
    %809 = vmatpush1.xpose.msra.mxu0 0.0
    %810 = vmatprep.subr.mxu0 0.0
    %811 = vmatpush1.xpose.msra.mxu0 0.0
    %812 = vmatprep.subr.mxu0 0.0
    %813 = vmatpush1.xpose.msra.mxu0 0.0
    %814 = vmatprep.subr.mxu0 0.0
    %815 = vmatpush1.xpose.msra.mxu0 0.0
    %816 = vmatprep.subr.mxu0 0.0
    %817 = vmatpush1.xpose.msra.mxu0 0.0
    %818 = vmatprep.subr.mxu0 0.0
    %819 = vmatpush1.xpose.msra.mxu0 0.0
    %820 = vmatprep.subr.mxu0 0.0
    %821 = vmatpush1.xpose.msra.mxu0 0.0
    %822 = vmatprep.subr.mxu0 0.0
    %823 = vmatpush1.xpose.msra.mxu0 0.0
    %824 = vmatprep.subr.mxu0 0.0
    %825 = vmatpush1.xpose.msra.mxu0 0.0
    %826 = vmatprep.subr.mxu0 0.0
    %827 = vmatpush1.xpose.msra.mxu0 0.0
    %828 = vmatprep.subr.mxu0 0.0
    %829 = vmatpush1.xpose.msra.mxu0 %v613
    %830 = vmatprep.subr.mxu0 0.0
    %831 = vmatpush2.xpose.msra.mxu0 0.0
    %832 = vmatprep.subr.mxu0 0.0
    %833 = vmatpush2.xpose.msra.mxu0 0.0
    %834 = vmatprep.subr.mxu0 0.0
    %835 = vmatpush2.xpose.msra.mxu0 0.0
    %836 = vmatprep.subr.mxu0 0.0
    %837 = vmatpush2.xpose.msra.mxu0 0.0
    %838 = vmatprep.subr.mxu0 0.0
    %839 = vmatpush2.xpose.msra.mxu0 0.0
    %840 = vmatprep.subr.mxu0 0.0
    %841 = vmatpush2.xpose.msra.mxu0 0.0
    %842 = vmatprep.subr.mxu0 0.0
    %843 = vmatpush2.xpose.msra.mxu0 0.0
    %844 = vmatprep.subr.mxu0 0.0
    %845 = vmatpush2.xpose.msra.mxu0 0.0
    %846 = vmatprep.subr.mxu0 0.0
    %847 = vmatpush2.xpose.msra.mxu0 0.0
    %848 = vmatprep.subr.mxu0 0.0
    %849 = vmatpush2.xpose.msra.mxu0 0.0
    %850 = vmatprep.subr.mxu0 0.0
    %851 = vmatpush2.xpose.msra.mxu0 0.0
    %852 = vmatprep.subr.mxu0 0.0
    %853 = vmatpush2.xpose.msra.mxu0 0.0
    %854 = vmatprep.subr.mxu0 0.0
    %855 = vmatpush2.xpose.msra.mxu0 0.0
    %856 = vmatprep.subr.mxu0 0.0
    %857 = vmatpush2.xpose.msra.mxu0 0.0
    %858 = vmatprep.subr.mxu0 0.0
    %859 = vmatpush2.xpose.msra.mxu0 0.0
    %860 = vmatprep.subr.mxu0 0.0
    %861 = vmatpush2.xpose.msra.mxu0 0.0
    %862 = vmatprep.mubr.f32.mxu0 0.0
    %863 = vmatmul.mubr.f32.gmra.mxu0 %v501
    %v864 = vpop.f32.mrf.mxu0
    %v865 = vadd.f32 0.0, %v864
    %v866 = vpop.f32.mrf.mxu0
    %867 = vdwg.mxu0
    %vm868 = vcmask 64512
    %v869 = vsel %vm868, %v795, -inf
    %870 = vmax.xlane.f32.xlu0 %v869
    %v871 = vpop.xlane.xlu0 %870
    %v872 = vsel %vm868, %v865, -inf
    %873 = vmax.xlane.f32.xlu0 %v872
    %v874 = vpop.xlane.xlu0 %873
    %v875 = vsub.f32 %v795, %v871
    %v876 = vsub.f32 %v865, %v874
    %v877 = vmul.f32 %v875, 1.442695
    %v878 = vpow.pop %v877
    %v879 = vmul.f32 %v876, 1.442695
    %v880 = vpow.pop %v879
    %v881 = vsel %vm868, %v878, 0.0
    %882 = vadd.xlane.f32.xlu0 %v881
    %v883 = vpop.xlane.xlu0 %882
    %v884 = vsel %vm868, %v880, 0.0
    %885 = vadd.xlane.f32.xlu0 %v884
    %v886 = vpop.xlane.xlu0 %885
    %v887 = vrcp.pop %v883
    %v888 = vrcp.pop %v886
    %v889 = vmul.f32 %v878, %v887
    %v890 = vmul.f32 %v880, %v888
    %v892 = vsel %vm868, %v889, 0
    %894 = vmatprep.subr.mxu0 0.0
    %895 = vmatpush1.msra.mxu0 0.0
    %896 = vmatprep.subr.mxu0 0.0
    %897 = vmatpush1.msra.mxu0 0.0
    %898 = vmatprep.subr.mxu0 0.0
    %899 = vmatpush1.msra.mxu0 0.0
    %900 = vmatprep.subr.mxu0 0.0
    %901 = vmatpush1.msra.mxu0 0.0
    %902 = vmatprep.subr.mxu0 0.0
    %903 = vmatpush1.msra.mxu0 0.0
    %904 = vmatprep.subr.mxu0 0.0
    %905 = vmatpush1.msra.mxu0 0.0
    %906 = vmatprep.subr.mxu0 0.0
    %907 = vmatpush1.msra.mxu0 0.0
    %908 = vmatprep.subr.mxu0 0.0
    %909 = vmatpush1.msra.mxu0 0.0
    %910 = vmatprep.subr.mxu0 0.0
    %911 = vmatpush1.msra.mxu0 0.0
    %912 = vmatprep.subr.mxu0 0.0
    %913 = vmatpush1.msra.mxu0 0.0
    %914 = vmatprep.subr.mxu0 0.0
    %915 = vmatpush1.msra.mxu0 0.0
    %916 = vmatprep.subr.mxu0 0.0
    %917 = vmatpush1.msra.mxu0 0.0
    %918 = vmatprep.subr.mxu0 0.0
    %919 = vmatpush1.msra.mxu0 0.0
    %920 = vmatprep.subr.mxu0 0.0
    %921 = vmatpush1.msra.mxu0 0.0
    %922 = vmatprep.subr.mxu0 0.0
    %923 = vmatpush1.msra.mxu0 0.0
    %924 = vmatprep.subr.mxu0 0.0
    %925 = vmatpush1.msra.mxu0 %v722
    %926 = vmatprep.subr.mxu0 0.0
    %927 = vmatpush2.msra.mxu0 0.0
    %928 = vmatprep.subr.mxu0 0.0
    %929 = vmatpush2.msra.mxu0 0.0
    %930 = vmatprep.subr.mxu0 0.0
    %931 = vmatpush2.msra.mxu0 0.0
    %932 = vmatprep.subr.mxu0 0.0
    %933 = vmatpush2.msra.mxu0 0.0
    %934 = vmatprep.subr.mxu0 0.0
    %935 = vmatpush2.msra.mxu0 0.0
    %936 = vmatprep.subr.mxu0 0.0
    %937 = vmatpush2.msra.mxu0 0.0
    %938 = vmatprep.subr.mxu0 0.0
    %939 = vmatpush2.msra.mxu0 0.0
    %940 = vmatprep.subr.mxu0 0.0
    %941 = vmatpush2.msra.mxu0 0.0
    %942 = vmatprep.subr.mxu0 0.0
    %943 = vmatpush2.msra.mxu0 0.0
    %944 = vmatprep.subr.mxu0 0.0
    %945 = vmatpush2.msra.mxu0 0.0
    %946 = vmatprep.subr.mxu0 0.0
    %947 = vmatpush2.msra.mxu0 0.0
    %948 = vmatprep.subr.mxu0 0.0
    %949 = vmatpush2.msra.mxu0 0.0
    %950 = vmatprep.subr.mxu0 0.0
    %951 = vmatpush2.msra.mxu0 0.0
    %952 = vmatprep.subr.mxu0 0.0
    %953 = vmatpush2.msra.mxu0 0.0
    %954 = vmatprep.subr.mxu0 0.0
    %955 = vmatpush2.msra.mxu0 0.0
    %956 = vmatprep.subr.mxu0 0.0
    %957 = vmatpush2.msra.mxu0 0.0
    %958 = vmatprep.mubr.f32.mxu0 0.0
    %959 = vmatmul.mubr.f32.gmra.mxu0 %v892
    %v960 = vpop.f32.mrf.mxu0
    %v961 = vadd.f32 0.0, %v960
    %v962 = vpop.f32.mrf.mxu0
    %963 = vdwg.mxu0
    %v965 = vsel %vm868, %v890, 0
    %967 = vmatprep.subr.mxu0 0.0
    %968 = vmatpush1.msra.mxu0 0.0
    %969 = vmatprep.subr.mxu0 0.0
    %970 = vmatpush1.msra.mxu0 0.0
    %971 = vmatprep.subr.mxu0 0.0
    %972 = vmatpush1.msra.mxu0 0.0
    %973 = vmatprep.subr.mxu0 0.0
    %974 = vmatpush1.msra.mxu0 0.0
    %975 = vmatprep.subr.mxu0 0.0
    %976 = vmatpush1.msra.mxu0 0.0
    %977 = vmatprep.subr.mxu0 0.0
    %978 = vmatpush1.msra.mxu0 0.0
    %979 = vmatprep.subr.mxu0 0.0
    %980 = vmatpush1.msra.mxu0 0.0
    %981 = vmatprep.subr.mxu0 0.0
    %982 = vmatpush1.msra.mxu0 0.0
    %983 = vmatprep.subr.mxu0 0.0
    %984 = vmatpush1.msra.mxu0 0.0
    %985 = vmatprep.subr.mxu0 0.0
    %986 = vmatpush1.msra.mxu0 0.0
    %987 = vmatprep.subr.mxu0 0.0
    %988 = vmatpush1.msra.mxu0 0.0
    %989 = vmatprep.subr.mxu0 0.0
    %990 = vmatpush1.msra.mxu0 0.0
    %991 = vmatprep.subr.mxu0 0.0
    %992 = vmatpush1.msra.mxu0 0.0
    %993 = vmatprep.subr.mxu0 0.0
    %994 = vmatpush1.msra.mxu0 0.0
    %995 = vmatprep.subr.mxu0 0.0
    %996 = vmatpush1.msra.mxu0 0.0
    %997 = vmatprep.subr.mxu0 0.0
    %998 = vmatpush1.msra.mxu0 %v725
    %999 = vmatprep.subr.mxu0 0.0
    %1000 = vmatpush2.msra.mxu0 0.0
    %1001 = vmatprep.subr.mxu0 0.0
    %1002 = vmatpush2.msra.mxu0 0.0
    %1003 = vmatprep.subr.mxu0 0.0
    %1004 = vmatpush2.msra.mxu0 0.0
    %1005 = vmatprep.subr.mxu0 0.0
    %1006 = vmatpush2.msra.mxu0 0.0
    %1007 = vmatprep.subr.mxu0 0.0
    %1008 = vmatpush2.msra.mxu0 0.0
    %1009 = vmatprep.subr.mxu0 0.0
    %1010 = vmatpush2.msra.mxu0 0.0
    %1011 = vmatprep.subr.mxu0 0.0
    %1012 = vmatpush2.msra.mxu0 0.0
    %1013 = vmatprep.subr.mxu0 0.0
    %1014 = vmatpush2.msra.mxu0 0.0
    %1015 = vmatprep.subr.mxu0 0.0
    %1016 = vmatpush2.msra.mxu0 0.0
    %1017 = vmatprep.subr.mxu0 0.0
    %1018 = vmatpush2.msra.mxu0 0.0
    %1019 = vmatprep.subr.mxu0 0.0
    %1020 = vmatpush2.msra.mxu0 0.0
    %1021 = vmatprep.subr.mxu0 0.0
    %1022 = vmatpush2.msra.mxu0 0.0
    %1023 = vmatprep.subr.mxu0 0.0
    %1024 = vmatpush2.msra.mxu0 0.0
    %1025 = vmatprep.subr.mxu0 0.0
    %1026 = vmatpush2.msra.mxu0 0.0
    %1027 = vmatprep.subr.mxu0 0.0
    %1028 = vmatpush2.msra.mxu0 0.0
    %1029 = vmatprep.subr.mxu0 0.0
    %1030 = vmatpush2.msra.mxu0 0.0
    %1031 = vmatprep.mubr.f32.mxu0 0.0
    %1032 = vmatmul.mubr.f32.gmra.mxu0 %v965
    %v1033 = vpop.f32.mrf.mxu0
    %v1034 = vadd.f32 0.0, %v1033
    %v1035 = vpop.f32.mrf.mxu0
    %1036 = vdwg.mxu0
    %s1037 = scalar_lea.vmem [#allocation11], 64
    %v1038 = vld [vmem:[%s1037] sm:$0xf]
    %v1039 = vld [vmem:[%s1037 + $0x4] sm:$0xf]
    %v1040 = vld [vmem:[%s1037 + $0x8] sm:$0xf]
    %v1041 = vld [vmem:[%s1037 + $0xc] sm:$0xf]
    %v1042 = vld [vmem:[%s1037 + $0x10] sm:$0xf]
    %v1043 = vld [vmem:[%s1037 + $0x14] sm:$0xf]
    %v1044 = vld [vmem:[%s1037 + $0x18] sm:$0xf]
    %v1045 = vld [vmem:[%s1037 + $0x1c] sm:$0xf]
    %v1046 = vld [vmem:[%s1037 + $0x20] sm:$0xf]
    %v1047 = vld [vmem:[%s1037 + $0x24] sm:$0xf]
    %v1048 = vld [vmem:[%s1037 + $0x28] sm:$0xf]
    %v1049 = vld [vmem:[%s1037 + $0x2c] sm:$0xf]
    %v1050 = vld [vmem:[%s1037 + $0x30] sm:$0xf]
    %v1051 = vld [vmem:[%s1037 + $0x34] sm:$0xf]
    %v1052 = vld [vmem:[%s1037 + $0x38] sm:$0xf]
    %v1053 = vld [vmem:[%s1037 + $0x3c] sm:$0xf]
    %s1054 = scalar_lea.vmem %s8, 1
    %v1055 = vld [vmem:[%s1054] sm:$0x1]
    %v1057 = vlaneseq
    %v1058 = vshrl.u32 %v1057, 7
    %v1059 = vsub.s32 0, %v1058
    %v1060 = vrot.slane %v1055, %v1059
    %v1078 = vunpack.c.l.b16 %v1038
    %v1079 = vunpack.c.l.b16 %v1039
    %v1080 = vunpack.c.l.b16 %v1040
    %v1081 = vunpack.c.l.b16 %v1041
    %v1082 = vunpack.c.l.b16 %v1042
    %v1083 = vunpack.c.l.b16 %v1043
    %v1084 = vunpack.c.l.b16 %v1044
    %v1085 = vunpack.c.l.b16 %v1045
    %v1086 = vunpack.c.l.b16 %v1046
    %v1087 = vunpack.c.l.b16 %v1047
    %v1088 = vunpack.c.l.b16 %v1048
    %v1089 = vunpack.c.l.b16 %v1049
    %v1090 = vunpack.c.l.b16 %v1050
    %v1091 = vunpack.c.l.b16 %v1051
    %v1092 = vunpack.c.l.b16 %v1052
    %v1093 = vunpack.c.l.b16 %v1053
    %v1094 = vpack.c.b16 %v1079, %v1078
    %v1095 = vpack.c.b16 %v1081, %v1080
    %v1096 = vpack.c.b16 %v1083, %v1082
    %v1097 = vpack.c.b16 %v1085, %v1084
    %v1098 = vpack.c.b16 %v1087, %v1086
    %v1099 = vpack.c.b16 %v1089, %v1088
    %v1100 = vpack.c.b16 %v1091, %v1090
    %v1101 = vpack.c.b16 %v1093, %v1092
    %1110 = vmatprep.subr.bf16.mxu0 0
    %1111 = vmatpush1.bf16.msra.mxu0 %v1101
    %1112 = vmatprep.subr.bf16.mxu0 0
    %1113 = vmatpush1.bf16.msra.mxu0 %v1100
    %1114 = vmatprep.subr.bf16.mxu0 0
    %1115 = vmatpush1.bf16.msra.mxu0 %v1099
    %1116 = vmatprep.subr.bf16.mxu0 0
    %1117 = vmatpush1.bf16.msra.mxu0 %v1098
    %1118 = vmatprep.subr.bf16.mxu0 0
    %1119 = vmatpush1.bf16.msra.mxu0 %v1097
    %1120 = vmatprep.subr.bf16.mxu0 0
    %1121 = vmatpush1.bf16.msra.mxu0 %v1096
    %1122 = vmatprep.subr.bf16.mxu0 0
    %1123 = vmatpush1.bf16.msra.mxu0 %v1095
    %1124 = vmatprep.subr.bf16.mxu0 0
    %1125 = vmatpush1.bf16.msra.mxu0 %v1094
    %1126 = vmatprep.subr.bf16.mxu0 0
    %1127 = vmatpush2.bf16.msra.mxu0 0
    %1128 = vmatprep.subr.bf16.mxu0 0
    %1129 = vmatpush2.bf16.msra.mxu0 0
    %1130 = vmatprep.subr.bf16.mxu0 0
    %1131 = vmatpush2.bf16.msra.mxu0 0
    %1132 = vmatprep.subr.bf16.mxu0 0
    %1133 = vmatpush2.bf16.msra.mxu0 0
    %1134 = vmatprep.subr.bf16.mxu0 0
    %1135 = vmatpush2.bf16.msra.mxu0 0
    %1136 = vmatprep.subr.bf16.mxu0 0
    %1137 = vmatpush2.bf16.msra.mxu0 0
    %1138 = vmatprep.subr.bf16.mxu0 0
    %1139 = vmatpush2.bf16.msra.mxu0 0
    %1140 = vmatprep.subr.bf16.mxu0 0
    %1141 = vmatpush2.bf16.msra.mxu0 0
    %1142 = vmatprep.mubr.bf16.mxu0 0
    %1143 = vmatmul.mubr.bf16.gmra.mxu0 %v391
    %v1144 = vpop.f32.mrf.mxu0
    %v1145 = vadd.f32 %v1060, %v1144
    %v1146 = vpop.f32.mrf.mxu0
    %v1147 = vpop.f32.mrf.mxu0
    %v1148 = vadd.f32 %v1060, %v1147
    %v1149 = vpop.f32.mrf.mxu0
    %1150 = vdwg.mxu0
    %s1151 = scalar_lea.vmem [#allocation13], 64
    %v1152 = vld [vmem:[%s1151] sm:$0xf]
    %v1153 = vld [vmem:[%s1151 + $0x4] sm:$0xf]
    %v1154 = vld [vmem:[%s1151 + $0x8] sm:$0xf]
    %v1155 = vld [vmem:[%s1151 + $0xc] sm:$0xf]
    %v1156 = vld [vmem:[%s1151 + $0x10] sm:$0xf]
    %v1157 = vld [vmem:[%s1151 + $0x14] sm:$0xf]
    %v1158 = vld [vmem:[%s1151 + $0x18] sm:$0xf]
    %v1159 = vld [vmem:[%s1151 + $0x1c] sm:$0xf]
    %v1160 = vld [vmem:[%s1151 + $0x20] sm:$0xf]
    %v1161 = vld [vmem:[%s1151 + $0x24] sm:$0xf]
    %v1162 = vld [vmem:[%s1151 + $0x28] sm:$0xf]
    %v1163 = vld [vmem:[%s1151 + $0x2c] sm:$0xf]
    %v1164 = vld [vmem:[%s1151 + $0x30] sm:$0xf]
    %v1165 = vld [vmem:[%s1151 + $0x34] sm:$0xf]
    %v1166 = vld [vmem:[%s1151 + $0x38] sm:$0xf]
    %v1167 = vld [vmem:[%s1151 + $0x3c] sm:$0xf]
    %s1168 = scalar_lea.vmem %s9, 1
    %v1169 = vld [vmem:[%s1168] sm:$0x1]
    %v1171 = vlaneseq
    %v1172 = vshrl.u32 %v1171, 7
    %v1173 = vsub.s32 0, %v1172
    %v1174 = vrot.slane %v1169, %v1173
    %v1192 = vunpack.c.l.b16 %v1152
    %v1193 = vunpack.c.l.b16 %v1153
    %v1194 = vunpack.c.l.b16 %v1154
    %v1195 = vunpack.c.l.b16 %v1155
    %v1196 = vunpack.c.l.b16 %v1156
    %v1197 = vunpack.c.l.b16 %v1157
    %v1198 = vunpack.c.l.b16 %v1158
    %v1199 = vunpack.c.l.b16 %v1159
    %v1200 = vunpack.c.l.b16 %v1160
    %v1201 = vunpack.c.l.b16 %v1161
    %v1202 = vunpack.c.l.b16 %v1162
    %v1203 = vunpack.c.l.b16 %v1163
    %v1204 = vunpack.c.l.b16 %v1164
    %v1205 = vunpack.c.l.b16 %v1165
    %v1206 = vunpack.c.l.b16 %v1166
    %v1207 = vunpack.c.l.b16 %v1167
    %v1208 = vpack.c.b16 %v1193, %v1192
    %v1209 = vpack.c.b16 %v1195, %v1194
    %v1210 = vpack.c.b16 %v1197, %v1196
    %v1211 = vpack.c.b16 %v1199, %v1198
    %v1212 = vpack.c.b16 %v1201, %v1200
    %v1213 = vpack.c.b16 %v1203, %v1202
    %v1214 = vpack.c.b16 %v1205, %v1204
    %v1215 = vpack.c.b16 %v1207, %v1206
    %1224 = vmatprep.subr.bf16.mxu0 0
    %1225 = vmatpush1.bf16.msra.mxu0 %v1215
    %1226 = vmatprep.subr.bf16.mxu0 0
    %1227 = vmatpush1.bf16.msra.mxu0 %v1214
    %1228 = vmatprep.subr.bf16.mxu0 0
    %1229 = vmatpush1.bf16.msra.mxu0 %v1213
    %1230 = vmatprep.subr.bf16.mxu0 0
    %1231 = vmatpush1.bf16.msra.mxu0 %v1212
    %1232 = vmatprep.subr.bf16.mxu0 0
    %1233 = vmatpush1.bf16.msra.mxu0 %v1211
    %1234 = vmatprep.subr.bf16.mxu0 0
    %1235 = vmatpush1.bf16.msra.mxu0 %v1210
    %1236 = vmatprep.subr.bf16.mxu0 0
    %1237 = vmatpush1.bf16.msra.mxu0 %v1209
    %1238 = vmatprep.subr.bf16.mxu0 0
    %1239 = vmatpush1.bf16.msra.mxu0 %v1208
    %1240 = vmatprep.subr.bf16.mxu0 0
    %1241 = vmatpush2.bf16.msra.mxu0 0
    %1242 = vmatprep.subr.bf16.mxu0 0
    %1243 = vmatpush2.bf16.msra.mxu0 0
    %1244 = vmatprep.subr.bf16.mxu0 0
    %1245 = vmatpush2.bf16.msra.mxu0 0
    %1246 = vmatprep.subr.bf16.mxu0 0
    %1247 = vmatpush2.bf16.msra.mxu0 0
    %1248 = vmatprep.subr.bf16.mxu0 0
    %1249 = vmatpush2.bf16.msra.mxu0 0
    %1250 = vmatprep.subr.bf16.mxu0 0
    %1251 = vmatpush2.bf16.msra.mxu0 0
    %1252 = vmatprep.subr.bf16.mxu0 0
    %1253 = vmatpush2.bf16.msra.mxu0 0
    %1254 = vmatprep.subr.bf16.mxu0 0
    %1255 = vmatpush2.bf16.msra.mxu0 0
    %1256 = vmatprep.mubr.bf16.mxu0 0
    %1257 = vmatmul.mubr.bf16.gmra.mxu0 %v391
    %v1258 = vpop.f32.mrf.mxu0
    %v1259 = vadd.f32 %v1174, %v1258
    %v1260 = vpop.f32.mrf.mxu0
    %v1261 = vpop.f32.mrf.mxu0
    %v1262 = vadd.f32 %v1174, %v1261
    %v1263 = vpop.f32.mrf.mxu0
    %1264 = vdwg.mxu0
    %s1265 = scalar_lea.vmem [#allocation14], 64
    %v1266 = vld [vmem:[%s1265] sm:$0xf]
    %v1267 = vld [vmem:[%s1265 + $0x4] sm:$0xf]
    %v1268 = vld [vmem:[%s1265 + $0x8] sm:$0xf]
    %v1269 = vld [vmem:[%s1265 + $0xc] sm:$0xf]
    %v1270 = vld [vmem:[%s1265 + $0x10] sm:$0xf]
    %v1271 = vld [vmem:[%s1265 + $0x14] sm:$0xf]
    %v1272 = vld [vmem:[%s1265 + $0x18] sm:$0xf]
    %v1273 = vld [vmem:[%s1265 + $0x1c] sm:$0xf]
    %v1274 = vld [vmem:[%s1265 + $0x20] sm:$0xf]
    %v1275 = vld [vmem:[%s1265 + $0x24] sm:$0xf]
    %v1276 = vld [vmem:[%s1265 + $0x28] sm:$0xf]
    %v1277 = vld [vmem:[%s1265 + $0x2c] sm:$0xf]
    %v1278 = vld [vmem:[%s1265 + $0x30] sm:$0xf]
    %v1279 = vld [vmem:[%s1265 + $0x34] sm:$0xf]
    %v1280 = vld [vmem:[%s1265 + $0x38] sm:$0xf]
    %v1281 = vld [vmem:[%s1265 + $0x3c] sm:$0xf]
    %s1282 = scalar_lea.vmem [#allocation16], 1
    %v1283 = vld [vmem:[%s1282] sm:$0x1]
    %v1285 = vlaneseq
    %v1286 = vshrl.u32 %v1285, 7
    %v1287 = vsub.s32 0, %v1286
    %v1288 = vrot.slane %v1283, %v1287
    %v1306 = vunpack.c.l.b16 %v1266
    %v1307 = vunpack.c.l.b16 %v1267
    %v1308 = vunpack.c.l.b16 %v1268
    %v1309 = vunpack.c.l.b16 %v1269
    %v1310 = vunpack.c.l.b16 %v1270
    %v1311 = vunpack.c.l.b16 %v1271
    %v1312 = vunpack.c.l.b16 %v1272
    %v1313 = vunpack.c.l.b16 %v1273
    %v1314 = vunpack.c.l.b16 %v1274
    %v1315 = vunpack.c.l.b16 %v1275
    %v1316 = vunpack.c.l.b16 %v1276
    %v1317 = vunpack.c.l.b16 %v1277
    %v1318 = vunpack.c.l.b16 %v1278
    %v1319 = vunpack.c.l.b16 %v1279
    %v1320 = vunpack.c.l.b16 %v1280
    %v1321 = vunpack.c.l.b16 %v1281
    %v1322 = vpack.c.b16 %v1307, %v1306
    %v1323 = vpack.c.b16 %v1309, %v1308
    %v1324 = vpack.c.b16 %v1311, %v1310
    %v1325 = vpack.c.b16 %v1313, %v1312
    %v1326 = vpack.c.b16 %v1315, %v1314
    %v1327 = vpack.c.b16 %v1317, %v1316
    %v1328 = vpack.c.b16 %v1319, %v1318
    %v1329 = vpack.c.b16 %v1321, %v1320
    %1338 = vmatprep.subr.bf16.mxu0 0
    %1339 = vmatpush1.bf16.msra.mxu0 %v1329
    %1340 = vmatprep.subr.bf16.mxu0 0
    %1341 = vmatpush1.bf16.msra.mxu0 %v1328
    %1342 = vmatprep.subr.bf16.mxu0 0
    %1343 = vmatpush1.bf16.msra.mxu0 %v1327
    %1344 = vmatprep.subr.bf16.mxu0 0
    %1345 = vmatpush1.bf16.msra.mxu0 %v1326
    %1346 = vmatprep.subr.bf16.mxu0 0
    %1347 = vmatpush1.bf16.msra.mxu0 %v1325
    %1348 = vmatprep.subr.bf16.mxu0 0
    %1349 = vmatpush1.bf16.msra.mxu0 %v1324
    %1350 = vmatprep.subr.bf16.mxu0 0
    %1351 = vmatpush1.bf16.msra.mxu0 %v1323
    %1352 = vmatprep.subr.bf16.mxu0 0
    %1353 = vmatpush1.bf16.msra.mxu0 %v1322
    %1354 = vmatprep.subr.bf16.mxu0 0
    %1355 = vmatpush2.bf16.msra.mxu0 0
    %1356 = vmatprep.subr.bf16.mxu0 0
    %1357 = vmatpush2.bf16.msra.mxu0 0
    %1358 = vmatprep.subr.bf16.mxu0 0
    %1359 = vmatpush2.bf16.msra.mxu0 0
    %1360 = vmatprep.subr.bf16.mxu0 0
    %1361 = vmatpush2.bf16.msra.mxu0 0
    %1362 = vmatprep.subr.bf16.mxu0 0
    %1363 = vmatpush2.bf16.msra.mxu0 0
    %1364 = vmatprep.subr.bf16.mxu0 0
    %1365 = vmatpush2.bf16.msra.mxu0 0
    %1366 = vmatprep.subr.bf16.mxu0 0
    %1367 = vmatpush2.bf16.msra.mxu0 0
    %1368 = vmatprep.subr.bf16.mxu0 0
    %1369 = vmatpush2.bf16.msra.mxu0 0
    %1370 = vmatprep.mubr.bf16.mxu0 0
    %1371 = vmatmul.mubr.bf16.gmra.mxu0 %v391
    %v1372 = vpop.f32.mrf.mxu0
    %v1373 = vadd.f32 %v1288, %v1372
    %v1374 = vpop.f32.mrf.mxu0
    %v1375 = vpop.f32.mrf.mxu0
    %v1376 = vadd.f32 %v1288, %v1375
    %v1377 = vpop.f32.mrf.mxu0
    %1378 = vdwg.mxu0
    %1379 = vmatprep.subr.mxu0 0.0
    %1380 = vmatpush1.xpose.msra.mxu0 0.0
    %1381 = vmatprep.subr.mxu0 0.0
    %1382 = vmatpush1.xpose.msra.mxu0 0.0
    %1383 = vmatprep.subr.mxu0 0.0
    %1384 = vmatpush1.xpose.msra.mxu0 0.0
    %1385 = vmatprep.subr.mxu0 0.0
    %1386 = vmatpush1.xpose.msra.mxu0 0.0
    %1387 = vmatprep.subr.mxu0 0.0
    %1388 = vmatpush1.xpose.msra.mxu0 0.0
    %1389 = vmatprep.subr.mxu0 0.0
    %1390 = vmatpush1.xpose.msra.mxu0 0.0
    %1391 = vmatprep.subr.mxu0 0.0
    %1392 = vmatpush1.xpose.msra.mxu0 0.0
    %1393 = vmatprep.subr.mxu0 0.0
    %1394 = vmatpush1.xpose.msra.mxu0 0.0
    %1395 = vmatprep.subr.mxu0 0.0
    %1396 = vmatpush1.xpose.msra.mxu0 0.0
    %1397 = vmatprep.subr.mxu0 0.0
    %1398 = vmatpush1.xpose.msra.mxu0 0.0
    %1399 = vmatprep.subr.mxu0 0.0
    %1400 = vmatpush1.xpose.msra.mxu0 0.0
    %1401 = vmatprep.subr.mxu0 0.0
    %1402 = vmatpush1.xpose.msra.mxu0 0.0
    %1403 = vmatprep.subr.mxu0 0.0
    %1404 = vmatpush1.xpose.msra.mxu0 0.0
    %1405 = vmatprep.subr.mxu0 0.0
    %1406 = vmatpush1.xpose.msra.mxu0 0.0
    %1407 = vmatprep.subr.mxu0 0.0
    %1408 = vmatpush1.xpose.msra.mxu0 0.0
    %1409 = vmatprep.subr.mxu0 0.0
    %1410 = vmatpush1.xpose.msra.mxu0 %v1259
    %1411 = vmatprep.subr.mxu0 0.0
    %1412 = vmatpush2.xpose.msra.mxu0 0.0
    %1413 = vmatprep.subr.mxu0 0.0
    %1414 = vmatpush2.xpose.msra.mxu0 0.0
    %1415 = vmatprep.subr.mxu0 0.0
    %1416 = vmatpush2.xpose.msra.mxu0 0.0
    %1417 = vmatprep.subr.mxu0 0.0
    %1418 = vmatpush2.xpose.msra.mxu0 0.0
    %1419 = vmatprep.subr.mxu0 0.0
    %1420 = vmatpush2.xpose.msra.mxu0 0.0
    %1421 = vmatprep.subr.mxu0 0.0
    %1422 = vmatpush2.xpose.msra.mxu0 0.0
    %1423 = vmatprep.subr.mxu0 0.0
    %1424 = vmatpush2.xpose.msra.mxu0 0.0
    %1425 = vmatprep.subr.mxu0 0.0
    %1426 = vmatpush2.xpose.msra.mxu0 0.0
    %1427 = vmatprep.subr.mxu0 0.0
    %1428 = vmatpush2.xpose.msra.mxu0 0.0
    %1429 = vmatprep.subr.mxu0 0.0
    %1430 = vmatpush2.xpose.msra.mxu0 0.0
    %1431 = vmatprep.subr.mxu0 0.0
    %1432 = vmatpush2.xpose.msra.mxu0 0.0
    %1433 = vmatprep.subr.mxu0 0.0
    %1434 = vmatpush2.xpose.msra.mxu0 0.0
    %1435 = vmatprep.subr.mxu0 0.0
    %1436 = vmatpush2.xpose.msra.mxu0 0.0
    %1437 = vmatprep.subr.mxu0 0.0
    %1438 = vmatpush2.xpose.msra.mxu0 0.0
    %1439 = vmatprep.subr.mxu0 0.0
    %1440 = vmatpush2.xpose.msra.mxu0 0.0
    %1441 = vmatprep.subr.mxu0 0.0
    %1442 = vmatpush2.xpose.msra.mxu0 0.0
    %1443 = vmatprep.mubr.f32.mxu0 0.0
    %1444 = vmatmul.mubr.f32.gmra.mxu0 %v1145
    %v1445 = vpop.f32.mrf.mxu0
    %v1446 = vadd.f32 0.0, %v1445
    %v1447 = vpop.f32.mrf.mxu0
    %1448 = vdwg.mxu0
    %1449 = vmatprep.subr.mxu0 0.0
    %1450 = vmatpush1.xpose.msra.mxu0 0.0
    %1451 = vmatprep.subr.mxu0 0.0
    %1452 = vmatpush1.xpose.msra.mxu0 0.0
    %1453 = vmatprep.subr.mxu0 0.0
    %1454 = vmatpush1.xpose.msra.mxu0 0.0
    %1455 = vmatprep.subr.mxu0 0.0
    %1456 = vmatpush1.xpose.msra.mxu0 0.0
    %1457 = vmatprep.subr.mxu0 0.0
    %1458 = vmatpush1.xpose.msra.mxu0 0.0
    %1459 = vmatprep.subr.mxu0 0.0
    %1460 = vmatpush1.xpose.msra.mxu0 0.0
    %1461 = vmatprep.subr.mxu0 0.0
    %1462 = vmatpush1.xpose.msra.mxu0 0.0
    %1463 = vmatprep.subr.mxu0 0.0
    %1464 = vmatpush1.xpose.msra.mxu0 0.0
    %1465 = vmatprep.subr.mxu0 0.0
    %1466 = vmatpush1.xpose.msra.mxu0 0.0
    %1467 = vmatprep.subr.mxu0 0.0
    %1468 = vmatpush1.xpose.msra.mxu0 0.0
    %1469 = vmatprep.subr.mxu0 0.0
    %1470 = vmatpush1.xpose.msra.mxu0 0.0
    %1471 = vmatprep.subr.mxu0 0.0
    %1472 = vmatpush1.xpose.msra.mxu0 0.0
    %1473 = vmatprep.subr.mxu0 0.0
    %1474 = vmatpush1.xpose.msra.mxu0 0.0
    %1475 = vmatprep.subr.mxu0 0.0
    %1476 = vmatpush1.xpose.msra.mxu0 0.0
    %1477 = vmatprep.subr.mxu0 0.0
    %1478 = vmatpush1.xpose.msra.mxu0 0.0
    %1479 = vmatprep.subr.mxu0 0.0
    %1480 = vmatpush1.xpose.msra.mxu0 %v1262
    %1481 = vmatprep.subr.mxu0 0.0
    %1482 = vmatpush2.xpose.msra.mxu0 0.0
    %1483 = vmatprep.subr.mxu0 0.0
    %1484 = vmatpush2.xpose.msra.mxu0 0.0
    %1485 = vmatprep.subr.mxu0 0.0
    %1486 = vmatpush2.xpose.msra.mxu0 0.0
    %1487 = vmatprep.subr.mxu0 0.0
    %1488 = vmatpush2.xpose.msra.mxu0 0.0
    %1489 = vmatprep.subr.mxu0 0.0
    %1490 = vmatpush2.xpose.msra.mxu0 0.0
    %1491 = vmatprep.subr.mxu0 0.0
    %1492 = vmatpush2.xpose.msra.mxu0 0.0
    %1493 = vmatprep.subr.mxu0 0.0
    %1494 = vmatpush2.xpose.msra.mxu0 0.0
    %1495 = vmatprep.subr.mxu0 0.0
    %1496 = vmatpush2.xpose.msra.mxu0 0.0
    %1497 = vmatprep.subr.mxu0 0.0
    %1498 = vmatpush2.xpose.msra.mxu0 0.0
    %1499 = vmatprep.subr.mxu0 0.0
    %1500 = vmatpush2.xpose.msra.mxu0 0.0
    %1501 = vmatprep.subr.mxu0 0.0
    %1502 = vmatpush2.xpose.msra.mxu0 0.0
    %1503 = vmatprep.subr.mxu0 0.0
    %1504 = vmatpush2.xpose.msra.mxu0 0.0
    %1505 = vmatprep.subr.mxu0 0.0
    %1506 = vmatpush2.xpose.msra.mxu0 0.0
    %1507 = vmatprep.subr.mxu0 0.0
    %1508 = vmatpush2.xpose.msra.mxu0 0.0
    %1509 = vmatprep.subr.mxu0 0.0
    %1510 = vmatpush2.xpose.msra.mxu0 0.0
    %1511 = vmatprep.subr.mxu0 0.0
    %1512 = vmatpush2.xpose.msra.mxu0 0.0
    %1513 = vmatprep.mubr.f32.mxu0 0.0
    %1514 = vmatmul.mubr.f32.gmra.mxu0 %v1148
    %v1515 = vpop.f32.mrf.mxu0
    %v1516 = vadd.f32 0.0, %v1515
    %v1517 = vpop.f32.mrf.mxu0
    %1518 = vdwg.mxu0
    %v1519 = vsel %vm868, %v1446, -inf
    %1520 = vmax.xlane.f32.xlu0 %v1519
    %v1521 = vpop.xlane.xlu0 %1520
    %v1522 = vsel %vm868, %v1516, -inf
    %1523 = vmax.xlane.f32.xlu0 %v1522
    %v1524 = vpop.xlane.xlu0 %1523
    %v1525 = vsub.f32 %v1446, %v1521
    %v1526 = vsub.f32 %v1516, %v1524
    %v1527 = vmul.f32 %v1525, 1.442695
    %v1528 = vpow.pop %v1527
    %v1529 = vmul.f32 %v1526, 1.442695
    %v1530 = vpow.pop %v1529
    %v1531 = vsel %vm868, %v1528, 0.0
    %1532 = vadd.xlane.f32.xlu0 %v1531
    %v1533 = vpop.xlane.xlu0 %1532
    %v1534 = vsel %vm868, %v1530, 0.0
    %1535 = vadd.xlane.f32.xlu0 %v1534
    %v1536 = vpop.xlane.xlu0 %1535
    %v1537 = vrcp.pop %v1533
    %v1538 = vrcp.pop %v1536
    %v1539 = vmul.f32 %v1528, %v1537
    %v1540 = vmul.f32 %v1530, %v1538
    %v1542 = vsel %vm868, %v1539, 0
    %1544 = vmatprep.subr.mxu0 0.0
    %1545 = vmatpush1.msra.mxu0 0.0
    %1546 = vmatprep.subr.mxu0 0.0
    %1547 = vmatpush1.msra.mxu0 0.0
    %1548 = vmatprep.subr.mxu0 0.0
    %1549 = vmatpush1.msra.mxu0 0.0
    %1550 = vmatprep.subr.mxu0 0.0
    %1551 = vmatpush1.msra.mxu0 0.0
    %1552 = vmatprep.subr.mxu0 0.0
    %1553 = vmatpush1.msra.mxu0 0.0
    %1554 = vmatprep.subr.mxu0 0.0
    %1555 = vmatpush1.msra.mxu0 0.0
    %1556 = vmatprep.subr.mxu0 0.0
    %1557 = vmatpush1.msra.mxu0 0.0
    %1558 = vmatprep.subr.mxu0 0.0
    %1559 = vmatpush1.msra.mxu0 0.0
    %1560 = vmatprep.subr.mxu0 0.0
    %1561 = vmatpush1.msra.mxu0 0.0
    %1562 = vmatprep.subr.mxu0 0.0
    %1563 = vmatpush1.msra.mxu0 0.0
    %1564 = vmatprep.subr.mxu0 0.0
    %1565 = vmatpush1.msra.mxu0 0.0
    %1566 = vmatprep.subr.mxu0 0.0
    %1567 = vmatpush1.msra.mxu0 0.0
    %1568 = vmatprep.subr.mxu0 0.0
    %1569 = vmatpush1.msra.mxu0 0.0
    %1570 = vmatprep.subr.mxu0 0.0
    %1571 = vmatpush1.msra.mxu0 0.0
    %1572 = vmatprep.subr.mxu0 0.0
    %1573 = vmatpush1.msra.mxu0 0.0
    %1574 = vmatprep.subr.mxu0 0.0
    %1575 = vmatpush1.msra.mxu0 %v1373
    %1576 = vmatprep.subr.mxu0 0.0
    %1577 = vmatpush2.msra.mxu0 0.0
    %1578 = vmatprep.subr.mxu0 0.0
    %1579 = vmatpush2.msra.mxu0 0.0
    %1580 = vmatprep.subr.mxu0 0.0
    %1581 = vmatpush2.msra.mxu0 0.0
    %1582 = vmatprep.subr.mxu0 0.0
    %1583 = vmatpush2.msra.mxu0 0.0
    %1584 = vmatprep.subr.mxu0 0.0
    %1585 = vmatpush2.msra.mxu0 0.0
    %1586 = vmatprep.subr.mxu0 0.0
    %1587 = vmatpush2.msra.mxu0 0.0
    %1588 = vmatprep.subr.mxu0 0.0
    %1589 = vmatpush2.msra.mxu0 0.0
    %1590 = vmatprep.subr.mxu0 0.0
    %1591 = vmatpush2.msra.mxu0 0.0
    %1592 = vmatprep.subr.mxu0 0.0
    %1593 = vmatpush2.msra.mxu0 0.0
    %1594 = vmatprep.subr.mxu0 0.0
    %1595 = vmatpush2.msra.mxu0 0.0
    %1596 = vmatprep.subr.mxu0 0.0
    %1597 = vmatpush2.msra.mxu0 0.0
    %1598 = vmatprep.subr.mxu0 0.0
    %1599 = vmatpush2.msra.mxu0 0.0
    %1600 = vmatprep.subr.mxu0 0.0
    %1601 = vmatpush2.msra.mxu0 0.0
    %1602 = vmatprep.subr.mxu0 0.0
    %1603 = vmatpush2.msra.mxu0 0.0
    %1604 = vmatprep.subr.mxu0 0.0
    %1605 = vmatpush2.msra.mxu0 0.0
    %1606 = vmatprep.subr.mxu0 0.0
    %1607 = vmatpush2.msra.mxu0 0.0
    %1608 = vmatprep.mubr.f32.mxu0 0.0
    %1609 = vmatmul.mubr.f32.gmra.mxu0 %v1542
    %v1610 = vpop.f32.mrf.mxu0
    %v1611 = vadd.f32 0.0, %v1610
    %v1612 = vpop.f32.mrf.mxu0
    %1613 = vdwg.mxu0
    %v1615 = vsel %vm868, %v1540, 0
    %1617 = vmatprep.subr.mxu0 0.0
    %1618 = vmatpush1.msra.mxu0 0.0
    %1619 = vmatprep.subr.mxu0 0.0
    %1620 = vmatpush1.msra.mxu0 0.0
    %1621 = vmatprep.subr.mxu0 0.0
    %1622 = vmatpush1.msra.mxu0 0.0
    %1623 = vmatprep.subr.mxu0 0.0
    %1624 = vmatpush1.msra.mxu0 0.0
    %1625 = vmatprep.subr.mxu0 0.0
    %1626 = vmatpush1.msra.mxu0 0.0
    %1627 = vmatprep.subr.mxu0 0.0
    %1628 = vmatpush1.msra.mxu0 0.0
    %1629 = vmatprep.subr.mxu0 0.0
    %1630 = vmatpush1.msra.mxu0 0.0
    %1631 = vmatprep.subr.mxu0 0.0
    %1632 = vmatpush1.msra.mxu0 0.0
    %1633 = vmatprep.subr.mxu0 0.0
    %1634 = vmatpush1.msra.mxu0 0.0
    %1635 = vmatprep.subr.mxu0 0.0
    %1636 = vmatpush1.msra.mxu0 0.0
    %1637 = vmatprep.subr.mxu0 0.0
    %1638 = vmatpush1.msra.mxu0 0.0
    %1639 = vmatprep.subr.mxu0 0.0
    %1640 = vmatpush1.msra.mxu0 0.0
    %1641 = vmatprep.subr.mxu0 0.0
    %1642 = vmatpush1.msra.mxu0 0.0
    %1643 = vmatprep.subr.mxu0 0.0
    %1644 = vmatpush1.msra.mxu0 0.0
    %1645 = vmatprep.subr.mxu0 0.0
    %1646 = vmatpush1.msra.mxu0 0.0
    %1647 = vmatprep.subr.mxu0 0.0
    %1648 = vmatpush1.msra.mxu0 %v1376
    %1649 = vmatprep.subr.mxu0 0.0
    %1650 = vmatpush2.msra.mxu0 0.0
    %1651 = vmatprep.subr.mxu0 0.0
    %1652 = vmatpush2.msra.mxu0 0.0
    %1653 = vmatprep.subr.mxu0 0.0
    %1654 = vmatpush2.msra.mxu0 0.0
    %1655 = vmatprep.subr.mxu0 0.0
    %1656 = vmatpush2.msra.mxu0 0.0
    %1657 = vmatprep.subr.mxu0 0.0
    %1658 = vmatpush2.msra.mxu0 0.0
    %1659 = vmatprep.subr.mxu0 0.0
    %1660 = vmatpush2.msra.mxu0 0.0
    %1661 = vmatprep.subr.mxu0 0.0
    %1662 = vmatpush2.msra.mxu0 0.0
    %1663 = vmatprep.subr.mxu0 0.0
    %1664 = vmatpush2.msra.mxu0 0.0
    %1665 = vmatprep.subr.mxu0 0.0
    %1666 = vmatpush2.msra.mxu0 0.0
    %1667 = vmatprep.subr.mxu0 0.0
    %1668 = vmatpush2.msra.mxu0 0.0
    %1669 = vmatprep.subr.mxu0 0.0
    %1670 = vmatpush2.msra.mxu0 0.0
    %1671 = vmatprep.subr.mxu0 0.0
    %1672 = vmatpush2.msra.mxu0 0.0
    %1673 = vmatprep.subr.mxu0 0.0
    %1674 = vmatpush2.msra.mxu0 0.0
    %1675 = vmatprep.subr.mxu0 0.0
    %1676 = vmatpush2.msra.mxu0 0.0
    %1677 = vmatprep.subr.mxu0 0.0
    %1678 = vmatpush2.msra.mxu0 0.0
    %1679 = vmatprep.subr.mxu0 0.0
    %1680 = vmatpush2.msra.mxu0 0.0
    %1681 = vmatprep.mubr.f32.mxu0 0.0
    %1682 = vmatmul.mubr.f32.gmra.mxu0 %v1615
    %v1683 = vpop.f32.mrf.mxu0
    %v1684 = vadd.f32 0.0, %v1683
    %v1685 = vpop.f32.mrf.mxu0
    %1686 = vdwg.mxu0
    %s1687 = scalar_lea.vmem [#allocation11], 128
    %v1688 = vld [vmem:[%s1687] sm:$0xf]
    %v1689 = vld [vmem:[%s1687 + $0x4] sm:$0xf]
    %v1690 = vld [vmem:[%s1687 + $0x8] sm:$0xf]
    %v1691 = vld [vmem:[%s1687 + $0xc] sm:$0xf]
    %v1692 = vld [vmem:[%s1687 + $0x10] sm:$0xf]
    %v1693 = vld [vmem:[%s1687 + $0x14] sm:$0xf]
    %v1694 = vld [vmem:[%s1687 + $0x18] sm:$0xf]
    %v1695 = vld [vmem:[%s1687 + $0x1c] sm:$0xf]
    %v1696 = vld [vmem:[%s1687 + $0x20] sm:$0xf]
    %v1697 = vld [vmem:[%s1687 + $0x24] sm:$0xf]
    %v1698 = vld [vmem:[%s1687 + $0x28] sm:$0xf]
    %v1699 = vld [vmem:[%s1687 + $0x2c] sm:$0xf]
    %v1700 = vld [vmem:[%s1687 + $0x30] sm:$0xf]
    %v1701 = vld [vmem:[%s1687 + $0x34] sm:$0xf]
    %v1702 = vld [vmem:[%s1687 + $0x38] sm:$0xf]
    %v1703 = vld [vmem:[%s1687 + $0x3c] sm:$0xf]
    %s1704 = scalar_lea.vmem %s8, 2
    %v1705 = vld [vmem:[%s1704] sm:$0x1]
    %v1707 = vlaneseq
    %v1708 = vshrl.u32 %v1707, 7
    %v1709 = vsub.s32 0, %v1708
    %v1710 = vrot.slane %v1705, %v1709
    %v1728 = vunpack.c.l.b16 %v1688
    %v1729 = vunpack.c.l.b16 %v1689
    %v1730 = vunpack.c.l.b16 %v1690
    %v1731 = vunpack.c.l.b16 %v1691
    %v1732 = vunpack.c.l.b16 %v1692
    %v1733 = vunpack.c.l.b16 %v1693
    %v1734 = vunpack.c.l.b16 %v1694
    %v1735 = vunpack.c.l.b16 %v1695
    %v1736 = vunpack.c.l.b16 %v1696
    %v1737 = vunpack.c.l.b16 %v1697
    %v1738 = vunpack.c.l.b16 %v1698
    %v1739 = vunpack.c.l.b16 %v1699
    %v1740 = vunpack.c.l.b16 %v1700
    %v1741 = vunpack.c.l.b16 %v1701
    %v1742 = vunpack.c.l.b16 %v1702
    %v1743 = vunpack.c.l.b16 %v1703
    %v1744 = vpack.c.b16 %v1729, %v1728
    %v1745 = vpack.c.b16 %v1731, %v1730
    %v1746 = vpack.c.b16 %v1733, %v1732
    %v1747 = vpack.c.b16 %v1735, %v1734
    %v1748 = vpack.c.b16 %v1737, %v1736
    %v1749 = vpack.c.b16 %v1739, %v1738
    %v1750 = vpack.c.b16 %v1741, %v1740
    %v1751 = vpack.c.b16 %v1743, %v1742
    %1760 = vmatprep.subr.bf16.mxu0 0
    %1761 = vmatpush1.bf16.msra.mxu0 %v1751
    %1762 = vmatprep.subr.bf16.mxu0 0
    %1763 = vmatpush1.bf16.msra.mxu0 %v1750
    %1764 = vmatprep.subr.bf16.mxu0 0
    %1765 = vmatpush1.bf16.msra.mxu0 %v1749
    %1766 = vmatprep.subr.bf16.mxu0 0
    %1767 = vmatpush1.bf16.msra.mxu0 %v1748
    %1768 = vmatprep.subr.bf16.mxu0 0
    %1769 = vmatpush1.bf16.msra.mxu0 %v1747
    %1770 = vmatprep.subr.bf16.mxu0 0
    %1771 = vmatpush1.bf16.msra.mxu0 %v1746
    %1772 = vmatprep.subr.bf16.mxu0 0
    %1773 = vmatpush1.bf16.msra.mxu0 %v1745
    %1774 = vmatprep.subr.bf16.mxu0 0
    %1775 = vmatpush1.bf16.msra.mxu0 %v1744
    %1776 = vmatprep.subr.bf16.mxu0 0
    %1777 = vmatpush2.bf16.msra.mxu0 0
    %1778 = vmatprep.subr.bf16.mxu0 0
    %1779 = vmatpush2.bf16.msra.mxu0 0
    %1780 = vmatprep.subr.bf16.mxu0 0
    %1781 = vmatpush2.bf16.msra.mxu0 0
    %1782 = vmatprep.subr.bf16.mxu0 0
    %1783 = vmatpush2.bf16.msra.mxu0 0
    %1784 = vmatprep.subr.bf16.mxu0 0
    %1785 = vmatpush2.bf16.msra.mxu0 0
    %1786 = vmatprep.subr.bf16.mxu0 0
    %1787 = vmatpush2.bf16.msra.mxu0 0
    %1788 = vmatprep.subr.bf16.mxu0 0
    %1789 = vmatpush2.bf16.msra.mxu0 0
    %1790 = vmatprep.subr.bf16.mxu0 0
    %1791 = vmatpush2.bf16.msra.mxu0 0
    %1792 = vmatprep.mubr.bf16.mxu0 0
    %1793 = vmatmul.mubr.bf16.gmra.mxu0 %v391
    %v1794 = vpop.f32.mrf.mxu0
    %v1795 = vadd.f32 %v1710, %v1794
    %v1796 = vpop.f32.mrf.mxu0
    %v1797 = vpop.f32.mrf.mxu0
    %v1798 = vadd.f32 %v1710, %v1797
    %v1799 = vpop.f32.mrf.mxu0
    %1800 = vdwg.mxu0
    %s1801 = scalar_lea.vmem [#allocation13], 128
    %v1802 = vld [vmem:[%s1801] sm:$0xf]
    %v1803 = vld [vmem:[%s1801 + $0x4] sm:$0xf]
    %v1804 = vld [vmem:[%s1801 + $0x8] sm:$0xf]
    %v1805 = vld [vmem:[%s1801 + $0xc] sm:$0xf]
    %v1806 = vld [vmem:[%s1801 + $0x10] sm:$0xf]
    %v1807 = vld [vmem:[%s1801 + $0x14] sm:$0xf]
    %v1808 = vld [vmem:[%s1801 + $0x18] sm:$0xf]
    %v1809 = vld [vmem:[%s1801 + $0x1c] sm:$0xf]
    %v1810 = vld [vmem:[%s1801 + $0x20] sm:$0xf]
    %v1811 = vld [vmem:[%s1801 + $0x24] sm:$0xf]
    %v1812 = vld [vmem:[%s1801 + $0x28] sm:$0xf]
    %v1813 = vld [vmem:[%s1801 + $0x2c] sm:$0xf]
    %v1814 = vld [vmem:[%s1801 + $0x30] sm:$0xf]
    %v1815 = vld [vmem:[%s1801 + $0x34] sm:$0xf]
    %v1816 = vld [vmem:[%s1801 + $0x38] sm:$0xf]
    %v1817 = vld [vmem:[%s1801 + $0x3c] sm:$0xf]
    %s1818 = scalar_lea.vmem %s9, 2
    %v1819 = vld [vmem:[%s1818] sm:$0x1]
    %v1821 = vlaneseq
    %v1822 = vshrl.u32 %v1821, 7
    %v1823 = vsub.s32 0, %v1822
    %v1824 = vrot.slane %v1819, %v1823
    %v1842 = vunpack.c.l.b16 %v1802
    %v1843 = vunpack.c.l.b16 %v1803
    %v1844 = vunpack.c.l.b16 %v1804
    %v1845 = vunpack.c.l.b16 %v1805
    %v1846 = vunpack.c.l.b16 %v1806
    %v1847 = vunpack.c.l.b16 %v1807
    %v1848 = vunpack.c.l.b16 %v1808
    %v1849 = vunpack.c.l.b16 %v1809
    %v1850 = vunpack.c.l.b16 %v1810
    %v1851 = vunpack.c.l.b16 %v1811
    %v1852 = vunpack.c.l.b16 %v1812
    %v1853 = vunpack.c.l.b16 %v1813
    %v1854 = vunpack.c.l.b16 %v1814
    %v1855 = vunpack.c.l.b16 %v1815
    %v1856 = vunpack.c.l.b16 %v1816
    %v1857 = vunpack.c.l.b16 %v1817
    %v1858 = vpack.c.b16 %v1843, %v1842
    %v1859 = vpack.c.b16 %v1845, %v1844
    %v1860 = vpack.c.b16 %v1847, %v1846
    %v1861 = vpack.c.b16 %v1849, %v1848
    %v1862 = vpack.c.b16 %v1851, %v1850
    %v1863 = vpack.c.b16 %v1853, %v1852
    %v1864 = vpack.c.b16 %v1855, %v1854
    %v1865 = vpack.c.b16 %v1857, %v1856
    %1874 = vmatprep.subr.bf16.mxu0 0
    %1875 = vmatpush1.bf16.msra.mxu0 %v1865
    %1876 = vmatprep.subr.bf16.mxu0 0
    %1877 = vmatpush1.bf16.msra.mxu0 %v1864
    %1878 = vmatprep.subr.bf16.mxu0 0
    %1879 = vmatpush1.bf16.msra.mxu0 %v1863
    %1880 = vmatprep.subr.bf16.mxu0 0
    %1881 = vmatpush1.bf16.msra.mxu0 %v1862
    %1882 = vmatprep.subr.bf16.mxu0 0
    %1883 = vmatpush1.bf16.msra.mxu0 %v1861
    %1884 = vmatprep.subr.bf16.mxu0 0
    %1885 = vmatpush1.bf16.msra.mxu0 %v1860
    %1886 = vmatprep.subr.bf16.mxu0 0
    %1887 = vmatpush1.bf16.msra.mxu0 %v1859
    %1888 = vmatprep.subr.bf16.mxu0 0
    %1889 = vmatpush1.bf16.msra.mxu0 %v1858
    %1890 = vmatprep.subr.bf16.mxu0 0
    %1891 = vmatpush2.bf16.msra.mxu0 0
    %1892 = vmatprep.subr.bf16.mxu0 0
    %1893 = vmatpush2.bf16.msra.mxu0 0
    %1894 = vmatprep.subr.bf16.mxu0 0
    %1895 = vmatpush2.bf16.msra.mxu0 0
    %1896 = vmatprep.subr.bf16.mxu0 0
    %1897 = vmatpush2.bf16.msra.mxu0 0
    %1898 = vmatprep.subr.bf16.mxu0 0
    %1899 = vmatpush2.bf16.msra.mxu0 0
    %1900 = vmatprep.subr.bf16.mxu0 0
    %1901 = vmatpush2.bf16.msra.mxu0 0
    %1902 = vmatprep.subr.bf16.mxu0 0
    %1903 = vmatpush2.bf16.msra.mxu0 0
    %1904 = vmatprep.subr.bf16.mxu0 0
    %1905 = vmatpush2.bf16.msra.mxu0 0
    %1906 = vmatprep.mubr.bf16.mxu0 0
    %1907 = vmatmul.mubr.bf16.gmra.mxu0 %v391
    %v1908 = vpop.f32.mrf.mxu0
    %v1909 = vadd.f32 %v1824, %v1908
    %v1910 = vpop.f32.mrf.mxu0
    %v1911 = vpop.f32.mrf.mxu0
    %v1912 = vadd.f32 %v1824, %v1911
    %v1913 = vpop.f32.mrf.mxu0
    %1914 = vdwg.mxu0
    %s1915 = scalar_lea.vmem [#allocation14], 128
    %v1916 = vld [vmem:[%s1915] sm:$0xf]
    %v1917 = vld [vmem:[%s1915 + $0x4] sm:$0xf]
    %v1918 = vld [vmem:[%s1915 + $0x8] sm:$0xf]
    %v1919 = vld [vmem:[%s1915 + $0xc] sm:$0xf]
    %v1920 = vld [vmem:[%s1915 + $0x10] sm:$0xf]
    %v1921 = vld [vmem:[%s1915 + $0x14] sm:$0xf]
    %v1922 = vld [vmem:[%s1915 + $0x18] sm:$0xf]
    %v1923 = vld [vmem:[%s1915 + $0x1c] sm:$0xf]
    %v1924 = vld [vmem:[%s1915 + $0x20] sm:$0xf]
    %v1925 = vld [vmem:[%s1915 + $0x24] sm:$0xf]
    %v1926 = vld [vmem:[%s1915 + $0x28] sm:$0xf]
    %v1927 = vld [vmem:[%s1915 + $0x2c] sm:$0xf]
    %v1928 = vld [vmem:[%s1915 + $0x30] sm:$0xf]
    %v1929 = vld [vmem:[%s1915 + $0x34] sm:$0xf]
    %v1930 = vld [vmem:[%s1915 + $0x38] sm:$0xf]
    %v1931 = vld [vmem:[%s1915 + $0x3c] sm:$0xf]
    %s1932 = scalar_lea.vmem [#allocation16], 2
    %v1933 = vld [vmem:[%s1932] sm:$0x1]
    %v1935 = vlaneseq
    %v1936 = vshrl.u32 %v1935, 7
    %v1937 = vsub.s32 0, %v1936
    %v1938 = vrot.slane %v1933, %v1937
    %v1956 = vunpack.c.l.b16 %v1916
    %v1957 = vunpack.c.l.b16 %v1917
    %v1958 = vunpack.c.l.b16 %v1918
    %v1959 = vunpack.c.l.b16 %v1919
    %v1960 = vunpack.c.l.b16 %v1920
    %v1961 = vunpack.c.l.b16 %v1921
    %v1962 = vunpack.c.l.b16 %v1922
    %v1963 = vunpack.c.l.b16 %v1923
    %v1964 = vunpack.c.l.b16 %v1924
    %v1965 = vunpack.c.l.b16 %v1925
    %v1966 = vunpack.c.l.b16 %v1926
    %v1967 = vunpack.c.l.b16 %v1927
    %v1968 = vunpack.c.l.b16 %v1928
    %v1969 = vunpack.c.l.b16 %v1929
    %v1970 = vunpack.c.l.b16 %v1930
    %v1971 = vunpack.c.l.b16 %v1931
    %v1972 = vpack.c.b16 %v1957, %v1956
    %v1973 = vpack.c.b16 %v1959, %v1958
    %v1974 = vpack.c.b16 %v1961, %v1960
    %v1975 = vpack.c.b16 %v1963, %v1962
    %v1976 = vpack.c.b16 %v1965, %v1964
    %v1977 = vpack.c.b16 %v1967, %v1966
    %v1978 = vpack.c.b16 %v1969, %v1968
    %v1979 = vpack.c.b16 %v1971, %v1970
    %1988 = vmatprep.subr.bf16.mxu0 0
    %1989 = vmatpush1.bf16.msra.mxu0 %v1979
    %1990 = vmatprep.subr.bf16.mxu0 0
    %1991 = vmatpush1.bf16.msra.mxu0 %v1978
    %1992 = vmatprep.subr.bf16.mxu0 0
    %1993 = vmatpush1.bf16.msra.mxu0 %v1977
    %1994 = vmatprep.subr.bf16.mxu0 0
    %1995 = vmatpush1.bf16.msra.mxu0 %v1976
    %1996 = vmatprep.subr.bf16.mxu0 0
    %1997 = vmatpush1.bf16.msra.mxu0 %v1975
    %1998 = vmatprep.subr.bf16.mxu0 0
    %1999 = vmatpush1.bf16.msra.mxu0 %v1974
    %2000 = vmatprep.subr.bf16.mxu0 0
    %2001 = vmatpush1.bf16.msra.mxu0 %v1973
    %2002 = vmatprep.subr.bf16.mxu0 0
    %2003 = vmatpush1.bf16.msra.mxu0 %v1972
    %2004 = vmatprep.subr.bf16.mxu0 0
    %2005 = vmatpush2.bf16.msra.mxu0 0
    %2006 = vmatprep.subr.bf16.mxu0 0
    %2007 = vmatpush2.bf16.msra.mxu0 0
    %2008 = vmatprep.subr.bf16.mxu0 0
    %2009 = vmatpush2.bf16.msra.mxu0 0
    %2010 = vmatprep.subr.bf16.mxu0 0
    %2011 = vmatpush2.bf16.msra.mxu0 0
    %2012 = vmatprep.subr.bf16.mxu0 0
    %2013 = vmatpush2.bf16.msra.mxu0 0
    %2014 = vmatprep.subr.bf16.mxu0 0
    %2015 = vmatpush2.bf16.msra.mxu0 0
    %2016 = vmatprep.subr.bf16.mxu0 0
    %2017 = vmatpush2.bf16.msra.mxu0 0
    %2018 = vmatprep.subr.bf16.mxu0 0
    %2019 = vmatpush2.bf16.msra.mxu0 0
    %2020 = vmatprep.mubr.bf16.mxu0 0
    %2021 = vmatmul.mubr.bf16.gmra.mxu0 %v391
    %v2022 = vpop.f32.mrf.mxu0
    %v2023 = vadd.f32 %v1938, %v2022
    %v2024 = vpop.f32.mrf.mxu0
    %v2025 = vpop.f32.mrf.mxu0
    %v2026 = vadd.f32 %v1938, %v2025
    %v2027 = vpop.f32.mrf.mxu0
    %2028 = vdwg.mxu0
    %2029 = vmatprep.subr.mxu0 0.0
    %2030 = vmatpush1.xpose.msra.mxu0 0.0
    %2031 = vmatprep.subr.mxu0 0.0
    %2032 = vmatpush1.xpose.msra.mxu0 0.0
    %2033 = vmatprep.subr.mxu0 0.0
    %2034 = vmatpush1.xpose.msra.mxu0 0.0
    %2035 = vmatprep.subr.mxu0 0.0
    %2036 = vmatpush1.xpose.msra.mxu0 0.0
    %2037 = vmatprep.subr.mxu0 0.0
    %2038 = vmatpush1.xpose.msra.mxu0 0.0
    %2039 = vmatprep.subr.mxu0 0.0
    %2040 = vmatpush1.xpose.msra.mxu0 0.0
    %2041 = vmatprep.subr.mxu0 0.0
    %2042 = vmatpush1.xpose.msra.mxu0 0.0
    %2043 = vmatprep.subr.mxu0 0.0
    %2044 = vmatpush1.xpose.msra.mxu0 0.0
    %2045 = vmatprep.subr.mxu0 0.0
    %2046 = vmatpush1.xpose.msra.mxu0 0.0
    %2047 = vmatprep.subr.mxu0 0.0
    %2048 = vmatpush1.xpose.msra.mxu0 0.0
    %2049 = vmatprep.subr.mxu0 0.0
    %2050 = vmatpush1.xpose.msra.mxu0 0.0
    %2051 = vmatprep.subr.mxu0 0.0
    %2052 = vmatpush1.xpose.msra.mxu0 0.0
    %2053 = vmatprep.subr.mxu0 0.0
    %2054 = vmatpush1.xpose.msra.mxu0 0.0
    %2055 = vmatprep.subr.mxu0 0.0
    %2056 = vmatpush1.xpose.msra.mxu0 0.0
    %2057 = vmatprep.subr.mxu0 0.0
    %2058 = vmatpush1.xpose.msra.mxu0 0.0
    %2059 = vmatprep.subr.mxu0 0.0
    %2060 = vmatpush1.xpose.msra.mxu0 %v1909
    %2061 = vmatprep.subr.mxu0 0.0
    %2062 = vmatpush2.xpose.msra.mxu0 0.0
    %2063 = vmatprep.subr.mxu0 0.0
    %2064 = vmatpush2.xpose.msra.mxu0 0.0
    %2065 = vmatprep.subr.mxu0 0.0
    %2066 = vmatpush2.xpose.msra.mxu0 0.0
    %2067 = vmatprep.subr.mxu0 0.0
    %2068 = vmatpush2.xpose.msra.mxu0 0.0
    %2069 = vmatprep.subr.mxu0 0.0
    %2070 = vmatpush2.xpose.msra.mxu0 0.0
    %2071 = vmatprep.subr.mxu0 0.0
    %2072 = vmatpush2.xpose.msra.mxu0 0.0
    %2073 = vmatprep.subr.mxu0 0.0
    %2074 = vmatpush2.xpose.msra.mxu0 0.0
    %2075 = vmatprep.subr.mxu0 0.0
    %2076 = vmatpush2.xpose.msra.mxu0 0.0
    %2077 = vmatprep.subr.mxu0 0.0
    %2078 = vmatpush2.xpose.msra.mxu0 0.0
    %2079 = vmatprep.subr.mxu0 0.0
    %2080 = vmatpush2.xpose.msra.mxu0 0.0
    %2081 = vmatprep.subr.mxu0 0.0
    %2082 = vmatpush2.xpose.msra.mxu0 0.0
    %2083 = vmatprep.subr.mxu0 0.0
    %2084 = vmatpush2.xpose.msra.mxu0 0.0
    %2085 = vmatprep.subr.mxu0 0.0
    %2086 = vmatpush2.xpose.msra.mxu0 0.0
    %2087 = vmatprep.subr.mxu0 0.0
    %2088 = vmatpush2.xpose.msra.mxu0 0.0
    %2089 = vmatprep.subr.mxu0 0.0
    %2090 = vmatpush2.xpose.msra.mxu0 0.0
    %2091 = vmatprep.subr.mxu0 0.0
    %2092 = vmatpush2.xpose.msra.mxu0 0.0
    %2093 = vmatprep.mubr.f32.mxu0 0.0
    %2094 = vmatmul.mubr.f32.gmra.mxu0 %v1795
    %v2095 = vpop.f32.mrf.mxu0
    %v2096 = vadd.f32 0.0, %v2095
    %v2097 = vpop.f32.mrf.mxu0
    %2098 = vdwg.mxu0
    %2099 = vmatprep.subr.mxu0 0.0
    %2100 = vmatpush1.xpose.msra.mxu0 0.0
    %2101 = vmatprep.subr.mxu0 0.0
    %2102 = vmatpush1.xpose.msra.mxu0 0.0
    %2103 = vmatprep.subr.mxu0 0.0
    %2104 = vmatpush1.xpose.msra.mxu0 0.0
    %2105 = vmatprep.subr.mxu0 0.0
    %2106 = vmatpush1.xpose.msra.mxu0 0.0
    %2107 = vmatprep.subr.mxu0 0.0
    %2108 = vmatpush1.xpose.msra.mxu0 0.0
    %2109 = vmatprep.subr.mxu0 0.0
    %2110 = vmatpush1.xpose.msra.mxu0 0.0
    %2111 = vmatprep.subr.mxu0 0.0
    %2112 = vmatpush1.xpose.msra.mxu0 0.0
    %2113 = vmatprep.subr.mxu0 0.0
    %2114 = vmatpush1.xpose.msra.mxu0 0.0
    %2115 = vmatprep.subr.mxu0 0.0
    %2116 = vmatpush1.xpose.msra.mxu0 0.0
    %2117 = vmatprep.subr.mxu0 0.0
    %2118 = vmatpush1.xpose.msra.mxu0 0.0
    %2119 = vmatprep.subr.mxu0 0.0
    %2120 = vmatpush1.xpose.msra.mxu0 0.0
    %2121 = vmatprep.subr.mxu0 0.0
    %2122 = vmatpush1.xpose.msra.mxu0 0.0
    %2123 = vmatprep.subr.mxu0 0.0
    %2124 = vmatpush1.xpose.msra.mxu0 0.0
    %2125 = vmatprep.subr.mxu0 0.0
    %2126 = vmatpush1.xpose.msra.mxu0 0.0
    %2127 = vmatprep.subr.mxu0 0.0
    %2128 = vmatpush1.xpose.msra.mxu0 0.0
    %2129 = vmatprep.subr.mxu0 0.0
    %2130 = vmatpush1.xpose.msra.mxu0 %v1912
    %2131 = vmatprep.subr.mxu0 0.0
    %2132 = vmatpush2.xpose.msra.mxu0 0.0
    %2133 = vmatprep.subr.mxu0 0.0
    %2134 = vmatpush2.xpose.msra.mxu0 0.0
    %2135 = vmatprep.subr.mxu0 0.0
    %2136 = vmatpush2.xpose.msra.mxu0 0.0
    %2137 = vmatprep.subr.mxu0 0.0
    %2138 = vmatpush2.xpose.msra.mxu0 0.0
    %2139 = vmatprep.subr.mxu0 0.0
    %2140 = vmatpush2.xpose.msra.mxu0 0.0
    %2141 = vmatprep.subr.mxu0 0.0
    %2142 = vmatpush2.xpose.msra.mxu0 0.0
    %2143 = vmatprep.subr.mxu0 0.0
    %2144 = vmatpush2.xpose.msra.mxu0 0.0
    %2145 = vmatprep.subr.mxu0 0.0
    %2146 = vmatpush2.xpose.msra.mxu0 0.0
    %2147 = vmatprep.subr.mxu0 0.0
    %2148 = vmatpush2.xpose.msra.mxu0 0.0
    %2149 = vmatprep.subr.mxu0 0.0
    %2150 = vmatpush2.xpose.msra.mxu0 0.0
    %2151 = vmatprep.subr.mxu0 0.0
    %2152 = vmatpush2.xpose.msra.mxu0 0.0
    %2153 = vmatprep.subr.mxu0 0.0
    %2154 = vmatpush2.xpose.msra.mxu0 0.0
    %2155 = vmatprep.subr.mxu0 0.0
    %2156 = vmatpush2.xpose.msra.mxu0 0.0
    %2157 = vmatprep.subr.mxu0 0.0
    %2158 = vmatpush2.xpose.msra.mxu0 0.0
    %2159 = vmatprep.subr.mxu0 0.0
    %2160 = vmatpush2.xpose.msra.mxu0 0.0
    %2161 = vmatprep.subr.mxu0 0.0
    %2162 = vmatpush2.xpose.msra.mxu0 0.0
    %2163 = vmatprep.mubr.f32.mxu0 0.0
    %2164 = vmatmul.mubr.f32.gmra.mxu0 %v1798
    %v2165 = vpop.f32.mrf.mxu0
    %v2166 = vadd.f32 0.0, %v2165
    %v2167 = vpop.f32.mrf.mxu0
    %2168 = vdwg.mxu0
    %v2169 = vsel %vm868, %v2096, -inf
    %2170 = vmax.xlane.f32.xlu0 %v2169
    %v2171 = vpop.xlane.xlu0 %2170
    %v2172 = vsel %vm868, %v2166, -inf
    %2173 = vmax.xlane.f32.xlu0 %v2172
    %v2174 = vpop.xlane.xlu0 %2173
    %v2175 = vsub.f32 %v2096, %v2171
    %v2176 = vsub.f32 %v2166, %v2174
    %v2177 = vmul.f32 %v2175, 1.442695
    %v2178 = vpow.pop %v2177
    %v2179 = vmul.f32 %v2176, 1.442695
    %v2180 = vpow.pop %v2179
    %v2181 = vsel %vm868, %v2178, 0.0
    %2182 = vadd.xlane.f32.xlu0 %v2181
    %v2183 = vpop.xlane.xlu0 %2182
    %v2184 = vsel %vm868, %v2180, 0.0
    %2185 = vadd.xlane.f32.xlu0 %v2184
    %v2186 = vpop.xlane.xlu0 %2185
    %v2187 = vrcp.pop %v2183
    %v2188 = vrcp.pop %v2186
    %v2189 = vmul.f32 %v2178, %v2187
    %v2190 = vmul.f32 %v2180, %v2188
    %v2192 = vsel %vm868, %v2189, 0
    %2194 = vmatprep.subr.mxu0 0.0
    %2195 = vmatpush1.msra.mxu0 0.0
    %2196 = vmatprep.subr.mxu0 0.0
    %2197 = vmatpush1.msra.mxu0 0.0
    %2198 = vmatprep.subr.mxu0 0.0
    %2199 = vmatpush1.msra.mxu0 0.0
    %2200 = vmatprep.subr.mxu0 0.0
    %2201 = vmatpush1.msra.mxu0 0.0
    %2202 = vmatprep.subr.mxu0 0.0
    %2203 = vmatpush1.msra.mxu0 0.0
    %2204 = vmatprep.subr.mxu0 0.0
    %2205 = vmatpush1.msra.mxu0 0.0
    %2206 = vmatprep.subr.mxu0 0.0
    %2207 = vmatpush1.msra.mxu0 0.0
    %2208 = vmatprep.subr.mxu0 0.0
    %2209 = vmatpush1.msra.mxu0 0.0
    %2210 = vmatprep.subr.mxu0 0.0
    %2211 = vmatpush1.msra.mxu0 0.0
    %2212 = vmatprep.subr.mxu0 0.0
    %2213 = vmatpush1.msra.mxu0 0.0
    %2214 = vmatprep.subr.mxu0 0.0
    %2215 = vmatpush1.msra.mxu0 0.0
    %2216 = vmatprep.subr.mxu0 0.0
    %2217 = vmatpush1.msra.mxu0 0.0
    %2218 = vmatprep.subr.mxu0 0.0
    %2219 = vmatpush1.msra.mxu0 0.0
    %2220 = vmatprep.subr.mxu0 0.0
    %2221 = vmatpush1.msra.mxu0 0.0
    %2222 = vmatprep.subr.mxu0 0.0
    %2223 = vmatpush1.msra.mxu0 0.0
    %2224 = vmatprep.subr.mxu0 0.0
    %2225 = vmatpush1.msra.mxu0 %v2023
    %2226 = vmatprep.subr.mxu0 0.0
    %2227 = vmatpush2.msra.mxu0 0.0
    %2228 = vmatprep.subr.mxu0 0.0
    %2229 = vmatpush2.msra.mxu0 0.0
    %2230 = vmatprep.subr.mxu0 0.0
    %2231 = vmatpush2.msra.mxu0 0.0
    %2232 = vmatprep.subr.mxu0 0.0
    %2233 = vmatpush2.msra.mxu0 0.0
    %2234 = vmatprep.subr.mxu0 0.0
    %2235 = vmatpush2.msra.mxu0 0.0
    %2236 = vmatprep.subr.mxu0 0.0
    %2237 = vmatpush2.msra.mxu0 0.0
    %2238 = vmatprep.subr.mxu0 0.0
    %2239 = vmatpush2.msra.mxu0 0.0
    %2240 = vmatprep.subr.mxu0 0.0
    %2241 = vmatpush2.msra.mxu0 0.0
    %2242 = vmatprep.subr.mxu0 0.0
    %2243 = vmatpush2.msra.mxu0 0.0
    %2244 = vmatprep.subr.mxu0 0.0
    %2245 = vmatpush2.msra.mxu0 0.0
    %2246 = vmatprep.subr.mxu0 0.0
    %2247 = vmatpush2.msra.mxu0 0.0
    %2248 = vmatprep.subr.mxu0 0.0
    %2249 = vmatpush2.msra.mxu0 0.0
    %2250 = vmatprep.subr.mxu0 0.0
    %2251 = vmatpush2.msra.mxu0 0.0
    %2252 = vmatprep.subr.mxu0 0.0
    %2253 = vmatpush2.msra.mxu0 0.0
    %2254 = vmatprep.subr.mxu0 0.0
    %2255 = vmatpush2.msra.mxu0 0.0
    %2256 = vmatprep.subr.mxu0 0.0
    %2257 = vmatpush2.msra.mxu0 0.0
    %2258 = vmatprep.mubr.f32.mxu0 0.0
    %2259 = vmatmul.mubr.f32.gmra.mxu0 %v2192
    %v2260 = vpop.f32.mrf.mxu0
    %v2261 = vadd.f32 0.0, %v2260
    %v2262 = vpop.f32.mrf.mxu0
    %2263 = vdwg.mxu0
    %v2265 = vsel %vm868, %v2190, 0
    %2267 = vmatprep.subr.mxu0 0.0
    %2268 = vmatpush1.msra.mxu0 0.0
    %2269 = vmatprep.subr.mxu0 0.0
    %2270 = vmatpush1.msra.mxu0 0.0
    %2271 = vmatprep.subr.mxu0 0.0
    %2272 = vmatpush1.msra.mxu0 0.0
    %2273 = vmatprep.subr.mxu0 0.0
    %2274 = vmatpush1.msra.mxu0 0.0
    %2275 = vmatprep.subr.mxu0 0.0
    %2276 = vmatpush1.msra.mxu0 0.0
    %2277 = vmatprep.subr.mxu0 0.0
    %2278 = vmatpush1.msra.mxu0 0.0
    %2279 = vmatprep.subr.mxu0 0.0
    %2280 = vmatpush1.msra.mxu0 0.0
    %2281 = vmatprep.subr.mxu0 0.0
    %2282 = vmatpush1.msra.mxu0 0.0
    %2283 = vmatprep.subr.mxu0 0.0
    %2284 = vmatpush1.msra.mxu0 0.0
    %2285 = vmatprep.subr.mxu0 0.0
    %2286 = vmatpush1.msra.mxu0 0.0
    %2287 = vmatprep.subr.mxu0 0.0
    %2288 = vmatpush1.msra.mxu0 0.0
    %2289 = vmatprep.subr.mxu0 0.0
    %2290 = vmatpush1.msra.mxu0 0.0
    %2291 = vmatprep.subr.mxu0 0.0
    %2292 = vmatpush1.msra.mxu0 0.0
    %2293 = vmatprep.subr.mxu0 0.0
    %2294 = vmatpush1.msra.mxu0 0.0
    %2295 = vmatprep.subr.mxu0 0.0
    %2296 = vmatpush1.msra.mxu0 0.0
    %2297 = vmatprep.subr.mxu0 0.0
    %2298 = vmatpush1.msra.mxu0 %v2026
    %2299 = vmatprep.subr.mxu0 0.0
    %2300 = vmatpush2.msra.mxu0 0.0
    %2301 = vmatprep.subr.mxu0 0.0
    %2302 = vmatpush2.msra.mxu0 0.0
    %2303 = vmatprep.subr.mxu0 0.0
    %2304 = vmatpush2.msra.mxu0 0.0
    %2305 = vmatprep.subr.mxu0 0.0
    %2306 = vmatpush2.msra.mxu0 0.0
    %2307 = vmatprep.subr.mxu0 0.0
    %2308 = vmatpush2.msra.mxu0 0.0
    %2309 = vmatprep.subr.mxu0 0.0
    %2310 = vmatpush2.msra.mxu0 0.0
    %2311 = vmatprep.subr.mxu0 0.0
    %2312 = vmatpush2.msra.mxu0 0.0
    %2313 = vmatprep.subr.mxu0 0.0
    %2314 = vmatpush2.msra.mxu0 0.0
    %2315 = vmatprep.subr.mxu0 0.0
    %2316 = vmatpush2.msra.mxu0 0.0
    %2317 = vmatprep.subr.mxu0 0.0
    %2318 = vmatpush2.msra.mxu0 0.0
    %2319 = vmatprep.subr.mxu0 0.0
    %2320 = vmatpush2.msra.mxu0 0.0
    %2321 = vmatprep.subr.mxu0 0.0
    %2322 = vmatpush2.msra.mxu0 0.0
    %2323 = vmatprep.subr.mxu0 0.0
    %2324 = vmatpush2.msra.mxu0 0.0
    %2325 = vmatprep.subr.mxu0 0.0
    %2326 = vmatpush2.msra.mxu0 0.0
    %2327 = vmatprep.subr.mxu0 0.0
    %2328 = vmatpush2.msra.mxu0 0.0
    %2329 = vmatprep.subr.mxu0 0.0
    %2330 = vmatpush2.msra.mxu0 0.0
    %2331 = vmatprep.mubr.f32.mxu0 0.0
    %2332 = vmatmul.mubr.f32.gmra.mxu0 %v2265
    %v2333 = vpop.f32.mrf.mxu0
    %v2334 = vadd.f32 0.0, %v2333
    %v2335 = vpop.f32.mrf.mxu0
    %2336 = vdwg.mxu0
    %s2337 = scalar_lea.vmem [#allocation11], 192
    %v2338 = vld [vmem:[%s2337] sm:$0xf]
    %v2339 = vld [vmem:[%s2337 + $0x4] sm:$0xf]
    %v2340 = vld [vmem:[%s2337 + $0x8] sm:$0xf]
    %v2341 = vld [vmem:[%s2337 + $0xc] sm:$0xf]
    %v2342 = vld [vmem:[%s2337 + $0x10] sm:$0xf]
    %v2343 = vld [vmem:[%s2337 + $0x14] sm:$0xf]
    %v2344 = vld [vmem:[%s2337 + $0x18] sm:$0xf]
    %v2345 = vld [vmem:[%s2337 + $0x1c] sm:$0xf]
    %v2346 = vld [vmem:[%s2337 + $0x20] sm:$0xf]
    %v2347 = vld [vmem:[%s2337 + $0x24] sm:$0xf]
    %v2348 = vld [vmem:[%s2337 + $0x28] sm:$0xf]
    %v2349 = vld [vmem:[%s2337 + $0x2c] sm:$0xf]
    %v2350 = vld [vmem:[%s2337 + $0x30] sm:$0xf]
    %v2351 = vld [vmem:[%s2337 + $0x34] sm:$0xf]
    %v2352 = vld [vmem:[%s2337 + $0x38] sm:$0xf]
    %v2353 = vld [vmem:[%s2337 + $0x3c] sm:$0xf]
    %s2354 = scalar_lea.vmem %s8, 3
    %v2355 = vld [vmem:[%s2354] sm:$0x1]
    %v2357 = vlaneseq
    %v2358 = vshrl.u32 %v2357, 7
    %v2359 = vsub.s32 0, %v2358
    %v2360 = vrot.slane %v2355, %v2359
    %v2378 = vunpack.c.l.b16 %v2338
    %v2379 = vunpack.c.l.b16 %v2339
    %v2380 = vunpack.c.l.b16 %v2340
    %v2381 = vunpack.c.l.b16 %v2341
    %v2382 = vunpack.c.l.b16 %v2342
    %v2383 = vunpack.c.l.b16 %v2343
    %v2384 = vunpack.c.l.b16 %v2344
    %v2385 = vunpack.c.l.b16 %v2345
    %v2386 = vunpack.c.l.b16 %v2346
    %v2387 = vunpack.c.l.b16 %v2347
    %v2388 = vunpack.c.l.b16 %v2348
    %v2389 = vunpack.c.l.b16 %v2349
    %v2390 = vunpack.c.l.b16 %v2350
    %v2391 = vunpack.c.l.b16 %v2351
    %v2392 = vunpack.c.l.b16 %v2352
    %v2393 = vunpack.c.l.b16 %v2353
    %v2394 = vpack.c.b16 %v2379, %v2378
    %v2395 = vpack.c.b16 %v2381, %v2380
    %v2396 = vpack.c.b16 %v2383, %v2382
    %v2397 = vpack.c.b16 %v2385, %v2384
    %v2398 = vpack.c.b16 %v2387, %v2386
    %v2399 = vpack.c.b16 %v2389, %v2388
    %v2400 = vpack.c.b16 %v2391, %v2390
    %v2401 = vpack.c.b16 %v2393, %v2392
    %2410 = vmatprep.subr.bf16.mxu0 0
    %2411 = vmatpush1.bf16.msra.mxu0 %v2401
    %2412 = vmatprep.subr.bf16.mxu0 0
    %2413 = vmatpush1.bf16.msra.mxu0 %v2400
    %2414 = vmatprep.subr.bf16.mxu0 0
    %2415 = vmatpush1.bf16.msra.mxu0 %v2399
    %2416 = vmatprep.subr.bf16.mxu0 0
    %2417 = vmatpush1.bf16.msra.mxu0 %v2398
    %2418 = vmatprep.subr.bf16.mxu0 0
    %2419 = vmatpush1.bf16.msra.mxu0 %v2397
    %2420 = vmatprep.subr.bf16.mxu0 0
    %2421 = vmatpush1.bf16.msra.mxu0 %v2396
    %2422 = vmatprep.subr.bf16.mxu0 0
    %2423 = vmatpush1.bf16.msra.mxu0 %v2395
    %2424 = vmatprep.subr.bf16.mxu0 0
    %2425 = vmatpush1.bf16.msra.mxu0 %v2394
    %2426 = vmatprep.subr.bf16.mxu0 0
    %2427 = vmatpush2.bf16.msra.mxu0 0
    %2428 = vmatprep.subr.bf16.mxu0 0
    %2429 = vmatpush2.bf16.msra.mxu0 0
    %2430 = vmatprep.subr.bf16.mxu0 0
    %2431 = vmatpush2.bf16.msra.mxu0 0
    %2432 = vmatprep.subr.bf16.mxu0 0
    %2433 = vmatpush2.bf16.msra.mxu0 0
    %2434 = vmatprep.subr.bf16.mxu0 0
    %2435 = vmatpush2.bf16.msra.mxu0 0
    %2436 = vmatprep.subr.bf16.mxu0 0
    %2437 = vmatpush2.bf16.msra.mxu0 0
    %2438 = vmatprep.subr.bf16.mxu0 0
    %2439 = vmatpush2.bf16.msra.mxu0 0
    %2440 = vmatprep.subr.bf16.mxu0 0
    %2441 = vmatpush2.bf16.msra.mxu0 0
    %2442 = vmatprep.mubr.bf16.mxu0 0
    %2443 = vmatmul.mubr.bf16.gmra.mxu0 %v391
    %v2444 = vpop.f32.mrf.mxu0
    %v2445 = vadd.f32 %v2360, %v2444
    %v2446 = vpop.f32.mrf.mxu0
    %v2447 = vpop.f32.mrf.mxu0
    %v2448 = vadd.f32 %v2360, %v2447
    %v2449 = vpop.f32.mrf.mxu0
    %2450 = vdwg.mxu0
    %s2451 = scalar_lea.vmem [#allocation13], 192
    %v2452 = vld [vmem:[%s2451] sm:$0xf]
    %v2453 = vld [vmem:[%s2451 + $0x4] sm:$0xf]
    %v2454 = vld [vmem:[%s2451 + $0x8] sm:$0xf]
    %v2455 = vld [vmem:[%s2451 + $0xc] sm:$0xf]
    %v2456 = vld [vmem:[%s2451 + $0x10] sm:$0xf]
    %v2457 = vld [vmem:[%s2451 + $0x14] sm:$0xf]
    %v2458 = vld [vmem:[%s2451 + $0x18] sm:$0xf]
    %v2459 = vld [vmem:[%s2451 + $0x1c] sm:$0xf]
    %v2460 = vld [vmem:[%s2451 + $0x20] sm:$0xf]
    %v2461 = vld [vmem:[%s2451 + $0x24] sm:$0xf]
    %v2462 = vld [vmem:[%s2451 + $0x28] sm:$0xf]
    %v2463 = vld [vmem:[%s2451 + $0x2c] sm:$0xf]
    %v2464 = vld [vmem:[%s2451 + $0x30] sm:$0xf]
    %v2465 = vld [vmem:[%s2451 + $0x34] sm:$0xf]
    %v2466 = vld [vmem:[%s2451 + $0x38] sm:$0xf]
    %v2467 = vld [vmem:[%s2451 + $0x3c] sm:$0xf]
    %s2468 = scalar_lea.vmem %s9, 3
    %v2469 = vld [vmem:[%s2468] sm:$0x1]
    %v2471 = vlaneseq
    %v2472 = vshrl.u32 %v2471, 7
    %v2473 = vsub.s32 0, %v2472
    %v2474 = vrot.slane %v2469, %v2473
    %v2492 = vunpack.c.l.b16 %v2452
    %v2493 = vunpack.c.l.b16 %v2453
    %v2494 = vunpack.c.l.b16 %v2454
    %v2495 = vunpack.c.l.b16 %v2455
    %v2496 = vunpack.c.l.b16 %v2456
    %v2497 = vunpack.c.l.b16 %v2457
    %v2498 = vunpack.c.l.b16 %v2458
    %v2499 = vunpack.c.l.b16 %v2459
    %v2500 = vunpack.c.l.b16 %v2460
    %v2501 = vunpack.c.l.b16 %v2461
    %v2502 = vunpack.c.l.b16 %v2462
    %v2503 = vunpack.c.l.b16 %v2463
    %v2504 = vunpack.c.l.b16 %v2464
    %v2505 = vunpack.c.l.b16 %v2465
    %v2506 = vunpack.c.l.b16 %v2466
    %v2507 = vunpack.c.l.b16 %v2467
    %v2508 = vpack.c.b16 %v2493, %v2492
    %v2509 = vpack.c.b16 %v2495, %v2494
    %v2510 = vpack.c.b16 %v2497, %v2496
    %v2511 = vpack.c.b16 %v2499, %v2498
    %v2512 = vpack.c.b16 %v2501, %v2500
    %v2513 = vpack.c.b16 %v2503, %v2502
    %v2514 = vpack.c.b16 %v2505, %v2504
    %v2515 = vpack.c.b16 %v2507, %v2506
    %2524 = vmatprep.subr.bf16.mxu0 0
    %2525 = vmatpush1.bf16.msra.mxu0 %v2515
    %2526 = vmatprep.subr.bf16.mxu0 0
    %2527 = vmatpush1.bf16.msra.mxu0 %v2514
    %2528 = vmatprep.subr.bf16.mxu0 0
    %2529 = vmatpush1.bf16.msra.mxu0 %v2513
    %2530 = vmatprep.subr.bf16.mxu0 0
    %2531 = vmatpush1.bf16.msra.mxu0 %v2512
    %2532 = vmatprep.subr.bf16.mxu0 0
    %2533 = vmatpush1.bf16.msra.mxu0 %v2511
    %2534 = vmatprep.subr.bf16.mxu0 0
    %2535 = vmatpush1.bf16.msra.mxu0 %v2510
    %2536 = vmatprep.subr.bf16.mxu0 0
    %2537 = vmatpush1.bf16.msra.mxu0 %v2509
    %2538 = vmatprep.subr.bf16.mxu0 0
    %2539 = vmatpush1.bf16.msra.mxu0 %v2508
    %2540 = vmatprep.subr.bf16.mxu0 0
    %2541 = vmatpush2.bf16.msra.mxu0 0
    %2542 = vmatprep.subr.bf16.mxu0 0
    %2543 = vmatpush2.bf16.msra.mxu0 0
    %2544 = vmatprep.subr.bf16.mxu0 0
    %2545 = vmatpush2.bf16.msra.mxu0 0
    %2546 = vmatprep.subr.bf16.mxu0 0
    %2547 = vmatpush2.bf16.msra.mxu0 0
    %2548 = vmatprep.subr.bf16.mxu0 0
    %2549 = vmatpush2.bf16.msra.mxu0 0
    %2550 = vmatprep.subr.bf16.mxu0 0
    %2551 = vmatpush2.bf16.msra.mxu0 0
    %2552 = vmatprep.subr.bf16.mxu0 0
    %2553 = vmatpush2.bf16.msra.mxu0 0
    %2554 = vmatprep.subr.bf16.mxu0 0
    %2555 = vmatpush2.bf16.msra.mxu0 0
    %2556 = vmatprep.mubr.bf16.mxu0 0
    %2557 = vmatmul.mubr.bf16.gmra.mxu0 %v391
    %v2558 = vpop.f32.mrf.mxu0
    %v2559 = vadd.f32 %v2474, %v2558
    %v2560 = vpop.f32.mrf.mxu0
    %v2561 = vpop.f32.mrf.mxu0
    %v2562 = vadd.f32 %v2474, %v2561
    %v2563 = vpop.f32.mrf.mxu0
    %2564 = vdwg.mxu0
    %s2565 = scalar_lea.vmem [#allocation14], 192
    %v2566 = vld [vmem:[%s2565] sm:$0xf]
    %v2567 = vld [vmem:[%s2565 + $0x4] sm:$0xf]
    %v2568 = vld [vmem:[%s2565 + $0x8] sm:$0xf]
    %v2569 = vld [vmem:[%s2565 + $0xc] sm:$0xf]
    %v2570 = vld [vmem:[%s2565 + $0x10] sm:$0xf]
    %v2571 = vld [vmem:[%s2565 + $0x14] sm:$0xf]
    %v2572 = vld [vmem:[%s2565 + $0x18] sm:$0xf]
    %v2573 = vld [vmem:[%s2565 + $0x1c] sm:$0xf]
    %v2574 = vld [vmem:[%s2565 + $0x20] sm:$0xf]
    %v2575 = vld [vmem:[%s2565 + $0x24] sm:$0xf]
    %v2576 = vld [vmem:[%s2565 + $0x28] sm:$0xf]
    %v2577 = vld [vmem:[%s2565 + $0x2c] sm:$0xf]
    %v2578 = vld [vmem:[%s2565 + $0x30] sm:$0xf]
    %v2579 = vld [vmem:[%s2565 + $0x34] sm:$0xf]
    %v2580 = vld [vmem:[%s2565 + $0x38] sm:$0xf]
    %v2581 = vld [vmem:[%s2565 + $0x3c] sm:$0xf]
    %s2582 = scalar_lea.vmem [#allocation16], 3
    %v2583 = vld [vmem:[%s2582] sm:$0x1]
    %v2585 = vlaneseq
    %v2586 = vshrl.u32 %v2585, 7
    %v2587 = vsub.s32 0, %v2586
    %v2588 = vrot.slane %v2583, %v2587
    %v2606 = vunpack.c.l.b16 %v2566
    %v2607 = vunpack.c.l.b16 %v2567
    %v2608 = vunpack.c.l.b16 %v2568
    %v2609 = vunpack.c.l.b16 %v2569
    %v2610 = vunpack.c.l.b16 %v2570
    %v2611 = vunpack.c.l.b16 %v2571
    %v2612 = vunpack.c.l.b16 %v2572
    %v2613 = vunpack.c.l.b16 %v2573
    %v2614 = vunpack.c.l.b16 %v2574
    %v2615 = vunpack.c.l.b16 %v2575
    %v2616 = vunpack.c.l.b16 %v2576
    %v2617 = vunpack.c.l.b16 %v2577
    %v2618 = vunpack.c.l.b16 %v2578
    %v2619 = vunpack.c.l.b16 %v2579
    %v2620 = vunpack.c.l.b16 %v2580
    %v2621 = vunpack.c.l.b16 %v2581
    %v2622 = vpack.c.b16 %v2607, %v2606
    %v2623 = vpack.c.b16 %v2609, %v2608
    %v2624 = vpack.c.b16 %v2611, %v2610
    %v2625 = vpack.c.b16 %v2613, %v2612
    %v2626 = vpack.c.b16 %v2615, %v2614
    %v2627 = vpack.c.b16 %v2617, %v2616
    %v2628 = vpack.c.b16 %v2619, %v2618
    %v2629 = vpack.c.b16 %v2621, %v2620
    %2638 = vmatprep.subr.bf16.mxu0 0
    %2639 = vmatpush1.bf16.msra.mxu0 %v2629
    %2640 = vmatprep.subr.bf16.mxu0 0
    %2641 = vmatpush1.bf16.msra.mxu0 %v2628
    %2642 = vmatprep.subr.bf16.mxu0 0
    %2643 = vmatpush1.bf16.msra.mxu0 %v2627
    %2644 = vmatprep.subr.bf16.mxu0 0
    %2645 = vmatpush1.bf16.msra.mxu0 %v2626
    %2646 = vmatprep.subr.bf16.mxu0 0
    %2647 = vmatpush1.bf16.msra.mxu0 %v2625
    %2648 = vmatprep.subr.bf16.mxu0 0
    %2649 = vmatpush1.bf16.msra.mxu0 %v2624
    %2650 = vmatprep.subr.bf16.mxu0 0
    %2651 = vmatpush1.bf16.msra.mxu0 %v2623
    %2652 = vmatprep.subr.bf16.mxu0 0
    %2653 = vmatpush1.bf16.msra.mxu0 %v2622
    %2654 = vmatprep.subr.bf16.mxu0 0
    %2655 = vmatpush2.bf16.msra.mxu0 0
    %2656 = vmatprep.subr.bf16.mxu0 0
    %2657 = vmatpush2.bf16.msra.mxu0 0
    %2658 = vmatprep.subr.bf16.mxu0 0
    %2659 = vmatpush2.bf16.msra.mxu0 0
    %2660 = vmatprep.subr.bf16.mxu0 0
    %2661 = vmatpush2.bf16.msra.mxu0 0
    %2662 = vmatprep.subr.bf16.mxu0 0
    %2663 = vmatpush2.bf16.msra.mxu0 0
    %2664 = vmatprep.subr.bf16.mxu0 0
    %2665 = vmatpush2.bf16.msra.mxu0 0
    %2666 = vmatprep.subr.bf16.mxu0 0
    %2667 = vmatpush2.bf16.msra.mxu0 0
    %2668 = vmatprep.subr.bf16.mxu0 0
    %2669 = vmatpush2.bf16.msra.mxu0 0
    %2670 = vmatprep.mubr.bf16.mxu0 0
    %2671 = vmatmul.mubr.bf16.gmra.mxu0 %v391
    %v2672 = vpop.f32.mrf.mxu0
    %v2673 = vadd.f32 %v2588, %v2672
    %v2674 = vpop.f32.mrf.mxu0
    %v2675 = vpop.f32.mrf.mxu0
    %v2676 = vadd.f32 %v2588, %v2675
    %v2677 = vpop.f32.mrf.mxu0
    %2678 = vdwg.mxu0
    %2679 = vmatprep.subr.mxu0 0.0
    %2680 = vmatpush1.xpose.msra.mxu0 0.0
    %2681 = vmatprep.subr.mxu0 0.0
    %2682 = vmatpush1.xpose.msra.mxu0 0.0
    %2683 = vmatprep.subr.mxu0 0.0
    %2684 = vmatpush1.xpose.msra.mxu0 0.0
    %2685 = vmatprep.subr.mxu0 0.0
    %2686 = vmatpush1.xpose.msra.mxu0 0.0
    %2687 = vmatprep.subr.mxu0 0.0
    %2688 = vmatpush1.xpose.msra.mxu0 0.0
    %2689 = vmatprep.subr.mxu0 0.0
    %2690 = vmatpush1.xpose.msra.mxu0 0.0
    %2691 = vmatprep.subr.mxu0 0.0
    %2692 = vmatpush1.xpose.msra.mxu0 0.0
    %2693 = vmatprep.subr.mxu0 0.0
    %2694 = vmatpush1.xpose.msra.mxu0 0.0
    %2695 = vmatprep.subr.mxu0 0.0
    %2696 = vmatpush1.xpose.msra.mxu0 0.0
    %2697 = vmatprep.subr.mxu0 0.0
    %2698 = vmatpush1.xpose.msra.mxu0 0.0
    %2699 = vmatprep.subr.mxu0 0.0
    %2700 = vmatpush1.xpose.msra.mxu0 0.0
    %2701 = vmatprep.subr.mxu0 0.0
    %2702 = vmatpush1.xpose.msra.mxu0 0.0
    %2703 = vmatprep.subr.mxu0 0.0
    %2704 = vmatpush1.xpose.msra.mxu0 0.0
    %2705 = vmatprep.subr.mxu0 0.0
    %2706 = vmatpush1.xpose.msra.mxu0 0.0
    %2707 = vmatprep.subr.mxu0 0.0
    %2708 = vmatpush1.xpose.msra.mxu0 0.0
    %2709 = vmatprep.subr.mxu0 0.0
    %2710 = vmatpush1.xpose.msra.mxu0 %v2559
    %2711 = vmatprep.subr.mxu0 0.0
    %2712 = vmatpush2.xpose.msra.mxu0 0.0
    %2713 = vmatprep.subr.mxu0 0.0
    %2714 = vmatpush2.xpose.msra.mxu0 0.0
    %2715 = vmatprep.subr.mxu0 0.0
    %2716 = vmatpush2.xpose.msra.mxu0 0.0
    %2717 = vmatprep.subr.mxu0 0.0
    %2718 = vmatpush2.xpose.msra.mxu0 0.0
    %2719 = vmatprep.subr.mxu0 0.0
    %2720 = vmatpush2.xpose.msra.mxu0 0.0
    %2721 = vmatprep.subr.mxu0 0.0
    %2722 = vmatpush2.xpose.msra.mxu0 0.0
    %2723 = vmatprep.subr.mxu0 0.0
    %2724 = vmatpush2.xpose.msra.mxu0 0.0
    %2725 = vmatprep.subr.mxu0 0.0
    %2726 = vmatpush2.xpose.msra.mxu0 0.0
    %2727 = vmatprep.subr.mxu0 0.0
    %2728 = vmatpush2.xpose.msra.mxu0 0.0
    %2729 = vmatprep.subr.mxu0 0.0
    %2730 = vmatpush2.xpose.msra.mxu0 0.0
    %2731 = vmatprep.subr.mxu0 0.0
    %2732 = vmatpush2.xpose.msra.mxu0 0.0
    %2733 = vmatprep.subr.mxu0 0.0
    %2734 = vmatpush2.xpose.msra.mxu0 0.0
    %2735 = vmatprep.subr.mxu0 0.0
    %2736 = vmatpush2.xpose.msra.mxu0 0.0
    %2737 = vmatprep.subr.mxu0 0.0
    %2738 = vmatpush2.xpose.msra.mxu0 0.0
    %2739 = vmatprep.subr.mxu0 0.0
    %2740 = vmatpush2.xpose.msra.mxu0 0.0
    %2741 = vmatprep.subr.mxu0 0.0
    %2742 = vmatpush2.xpose.msra.mxu0 0.0
    %2743 = vmatprep.mubr.f32.mxu0 0.0
    %2744 = vmatmul.mubr.f32.gmra.mxu0 %v2445
    %v2745 = vpop.f32.mrf.mxu0
    %v2746 = vadd.f32 0.0, %v2745
    %v2747 = vpop.f32.mrf.mxu0
    %2748 = vdwg.mxu0
    %2749 = vmatprep.subr.mxu0 0.0
    %2750 = vmatpush1.xpose.msra.mxu0 0.0
    %2751 = vmatprep.subr.mxu0 0.0
    %2752 = vmatpush1.xpose.msra.mxu0 0.0
    %2753 = vmatprep.subr.mxu0 0.0
    %2754 = vmatpush1.xpose.msra.mxu0 0.0
    %2755 = vmatprep.subr.mxu0 0.0
    %2756 = vmatpush1.xpose.msra.mxu0 0.0
    %2757 = vmatprep.subr.mxu0 0.0
    %2758 = vmatpush1.xpose.msra.mxu0 0.0
    %2759 = vmatprep.subr.mxu0 0.0
    %2760 = vmatpush1.xpose.msra.mxu0 0.0
    %2761 = vmatprep.subr.mxu0 0.0
    %2762 = vmatpush1.xpose.msra.mxu0 0.0
    %2763 = vmatprep.subr.mxu0 0.0
    %2764 = vmatpush1.xpose.msra.mxu0 0.0
    %2765 = vmatprep.subr.mxu0 0.0
    %2766 = vmatpush1.xpose.msra.mxu0 0.0
    %2767 = vmatprep.subr.mxu0 0.0
    %2768 = vmatpush1.xpose.msra.mxu0 0.0
    %2769 = vmatprep.subr.mxu0 0.0
    %2770 = vmatpush1.xpose.msra.mxu0 0.0
    %2771 = vmatprep.subr.mxu0 0.0
    %2772 = vmatpush1.xpose.msra.mxu0 0.0
    %2773 = vmatprep.subr.mxu0 0.0
    %2774 = vmatpush1.xpose.msra.mxu0 0.0
    %2775 = vmatprep.subr.mxu0 0.0
    %2776 = vmatpush1.xpose.msra.mxu0 0.0
    %2777 = vmatprep.subr.mxu0 0.0
    %2778 = vmatpush1.xpose.msra.mxu0 0.0
    %2779 = vmatprep.subr.mxu0 0.0
    %2780 = vmatpush1.xpose.msra.mxu0 %v2562
    %2781 = vmatprep.subr.mxu0 0.0
    %2782 = vmatpush2.xpose.msra.mxu0 0.0
    %2783 = vmatprep.subr.mxu0 0.0
    %2784 = vmatpush2.xpose.msra.mxu0 0.0
    %2785 = vmatprep.subr.mxu0 0.0
    %2786 = vmatpush2.xpose.msra.mxu0 0.0
    %2787 = vmatprep.subr.mxu0 0.0
    %2788 = vmatpush2.xpose.msra.mxu0 0.0
    %2789 = vmatprep.subr.mxu0 0.0
    %2790 = vmatpush2.xpose.msra.mxu0 0.0
    %2791 = vmatprep.subr.mxu0 0.0
    %2792 = vmatpush2.xpose.msra.mxu0 0.0
    %2793 = vmatprep.subr.mxu0 0.0
    %2794 = vmatpush2.xpose.msra.mxu0 0.0
    %2795 = vmatprep.subr.mxu0 0.0
    %2796 = vmatpush2.xpose.msra.mxu0 0.0
    %2797 = vmatprep.subr.mxu0 0.0
    %2798 = vmatpush2.xpose.msra.mxu0 0.0
    %2799 = vmatprep.subr.mxu0 0.0
    %2800 = vmatpush2.xpose.msra.mxu0 0.0
    %2801 = vmatprep.subr.mxu0 0.0
    %2802 = vmatpush2.xpose.msra.mxu0 0.0
    %2803 = vmatprep.subr.mxu0 0.0
    %2804 = vmatpush2.xpose.msra.mxu0 0.0
    %2805 = vmatprep.subr.mxu0 0.0
    %2806 = vmatpush2.xpose.msra.mxu0 0.0
    %2807 = vmatprep.subr.mxu0 0.0
    %2808 = vmatpush2.xpose.msra.mxu0 0.0
    %2809 = vmatprep.subr.mxu0 0.0
    %2810 = vmatpush2.xpose.msra.mxu0 0.0
    %2811 = vmatprep.subr.mxu0 0.0
    %2812 = vmatpush2.xpose.msra.mxu0 0.0
    %2813 = vmatprep.mubr.f32.mxu0 0.0
    %2814 = vmatmul.mubr.f32.gmra.mxu0 %v2448
    %v2815 = vpop.f32.mrf.mxu0
    %v2816 = vadd.f32 0.0, %v2815
    %v2817 = vpop.f32.mrf.mxu0
    %2818 = vdwg.mxu0
    %v2819 = vsel %vm868, %v2746, -inf
    %2820 = vmax.xlane.f32.xlu0 %v2819
    %v2821 = vpop.xlane.xlu0 %2820
    %v2822 = vsel %vm868, %v2816, -inf
    %2823 = vmax.xlane.f32.xlu0 %v2822
    %v2824 = vpop.xlane.xlu0 %2823
    %v2825 = vsub.f32 %v2746, %v2821
    %v2826 = vsub.f32 %v2816, %v2824
    %v2827 = vmul.f32 %v2825, 1.442695
    %v2828 = vpow.pop %v2827
    %v2829 = vmul.f32 %v2826, 1.442695
    %v2830 = vpow.pop %v2829
    %v2831 = vsel %vm868, %v2828, 0.0
    %2832 = vadd.xlane.f32.xlu0 %v2831
    %v2833 = vpop.xlane.xlu0 %2832
    %v2834 = vsel %vm868, %v2830, 0.0
    %2835 = vadd.xlane.f32.xlu0 %v2834
    %v2836 = vpop.xlane.xlu0 %2835
    %v2837 = vrcp.pop %v2833
    %v2838 = vrcp.pop %v2836
    %v2839 = vmul.f32 %v2828, %v2837
    %v2840 = vmul.f32 %v2830, %v2838
    %v2842 = vsel %vm868, %v2839, 0
    %2844 = vmatprep.subr.mxu0 0.0
    %2845 = vmatpush1.msra.mxu0 0.0
    %2846 = vmatprep.subr.mxu0 0.0
    %2847 = vmatpush1.msra.mxu0 0.0
    %2848 = vmatprep.subr.mxu0 0.0
    %2849 = vmatpush1.msra.mxu0 0.0
    %2850 = vmatprep.subr.mxu0 0.0
    %2851 = vmatpush1.msra.mxu0 0.0
    %2852 = vmatprep.subr.mxu0 0.0
    %2853 = vmatpush1.msra.mxu0 0.0
    %2854 = vmatprep.subr.mxu0 0.0
    %2855 = vmatpush1.msra.mxu0 0.0
    %2856 = vmatprep.subr.mxu0 0.0
    %2857 = vmatpush1.msra.mxu0 0.0
    %2858 = vmatprep.subr.mxu0 0.0
    %2859 = vmatpush1.msra.mxu0 0.0
    %2860 = vmatprep.subr.mxu0 0.0
    %2861 = vmatpush1.msra.mxu0 0.0
    %2862 = vmatprep.subr.mxu0 0.0
    %2863 = vmatpush1.msra.mxu0 0.0
    %2864 = vmatprep.subr.mxu0 0.0
    %2865 = vmatpush1.msra.mxu0 0.0
    %2866 = vmatprep.subr.mxu0 0.0
    %2867 = vmatpush1.msra.mxu0 0.0
    %2868 = vmatprep.subr.mxu0 0.0
    %2869 = vmatpush1.msra.mxu0 0.0
    %2870 = vmatprep.subr.mxu0 0.0
    %2871 = vmatpush1.msra.mxu0 0.0
    %2872 = vmatprep.subr.mxu0 0.0
    %2873 = vmatpush1.msra.mxu0 0.0
    %2874 = vmatprep.subr.mxu0 0.0
    %2875 = vmatpush1.msra.mxu0 %v2673
    %2876 = vmatprep.subr.mxu0 0.0
    %2877 = vmatpush2.msra.mxu0 0.0
    %2878 = vmatprep.subr.mxu0 0.0
    %2879 = vmatpush2.msra.mxu0 0.0
    %2880 = vmatprep.subr.mxu0 0.0
    %2881 = vmatpush2.msra.mxu0 0.0
    %2882 = vmatprep.subr.mxu0 0.0
    %2883 = vmatpush2.msra.mxu0 0.0
    %2884 = vmatprep.subr.mxu0 0.0
    %2885 = vmatpush2.msra.mxu0 0.0
    %2886 = vmatprep.subr.mxu0 0.0
    %2887 = vmatpush2.msra.mxu0 0.0
    %2888 = vmatprep.subr.mxu0 0.0
    %2889 = vmatpush2.msra.mxu0 0.0
    %2890 = vmatprep.subr.mxu0 0.0
    %2891 = vmatpush2.msra.mxu0 0.0
    %2892 = vmatprep.subr.mxu0 0.0
    %2893 = vmatpush2.msra.mxu0 0.0
    %2894 = vmatprep.subr.mxu0 0.0
    %2895 = vmatpush2.msra.mxu0 0.0
    %2896 = vmatprep.subr.mxu0 0.0
    %2897 = vmatpush2.msra.mxu0 0.0
    %2898 = vmatprep.subr.mxu0 0.0
    %2899 = vmatpush2.msra.mxu0 0.0
    %2900 = vmatprep.subr.mxu0 0.0
    %2901 = vmatpush2.msra.mxu0 0.0
    %2902 = vmatprep.subr.mxu0 0.0
    %2903 = vmatpush2.msra.mxu0 0.0
    %2904 = vmatprep.subr.mxu0 0.0
    %2905 = vmatpush2.msra.mxu0 0.0
    %2906 = vmatprep.subr.mxu0 0.0
    %2907 = vmatpush2.msra.mxu0 0.0
    %2908 = vmatprep.mubr.f32.mxu0 0.0
    %2909 = vmatmul.mubr.f32.gmra.mxu0 %v2842
    %v2910 = vpop.f32.mrf.mxu0
    %v2911 = vadd.f32 0.0, %v2910
    %v2912 = vpop.f32.mrf.mxu0
    %2913 = vdwg.mxu0
    %v2915 = vsel %vm868, %v2840, 0
    %2917 = vmatprep.subr.mxu0 0.0
    %2918 = vmatpush1.msra.mxu0 0.0
    %2919 = vmatprep.subr.mxu0 0.0
    %2920 = vmatpush1.msra.mxu0 0.0
    %2921 = vmatprep.subr.mxu0 0.0
    %2922 = vmatpush1.msra.mxu0 0.0
    %2923 = vmatprep.subr.mxu0 0.0
    %2924 = vmatpush1.msra.mxu0 0.0
    %2925 = vmatprep.subr.mxu0 0.0
    %2926 = vmatpush1.msra.mxu0 0.0
    %2927 = vmatprep.subr.mxu0 0.0
    %2928 = vmatpush1.msra.mxu0 0.0
    %2929 = vmatprep.subr.mxu0 0.0
    %2930 = vmatpush1.msra.mxu0 0.0
    %2931 = vmatprep.subr.mxu0 0.0
    %2932 = vmatpush1.msra.mxu0 0.0
    %2933 = vmatprep.subr.mxu0 0.0
    %2934 = vmatpush1.msra.mxu0 0.0
    %2935 = vmatprep.subr.mxu0 0.0
    %2936 = vmatpush1.msra.mxu0 0.0
    %2937 = vmatprep.subr.mxu0 0.0
    %2938 = vmatpush1.msra.mxu0 0.0
    %2939 = vmatprep.subr.mxu0 0.0
    %2940 = vmatpush1.msra.mxu0 0.0
    %2941 = vmatprep.subr.mxu0 0.0
    %2942 = vmatpush1.msra.mxu0 0.0
    %2943 = vmatprep.subr.mxu0 0.0
    %2944 = vmatpush1.msra.mxu0 0.0
    %2945 = vmatprep.subr.mxu0 0.0
    %2946 = vmatpush1.msra.mxu0 0.0
    %2947 = vmatprep.subr.mxu0 0.0
    %2948 = vmatpush1.msra.mxu0 %v2676
    %2949 = vmatprep.subr.mxu0 0.0
    %2950 = vmatpush2.msra.mxu0 0.0
    %2951 = vmatprep.subr.mxu0 0.0
    %2952 = vmatpush2.msra.mxu0 0.0
    %2953 = vmatprep.subr.mxu0 0.0
    %2954 = vmatpush2.msra.mxu0 0.0
    %2955 = vmatprep.subr.mxu0 0.0
    %2956 = vmatpush2.msra.mxu0 0.0
    %2957 = vmatprep.subr.mxu0 0.0
    %2958 = vmatpush2.msra.mxu0 0.0
    %2959 = vmatprep.subr.mxu0 0.0
    %2960 = vmatpush2.msra.mxu0 0.0
    %2961 = vmatprep.subr.mxu0 0.0
    %2962 = vmatpush2.msra.mxu0 0.0
    %2963 = vmatprep.subr.mxu0 0.0
    %2964 = vmatpush2.msra.mxu0 0.0
    %2965 = vmatprep.subr.mxu0 0.0
    %2966 = vmatpush2.msra.mxu0 0.0
    %2967 = vmatprep.subr.mxu0 0.0
    %2968 = vmatpush2.msra.mxu0 0.0
    %2969 = vmatprep.subr.mxu0 0.0
    %2970 = vmatpush2.msra.mxu0 0.0
    %2971 = vmatprep.subr.mxu0 0.0
    %2972 = vmatpush2.msra.mxu0 0.0
    %2973 = vmatprep.subr.mxu0 0.0
    %2974 = vmatpush2.msra.mxu0 0.0
    %2975 = vmatprep.subr.mxu0 0.0
    %2976 = vmatpush2.msra.mxu0 0.0
    %2977 = vmatprep.subr.mxu0 0.0
    %2978 = vmatpush2.msra.mxu0 0.0
    %2979 = vmatprep.subr.mxu0 0.0
    %2980 = vmatpush2.msra.mxu0 0.0
    %2981 = vmatprep.mubr.f32.mxu0 0.0
    %2982 = vmatmul.mubr.f32.gmra.mxu0 %v2915
    %v2983 = vpop.f32.mrf.mxu0
    %v2984 = vadd.f32 0.0, %v2983
    %v2985 = vpop.f32.mrf.mxu0
    %2986 = vdwg.mxu0
    %v2987 = vpack.c.bf16 %v1034, %v961
    %v2988 = vpack.c.bf16 %v1684, %v1611
    %v2989 = vpack.c.bf16 %v2334, %v2261
    %v2990 = vpack.c.bf16 %v2984, %v2911
    %v2991 = vld [vmem:[#allocation17] sm:$0xf]
    %v2992 = vld [vmem:[#allocation17 + $0x4] sm:$0xf]
    %v2993 = vld [vmem:[#allocation17 + $0x8] sm:$0xf]
    %v2994 = vld [vmem:[#allocation17 + $0xc] sm:$0xf]
    %v2995 = vld [vmem:[#allocation17 + $0x10] sm:$0xf]
    %v2996 = vld [vmem:[#allocation17 + $0x14] sm:$0xf]
    %v2997 = vld [vmem:[#allocation17 + $0x18] sm:$0xf]
    %v2998 = vld [vmem:[#allocation17 + $0x1c] sm:$0xf]
    %v2999 = vld [vmem:[#allocation17 + $0x20] sm:$0xf]
    %v3000 = vld [vmem:[#allocation17 + $0x24] sm:$0xf]
    %v3001 = vld [vmem:[#allocation17 + $0x28] sm:$0xf]
    %v3002 = vld [vmem:[#allocation17 + $0x2c] sm:$0xf]
    %v3003 = vld [vmem:[#allocation17 + $0x30] sm:$0xf]
    %v3004 = vld [vmem:[#allocation17 + $0x34] sm:$0xf]
    %v3005 = vld [vmem:[#allocation17 + $0x38] sm:$0xf]
    %v3006 = vld [vmem:[#allocation17 + $0x3c] sm:$0xf]
    %v3007 = vld [vmem:[#allocation17 + $0x40] sm:$0xf]
    %v3008 = vld [vmem:[#allocation17 + $0x44] sm:$0xf]
    %v3009 = vld [vmem:[#allocation17 + $0x48] sm:$0xf]
    %v3010 = vld [vmem:[#allocation17 + $0x4c] sm:$0xf]
    %v3011 = vld [vmem:[#allocation17 + $0x50] sm:$0xf]
    %v3012 = vld [vmem:[#allocation17 + $0x54] sm:$0xf]
    %v3013 = vld [vmem:[#allocation17 + $0x58] sm:$0xf]
    %v3014 = vld [vmem:[#allocation17 + $0x5c] sm:$0xf]
    %v3015 = vld [vmem:[#allocation17 + $0x60] sm:$0xf]
    %v3016 = vld [vmem:[#allocation17 + $0x64] sm:$0xf]
    %v3017 = vld [vmem:[#allocation17 + $0x68] sm:$0xf]
    %v3018 = vld [vmem:[#allocation17 + $0x6c] sm:$0xf]
    %v3019 = vld [vmem:[#allocation17 + $0x70] sm:$0xf]
    %v3020 = vld [vmem:[#allocation17 + $0x74] sm:$0xf]
    %v3021 = vld [vmem:[#allocation17 + $0x78] sm:$0xf]
    %v3022 = vld [vmem:[#allocation17 + $0x7c] sm:$0xf]
    %v3023 = vld [vmem:[#allocation17 + $0x80] sm:$0xf]
    %v3024 = vld [vmem:[#allocation17 + $0x84] sm:$0xf]
    %v3025 = vld [vmem:[#allocation17 + $0x88] sm:$0xf]
    %v3026 = vld [vmem:[#allocation17 + $0x8c] sm:$0xf]
    %v3027 = vld [vmem:[#allocation17 + $0x90] sm:$0xf]
    %v3028 = vld [vmem:[#allocation17 + $0x94] sm:$0xf]
    %v3029 = vld [vmem:[#allocation17 + $0x98] sm:$0xf]
    %v3030 = vld [vmem:[#allocation17 + $0x9c] sm:$0xf]
    %v3031 = vld [vmem:[#allocation17 + $0xa0] sm:$0xf]
    %v3032 = vld [vmem:[#allocation17 + $0xa4] sm:$0xf]
    %v3033 = vld [vmem:[#allocation17 + $0xa8] sm:$0xf]
    %v3034 = vld [vmem:[#allocation17 + $0xac] sm:$0xf]
    %v3035 = vld [vmem:[#allocation17 + $0xb0] sm:$0xf]
    %v3036 = vld [vmem:[#allocation17 + $0xb4] sm:$0xf]
    %v3037 = vld [vmem:[#allocation17 + $0xb8] sm:$0xf]
    %v3038 = vld [vmem:[#allocation17 + $0xbc] sm:$0xf]
    %v3039 = vld [vmem:[#allocation17 + $0xc0] sm:$0xf]
    %v3040 = vld [vmem:[#allocation17 + $0xc4] sm:$0xf]
    %v3041 = vld [vmem:[#allocation17 + $0xc8] sm:$0xf]
    %v3042 = vld [vmem:[#allocation17 + $0xcc] sm:$0xf]
    %v3043 = vld [vmem:[#allocation17 + $0xd0] sm:$0xf]
    %v3044 = vld [vmem:[#allocation17 + $0xd4] sm:$0xf]
    %v3045 = vld [vmem:[#allocation17 + $0xd8] sm:$0xf]
    %v3046 = vld [vmem:[#allocation17 + $0xdc] sm:$0xf]
    %v3047 = vld [vmem:[#allocation17 + $0xe0] sm:$0xf]
    %v3048 = vld [vmem:[#allocation17 + $0xe4] sm:$0xf]
    %v3049 = vld [vmem:[#allocation17 + $0xe8] sm:$0xf]
    %v3050 = vld [vmem:[#allocation17 + $0xec] sm:$0xf]
    %v3051 = vld [vmem:[#allocation17 + $0xf0] sm:$0xf]
    %v3052 = vld [vmem:[#allocation17 + $0xf4] sm:$0xf]
    %v3053 = vld [vmem:[#allocation17 + $0xf8] sm:$0xf]
    %v3054 = vld [vmem:[#allocation17 + $0xfc] sm:$0xf]
    %v3055 = vld [vmem:[%s12] sm:$0x1]
    %v3057 = vlaneseq
    %v3058 = vshrl.u32 %v3057, 7
    %v3059 = vsub.s32 0, %v3058
    %v3060 = vrot.slane %v3055, %v3059
    %v3126 = vunpack.c.l.b16 %v2991
    %v3127 = vunpack.c.l.b16 %v2992
    %v3128 = vunpack.c.l.b16 %v2993
    %v3129 = vunpack.c.l.b16 %v2994
    %v3130 = vunpack.c.l.b16 %v2995
    %v3131 = vunpack.c.l.b16 %v2996
    %v3132 = vunpack.c.l.b16 %v2997
    %v3133 = vunpack.c.l.b16 %v2998
    %v3134 = vunpack.c.l.b16 %v2999
    %v3135 = vunpack.c.l.b16 %v3000
    %v3136 = vunpack.c.l.b16 %v3001
    %v3137 = vunpack.c.l.b16 %v3002
    %v3138 = vunpack.c.l.b16 %v3003
    %v3139 = vunpack.c.l.b16 %v3004
    %v3140 = vunpack.c.l.b16 %v3005
    %v3141 = vunpack.c.l.b16 %v3006
    %v3142 = vunpack.c.l.b16 %v3007
    %v3143 = vunpack.c.l.b16 %v3008
    %v3144 = vunpack.c.l.b16 %v3009
    %v3145 = vunpack.c.l.b16 %v3010
    %v3146 = vunpack.c.l.b16 %v3011
    %v3147 = vunpack.c.l.b16 %v3012
    %v3148 = vunpack.c.l.b16 %v3013
    %v3149 = vunpack.c.l.b16 %v3014
    %v3150 = vunpack.c.l.b16 %v3015
    %v3151 = vunpack.c.l.b16 %v3016
    %v3152 = vunpack.c.l.b16 %v3017
    %v3153 = vunpack.c.l.b16 %v3018
    %v3154 = vunpack.c.l.b16 %v3019
    %v3155 = vunpack.c.l.b16 %v3020
    %v3156 = vunpack.c.l.b16 %v3021
    %v3157 = vunpack.c.l.b16 %v3022
    %v3158 = vunpack.c.l.b16 %v3023
    %v3159 = vunpack.c.l.b16 %v3024
    %v3160 = vunpack.c.l.b16 %v3025
    %v3161 = vunpack.c.l.b16 %v3026
    %v3162 = vunpack.c.l.b16 %v3027
    %v3163 = vunpack.c.l.b16 %v3028
    %v3164 = vunpack.c.l.b16 %v3029
    %v3165 = vunpack.c.l.b16 %v3030
    %v3166 = vunpack.c.l.b16 %v3031
    %v3167 = vunpack.c.l.b16 %v3032
    %v3168 = vunpack.c.l.b16 %v3033
    %v3169 = vunpack.c.l.b16 %v3034
    %v3170 = vunpack.c.l.b16 %v3035
    %v3171 = vunpack.c.l.b16 %v3036
    %v3172 = vunpack.c.l.b16 %v3037
    %v3173 = vunpack.c.l.b16 %v3038
    %v3174 = vunpack.c.l.b16 %v3039
    %v3175 = vunpack.c.l.b16 %v3040
    %v3176 = vunpack.c.l.b16 %v3041
    %v3177 = vunpack.c.l.b16 %v3042
    %v3178 = vunpack.c.l.b16 %v3043
    %v3179 = vunpack.c.l.b16 %v3044
    %v3180 = vunpack.c.l.b16 %v3045
    %v3181 = vunpack.c.l.b16 %v3046
    %v3182 = vunpack.c.l.b16 %v3047
    %v3183 = vunpack.c.l.b16 %v3048
    %v3184 = vunpack.c.l.b16 %v3049
    %v3185 = vunpack.c.l.b16 %v3050
    %v3186 = vunpack.c.l.b16 %v3051
    %v3187 = vunpack.c.l.b16 %v3052
    %v3188 = vunpack.c.l.b16 %v3053
    %v3189 = vunpack.c.l.b16 %v3054
    %v3190 = vpack.c.b16 %v3127, %v3126
    %v3191 = vpack.c.b16 %v3129, %v3128
    %v3192 = vpack.c.b16 %v3131, %v3130
    %v3193 = vpack.c.b16 %v3133, %v3132
    %v3194 = vpack.c.b16 %v3135, %v3134
    %v3195 = vpack.c.b16 %v3137, %v3136
    %v3196 = vpack.c.b16 %v3139, %v3138
    %v3197 = vpack.c.b16 %v3141, %v3140
    %v3198 = vpack.c.b16 %v3143, %v3142
    %v3199 = vpack.c.b16 %v3145, %v3144
    %v3200 = vpack.c.b16 %v3147, %v3146
    %v3201 = vpack.c.b16 %v3149, %v3148
    %v3202 = vpack.c.b16 %v3151, %v3150
    %v3203 = vpack.c.b16 %v3153, %v3152
    %v3204 = vpack.c.b16 %v3155, %v3154
    %v3205 = vpack.c.b16 %v3157, %v3156
    %v3206 = vpack.c.b16 %v3159, %v3158
    %v3207 = vpack.c.b16 %v3161, %v3160
    %v3208 = vpack.c.b16 %v3163, %v3162
    %v3209 = vpack.c.b16 %v3165, %v3164
    %v3210 = vpack.c.b16 %v3167, %v3166
    %v3211 = vpack.c.b16 %v3169, %v3168
    %v3212 = vpack.c.b16 %v3171, %v3170
    %v3213 = vpack.c.b16 %v3173, %v3172
    %v3214 = vpack.c.b16 %v3175, %v3174
    %v3215 = vpack.c.b16 %v3177, %v3176
    %v3216 = vpack.c.b16 %v3179, %v3178
    %v3217 = vpack.c.b16 %v3181, %v3180
    %v3218 = vpack.c.b16 %v3183, %v3182
    %v3219 = vpack.c.b16 %v3185, %v3184
    %v3220 = vpack.c.b16 %v3187, %v3186
    %v3221 = vpack.c.b16 %v3189, %v3188
    %3254 = vmatprep.subr.bf16.mxu0 0
    %3255 = vmatpush1.bf16.msra.mxu0 %v3197
    %3256 = vmatprep.subr.bf16.mxu0 0
    %3257 = vmatpush1.bf16.msra.mxu0 %v3196
    %3258 = vmatprep.subr.bf16.mxu0 0
    %3259 = vmatpush1.bf16.msra.mxu0 %v3195
    %3260 = vmatprep.subr.bf16.mxu0 0
    %3261 = vmatpush1.bf16.msra.mxu0 %v3194
    %3262 = vmatprep.subr.bf16.mxu0 0
    %3263 = vmatpush1.bf16.msra.mxu0 %v3193
    %3264 = vmatprep.subr.bf16.mxu0 0
    %3265 = vmatpush1.bf16.msra.mxu0 %v3192
    %3266 = vmatprep.subr.bf16.mxu0 0
    %3267 = vmatpush1.bf16.msra.mxu0 %v3191
    %3268 = vmatprep.subr.bf16.mxu0 0
    %3269 = vmatpush1.bf16.msra.mxu0 %v3190
    %3270 = vmatprep.subr.bf16.mxu0 0
    %3271 = vmatpush2.bf16.msra.mxu0 %v3205
    %3272 = vmatprep.subr.bf16.mxu0 0
    %3273 = vmatpush2.bf16.msra.mxu0 %v3204
    %3274 = vmatprep.subr.bf16.mxu0 0
    %3275 = vmatpush2.bf16.msra.mxu0 %v3203
    %3276 = vmatprep.subr.bf16.mxu0 0
    %3277 = vmatpush2.bf16.msra.mxu0 %v3202
    %3278 = vmatprep.subr.bf16.mxu0 0
    %3279 = vmatpush2.bf16.msra.mxu0 %v3201
    %3280 = vmatprep.subr.bf16.mxu0 0
    %3281 = vmatpush2.bf16.msra.mxu0 %v3200
    %3282 = vmatprep.subr.bf16.mxu0 0
    %3283 = vmatpush2.bf16.msra.mxu0 %v3199
    %3284 = vmatprep.subr.bf16.mxu0 0
    %3285 = vmatpush2.bf16.msra.mxu0 %v3198
    %3286 = vmatprep.mubr.bf16.mxu0 %v2988
    %3287 = vmatmul.mubr.bf16.gmra.mxu0 %v2987
    %v3288 = vpop.f32.mrf.mxu0
    %v3289 = vadd.f32 %v3060, %v3288
    %v3290 = vpop.f32.mrf.mxu0
    %v3291 = vpop.f32.mrf.mxu0
    %v3292 = vadd.f32 %v3060, %v3291
    %v3293 = vpop.f32.mrf.mxu0
    %3294 = vdwg.mxu0
    %3295 = vmatprep.subr.bf16.mxu0 0
    %3296 = vmatpush1.bf16.msra.mxu0 %v3213
    %3297 = vmatprep.subr.bf16.mxu0 0
    %3298 = vmatpush1.bf16.msra.mxu0 %v3212
    %3299 = vmatprep.subr.bf16.mxu0 0
    %3300 = vmatpush1.bf16.msra.mxu0 %v3211
    %3301 = vmatprep.subr.bf16.mxu0 0
    %3302 = vmatpush1.bf16.msra.mxu0 %v3210
    %3303 = vmatprep.subr.bf16.mxu0 0
    %3304 = vmatpush1.bf16.msra.mxu0 %v3209
    %3305 = vmatprep.subr.bf16.mxu0 0
    %3306 = vmatpush1.bf16.msra.mxu0 %v3208
    %3307 = vmatprep.subr.bf16.mxu0 0
    %3308 = vmatpush1.bf16.msra.mxu0 %v3207
    %3309 = vmatprep.subr.bf16.mxu0 0
    %3310 = vmatpush1.bf16.msra.mxu0 %v3206
    %3311 = vmatprep.subr.bf16.mxu0 0
    %3312 = vmatpush2.bf16.msra.mxu0 %v3221
    %3313 = vmatprep.subr.bf16.mxu0 0
    %3314 = vmatpush2.bf16.msra.mxu0 %v3220
    %3315 = vmatprep.subr.bf16.mxu0 0
    %3316 = vmatpush2.bf16.msra.mxu0 %v3219
    %3317 = vmatprep.subr.bf16.mxu0 0
    %3318 = vmatpush2.bf16.msra.mxu0 %v3218
    %3319 = vmatprep.subr.bf16.mxu0 0
    %3320 = vmatpush2.bf16.msra.mxu0 %v3217
    %3321 = vmatprep.subr.bf16.mxu0 0
    %3322 = vmatpush2.bf16.msra.mxu0 %v3216
    %3323 = vmatprep.subr.bf16.mxu0 0
    %3324 = vmatpush2.bf16.msra.mxu0 %v3215
    %3325 = vmatprep.subr.bf16.mxu0 0
    %3326 = vmatpush2.bf16.msra.mxu0 %v3214
    %3327 = vmatprep.mubr.bf16.mxu0 %v2990
    %3328 = vmatmul.mubr.bf16.gmra.mxu0 %v2989
    %v3329 = vpop.f32.mrf.mxu0
    %v3330 = vadd.f32 %v3289, %v3329
    %v3331 = vpop.f32.mrf.mxu0
    %v3332 = vpop.f32.mrf.mxu0
    %v3333 = vadd.f32 %v3292, %v3332
    %v3334 = vpop.f32.mrf.mxu0
    %3335 = vdwg.mxu0
    %v3336 = vadd.f32 %v389, %v3330
    %v3337 = vadd.f32 %v390, %v3333
    %v3338 = vld [vmem:[%s17] sm:$0x1]
    %v3339 = vld [vmem:[%s18] sm:$0x1]
    %v3340 = vmul.f32 %v3336, %v231
    %v3341 = vmul.f32 %v3337, %v231
    %3342 = vadd.xlane.f32.xlu0 %v3340
    %v3343 = vpop.xlane.xlu0 %3342
    %3344 = vadd.xlane.f32.xlu0 %v3341
    %v3345 = vpop.xlane.xlu0 %3344
    %v3346 = vmul.f32 %v3343, 0.03125
    %v3347 = vmul.f32 %v3345, 0.03125
    %v3348 = vsub.f32 %v3336, %v3346
    %v3349 = vsub.f32 %v3337, %v3347
    %v3350 = vmul.f32 %v3348, %v231
    %v3351 = vmul.f32 %v3349, %v231
    %v3352 = vmul.f32 %v3350, %v3350
    %v3353 = vmul.f32 %v3351, %v3351
    %3354 = vadd.xlane.f32.xlu0 %v3352
    %v3355 = vpop.xlane.xlu0 %3354
    %3356 = vadd.xlane.f32.xlu0 %v3353
    %v3357 = vpop.xlane.xlu0 %3356
    %v3358 = vmul.f32 %v3355, 0.03125
    %v3359 = vmul.f32 %v3357, 0.03125
    %v3360 = vadd.f32 %v3358, 1e-05
    %v3361 = vadd.f32 %v3359, 1e-05
    %v3362 = vrsqrt.pop %v3360
    %v3363 = vrsqrt.pop %v3361
    %v3364 = vmul.f32 %v3350, %v3362
    %v3365 = vmul.f32 %v3351, %v3363
    %v3367 = vlaneseq
    %v3368 = vshrl.u32 %v3367, 7
    %v3369 = vsub.s32 0, %v3368
    %v3370 = vrot.slane %v3338, %v3369
    %v3372 = vmul.f32 %v3364, %v3370
    %v3373 = vmul.f32 %v3365, %v3370
    %v3375 = vlaneseq
    %v3376 = vshrl.u32 %v3375, 7
    %v3377 = vsub.s32 0, %v3376
    %v3378 = vrot.slane %v3339, %v3377
    %v3380 = vadd.f32 %v3372, %v3378
    %v3381 = vadd.f32 %v3373, %v3378
    %v3382 = vpack.c.bf16 %v3381, %v3380
    %v3383 = vld [vmem:[#allocation19] sm:$0xf]
    %v3384 = vld [vmem:[#allocation19 + $0x4] sm:$0xf]
    %v3385 = vld [vmem:[#allocation19 + $0x8] sm:$0xf]
    %v3386 = vld [vmem:[#allocation19 + $0xc] sm:$0xf]
    %v3387 = vld [vmem:[#allocation19 + $0x10] sm:$0xf]
    %v3388 = vld [vmem:[#allocation19 + $0x14] sm:$0xf]
    %v3389 = vld [vmem:[#allocation19 + $0x18] sm:$0xf]
    %v3390 = vld [vmem:[#allocation19 + $0x1c] sm:$0xf]
    %v3391 = vld [vmem:[#allocation19 + $0x20] sm:$0xf]
    %v3392 = vld [vmem:[#allocation19 + $0x24] sm:$0xf]
    %v3393 = vld [vmem:[#allocation19 + $0x28] sm:$0xf]
    %v3394 = vld [vmem:[#allocation19 + $0x2c] sm:$0xf]
    %v3395 = vld [vmem:[#allocation19 + $0x30] sm:$0xf]
    %v3396 = vld [vmem:[#allocation19 + $0x34] sm:$0xf]
    %v3397 = vld [vmem:[#allocation19 + $0x38] sm:$0xf]
    %v3398 = vld [vmem:[#allocation19 + $0x3c] sm:$0xf]
    %v3399 = vld [vmem:[%s14] sm:$0x1]
    %v3401 = vlaneseq
    %v3402 = vshrl.u32 %v3401, 7
    %v3403 = vsub.s32 0, %v3402
    %v3404 = vrot.slane %v3399, %v3403
    %v3422 = vunpack.c.l.b16 %v3383
    %v3423 = vunpack.c.l.b16 %v3384
    %v3424 = vunpack.c.l.b16 %v3385
    %v3425 = vunpack.c.l.b16 %v3386
    %v3426 = vunpack.c.l.b16 %v3387
    %v3427 = vunpack.c.l.b16 %v3388
    %v3428 = vunpack.c.l.b16 %v3389
    %v3429 = vunpack.c.l.b16 %v3390
    %v3430 = vunpack.c.l.b16 %v3391
    %v3431 = vunpack.c.l.b16 %v3392
    %v3432 = vunpack.c.l.b16 %v3393
    %v3433 = vunpack.c.l.b16 %v3394
    %v3434 = vunpack.c.l.b16 %v3395
    %v3435 = vunpack.c.l.b16 %v3396
    %v3436 = vunpack.c.l.b16 %v3397
    %v3437 = vunpack.c.l.b16 %v3398
    %v3438 = vpack.c.b16 %v3423, %v3422
    %v3439 = vpack.c.b16 %v3425, %v3424
    %v3440 = vpack.c.b16 %v3427, %v3426
    %v3441 = vpack.c.b16 %v3429, %v3428
    %v3442 = vpack.c.b16 %v3431, %v3430
    %v3443 = vpack.c.b16 %v3433, %v3432
    %v3444 = vpack.c.b16 %v3435, %v3434
    %v3445 = vpack.c.b16 %v3437, %v3436
    %3454 = vmatprep.subr.bf16.mxu0 0
    %3455 = vmatpush1.bf16.msra.mxu0 %v3445
    %3456 = vmatprep.subr.bf16.mxu0 0
    %3457 = vmatpush1.bf16.msra.mxu0 %v3444
    %3458 = vmatprep.subr.bf16.mxu0 0
    %3459 = vmatpush1.bf16.msra.mxu0 %v3443
    %3460 = vmatprep.subr.bf16.mxu0 0
    %3461 = vmatpush1.bf16.msra.mxu0 %v3442
    %3462 = vmatprep.subr.bf16.mxu0 0
    %3463 = vmatpush1.bf16.msra.mxu0 %v3441
    %3464 = vmatprep.subr.bf16.mxu0 0
    %3465 = vmatpush1.bf16.msra.mxu0 %v3440
    %3466 = vmatprep.subr.bf16.mxu0 0
    %3467 = vmatpush1.bf16.msra.mxu0 %v3439
    %3468 = vmatprep.subr.bf16.mxu0 0
    %3469 = vmatpush1.bf16.msra.mxu0 %v3438
    %3470 = vmatprep.subr.bf16.mxu0 0
    %3471 = vmatpush2.bf16.msra.mxu0 0
    %3472 = vmatprep.subr.bf16.mxu0 0
    %3473 = vmatpush2.bf16.msra.mxu0 0
    %3474 = vmatprep.subr.bf16.mxu0 0
    %3475 = vmatpush2.bf16.msra.mxu0 0
    %3476 = vmatprep.subr.bf16.mxu0 0
    %3477 = vmatpush2.bf16.msra.mxu0 0
    %3478 = vmatprep.subr.bf16.mxu0 0
    %3479 = vmatpush2.bf16.msra.mxu0 0
    %3480 = vmatprep.subr.bf16.mxu0 0
    %3481 = vmatpush2.bf16.msra.mxu0 0
    %3482 = vmatprep.subr.bf16.mxu0 0
    %3483 = vmatpush2.bf16.msra.mxu0 0
    %3484 = vmatprep.subr.bf16.mxu0 0
    %3485 = vmatpush2.bf16.msra.mxu0 0
    %3486 = vmatprep.mubr.bf16.mxu0 0
    %3487 = vmatmul.mubr.bf16.gmra.mxu0 %v3382
    %v3488 = vpop.f32.mrf.mxu0
    %v3489 = vadd.f32 %v3404, %v3488
    %v3490 = vpop.f32.mrf.mxu0
    %v3491 = vpop.f32.mrf.mxu0
    %v3492 = vadd.f32 %v3404, %v3491
    %v3493 = vpop.f32.mrf.mxu0
    %3494 = vdwg.mxu0
    %v3495 = vmax.f32 %v3489, 0.0
    %v3496 = vmax.f32 %v3492, 0.0
    %v3497 = vpack.c.bf16 %v3496, %v3495
    %v3498 = vld [vmem:[#allocation20] sm:$0xf]
    %v3499 = vld [vmem:[#allocation20 + $0x4] sm:$0xf]
    %v3500 = vld [vmem:[#allocation20 + $0x8] sm:$0xf]
    %v3501 = vld [vmem:[#allocation20 + $0xc] sm:$0xf]
    %v3502 = vld [vmem:[#allocation20 + $0x10] sm:$0xf]
    %v3503 = vld [vmem:[#allocation20 + $0x14] sm:$0xf]
    %v3504 = vld [vmem:[#allocation20 + $0x18] sm:$0xf]
    %v3505 = vld [vmem:[#allocation20 + $0x1c] sm:$0xf]
    %v3506 = vld [vmem:[#allocation20 + $0x20] sm:$0xf]
    %v3507 = vld [vmem:[#allocation20 + $0x24] sm:$0xf]
    %v3508 = vld [vmem:[#allocation20 + $0x28] sm:$0xf]
    %v3509 = vld [vmem:[#allocation20 + $0x2c] sm:$0xf]
    %v3510 = vld [vmem:[#allocation20 + $0x30] sm:$0xf]
    %v3511 = vld [vmem:[#allocation20 + $0x34] sm:$0xf]
    %v3512 = vld [vmem:[#allocation20 + $0x38] sm:$0xf]
    %v3513 = vld [vmem:[#allocation20 + $0x3c] sm:$0xf]
    %v3514 = vld [vmem:[%s16] sm:$0x1]
    %v3516 = vlaneseq
    %v3517 = vshrl.u32 %v3516, 7
    %v3518 = vsub.s32 0, %v3517
    %v3519 = vrot.slane %v3514, %v3518
    %v3537 = vunpack.c.l.b16 %v3498
    %v3538 = vunpack.c.l.b16 %v3499
    %v3539 = vunpack.c.l.b16 %v3500
    %v3540 = vunpack.c.l.b16 %v3501
    %v3541 = vunpack.c.l.b16 %v3502
    %v3542 = vunpack.c.l.b16 %v3503
    %v3543 = vunpack.c.l.b16 %v3504
    %v3544 = vunpack.c.l.b16 %v3505
    %v3545 = vunpack.c.l.b16 %v3506
    %v3546 = vunpack.c.l.b16 %v3507
    %v3547 = vunpack.c.l.b16 %v3508
    %v3548 = vunpack.c.l.b16 %v3509
    %v3549 = vunpack.c.l.b16 %v3510
    %v3550 = vunpack.c.l.b16 %v3511
    %v3551 = vunpack.c.l.b16 %v3512
    %v3552 = vunpack.c.l.b16 %v3513
    %v3553 = vpack.c.b16 %v3538, %v3537
    %v3554 = vpack.c.b16 %v3540, %v3539
    %v3555 = vpack.c.b16 %v3542, %v3541
    %v3556 = vpack.c.b16 %v3544, %v3543
    %v3557 = vpack.c.b16 %v3546, %v3545
    %v3558 = vpack.c.b16 %v3548, %v3547
    %v3559 = vpack.c.b16 %v3550, %v3549
    %v3560 = vpack.c.b16 %v3552, %v3551
    %3569 = vmatprep.subr.bf16.mxu0 0
    %3570 = vmatpush1.bf16.msra.mxu0 %v3560
    %3571 = vmatprep.subr.bf16.mxu0 0
    %3572 = vmatpush1.bf16.msra.mxu0 %v3559
    %3573 = vmatprep.subr.bf16.mxu0 0
    %3574 = vmatpush1.bf16.msra.mxu0 %v3558
    %3575 = vmatprep.subr.bf16.mxu0 0
    %3576 = vmatpush1.bf16.msra.mxu0 %v3557
    %3577 = vmatprep.subr.bf16.mxu0 0
    %3578 = vmatpush1.bf16.msra.mxu0 %v3556
    %3579 = vmatprep.subr.bf16.mxu0 0
    %3580 = vmatpush1.bf16.msra.mxu0 %v3555
    %3581 = vmatprep.subr.bf16.mxu0 0
    %3582 = vmatpush1.bf16.msra.mxu0 %v3554
    %3583 = vmatprep.subr.bf16.mxu0 0
    %3584 = vmatpush1.bf16.msra.mxu0 %v3553
    %3585 = vmatprep.subr.bf16.mxu0 0
    %3586 = vmatpush2.bf16.msra.mxu0 0
    %3587 = vmatprep.subr.bf16.mxu0 0
    %3588 = vmatpush2.bf16.msra.mxu0 0
    %3589 = vmatprep.subr.bf16.mxu0 0
    %3590 = vmatpush2.bf16.msra.mxu0 0
    %3591 = vmatprep.subr.bf16.mxu0 0
    %3592 = vmatpush2.bf16.msra.mxu0 0
    %3593 = vmatprep.subr.bf16.mxu0 0
    %3594 = vmatpush2.bf16.msra.mxu0 0
    %3595 = vmatprep.subr.bf16.mxu0 0
    %3596 = vmatpush2.bf16.msra.mxu0 0
    %3597 = vmatprep.subr.bf16.mxu0 0
    %3598 = vmatpush2.bf16.msra.mxu0 0
    %3599 = vmatprep.subr.bf16.mxu0 0
    %3600 = vmatpush2.bf16.msra.mxu0 0
    %3601 = vmatprep.mubr.bf16.mxu0 0
    %3602 = vmatmul.mubr.bf16.gmra.mxu0 %v3497
    %v3603 = vpop.f32.mrf.mxu0
    %v3604 = vadd.f32 %v3519, %v3603
    %v3605 = vpop.f32.mrf.mxu0
    %v3606 = vpop.f32.mrf.mxu0
    %v3607 = vadd.f32 %v3519, %v3606
    %v3608 = vpop.f32.mrf.mxu0
    %3609 = vdwg.mxu0
    %v3610 = vadd.f32 %v3380, %v3604
    %v3611 = vadd.f32 %v3381, %v3607
    %v3612 = vld [vmem:[%s19] sm:$0x1]
    %v3613 = vld [vmem:[%s20] sm:$0x1]
    %v3614 = vmul.f32 %v3610, %v231
    %v3615 = vmul.f32 %v3611, %v231
    %3616 = vadd.xlane.f32.xlu0 %v3614
    %v3617 = vpop.xlane.xlu0 %3616
    %3618 = vadd.xlane.f32.xlu0 %v3615
    %v3619 = vpop.xlane.xlu0 %3618
    %v3620 = vmul.f32 %v3617, 0.03125
    %v3621 = vmul.f32 %v3619, 0.03125
    %v3622 = vsub.f32 %v3610, %v3620
    %v3623 = vsub.f32 %v3611, %v3621
    %v3624 = vmul.f32 %v3622, %v231
    %v3625 = vmul.f32 %v3623, %v231
    %v3626 = vmul.f32 %v3624, %v3624
    %v3627 = vmul.f32 %v3625, %v3625
    %3628 = vadd.xlane.f32.xlu0 %v3626
    %v3629 = vpop.xlane.xlu0 %3628
    %3630 = vadd.xlane.f32.xlu0 %v3627
    %v3631 = vpop.xlane.xlu0 %3630
    %v3632 = vmul.f32 %v3629, 0.03125
    %v3633 = vmul.f32 %v3631, 0.03125
    %v3634 = vadd.f32 %v3632, 1e-05
    %v3635 = vadd.f32 %v3633, 1e-05
    %v3636 = vrsqrt.pop %v3634
    %v3637 = vrsqrt.pop %v3635
    %v3638 = vmul.f32 %v3624, %v3636
    %v3639 = vmul.f32 %v3625, %v3637
    %v3641 = vlaneseq
    %v3642 = vshrl.u32 %v3641, 7
    %v3643 = vsub.s32 0, %v3642
    %v3644 = vrot.slane %v3612, %v3643
    %v3646 = vmul.f32 %v3638, %v3644
    %v3647 = vmul.f32 %v3639, %v3644
    %v3649 = vlaneseq
    %v3650 = vshrl.u32 %v3649, 7
    %v3651 = vsub.s32 0, %v3650
    %v3652 = vrot.slane %v3613, %v3651
    %v3654 = vadd.f32 %v3646, %v3652
    %v3655 = vadd.f32 %v3647, %v3652
    %v3656 = vpack.c.bf16 %v3655, %v3654
    %s3657 = scalar_lea.vmem [#allocation11], 256
    %v3658 = vld [vmem:[%s3657] sm:$0xf]
    %v3659 = vld [vmem:[%s3657 + $0x4] sm:$0xf]
    %v3660 = vld [vmem:[%s3657 + $0x8] sm:$0xf]
    %v3661 = vld [vmem:[%s3657 + $0xc] sm:$0xf]
    %v3662 = vld [vmem:[%s3657 + $0x10] sm:$0xf]
    %v3663 = vld [vmem:[%s3657 + $0x14] sm:$0xf]
    %v3664 = vld [vmem:[%s3657 + $0x18] sm:$0xf]
    %v3665 = vld [vmem:[%s3657 + $0x1c] sm:$0xf]
    %v3666 = vld [vmem:[%s3657 + $0x20] sm:$0xf]
    %v3667 = vld [vmem:[%s3657 + $0x24] sm:$0xf]
    %v3668 = vld [vmem:[%s3657 + $0x28] sm:$0xf]
    %v3669 = vld [vmem:[%s3657 + $0x2c] sm:$0xf]
    %v3670 = vld [vmem:[%s3657 + $0x30] sm:$0xf]
    %v3671 = vld [vmem:[%s3657 + $0x34] sm:$0xf]
    %v3672 = vld [vmem:[%s3657 + $0x38] sm:$0xf]
    %v3673 = vld [vmem:[%s3657 + $0x3c] sm:$0xf]
    %s3674 = scalar_lea.vmem %s8, 4
    %v3675 = vld [vmem:[%s3674] sm:$0x1]
    %v3677 = vlaneseq
    %v3678 = vshrl.u32 %v3677, 7
    %v3679 = vsub.s32 0, %v3678
    %v3680 = vrot.slane %v3675, %v3679
    %v3698 = vunpack.c.l.b16 %v3658
    %v3699 = vunpack.c.l.b16 %v3659
    %v3700 = vunpack.c.l.b16 %v3660
    %v3701 = vunpack.c.l.b16 %v3661
    %v3702 = vunpack.c.l.b16 %v3662
    %v3703 = vunpack.c.l.b16 %v3663
    %v3704 = vunpack.c.l.b16 %v3664
    %v3705 = vunpack.c.l.b16 %v3665
    %v3706 = vunpack.c.l.b16 %v3666
    %v3707 = vunpack.c.l.b16 %v3667
    %v3708 = vunpack.c.l.b16 %v3668
    %v3709 = vunpack.c.l.b16 %v3669
    %v3710 = vunpack.c.l.b16 %v3670
    %v3711 = vunpack.c.l.b16 %v3671
    %v3712 = vunpack.c.l.b16 %v3672
    %v3713 = vunpack.c.l.b16 %v3673
    %v3714 = vpack.c.b16 %v3699, %v3698
    %v3715 = vpack.c.b16 %v3701, %v3700
    %v3716 = vpack.c.b16 %v3703, %v3702
    %v3717 = vpack.c.b16 %v3705, %v3704
    %v3718 = vpack.c.b16 %v3707, %v3706
    %v3719 = vpack.c.b16 %v3709, %v3708
    %v3720 = vpack.c.b16 %v3711, %v3710
    %v3721 = vpack.c.b16 %v3713, %v3712
    %3730 = vmatprep.subr.bf16.mxu0 0
    %3731 = vmatpush1.bf16.msra.mxu0 %v3721
    %3732 = vmatprep.subr.bf16.mxu0 0
    %3733 = vmatpush1.bf16.msra.mxu0 %v3720
    %3734 = vmatprep.subr.bf16.mxu0 0
    %3735 = vmatpush1.bf16.msra.mxu0 %v3719
    %3736 = vmatprep.subr.bf16.mxu0 0
    %3737 = vmatpush1.bf16.msra.mxu0 %v3718
    %3738 = vmatprep.subr.bf16.mxu0 0
    %3739 = vmatpush1.bf16.msra.mxu0 %v3717
    %3740 = vmatprep.subr.bf16.mxu0 0
    %3741 = vmatpush1.bf16.msra.mxu0 %v3716
    %3742 = vmatprep.subr.bf16.mxu0 0
    %3743 = vmatpush1.bf16.msra.mxu0 %v3715
    %3744 = vmatprep.subr.bf16.mxu0 0
    %3745 = vmatpush1.bf16.msra.mxu0 %v3714
    %3746 = vmatprep.subr.bf16.mxu0 0
    %3747 = vmatpush2.bf16.msra.mxu0 0
    %3748 = vmatprep.subr.bf16.mxu0 0
    %3749 = vmatpush2.bf16.msra.mxu0 0
    %3750 = vmatprep.subr.bf16.mxu0 0
    %3751 = vmatpush2.bf16.msra.mxu0 0
    %3752 = vmatprep.subr.bf16.mxu0 0
    %3753 = vmatpush2.bf16.msra.mxu0 0
    %3754 = vmatprep.subr.bf16.mxu0 0
    %3755 = vmatpush2.bf16.msra.mxu0 0
    %3756 = vmatprep.subr.bf16.mxu0 0
    %3757 = vmatpush2.bf16.msra.mxu0 0
    %3758 = vmatprep.subr.bf16.mxu0 0
    %3759 = vmatpush2.bf16.msra.mxu0 0
    %3760 = vmatprep.subr.bf16.mxu0 0
    %3761 = vmatpush2.bf16.msra.mxu0 0
    %3762 = vmatprep.mubr.bf16.mxu0 0
    %3763 = vmatmul.mubr.bf16.gmra.mxu0 %v3656
    %v3764 = vpop.f32.mrf.mxu0
    %v3765 = vadd.f32 %v3680, %v3764
    %v3766 = vpop.f32.mrf.mxu0
    %v3767 = vpop.f32.mrf.mxu0
    %v3768 = vadd.f32 %v3680, %v3767
    %v3769 = vpop.f32.mrf.mxu0
    %3770 = vdwg.mxu0
    %s3771 = scalar_lea.vmem [#allocation13], 256
    %v3772 = vld [vmem:[%s3771] sm:$0xf]
    %v3773 = vld [vmem:[%s3771 + $0x4] sm:$0xf]
    %v3774 = vld [vmem:[%s3771 + $0x8] sm:$0xf]
    %v3775 = vld [vmem:[%s3771 + $0xc] sm:$0xf]
    %v3776 = vld [vmem:[%s3771 + $0x10] sm:$0xf]
    %v3777 = vld [vmem:[%s3771 + $0x14] sm:$0xf]
    %v3778 = vld [vmem:[%s3771 + $0x18] sm:$0xf]
    %v3779 = vld [vmem:[%s3771 + $0x1c] sm:$0xf]
    %v3780 = vld [vmem:[%s3771 + $0x20] sm:$0xf]
    %v3781 = vld [vmem:[%s3771 + $0x24] sm:$0xf]
    %v3782 = vld [vmem:[%s3771 + $0x28] sm:$0xf]
    %v3783 = vld [vmem:[%s3771 + $0x2c] sm:$0xf]
    %v3784 = vld [vmem:[%s3771 + $0x30] sm:$0xf]
    %v3785 = vld [vmem:[%s3771 + $0x34] sm:$0xf]
    %v3786 = vld [vmem:[%s3771 + $0x38] sm:$0xf]
    %v3787 = vld [vmem:[%s3771 + $0x3c] sm:$0xf]
    %s3788 = scalar_lea.vmem %s9, 4
    %v3789 = vld [vmem:[%s3788] sm:$0x1]
    %v3791 = vlaneseq
    %v3792 = vshrl.u32 %v3791, 7
    %v3793 = vsub.s32 0, %v3792
    %v3794 = vrot.slane %v3789, %v3793
    %v3812 = vunpack.c.l.b16 %v3772
    %v3813 = vunpack.c.l.b16 %v3773
    %v3814 = vunpack.c.l.b16 %v3774
    %v3815 = vunpack.c.l.b16 %v3775
    %v3816 = vunpack.c.l.b16 %v3776
    %v3817 = vunpack.c.l.b16 %v3777
    %v3818 = vunpack.c.l.b16 %v3778
    %v3819 = vunpack.c.l.b16 %v3779
    %v3820 = vunpack.c.l.b16 %v3780
    %v3821 = vunpack.c.l.b16 %v3781
    %v3822 = vunpack.c.l.b16 %v3782
    %v3823 = vunpack.c.l.b16 %v3783
    %v3824 = vunpack.c.l.b16 %v3784
    %v3825 = vunpack.c.l.b16 %v3785
    %v3826 = vunpack.c.l.b16 %v3786
    %v3827 = vunpack.c.l.b16 %v3787
    %v3828 = vpack.c.b16 %v3813, %v3812
    %v3829 = vpack.c.b16 %v3815, %v3814
    %v3830 = vpack.c.b16 %v3817, %v3816
    %v3831 = vpack.c.b16 %v3819, %v3818
    %v3832 = vpack.c.b16 %v3821, %v3820
    %v3833 = vpack.c.b16 %v3823, %v3822
    %v3834 = vpack.c.b16 %v3825, %v3824
    %v3835 = vpack.c.b16 %v3827, %v3826
    %3844 = vmatprep.subr.bf16.mxu0 0
    %3845 = vmatpush1.bf16.msra.mxu0 %v3835
    %3846 = vmatprep.subr.bf16.mxu0 0
    %3847 = vmatpush1.bf16.msra.mxu0 %v3834
    %3848 = vmatprep.subr.bf16.mxu0 0
    %3849 = vmatpush1.bf16.msra.mxu0 %v3833
    %3850 = vmatprep.subr.bf16.mxu0 0
    %3851 = vmatpush1.bf16.msra.mxu0 %v3832
    %3852 = vmatprep.subr.bf16.mxu0 0
    %3853 = vmatpush1.bf16.msra.mxu0 %v3831
    %3854 = vmatprep.subr.bf16.mxu0 0
    %3855 = vmatpush1.bf16.msra.mxu0 %v3830
    %3856 = vmatprep.subr.bf16.mxu0 0
    %3857 = vmatpush1.bf16.msra.mxu0 %v3829
    %3858 = vmatprep.subr.bf16.mxu0 0
    %3859 = vmatpush1.bf16.msra.mxu0 %v3828
    %3860 = vmatprep.subr.bf16.mxu0 0
    %3861 = vmatpush2.bf16.msra.mxu0 0
    %3862 = vmatprep.subr.bf16.mxu0 0
    %3863 = vmatpush2.bf16.msra.mxu0 0
    %3864 = vmatprep.subr.bf16.mxu0 0
    %3865 = vmatpush2.bf16.msra.mxu0 0
    %3866 = vmatprep.subr.bf16.mxu0 0
    %3867 = vmatpush2.bf16.msra.mxu0 0
    %3868 = vmatprep.subr.bf16.mxu0 0
    %3869 = vmatpush2.bf16.msra.mxu0 0
    %3870 = vmatprep.subr.bf16.mxu0 0
    %3871 = vmatpush2.bf16.msra.mxu0 0
    %3872 = vmatprep.subr.bf16.mxu0 0
    %3873 = vmatpush2.bf16.msra.mxu0 0
    %3874 = vmatprep.subr.bf16.mxu0 0
    %3875 = vmatpush2.bf16.msra.mxu0 0
    %3876 = vmatprep.mubr.bf16.mxu0 0
    %3877 = vmatmul.mubr.bf16.gmra.mxu0 %v3656
    %v3878 = vpop.f32.mrf.mxu0
    %v3879 = vadd.f32 %v3794, %v3878
    %v3880 = vpop.f32.mrf.mxu0
    %v3881 = vpop.f32.mrf.mxu0
    %v3882 = vadd.f32 %v3794, %v3881
    %v3883 = vpop.f32.mrf.mxu0
    %3884 = vdwg.mxu0
    %s3885 = scalar_lea.vmem [#allocation14], 256
    %v3886 = vld [vmem:[%s3885] sm:$0xf]
    %v3887 = vld [vmem:[%s3885 + $0x4] sm:$0xf]
    %v3888 = vld [vmem:[%s3885 + $0x8] sm:$0xf]
    %v3889 = vld [vmem:[%s3885 + $0xc] sm:$0xf]
    %v3890 = vld [vmem:[%s3885 + $0x10] sm:$0xf]
    %v3891 = vld [vmem:[%s3885 + $0x14] sm:$0xf]
    %v3892 = vld [vmem:[%s3885 + $0x18] sm:$0xf]
    %v3893 = vld [vmem:[%s3885 + $0x1c] sm:$0xf]
    %v3894 = vld [vmem:[%s3885 + $0x20] sm:$0xf]
    %v3895 = vld [vmem:[%s3885 + $0x24] sm:$0xf]
    %v3896 = vld [vmem:[%s3885 + $0x28] sm:$0xf]
    %v3897 = vld [vmem:[%s3885 + $0x2c] sm:$0xf]
    %v3898 = vld [vmem:[%s3885 + $0x30] sm:$0xf]
    %v3899 = vld [vmem:[%s3885 + $0x34] sm:$0xf]
    %v3900 = vld [vmem:[%s3885 + $0x38] sm:$0xf]
    %v3901 = vld [vmem:[%s3885 + $0x3c] sm:$0xf]
    %s3902 = scalar_lea.vmem [#allocation16], 4
    %v3903 = vld [vmem:[%s3902] sm:$0x1]
    %v3905 = vlaneseq
    %v3906 = vshrl.u32 %v3905, 7
    %v3907 = vsub.s32 0, %v3906
    %v3908 = vrot.slane %v3903, %v3907
    %v3926 = vunpack.c.l.b16 %v3886
    %v3927 = vunpack.c.l.b16 %v3887
    %v3928 = vunpack.c.l.b16 %v3888
    %v3929 = vunpack.c.l.b16 %v3889
    %v3930 = vunpack.c.l.b16 %v3890
    %v3931 = vunpack.c.l.b16 %v3891
    %v3932 = vunpack.c.l.b16 %v3892
    %v3933 = vunpack.c.l.b16 %v3893
    %v3934 = vunpack.c.l.b16 %v3894
    %v3935 = vunpack.c.l.b16 %v3895
    %v3936 = vunpack.c.l.b16 %v3896
    %v3937 = vunpack.c.l.b16 %v3897
    %v3938 = vunpack.c.l.b16 %v3898
    %v3939 = vunpack.c.l.b16 %v3899
    %v3940 = vunpack.c.l.b16 %v3900
    %v3941 = vunpack.c.l.b16 %v3901
    %v3942 = vpack.c.b16 %v3927, %v3926
    %v3943 = vpack.c.b16 %v3929, %v3928
    %v3944 = vpack.c.b16 %v3931, %v3930
    %v3945 = vpack.c.b16 %v3933, %v3932
    %v3946 = vpack.c.b16 %v3935, %v3934
    %v3947 = vpack.c.b16 %v3937, %v3936
    %v3948 = vpack.c.b16 %v3939, %v3938
    %v3949 = vpack.c.b16 %v3941, %v3940
    %3958 = vmatprep.subr.bf16.mxu0 0
    %3959 = vmatpush1.bf16.msra.mxu0 %v3949
    %3960 = vmatprep.subr.bf16.mxu0 0
    %3961 = vmatpush1.bf16.msra.mxu0 %v3948
    %3962 = vmatprep.subr.bf16.mxu0 0
    %3963 = vmatpush1.bf16.msra.mxu0 %v3947
    %3964 = vmatprep.subr.bf16.mxu0 0
    %3965 = vmatpush1.bf16.msra.mxu0 %v3946
    %3966 = vmatprep.subr.bf16.mxu0 0
    %3967 = vmatpush1.bf16.msra.mxu0 %v3945
    %3968 = vmatprep.subr.bf16.mxu0 0
    %3969 = vmatpush1.bf16.msra.mxu0 %v3944
    %3970 = vmatprep.subr.bf16.mxu0 0
    %3971 = vmatpush1.bf16.msra.mxu0 %v3943
    %3972 = vmatprep.subr.bf16.mxu0 0
    %3973 = vmatpush1.bf16.msra.mxu0 %v3942
    %3974 = vmatprep.subr.bf16.mxu0 0
    %3975 = vmatpush2.bf16.msra.mxu0 0
    %3976 = vmatprep.subr.bf16.mxu0 0
    %3977 = vmatpush2.bf16.msra.mxu0 0
    %3978 = vmatprep.subr.bf16.mxu0 0
    %3979 = vmatpush2.bf16.msra.mxu0 0
    %3980 = vmatprep.subr.bf16.mxu0 0
    %3981 = vmatpush2.bf16.msra.mxu0 0
    %3982 = vmatprep.subr.bf16.mxu0 0
    %3983 = vmatpush2.bf16.msra.mxu0 0
    %3984 = vmatprep.subr.bf16.mxu0 0
    %3985 = vmatpush2.bf16.msra.mxu0 0
    %3986 = vmatprep.subr.bf16.mxu0 0
    %3987 = vmatpush2.bf16.msra.mxu0 0
    %3988 = vmatprep.subr.bf16.mxu0 0
    %3989 = vmatpush2.bf16.msra.mxu0 0
    %3990 = vmatprep.mubr.bf16.mxu0 0
    %3991 = vmatmul.mubr.bf16.gmra.mxu0 %v3656
    %v3992 = vpop.f32.mrf.mxu0
    %v3993 = vadd.f32 %v3908, %v3992
    %v3994 = vpop.f32.mrf.mxu0
    %v3995 = vpop.f32.mrf.mxu0
    %v3996 = vadd.f32 %v3908, %v3995
    %v3997 = vpop.f32.mrf.mxu0
    %3998 = vdwg.mxu0
    %3999 = vmatprep.subr.mxu0 0.0
    %4000 = vmatpush1.xpose.msra.mxu0 0.0
    %4001 = vmatprep.subr.mxu0 0.0
    %4002 = vmatpush1.xpose.msra.mxu0 0.0
    %4003 = vmatprep.subr.mxu0 0.0
    %4004 = vmatpush1.xpose.msra.mxu0 0.0
    %4005 = vmatprep.subr.mxu0 0.0
    %4006 = vmatpush1.xpose.msra.mxu0 0.0
    %4007 = vmatprep.subr.mxu0 0.0
    %4008 = vmatpush1.xpose.msra.mxu0 0.0
    %4009 = vmatprep.subr.mxu0 0.0
    %4010 = vmatpush1.xpose.msra.mxu0 0.0
    %4011 = vmatprep.subr.mxu0 0.0
    %4012 = vmatpush1.xpose.msra.mxu0 0.0
    %4013 = vmatprep.subr.mxu0 0.0
    %4014 = vmatpush1.xpose.msra.mxu0 0.0
    %4015 = vmatprep.subr.mxu0 0.0
    %4016 = vmatpush1.xpose.msra.mxu0 0.0
    %4017 = vmatprep.subr.mxu0 0.0
    %4018 = vmatpush1.xpose.msra.mxu0 0.0
    %4019 = vmatprep.subr.mxu0 0.0
    %4020 = vmatpush1.xpose.msra.mxu0 0.0
    %4021 = vmatprep.subr.mxu0 0.0
    %4022 = vmatpush1.xpose.msra.mxu0 0.0
    %4023 = vmatprep.subr.mxu0 0.0
    %4024 = vmatpush1.xpose.msra.mxu0 0.0
    %4025 = vmatprep.subr.mxu0 0.0
    %4026 = vmatpush1.xpose.msra.mxu0 0.0
    %4027 = vmatprep.subr.mxu0 0.0
    %4028 = vmatpush1.xpose.msra.mxu0 0.0
    %4029 = vmatprep.subr.mxu0 0.0
    %4030 = vmatpush1.xpose.msra.mxu0 %v3879
    %4031 = vmatprep.subr.mxu0 0.0
    %4032 = vmatpush2.xpose.msra.mxu0 0.0
    %4033 = vmatprep.subr.mxu0 0.0
    %4034 = vmatpush2.xpose.msra.mxu0 0.0
    %4035 = vmatprep.subr.mxu0 0.0
    %4036 = vmatpush2.xpose.msra.mxu0 0.0
    %4037 = vmatprep.subr.mxu0 0.0
    %4038 = vmatpush2.xpose.msra.mxu0 0.0
    %4039 = vmatprep.subr.mxu0 0.0
    %4040 = vmatpush2.xpose.msra.mxu0 0.0
    %4041 = vmatprep.subr.mxu0 0.0
    %4042 = vmatpush2.xpose.msra.mxu0 0.0
    %4043 = vmatprep.subr.mxu0 0.0
    %4044 = vmatpush2.xpose.msra.mxu0 0.0
    %4045 = vmatprep.subr.mxu0 0.0
    %4046 = vmatpush2.xpose.msra.mxu0 0.0
    %4047 = vmatprep.subr.mxu0 0.0
    %4048 = vmatpush2.xpose.msra.mxu0 0.0
    %4049 = vmatprep.subr.mxu0 0.0
    %4050 = vmatpush2.xpose.msra.mxu0 0.0
    %4051 = vmatprep.subr.mxu0 0.0
    %4052 = vmatpush2.xpose.msra.mxu0 0.0
    %4053 = vmatprep.subr.mxu0 0.0
    %4054 = vmatpush2.xpose.msra.mxu0 0.0
    %4055 = vmatprep.subr.mxu0 0.0
    %4056 = vmatpush2.xpose.msra.mxu0 0.0
    %4057 = vmatprep.subr.mxu0 0.0
    %4058 = vmatpush2.xpose.msra.mxu0 0.0
    %4059 = vmatprep.subr.mxu0 0.0
    %4060 = vmatpush2.xpose.msra.mxu0 0.0
    %4061 = vmatprep.subr.mxu0 0.0
    %4062 = vmatpush2.xpose.msra.mxu0 0.0
    %4063 = vmatprep.mubr.f32.mxu0 0.0
    %4064 = vmatmul.mubr.f32.gmra.mxu0 %v3765
    %v4065 = vpop.f32.mrf.mxu0
    %v4066 = vadd.f32 0.0, %v4065
    %v4067 = vpop.f32.mrf.mxu0
    %4068 = vdwg.mxu0
    %4069 = vmatprep.subr.mxu0 0.0
    %4070 = vmatpush1.xpose.msra.mxu0 0.0
    %4071 = vmatprep.subr.mxu0 0.0
    %4072 = vmatpush1.xpose.msra.mxu0 0.0
    %4073 = vmatprep.subr.mxu0 0.0
    %4074 = vmatpush1.xpose.msra.mxu0 0.0
    %4075 = vmatprep.subr.mxu0 0.0
    %4076 = vmatpush1.xpose.msra.mxu0 0.0
    %4077 = vmatprep.subr.mxu0 0.0
    %4078 = vmatpush1.xpose.msra.mxu0 0.0
    %4079 = vmatprep.subr.mxu0 0.0
    %4080 = vmatpush1.xpose.msra.mxu0 0.0
    %4081 = vmatprep.subr.mxu0 0.0
    %4082 = vmatpush1.xpose.msra.mxu0 0.0
    %4083 = vmatprep.subr.mxu0 0.0
    %4084 = vmatpush1.xpose.msra.mxu0 0.0
    %4085 = vmatprep.subr.mxu0 0.0
    %4086 = vmatpush1.xpose.msra.mxu0 0.0
    %4087 = vmatprep.subr.mxu0 0.0
    %4088 = vmatpush1.xpose.msra.mxu0 0.0
    %4089 = vmatprep.subr.mxu0 0.0
    %4090 = vmatpush1.xpose.msra.mxu0 0.0
    %4091 = vmatprep.subr.mxu0 0.0
    %4092 = vmatpush1.xpose.msra.mxu0 0.0
    %4093 = vmatprep.subr.mxu0 0.0
    %4094 = vmatpush1.xpose.msra.mxu0 0.0
    %4095 = vmatprep.subr.mxu0 0.0
    %4096 = vmatpush1.xpose.msra.mxu0 0.0
    %4097 = vmatprep.subr.mxu0 0.0
    %4098 = vmatpush1.xpose.msra.mxu0 0.0
    %4099 = vmatprep.subr.mxu0 0.0
    %4100 = vmatpush1.xpose.msra.mxu0 %v3882
    %4101 = vmatprep.subr.mxu0 0.0
    %4102 = vmatpush2.xpose.msra.mxu0 0.0
    %4103 = vmatprep.subr.mxu0 0.0
    %4104 = vmatpush2.xpose.msra.mxu0 0.0
    %4105 = vmatprep.subr.mxu0 0.0
    %4106 = vmatpush2.xpose.msra.mxu0 0.0
    %4107 = vmatprep.subr.mxu0 0.0
    %4108 = vmatpush2.xpose.msra.mxu0 0.0
    %4109 = vmatprep.subr.mxu0 0.0
    %4110 = vmatpush2.xpose.msra.mxu0 0.0
    %4111 = vmatprep.subr.mxu0 0.0
    %4112 = vmatpush2.xpose.msra.mxu0 0.0
    %4113 = vmatprep.subr.mxu0 0.0
    %4114 = vmatpush2.xpose.msra.mxu0 0.0
    %4115 = vmatprep.subr.mxu0 0.0
    %4116 = vmatpush2.xpose.msra.mxu0 0.0
    %4117 = vmatprep.subr.mxu0 0.0
    %4118 = vmatpush2.xpose.msra.mxu0 0.0
    %4119 = vmatprep.subr.mxu0 0.0
    %4120 = vmatpush2.xpose.msra.mxu0 0.0
    %4121 = vmatprep.subr.mxu0 0.0
    %4122 = vmatpush2.xpose.msra.mxu0 0.0
    %4123 = vmatprep.subr.mxu0 0.0
    %4124 = vmatpush2.xpose.msra.mxu0 0.0
    %4125 = vmatprep.subr.mxu0 0.0
    %4126 = vmatpush2.xpose.msra.mxu0 0.0
    %4127 = vmatprep.subr.mxu0 0.0
    %4128 = vmatpush2.xpose.msra.mxu0 0.0
    %4129 = vmatprep.subr.mxu0 0.0
    %4130 = vmatpush2.xpose.msra.mxu0 0.0
    %4131 = vmatprep.subr.mxu0 0.0
    %4132 = vmatpush2.xpose.msra.mxu0 0.0
    %4133 = vmatprep.mubr.f32.mxu0 0.0
    %4134 = vmatmul.mubr.f32.gmra.mxu0 %v3768
    %v4135 = vpop.f32.mrf.mxu0
    %v4136 = vadd.f32 0.0, %v4135
    %v4137 = vpop.f32.mrf.mxu0
    %4138 = vdwg.mxu0
    %v4139 = vsel %vm868, %v4066, -inf
    %4140 = vmax.xlane.f32.xlu0 %v4139
    %v4141 = vpop.xlane.xlu0 %4140
    %v4142 = vsel %vm868, %v4136, -inf
    %4143 = vmax.xlane.f32.xlu0 %v4142
    %v4144 = vpop.xlane.xlu0 %4143
    %v4145 = vsub.f32 %v4066, %v4141
    %v4146 = vsub.f32 %v4136, %v4144
    %v4147 = vmul.f32 %v4145, 1.442695
    %v4148 = vpow.pop %v4147
    %v4149 = vmul.f32 %v4146, 1.442695
    %v4150 = vpow.pop %v4149
    %v4151 = vsel %vm868, %v4148, 0.0
    %4152 = vadd.xlane.f32.xlu0 %v4151
    %v4153 = vpop.xlane.xlu0 %4152
    %v4154 = vsel %vm868, %v4150, 0.0
    %4155 = vadd.xlane.f32.xlu0 %v4154
    %v4156 = vpop.xlane.xlu0 %4155
    %v4157 = vrcp.pop %v4153
    %v4158 = vrcp.pop %v4156
    %v4159 = vmul.f32 %v4148, %v4157
    %v4160 = vmul.f32 %v4150, %v4158
    %v4162 = vsel %vm868, %v4159, 0
    %4164 = vmatprep.subr.mxu0 0.0
    %4165 = vmatpush1.msra.mxu0 0.0
    %4166 = vmatprep.subr.mxu0 0.0
    %4167 = vmatpush1.msra.mxu0 0.0
    %4168 = vmatprep.subr.mxu0 0.0
    %4169 = vmatpush1.msra.mxu0 0.0
    %4170 = vmatprep.subr.mxu0 0.0
    %4171 = vmatpush1.msra.mxu0 0.0
    %4172 = vmatprep.subr.mxu0 0.0
    %4173 = vmatpush1.msra.mxu0 0.0
    %4174 = vmatprep.subr.mxu0 0.0
    %4175 = vmatpush1.msra.mxu0 0.0
    %4176 = vmatprep.subr.mxu0 0.0
    %4177 = vmatpush1.msra.mxu0 0.0
    %4178 = vmatprep.subr.mxu0 0.0
    %4179 = vmatpush1.msra.mxu0 0.0
    %4180 = vmatprep.subr.mxu0 0.0
    %4181 = vmatpush1.msra.mxu0 0.0
    %4182 = vmatprep.subr.mxu0 0.0
    %4183 = vmatpush1.msra.mxu0 0.0
    %4184 = vmatprep.subr.mxu0 0.0
    %4185 = vmatpush1.msra.mxu0 0.0
    %4186 = vmatprep.subr.mxu0 0.0
    %4187 = vmatpush1.msra.mxu0 0.0
    %4188 = vmatprep.subr.mxu0 0.0
    %4189 = vmatpush1.msra.mxu0 0.0
    %4190 = vmatprep.subr.mxu0 0.0
    %4191 = vmatpush1.msra.mxu0 0.0
    %4192 = vmatprep.subr.mxu0 0.0
    %4193 = vmatpush1.msra.mxu0 0.0
    %4194 = vmatprep.subr.mxu0 0.0
    %4195 = vmatpush1.msra.mxu0 %v3993
    %4196 = vmatprep.subr.mxu0 0.0
    %4197 = vmatpush2.msra.mxu0 0.0
    %4198 = vmatprep.subr.mxu0 0.0
    %4199 = vmatpush2.msra.mxu0 0.0
    %4200 = vmatprep.subr.mxu0 0.0
    %4201 = vmatpush2.msra.mxu0 0.0
    %4202 = vmatprep.subr.mxu0 0.0
    %4203 = vmatpush2.msra.mxu0 0.0
    %4204 = vmatprep.subr.mxu0 0.0
    %4205 = vmatpush2.msra.mxu0 0.0
    %4206 = vmatprep.subr.mxu0 0.0
    %4207 = vmatpush2.msra.mxu0 0.0
    %4208 = vmatprep.subr.mxu0 0.0
    %4209 = vmatpush2.msra.mxu0 0.0
    %4210 = vmatprep.subr.mxu0 0.0
    %4211 = vmatpush2.msra.mxu0 0.0
    %4212 = vmatprep.subr.mxu0 0.0
    %4213 = vmatpush2.msra.mxu0 0.0
    %4214 = vmatprep.subr.mxu0 0.0
    %4215 = vmatpush2.msra.mxu0 0.0
    %4216 = vmatprep.subr.mxu0 0.0
    %4217 = vmatpush2.msra.mxu0 0.0
    %4218 = vmatprep.subr.mxu0 0.0
    %4219 = vmatpush2.msra.mxu0 0.0
    %4220 = vmatprep.subr.mxu0 0.0
    %4221 = vmatpush2.msra.mxu0 0.0
    %4222 = vmatprep.subr.mxu0 0.0
    %4223 = vmatpush2.msra.mxu0 0.0
    %4224 = vmatprep.subr.mxu0 0.0
    %4225 = vmatpush2.msra.mxu0 0.0
    %4226 = vmatprep.subr.mxu0 0.0
    %4227 = vmatpush2.msra.mxu0 0.0
    %4228 = vmatprep.mubr.f32.mxu0 0.0
    %4229 = vmatmul.mubr.f32.gmra.mxu0 %v4162
    %v4230 = vpop.f32.mrf.mxu0
    %v4231 = vadd.f32 0.0, %v4230
    %v4232 = vpop.f32.mrf.mxu0
    %4233 = vdwg.mxu0
    %v4235 = vsel %vm868, %v4160, 0
    %4237 = vmatprep.subr.mxu0 0.0
    %4238 = vmatpush1.msra.mxu0 0.0
    %4239 = vmatprep.subr.mxu0 0.0
    %4240 = vmatpush1.msra.mxu0 0.0
    %4241 = vmatprep.subr.mxu0 0.0
    %4242 = vmatpush1.msra.mxu0 0.0
    %4243 = vmatprep.subr.mxu0 0.0
    %4244 = vmatpush1.msra.mxu0 0.0
    %4245 = vmatprep.subr.mxu0 0.0
    %4246 = vmatpush1.msra.mxu0 0.0
    %4247 = vmatprep.subr.mxu0 0.0
    %4248 = vmatpush1.msra.mxu0 0.0
    %4249 = vmatprep.subr.mxu0 0.0
    %4250 = vmatpush1.msra.mxu0 0.0
    %4251 = vmatprep.subr.mxu0 0.0
    %4252 = vmatpush1.msra.mxu0 0.0
    %4253 = vmatprep.subr.mxu0 0.0
    %4254 = vmatpush1.msra.mxu0 0.0
    %4255 = vmatprep.subr.mxu0 0.0
    %4256 = vmatpush1.msra.mxu0 0.0
    %4257 = vmatprep.subr.mxu0 0.0
    %4258 = vmatpush1.msra.mxu0 0.0
    %4259 = vmatprep.subr.mxu0 0.0
    %4260 = vmatpush1.msra.mxu0 0.0
    %4261 = vmatprep.subr.mxu0 0.0
    %4262 = vmatpush1.msra.mxu0 0.0
    %4263 = vmatprep.subr.mxu0 0.0
    %4264 = vmatpush1.msra.mxu0 0.0
    %4265 = vmatprep.subr.mxu0 0.0
    %4266 = vmatpush1.msra.mxu0 0.0
    %4267 = vmatprep.subr.mxu0 0.0
    %4268 = vmatpush1.msra.mxu0 %v3996
    %4269 = vmatprep.subr.mxu0 0.0
    %4270 = vmatpush2.msra.mxu0 0.0
    %4271 = vmatprep.subr.mxu0 0.0
    %4272 = vmatpush2.msra.mxu0 0.0
    %4273 = vmatprep.subr.mxu0 0.0
    %4274 = vmatpush2.msra.mxu0 0.0
    %4275 = vmatprep.subr.mxu0 0.0
    %4276 = vmatpush2.msra.mxu0 0.0
    %4277 = vmatprep.subr.mxu0 0.0
    %4278 = vmatpush2.msra.mxu0 0.0
    %4279 = vmatprep.subr.mxu0 0.0
    %4280 = vmatpush2.msra.mxu0 0.0
    %4281 = vmatprep.subr.mxu0 0.0
    %4282 = vmatpush2.msra.mxu0 0.0
    %4283 = vmatprep.subr.mxu0 0.0
    %4284 = vmatpush2.msra.mxu0 0.0
    %4285 = vmatprep.subr.mxu0 0.0
    %4286 = vmatpush2.msra.mxu0 0.0
    %4287 = vmatprep.subr.mxu0 0.0
    %4288 = vmatpush2.msra.mxu0 0.0
    %4289 = vmatprep.subr.mxu0 0.0
    %4290 = vmatpush2.msra.mxu0 0.0
    %4291 = vmatprep.subr.mxu0 0.0
    %4292 = vmatpush2.msra.mxu0 0.0
    %4293 = vmatprep.subr.mxu0 0.0
    %4294 = vmatpush2.msra.mxu0 0.0
    %4295 = vmatprep.subr.mxu0 0.0
    %4296 = vmatpush2.msra.mxu0 0.0
    %4297 = vmatprep.subr.mxu0 0.0
    %4298 = vmatpush2.msra.mxu0 0.0
    %4299 = vmatprep.subr.mxu0 0.0
    %4300 = vmatpush2.msra.mxu0 0.0
    %4301 = vmatprep.mubr.f32.mxu0 0.0
    %4302 = vmatmul.mubr.f32.gmra.mxu0 %v4235
    %v4303 = vpop.f32.mrf.mxu0
    %v4304 = vadd.f32 0.0, %v4303
    %v4305 = vpop.f32.mrf.mxu0
    %4306 = vdwg.mxu0
    %s4307 = scalar_lea.vmem [#allocation11], 320
    %v4308 = vld [vmem:[%s4307] sm:$0xf]
    %v4309 = vld [vmem:[%s4307 + $0x4] sm:$0xf]
    %v4310 = vld [vmem:[%s4307 + $0x8] sm:$0xf]
    %v4311 = vld [vmem:[%s4307 + $0xc] sm:$0xf]
    %v4312 = vld [vmem:[%s4307 + $0x10] sm:$0xf]
    %v4313 = vld [vmem:[%s4307 + $0x14] sm:$0xf]
    %v4314 = vld [vmem:[%s4307 + $0x18] sm:$0xf]
    %v4315 = vld [vmem:[%s4307 + $0x1c] sm:$0xf]
    %v4316 = vld [vmem:[%s4307 + $0x20] sm:$0xf]
    %v4317 = vld [vmem:[%s4307 + $0x24] sm:$0xf]
    %v4318 = vld [vmem:[%s4307 + $0x28] sm:$0xf]
    %v4319 = vld [vmem:[%s4307 + $0x2c] sm:$0xf]
    %v4320 = vld [vmem:[%s4307 + $0x30] sm:$0xf]
    %v4321 = vld [vmem:[%s4307 + $0x34] sm:$0xf]
    %v4322 = vld [vmem:[%s4307 + $0x38] sm:$0xf]
    %v4323 = vld [vmem:[%s4307 + $0x3c] sm:$0xf]
    %s4324 = scalar_lea.vmem %s8, 5
    %v4325 = vld [vmem:[%s4324] sm:$0x1]
    %v4327 = vlaneseq
    %v4328 = vshrl.u32 %v4327, 7
    %v4329 = vsub.s32 0, %v4328
    %v4330 = vrot.slane %v4325, %v4329
    %v4348 = vunpack.c.l.b16 %v4308
    %v4349 = vunpack.c.l.b16 %v4309
    %v4350 = vunpack.c.l.b16 %v4310
    %v4351 = vunpack.c.l.b16 %v4311
    %v4352 = vunpack.c.l.b16 %v4312
    %v4353 = vunpack.c.l.b16 %v4313
    %v4354 = vunpack.c.l.b16 %v4314
    %v4355 = vunpack.c.l.b16 %v4315
    %v4356 = vunpack.c.l.b16 %v4316
    %v4357 = vunpack.c.l.b16 %v4317
    %v4358 = vunpack.c.l.b16 %v4318
    %v4359 = vunpack.c.l.b16 %v4319
    %v4360 = vunpack.c.l.b16 %v4320
    %v4361 = vunpack.c.l.b16 %v4321
    %v4362 = vunpack.c.l.b16 %v4322
    %v4363 = vunpack.c.l.b16 %v4323
    %v4364 = vpack.c.b16 %v4349, %v4348
    %v4365 = vpack.c.b16 %v4351, %v4350
    %v4366 = vpack.c.b16 %v4353, %v4352
    %v4367 = vpack.c.b16 %v4355, %v4354
    %v4368 = vpack.c.b16 %v4357, %v4356
    %v4369 = vpack.c.b16 %v4359, %v4358
    %v4370 = vpack.c.b16 %v4361, %v4360
    %v4371 = vpack.c.b16 %v4363, %v4362
    %4380 = vmatprep.subr.bf16.mxu0 0
    %4381 = vmatpush1.bf16.msra.mxu0 %v4371
    %4382 = vmatprep.subr.bf16.mxu0 0
    %4383 = vmatpush1.bf16.msra.mxu0 %v4370
    %4384 = vmatprep.subr.bf16.mxu0 0
    %4385 = vmatpush1.bf16.msra.mxu0 %v4369
    %4386 = vmatprep.subr.bf16.mxu0 0
    %4387 = vmatpush1.bf16.msra.mxu0 %v4368
    %4388 = vmatprep.subr.bf16.mxu0 0
    %4389 = vmatpush1.bf16.msra.mxu0 %v4367
    %4390 = vmatprep.subr.bf16.mxu0 0
    %4391 = vmatpush1.bf16.msra.mxu0 %v4366
    %4392 = vmatprep.subr.bf16.mxu0 0
    %4393 = vmatpush1.bf16.msra.mxu0 %v4365
    %4394 = vmatprep.subr.bf16.mxu0 0
    %4395 = vmatpush1.bf16.msra.mxu0 %v4364
    %4396 = vmatprep.subr.bf16.mxu0 0
    %4397 = vmatpush2.bf16.msra.mxu0 0
    %4398 = vmatprep.subr.bf16.mxu0 0
    %4399 = vmatpush2.bf16.msra.mxu0 0
    %4400 = vmatprep.subr.bf16.mxu0 0
    %4401 = vmatpush2.bf16.msra.mxu0 0
    %4402 = vmatprep.subr.bf16.mxu0 0
    %4403 = vmatpush2.bf16.msra.mxu0 0
    %4404 = vmatprep.subr.bf16.mxu0 0
    %4405 = vmatpush2.bf16.msra.mxu0 0
    %4406 = vmatprep.subr.bf16.mxu0 0
    %4407 = vmatpush2.bf16.msra.mxu0 0
    %4408 = vmatprep.subr.bf16.mxu0 0
    %4409 = vmatpush2.bf16.msra.mxu0 0
    %4410 = vmatprep.subr.bf16.mxu0 0
    %4411 = vmatpush2.bf16.msra.mxu0 0
    %4412 = vmatprep.mubr.bf16.mxu0 0
    %4413 = vmatmul.mubr.bf16.gmra.mxu0 %v3656
    %v4414 = vpop.f32.mrf.mxu0
    %v4415 = vadd.f32 %v4330, %v4414
    %v4416 = vpop.f32.mrf.mxu0
    %v4417 = vpop.f32.mrf.mxu0
    %v4418 = vadd.f32 %v4330, %v4417
    %v4419 = vpop.f32.mrf.mxu0
    %4420 = vdwg.mxu0
    %s4421 = scalar_lea.vmem [#allocation13], 320
    %v4422 = vld [vmem:[%s4421] sm:$0xf]
    %v4423 = vld [vmem:[%s4421 + $0x4] sm:$0xf]
    %v4424 = vld [vmem:[%s4421 + $0x8] sm:$0xf]
    %v4425 = vld [vmem:[%s4421 + $0xc] sm:$0xf]
    %v4426 = vld [vmem:[%s4421 + $0x10] sm:$0xf]
    %v4427 = vld [vmem:[%s4421 + $0x14] sm:$0xf]
    %v4428 = vld [vmem:[%s4421 + $0x18] sm:$0xf]
    %v4429 = vld [vmem:[%s4421 + $0x1c] sm:$0xf]
    %v4430 = vld [vmem:[%s4421 + $0x20] sm:$0xf]
    %v4431 = vld [vmem:[%s4421 + $0x24] sm:$0xf]
    %v4432 = vld [vmem:[%s4421 + $0x28] sm:$0xf]
    %v4433 = vld [vmem:[%s4421 + $0x2c] sm:$0xf]
    %v4434 = vld [vmem:[%s4421 + $0x30] sm:$0xf]
    %v4435 = vld [vmem:[%s4421 + $0x34] sm:$0xf]
    %v4436 = vld [vmem:[%s4421 + $0x38] sm:$0xf]
    %v4437 = vld [vmem:[%s4421 + $0x3c] sm:$0xf]
    %s4438 = scalar_lea.vmem %s9, 5
    %v4439 = vld [vmem:[%s4438] sm:$0x1]
    %v4441 = vlaneseq
    %v4442 = vshrl.u32 %v4441, 7
    %v4443 = vsub.s32 0, %v4442
    %v4444 = vrot.slane %v4439, %v4443
    %v4462 = vunpack.c.l.b16 %v4422
    %v4463 = vunpack.c.l.b16 %v4423
    %v4464 = vunpack.c.l.b16 %v4424
    %v4465 = vunpack.c.l.b16 %v4425
    %v4466 = vunpack.c.l.b16 %v4426
    %v4467 = vunpack.c.l.b16 %v4427
    %v4468 = vunpack.c.l.b16 %v4428
    %v4469 = vunpack.c.l.b16 %v4429
    %v4470 = vunpack.c.l.b16 %v4430
    %v4471 = vunpack.c.l.b16 %v4431
    %v4472 = vunpack.c.l.b16 %v4432
    %v4473 = vunpack.c.l.b16 %v4433
    %v4474 = vunpack.c.l.b16 %v4434
    %v4475 = vunpack.c.l.b16 %v4435
    %v4476 = vunpack.c.l.b16 %v4436
    %v4477 = vunpack.c.l.b16 %v4437
    %v4478 = vpack.c.b16 %v4463, %v4462
    %v4479 = vpack.c.b16 %v4465, %v4464
    %v4480 = vpack.c.b16 %v4467, %v4466
    %v4481 = vpack.c.b16 %v4469, %v4468
    %v4482 = vpack.c.b16 %v4471, %v4470
    %v4483 = vpack.c.b16 %v4473, %v4472
    %v4484 = vpack.c.b16 %v4475, %v4474
    %v4485 = vpack.c.b16 %v4477, %v4476
    %4494 = vmatprep.subr.bf16.mxu0 0
    %4495 = vmatpush1.bf16.msra.mxu0 %v4485
    %4496 = vmatprep.subr.bf16.mxu0 0
    %4497 = vmatpush1.bf16.msra.mxu0 %v4484
    %4498 = vmatprep.subr.bf16.mxu0 0
    %4499 = vmatpush1.bf16.msra.mxu0 %v4483
    %4500 = vmatprep.subr.bf16.mxu0 0
    %4501 = vmatpush1.bf16.msra.mxu0 %v4482
    %4502 = vmatprep.subr.bf16.mxu0 0
    %4503 = vmatpush1.bf16.msra.mxu0 %v4481
    %4504 = vmatprep.subr.bf16.mxu0 0
    %4505 = vmatpush1.bf16.msra.mxu0 %v4480
    %4506 = vmatprep.subr.bf16.mxu0 0
    %4507 = vmatpush1.bf16.msra.mxu0 %v4479
    %4508 = vmatprep.subr.bf16.mxu0 0
    %4509 = vmatpush1.bf16.msra.mxu0 %v4478
    %4510 = vmatprep.subr.bf16.mxu0 0
    %4511 = vmatpush2.bf16.msra.mxu0 0
    %4512 = vmatprep.subr.bf16.mxu0 0
    %4513 = vmatpush2.bf16.msra.mxu0 0
    %4514 = vmatprep.subr.bf16.mxu0 0
    %4515 = vmatpush2.bf16.msra.mxu0 0
    %4516 = vmatprep.subr.bf16.mxu0 0
    %4517 = vmatpush2.bf16.msra.mxu0 0
    %4518 = vmatprep.subr.bf16.mxu0 0
    %4519 = vmatpush2.bf16.msra.mxu0 0
    %4520 = vmatprep.subr.bf16.mxu0 0
    %4521 = vmatpush2.bf16.msra.mxu0 0
    %4522 = vmatprep.subr.bf16.mxu0 0
    %4523 = vmatpush2.bf16.msra.mxu0 0
    %4524 = vmatprep.subr.bf16.mxu0 0
    %4525 = vmatpush2.bf16.msra.mxu0 0
    %4526 = vmatprep.mubr.bf16.mxu0 0
    %4527 = vmatmul.mubr.bf16.gmra.mxu0 %v3656
    %v4528 = vpop.f32.mrf.mxu0
    %v4529 = vadd.f32 %v4444, %v4528
    %v4530 = vpop.f32.mrf.mxu0
    %v4531 = vpop.f32.mrf.mxu0
    %v4532 = vadd.f32 %v4444, %v4531
    %v4533 = vpop.f32.mrf.mxu0
    %4534 = vdwg.mxu0
    %s4535 = scalar_lea.vmem [#allocation14], 320
    %v4536 = vld [vmem:[%s4535] sm:$0xf]
    %v4537 = vld [vmem:[%s4535 + $0x4] sm:$0xf]
    %v4538 = vld [vmem:[%s4535 + $0x8] sm:$0xf]
    %v4539 = vld [vmem:[%s4535 + $0xc] sm:$0xf]
    %v4540 = vld [vmem:[%s4535 + $0x10] sm:$0xf]
    %v4541 = vld [vmem:[%s4535 + $0x14] sm:$0xf]
    %v4542 = vld [vmem:[%s4535 + $0x18] sm:$0xf]
    %v4543 = vld [vmem:[%s4535 + $0x1c] sm:$0xf]
    %v4544 = vld [vmem:[%s4535 + $0x20] sm:$0xf]
    %v4545 = vld [vmem:[%s4535 + $0x24] sm:$0xf]
    %v4546 = vld [vmem:[%s4535 + $0x28] sm:$0xf]
    %v4547 = vld [vmem:[%s4535 + $0x2c] sm:$0xf]
    %v4548 = vld [vmem:[%s4535 + $0x30] sm:$0xf]
    %v4549 = vld [vmem:[%s4535 + $0x34] sm:$0xf]
    %v4550 = vld [vmem:[%s4535 + $0x38] sm:$0xf]
    %v4551 = vld [vmem:[%s4535 + $0x3c] sm:$0xf]
    %s4552 = scalar_lea.vmem [#allocation16], 5
    %v4553 = vld [vmem:[%s4552] sm:$0x1]
    %v4555 = vlaneseq
    %v4556 = vshrl.u32 %v4555, 7
    %v4557 = vsub.s32 0, %v4556
    %v4558 = vrot.slane %v4553, %v4557
    %v4576 = vunpack.c.l.b16 %v4536
    %v4577 = vunpack.c.l.b16 %v4537
    %v4578 = vunpack.c.l.b16 %v4538
    %v4579 = vunpack.c.l.b16 %v4539
    %v4580 = vunpack.c.l.b16 %v4540
    %v4581 = vunpack.c.l.b16 %v4541
    %v4582 = vunpack.c.l.b16 %v4542
    %v4583 = vunpack.c.l.b16 %v4543
    %v4584 = vunpack.c.l.b16 %v4544
    %v4585 = vunpack.c.l.b16 %v4545
    %v4586 = vunpack.c.l.b16 %v4546
    %v4587 = vunpack.c.l.b16 %v4547
    %v4588 = vunpack.c.l.b16 %v4548
    %v4589 = vunpack.c.l.b16 %v4549
    %v4590 = vunpack.c.l.b16 %v4550
    %v4591 = vunpack.c.l.b16 %v4551
    %v4592 = vpack.c.b16 %v4577, %v4576
    %v4593 = vpack.c.b16 %v4579, %v4578
    %v4594 = vpack.c.b16 %v4581, %v4580
    %v4595 = vpack.c.b16 %v4583, %v4582
    %v4596 = vpack.c.b16 %v4585, %v4584
    %v4597 = vpack.c.b16 %v4587, %v4586
    %v4598 = vpack.c.b16 %v4589, %v4588
    %v4599 = vpack.c.b16 %v4591, %v4590
    %4608 = vmatprep.subr.bf16.mxu0 0
    %4609 = vmatpush1.bf16.msra.mxu0 %v4599
    %4610 = vmatprep.subr.bf16.mxu0 0
    %4611 = vmatpush1.bf16.msra.mxu0 %v4598
    %4612 = vmatprep.subr.bf16.mxu0 0
    %4613 = vmatpush1.bf16.msra.mxu0 %v4597
    %4614 = vmatprep.subr.bf16.mxu0 0
    %4615 = vmatpush1.bf16.msra.mxu0 %v4596
    %4616 = vmatprep.subr.bf16.mxu0 0
    %4617 = vmatpush1.bf16.msra.mxu0 %v4595
    %4618 = vmatprep.subr.bf16.mxu0 0
    %4619 = vmatpush1.bf16.msra.mxu0 %v4594
    %4620 = vmatprep.subr.bf16.mxu0 0
    %4621 = vmatpush1.bf16.msra.mxu0 %v4593
    %4622 = vmatprep.subr.bf16.mxu0 0
    %4623 = vmatpush1.bf16.msra.mxu0 %v4592
    %4624 = vmatprep.subr.bf16.mxu0 0
    %4625 = vmatpush2.bf16.msra.mxu0 0
    %4626 = vmatprep.subr.bf16.mxu0 0
    %4627 = vmatpush2.bf16.msra.mxu0 0
    %4628 = vmatprep.subr.bf16.mxu0 0
    %4629 = vmatpush2.bf16.msra.mxu0 0
    %4630 = vmatprep.subr.bf16.mxu0 0
    %4631 = vmatpush2.bf16.msra.mxu0 0
    %4632 = vmatprep.subr.bf16.mxu0 0
    %4633 = vmatpush2.bf16.msra.mxu0 0
    %4634 = vmatprep.subr.bf16.mxu0 0
    %4635 = vmatpush2.bf16.msra.mxu0 0
    %4636 = vmatprep.subr.bf16.mxu0 0
    %4637 = vmatpush2.bf16.msra.mxu0 0
    %4638 = vmatprep.subr.bf16.mxu0 0
    %4639 = vmatpush2.bf16.msra.mxu0 0
    %4640 = vmatprep.mubr.bf16.mxu0 0
    %4641 = vmatmul.mubr.bf16.gmra.mxu0 %v3656
    %v4642 = vpop.f32.mrf.mxu0
    %v4643 = vadd.f32 %v4558, %v4642
    %v4644 = vpop.f32.mrf.mxu0
    %v4645 = vpop.f32.mrf.mxu0
    %v4646 = vadd.f32 %v4558, %v4645
    %v4647 = vpop.f32.mrf.mxu0
    %4648 = vdwg.mxu0
    %4649 = vmatprep.subr.mxu0 0.0
    %4650 = vmatpush1.xpose.msra.mxu0 0.0
    %4651 = vmatprep.subr.mxu0 0.0
    %4652 = vmatpush1.xpose.msra.mxu0 0.0
    %4653 = vmatprep.subr.mxu0 0.0
    %4654 = vmatpush1.xpose.msra.mxu0 0.0
    %4655 = vmatprep.subr.mxu0 0.0
    %4656 = vmatpush1.xpose.msra.mxu0 0.0
    %4657 = vmatprep.subr.mxu0 0.0
    %4658 = vmatpush1.xpose.msra.mxu0 0.0
    %4659 = vmatprep.subr.mxu0 0.0
    %4660 = vmatpush1.xpose.msra.mxu0 0.0
    %4661 = vmatprep.subr.mxu0 0.0
    %4662 = vmatpush1.xpose.msra.mxu0 0.0
    %4663 = vmatprep.subr.mxu0 0.0
    %4664 = vmatpush1.xpose.msra.mxu0 0.0
    %4665 = vmatprep.subr.mxu0 0.0
    %4666 = vmatpush1.xpose.msra.mxu0 0.0
    %4667 = vmatprep.subr.mxu0 0.0
    %4668 = vmatpush1.xpose.msra.mxu0 0.0
    %4669 = vmatprep.subr.mxu0 0.0
    %4670 = vmatpush1.xpose.msra.mxu0 0.0
    %4671 = vmatprep.subr.mxu0 0.0
    %4672 = vmatpush1.xpose.msra.mxu0 0.0
    %4673 = vmatprep.subr.mxu0 0.0
    %4674 = vmatpush1.xpose.msra.mxu0 0.0
    %4675 = vmatprep.subr.mxu0 0.0
    %4676 = vmatpush1.xpose.msra.mxu0 0.0
    %4677 = vmatprep.subr.mxu0 0.0
    %4678 = vmatpush1.xpose.msra.mxu0 0.0
    %4679 = vmatprep.subr.mxu0 0.0
    %4680 = vmatpush1.xpose.msra.mxu0 %v4529
    %4681 = vmatprep.subr.mxu0 0.0
    %4682 = vmatpush2.xpose.msra.mxu0 0.0
    %4683 = vmatprep.subr.mxu0 0.0
    %4684 = vmatpush2.xpose.msra.mxu0 0.0
    %4685 = vmatprep.subr.mxu0 0.0
    %4686 = vmatpush2.xpose.msra.mxu0 0.0
    %4687 = vmatprep.subr.mxu0 0.0
    %4688 = vmatpush2.xpose.msra.mxu0 0.0
    %4689 = vmatprep.subr.mxu0 0.0
    %4690 = vmatpush2.xpose.msra.mxu0 0.0
    %4691 = vmatprep.subr.mxu0 0.0
    %4692 = vmatpush2.xpose.msra.mxu0 0.0
    %4693 = vmatprep.subr.mxu0 0.0
    %4694 = vmatpush2.xpose.msra.mxu0 0.0
    %4695 = vmatprep.subr.mxu0 0.0
    %4696 = vmatpush2.xpose.msra.mxu0 0.0
    %4697 = vmatprep.subr.mxu0 0.0
    %4698 = vmatpush2.xpose.msra.mxu0 0.0
    %4699 = vmatprep.subr.mxu0 0.0
    %4700 = vmatpush2.xpose.msra.mxu0 0.0
    %4701 = vmatprep.subr.mxu0 0.0
    %4702 = vmatpush2.xpose.msra.mxu0 0.0
    %4703 = vmatprep.subr.mxu0 0.0
    %4704 = vmatpush2.xpose.msra.mxu0 0.0
    %4705 = vmatprep.subr.mxu0 0.0
    %4706 = vmatpush2.xpose.msra.mxu0 0.0
    %4707 = vmatprep.subr.mxu0 0.0
    %4708 = vmatpush2.xpose.msra.mxu0 0.0
    %4709 = vmatprep.subr.mxu0 0.0
    %4710 = vmatpush2.xpose.msra.mxu0 0.0
    %4711 = vmatprep.subr.mxu0 0.0
    %4712 = vmatpush2.xpose.msra.mxu0 0.0
    %4713 = vmatprep.mubr.f32.mxu0 0.0
    %4714 = vmatmul.mubr.f32.gmra.mxu0 %v4415
    %v4715 = vpop.f32.mrf.mxu0
    %v4716 = vadd.f32 0.0, %v4715
    %v4717 = vpop.f32.mrf.mxu0
    %4718 = vdwg.mxu0
    %4719 = vmatprep.subr.mxu0 0.0
    %4720 = vmatpush1.xpose.msra.mxu0 0.0
    %4721 = vmatprep.subr.mxu0 0.0
    %4722 = vmatpush1.xpose.msra.mxu0 0.0
    %4723 = vmatprep.subr.mxu0 0.0
    %4724 = vmatpush1.xpose.msra.mxu0 0.0
    %4725 = vmatprep.subr.mxu0 0.0
    %4726 = vmatpush1.xpose.msra.mxu0 0.0
    %4727 = vmatprep.subr.mxu0 0.0
    %4728 = vmatpush1.xpose.msra.mxu0 0.0
    %4729 = vmatprep.subr.mxu0 0.0
    %4730 = vmatpush1.xpose.msra.mxu0 0.0
    %4731 = vmatprep.subr.mxu0 0.0
    %4732 = vmatpush1.xpose.msra.mxu0 0.0
    %4733 = vmatprep.subr.mxu0 0.0
    %4734 = vmatpush1.xpose.msra.mxu0 0.0
    %4735 = vmatprep.subr.mxu0 0.0
    %4736 = vmatpush1.xpose.msra.mxu0 0.0
    %4737 = vmatprep.subr.mxu0 0.0
    %4738 = vmatpush1.xpose.msra.mxu0 0.0
    %4739 = vmatprep.subr.mxu0 0.0
    %4740 = vmatpush1.xpose.msra.mxu0 0.0
    %4741 = vmatprep.subr.mxu0 0.0
    %4742 = vmatpush1.xpose.msra.mxu0 0.0
    %4743 = vmatprep.subr.mxu0 0.0
    %4744 = vmatpush1.xpose.msra.mxu0 0.0
    %4745 = vmatprep.subr.mxu0 0.0
    %4746 = vmatpush1.xpose.msra.mxu0 0.0
    %4747 = vmatprep.subr.mxu0 0.0
    %4748 = vmatpush1.xpose.msra.mxu0 0.0
    %4749 = vmatprep.subr.mxu0 0.0
    %4750 = vmatpush1.xpose.msra.mxu0 %v4532
    %4751 = vmatprep.subr.mxu0 0.0
    %4752 = vmatpush2.xpose.msra.mxu0 0.0
    %4753 = vmatprep.subr.mxu0 0.0
    %4754 = vmatpush2.xpose.msra.mxu0 0.0
    %4755 = vmatprep.subr.mxu0 0.0
    %4756 = vmatpush2.xpose.msra.mxu0 0.0
    %4757 = vmatprep.subr.mxu0 0.0
    %4758 = vmatpush2.xpose.msra.mxu0 0.0
    %4759 = vmatprep.subr.mxu0 0.0
    %4760 = vmatpush2.xpose.msra.mxu0 0.0
    %4761 = vmatprep.subr.mxu0 0.0
    %4762 = vmatpush2.xpose.msra.mxu0 0.0
    %4763 = vmatprep.subr.mxu0 0.0
    %4764 = vmatpush2.xpose.msra.mxu0 0.0
    %4765 = vmatprep.subr.mxu0 0.0
    %4766 = vmatpush2.xpose.msra.mxu0 0.0
    %4767 = vmatprep.subr.mxu0 0.0
    %4768 = vmatpush2.xpose.msra.mxu0 0.0
    %4769 = vmatprep.subr.mxu0 0.0
    %4770 = vmatpush2.xpose.msra.mxu0 0.0
    %4771 = vmatprep.subr.mxu0 0.0
    %4772 = vmatpush2.xpose.msra.mxu0 0.0
    %4773 = vmatprep.subr.mxu0 0.0
    %4774 = vmatpush2.xpose.msra.mxu0 0.0
    %4775 = vmatprep.subr.mxu0 0.0
    %4776 = vmatpush2.xpose.msra.mxu0 0.0
    %4777 = vmatprep.subr.mxu0 0.0
    %4778 = vmatpush2.xpose.msra.mxu0 0.0
    %4779 = vmatprep.subr.mxu0 0.0
    %4780 = vmatpush2.xpose.msra.mxu0 0.0
    %4781 = vmatprep.subr.mxu0 0.0
    %4782 = vmatpush2.xpose.msra.mxu0 0.0
    %4783 = vmatprep.mubr.f32.mxu0 0.0
    %4784 = vmatmul.mubr.f32.gmra.mxu0 %v4418
    %v4785 = vpop.f32.mrf.mxu0
    %v4786 = vadd.f32 0.0, %v4785
    %v4787 = vpop.f32.mrf.mxu0
    %4788 = vdwg.mxu0
    %v4789 = vsel %vm868, %v4716, -inf
    %4790 = vmax.xlane.f32.xlu0 %v4789
    %v4791 = vpop.xlane.xlu0 %4790
    %v4792 = vsel %vm868, %v4786, -inf
    %4793 = vmax.xlane.f32.xlu0 %v4792
    %v4794 = vpop.xlane.xlu0 %4793
    %v4795 = vsub.f32 %v4716, %v4791
    %v4796 = vsub.f32 %v4786, %v4794
    %v4797 = vmul.f32 %v4795, 1.442695
    %v4798 = vpow.pop %v4797
    %v4799 = vmul.f32 %v4796, 1.442695
    %v4800 = vpow.pop %v4799
    %v4801 = vsel %vm868, %v4798, 0.0
    %4802 = vadd.xlane.f32.xlu0 %v4801
    %v4803 = vpop.xlane.xlu0 %4802
    %v4804 = vsel %vm868, %v4800, 0.0
    %4805 = vadd.xlane.f32.xlu0 %v4804
    %v4806 = vpop.xlane.xlu0 %4805
    %v4807 = vrcp.pop %v4803
    %v4808 = vrcp.pop %v4806
    %v4809 = vmul.f32 %v4798, %v4807
    %v4810 = vmul.f32 %v4800, %v4808
    %v4812 = vsel %vm868, %v4809, 0
    %4814 = vmatprep.subr.mxu0 0.0
    %4815 = vmatpush1.msra.mxu0 0.0
    %4816 = vmatprep.subr.mxu0 0.0
    %4817 = vmatpush1.msra.mxu0 0.0
    %4818 = vmatprep.subr.mxu0 0.0
    %4819 = vmatpush1.msra.mxu0 0.0
    %4820 = vmatprep.subr.mxu0 0.0
    %4821 = vmatpush1.msra.mxu0 0.0
    %4822 = vmatprep.subr.mxu0 0.0
    %4823 = vmatpush1.msra.mxu0 0.0
    %4824 = vmatprep.subr.mxu0 0.0
    %4825 = vmatpush1.msra.mxu0 0.0
    %4826 = vmatprep.subr.mxu0 0.0
    %4827 = vmatpush1.msra.mxu0 0.0
    %4828 = vmatprep.subr.mxu0 0.0
    %4829 = vmatpush1.msra.mxu0 0.0
    %4830 = vmatprep.subr.mxu0 0.0
    %4831 = vmatpush1.msra.mxu0 0.0
    %4832 = vmatprep.subr.mxu0 0.0
    %4833 = vmatpush1.msra.mxu0 0.0
    %4834 = vmatprep.subr.mxu0 0.0
    %4835 = vmatpush1.msra.mxu0 0.0
    %4836 = vmatprep.subr.mxu0 0.0
    %4837 = vmatpush1.msra.mxu0 0.0
    %4838 = vmatprep.subr.mxu0 0.0
    %4839 = vmatpush1.msra.mxu0 0.0
    %4840 = vmatprep.subr.mxu0 0.0
    %4841 = vmatpush1.msra.mxu0 0.0
    %4842 = vmatprep.subr.mxu0 0.0
    %4843 = vmatpush1.msra.mxu0 0.0
    %4844 = vmatprep.subr.mxu0 0.0
    %4845 = vmatpush1.msra.mxu0 %v4643
    %4846 = vmatprep.subr.mxu0 0.0
    %4847 = vmatpush2.msra.mxu0 0.0
    %4848 = vmatprep.subr.mxu0 0.0
    %4849 = vmatpush2.msra.mxu0 0.0
    %4850 = vmatprep.subr.mxu0 0.0
    %4851 = vmatpush2.msra.mxu0 0.0
    %4852 = vmatprep.subr.mxu0 0.0
    %4853 = vmatpush2.msra.mxu0 0.0
    %4854 = vmatprep.subr.mxu0 0.0
    %4855 = vmatpush2.msra.mxu0 0.0
    %4856 = vmatprep.subr.mxu0 0.0
    %4857 = vmatpush2.msra.mxu0 0.0
    %4858 = vmatprep.subr.mxu0 0.0
    %4859 = vmatpush2.msra.mxu0 0.0
    %4860 = vmatprep.subr.mxu0 0.0
    %4861 = vmatpush2.msra.mxu0 0.0
    %4862 = vmatprep.subr.mxu0 0.0
    %4863 = vmatpush2.msra.mxu0 0.0
    %4864 = vmatprep.subr.mxu0 0.0
    %4865 = vmatpush2.msra.mxu0 0.0
    %4866 = vmatprep.subr.mxu0 0.0
    %4867 = vmatpush2.msra.mxu0 0.0
    %4868 = vmatprep.subr.mxu0 0.0
    %4869 = vmatpush2.msra.mxu0 0.0
    %4870 = vmatprep.subr.mxu0 0.0
    %4871 = vmatpush2.msra.mxu0 0.0
    %4872 = vmatprep.subr.mxu0 0.0
    %4873 = vmatpush2.msra.mxu0 0.0
    %4874 = vmatprep.subr.mxu0 0.0
    %4875 = vmatpush2.msra.mxu0 0.0
    %4876 = vmatprep.subr.mxu0 0.0
    %4877 = vmatpush2.msra.mxu0 0.0
    %4878 = vmatprep.mubr.f32.mxu0 0.0
    %4879 = vmatmul.mubr.f32.gmra.mxu0 %v4812
    %v4880 = vpop.f32.mrf.mxu0
    %v4881 = vadd.f32 0.0, %v4880
    %v4882 = vpop.f32.mrf.mxu0
    %4883 = vdwg.mxu0
    %v4885 = vsel %vm868, %v4810, 0
    %4887 = vmatprep.subr.mxu0 0.0
    %4888 = vmatpush1.msra.mxu0 0.0
    %4889 = vmatprep.subr.mxu0 0.0
    %4890 = vmatpush1.msra.mxu0 0.0
    %4891 = vmatprep.subr.mxu0 0.0
    %4892 = vmatpush1.msra.mxu0 0.0
    %4893 = vmatprep.subr.mxu0 0.0
    %4894 = vmatpush1.msra.mxu0 0.0
    %4895 = vmatprep.subr.mxu0 0.0
    %4896 = vmatpush1.msra.mxu0 0.0
    %4897 = vmatprep.subr.mxu0 0.0
    %4898 = vmatpush1.msra.mxu0 0.0
    %4899 = vmatprep.subr.mxu0 0.0
    %4900 = vmatpush1.msra.mxu0 0.0
    %4901 = vmatprep.subr.mxu0 0.0
    %4902 = vmatpush1.msra.mxu0 0.0
    %4903 = vmatprep.subr.mxu0 0.0
    %4904 = vmatpush1.msra.mxu0 0.0
    %4905 = vmatprep.subr.mxu0 0.0
    %4906 = vmatpush1.msra.mxu0 0.0
    %4907 = vmatprep.subr.mxu0 0.0
    %4908 = vmatpush1.msra.mxu0 0.0
    %4909 = vmatprep.subr.mxu0 0.0
    %4910 = vmatpush1.msra.mxu0 0.0
    %4911 = vmatprep.subr.mxu0 0.0
    %4912 = vmatpush1.msra.mxu0 0.0
    %4913 = vmatprep.subr.mxu0 0.0
    %4914 = vmatpush1.msra.mxu0 0.0
    %4915 = vmatprep.subr.mxu0 0.0
    %4916 = vmatpush1.msra.mxu0 0.0
    %4917 = vmatprep.subr.mxu0 0.0
    %4918 = vmatpush1.msra.mxu0 %v4646
    %4919 = vmatprep.subr.mxu0 0.0
    %4920 = vmatpush2.msra.mxu0 0.0
    %4921 = vmatprep.subr.mxu0 0.0
    %4922 = vmatpush2.msra.mxu0 0.0
    %4923 = vmatprep.subr.mxu0 0.0
    %4924 = vmatpush2.msra.mxu0 0.0
    %4925 = vmatprep.subr.mxu0 0.0
    %4926 = vmatpush2.msra.mxu0 0.0
    %4927 = vmatprep.subr.mxu0 0.0
    %4928 = vmatpush2.msra.mxu0 0.0
    %4929 = vmatprep.subr.mxu0 0.0
    %4930 = vmatpush2.msra.mxu0 0.0
    %4931 = vmatprep.subr.mxu0 0.0
    %4932 = vmatpush2.msra.mxu0 0.0
    %4933 = vmatprep.subr.mxu0 0.0
    %4934 = vmatpush2.msra.mxu0 0.0
    %4935 = vmatprep.subr.mxu0 0.0
    %4936 = vmatpush2.msra.mxu0 0.0
    %4937 = vmatprep.subr.mxu0 0.0
    %4938 = vmatpush2.msra.mxu0 0.0
    %4939 = vmatprep.subr.mxu0 0.0
    %4940 = vmatpush2.msra.mxu0 0.0
    %4941 = vmatprep.subr.mxu0 0.0
    %4942 = vmatpush2.msra.mxu0 0.0
    %4943 = vmatprep.subr.mxu0 0.0
    %4944 = vmatpush2.msra.mxu0 0.0
    %4945 = vmatprep.subr.mxu0 0.0
    %4946 = vmatpush2.msra.mxu0 0.0
    %4947 = vmatprep.subr.mxu0 0.0
    %4948 = vmatpush2.msra.mxu0 0.0
    %4949 = vmatprep.subr.mxu0 0.0
    %4950 = vmatpush2.msra.mxu0 0.0
    %4951 = vmatprep.mubr.f32.mxu0 0.0
    %4952 = vmatmul.mubr.f32.gmra.mxu0 %v4885
    %v4953 = vpop.f32.mrf.mxu0
    %v4954 = vadd.f32 0.0, %v4953
    %v4955 = vpop.f32.mrf.mxu0
    %4956 = vdwg.mxu0
    %s4957 = scalar_lea.vmem [#allocation11], 384
    %v4958 = vld [vmem:[%s4957] sm:$0xf]
    %v4959 = vld [vmem:[%s4957 + $0x4] sm:$0xf]
    %v4960 = vld [vmem:[%s4957 + $0x8] sm:$0xf]
    %v4961 = vld [vmem:[%s4957 + $0xc] sm:$0xf]
    %v4962 = vld [vmem:[%s4957 + $0x10] sm:$0xf]
    %v4963 = vld [vmem:[%s4957 + $0x14] sm:$0xf]
    %v4964 = vld [vmem:[%s4957 + $0x18] sm:$0xf]
    %v4965 = vld [vmem:[%s4957 + $0x1c] sm:$0xf]
    %v4966 = vld [vmem:[%s4957 + $0x20] sm:$0xf]
    %v4967 = vld [vmem:[%s4957 + $0x24] sm:$0xf]
    %v4968 = vld [vmem:[%s4957 + $0x28] sm:$0xf]
    %v4969 = vld [vmem:[%s4957 + $0x2c] sm:$0xf]
    %v4970 = vld [vmem:[%s4957 + $0x30] sm:$0xf]
    %v4971 = vld [vmem:[%s4957 + $0x34] sm:$0xf]
    %v4972 = vld [vmem:[%s4957 + $0x38] sm:$0xf]
    %v4973 = vld [vmem:[%s4957 + $0x3c] sm:$0xf]
    %s4974 = scalar_lea.vmem %s8, 6
    %v4975 = vld [vmem:[%s4974] sm:$0x1]
    %v4977 = vlaneseq
    %v4978 = vshrl.u32 %v4977, 7
    %v4979 = vsub.s32 0, %v4978
    %v4980 = vrot.slane %v4975, %v4979
    %v4998 = vunpack.c.l.b16 %v4958
    %v4999 = vunpack.c.l.b16 %v4959
    %v5000 = vunpack.c.l.b16 %v4960
    %v5001 = vunpack.c.l.b16 %v4961
    %v5002 = vunpack.c.l.b16 %v4962
    %v5003 = vunpack.c.l.b16 %v4963
    %v5004 = vunpack.c.l.b16 %v4964
    %v5005 = vunpack.c.l.b16 %v4965
    %v5006 = vunpack.c.l.b16 %v4966
    %v5007 = vunpack.c.l.b16 %v4967
    %v5008 = vunpack.c.l.b16 %v4968
    %v5009 = vunpack.c.l.b16 %v4969
    %v5010 = vunpack.c.l.b16 %v4970
    %v5011 = vunpack.c.l.b16 %v4971
    %v5012 = vunpack.c.l.b16 %v4972
    %v5013 = vunpack.c.l.b16 %v4973
    %v5014 = vpack.c.b16 %v4999, %v4998
    %v5015 = vpack.c.b16 %v5001, %v5000
    %v5016 = vpack.c.b16 %v5003, %v5002
    %v5017 = vpack.c.b16 %v5005, %v5004
    %v5018 = vpack.c.b16 %v5007, %v5006
    %v5019 = vpack.c.b16 %v5009, %v5008
    %v5020 = vpack.c.b16 %v5011, %v5010
    %v5021 = vpack.c.b16 %v5013, %v5012
    %5030 = vmatprep.subr.bf16.mxu0 0
    %5031 = vmatpush1.bf16.msra.mxu0 %v5021
    %5032 = vmatprep.subr.bf16.mxu0 0
    %5033 = vmatpush1.bf16.msra.mxu0 %v5020
    %5034 = vmatprep.subr.bf16.mxu0 0
    %5035 = vmatpush1.bf16.msra.mxu0 %v5019
    %5036 = vmatprep.subr.bf16.mxu0 0
    %5037 = vmatpush1.bf16.msra.mxu0 %v5018
    %5038 = vmatprep.subr.bf16.mxu0 0
    %5039 = vmatpush1.bf16.msra.mxu0 %v5017
    %5040 = vmatprep.subr.bf16.mxu0 0
    %5041 = vmatpush1.bf16.msra.mxu0 %v5016
    %5042 = vmatprep.subr.bf16.mxu0 0
    %5043 = vmatpush1.bf16.msra.mxu0 %v5015
    %5044 = vmatprep.subr.bf16.mxu0 0
    %5045 = vmatpush1.bf16.msra.mxu0 %v5014
    %5046 = vmatprep.subr.bf16.mxu0 0
    %5047 = vmatpush2.bf16.msra.mxu0 0
    %5048 = vmatprep.subr.bf16.mxu0 0
    %5049 = vmatpush2.bf16.msra.mxu0 0
    %5050 = vmatprep.subr.bf16.mxu0 0
    %5051 = vmatpush2.bf16.msra.mxu0 0
    %5052 = vmatprep.subr.bf16.mxu0 0
    %5053 = vmatpush2.bf16.msra.mxu0 0
    %5054 = vmatprep.subr.bf16.mxu0 0
    %5055 = vmatpush2.bf16.msra.mxu0 0
    %5056 = vmatprep.subr.bf16.mxu0 0
    %5057 = vmatpush2.bf16.msra.mxu0 0
    %5058 = vmatprep.subr.bf16.mxu0 0
    %5059 = vmatpush2.bf16.msra.mxu0 0
    %5060 = vmatprep.subr.bf16.mxu0 0
    %5061 = vmatpush2.bf16.msra.mxu0 0
    %5062 = vmatprep.mubr.bf16.mxu0 0
    %5063 = vmatmul.mubr.bf16.gmra.mxu0 %v3656
    %v5064 = vpop.f32.mrf.mxu0
    %v5065 = vadd.f32 %v4980, %v5064
    %v5066 = vpop.f32.mrf.mxu0
    %v5067 = vpop.f32.mrf.mxu0
    %v5068 = vadd.f32 %v4980, %v5067
    %v5069 = vpop.f32.mrf.mxu0
    %5070 = vdwg.mxu0
    %s5071 = scalar_lea.vmem [#allocation13], 384
    %v5072 = vld [vmem:[%s5071] sm:$0xf]
    %v5073 = vld [vmem:[%s5071 + $0x4] sm:$0xf]
    %v5074 = vld [vmem:[%s5071 + $0x8] sm:$0xf]
    %v5075 = vld [vmem:[%s5071 + $0xc] sm:$0xf]
    %v5076 = vld [vmem:[%s5071 + $0x10] sm:$0xf]
    %v5077 = vld [vmem:[%s5071 + $0x14] sm:$0xf]
    %v5078 = vld [vmem:[%s5071 + $0x18] sm:$0xf]
    %v5079 = vld [vmem:[%s5071 + $0x1c] sm:$0xf]
    %v5080 = vld [vmem:[%s5071 + $0x20] sm:$0xf]
    %v5081 = vld [vmem:[%s5071 + $0x24] sm:$0xf]
    %v5082 = vld [vmem:[%s5071 + $0x28] sm:$0xf]
    %v5083 = vld [vmem:[%s5071 + $0x2c] sm:$0xf]
    %v5084 = vld [vmem:[%s5071 + $0x30] sm:$0xf]
    %v5085 = vld [vmem:[%s5071 + $0x34] sm:$0xf]
    %v5086 = vld [vmem:[%s5071 + $0x38] sm:$0xf]
    %v5087 = vld [vmem:[%s5071 + $0x3c] sm:$0xf]
    %s5088 = scalar_lea.vmem %s9, 6
    %v5089 = vld [vmem:[%s5088] sm:$0x1]
    %v5091 = vlaneseq
    %v5092 = vshrl.u32 %v5091, 7
    %v5093 = vsub.s32 0, %v5092
    %v5094 = vrot.slane %v5089, %v5093
    %v5112 = vunpack.c.l.b16 %v5072
    %v5113 = vunpack.c.l.b16 %v5073
    %v5114 = vunpack.c.l.b16 %v5074
    %v5115 = vunpack.c.l.b16 %v5075
    %v5116 = vunpack.c.l.b16 %v5076
    %v5117 = vunpack.c.l.b16 %v5077
    %v5118 = vunpack.c.l.b16 %v5078
    %v5119 = vunpack.c.l.b16 %v5079
    %v5120 = vunpack.c.l.b16 %v5080
    %v5121 = vunpack.c.l.b16 %v5081
    %v5122 = vunpack.c.l.b16 %v5082
    %v5123 = vunpack.c.l.b16 %v5083
    %v5124 = vunpack.c.l.b16 %v5084
    %v5125 = vunpack.c.l.b16 %v5085
    %v5126 = vunpack.c.l.b16 %v5086
    %v5127 = vunpack.c.l.b16 %v5087
    %v5128 = vpack.c.b16 %v5113, %v5112
    %v5129 = vpack.c.b16 %v5115, %v5114
    %v5130 = vpack.c.b16 %v5117, %v5116
    %v5131 = vpack.c.b16 %v5119, %v5118
    %v5132 = vpack.c.b16 %v5121, %v5120
    %v5133 = vpack.c.b16 %v5123, %v5122
    %v5134 = vpack.c.b16 %v5125, %v5124
    %v5135 = vpack.c.b16 %v5127, %v5126
    %5144 = vmatprep.subr.bf16.mxu0 0
    %5145 = vmatpush1.bf16.msra.mxu0 %v5135
    %5146 = vmatprep.subr.bf16.mxu0 0
    %5147 = vmatpush1.bf16.msra.mxu0 %v5134
    %5148 = vmatprep.subr.bf16.mxu0 0
    %5149 = vmatpush1.bf16.msra.mxu0 %v5133
    %5150 = vmatprep.subr.bf16.mxu0 0
    %5151 = vmatpush1.bf16.msra.mxu0 %v5132
    %5152 = vmatprep.subr.bf16.mxu0 0
    %5153 = vmatpush1.bf16.msra.mxu0 %v5131
    %5154 = vmatprep.subr.bf16.mxu0 0
    %5155 = vmatpush1.bf16.msra.mxu0 %v5130
    %5156 = vmatprep.subr.bf16.mxu0 0
    %5157 = vmatpush1.bf16.msra.mxu0 %v5129
    %5158 = vmatprep.subr.bf16.mxu0 0
    %5159 = vmatpush1.bf16.msra.mxu0 %v5128
    %5160 = vmatprep.subr.bf16.mxu0 0
    %5161 = vmatpush2.bf16.msra.mxu0 0
    %5162 = vmatprep.subr.bf16.mxu0 0
    %5163 = vmatpush2.bf16.msra.mxu0 0
    %5164 = vmatprep.subr.bf16.mxu0 0
    %5165 = vmatpush2.bf16.msra.mxu0 0
    %5166 = vmatprep.subr.bf16.mxu0 0
    %5167 = vmatpush2.bf16.msra.mxu0 0
    %5168 = vmatprep.subr.bf16.mxu0 0
    %5169 = vmatpush2.bf16.msra.mxu0 0
    %5170 = vmatprep.subr.bf16.mxu0 0
    %5171 = vmatpush2.bf16.msra.mxu0 0
    %5172 = vmatprep.subr.bf16.mxu0 0
    %5173 = vmatpush2.bf16.msra.mxu0 0
    %5174 = vmatprep.subr.bf16.mxu0 0
    %5175 = vmatpush2.bf16.msra.mxu0 0
    %5176 = vmatprep.mubr.bf16.mxu0 0
    %5177 = vmatmul.mubr.bf16.gmra.mxu0 %v3656
    %v5178 = vpop.f32.mrf.mxu0
    %v5179 = vadd.f32 %v5094, %v5178
    %v5180 = vpop.f32.mrf.mxu0
    %v5181 = vpop.f32.mrf.mxu0
    %v5182 = vadd.f32 %v5094, %v5181
    %v5183 = vpop.f32.mrf.mxu0
    %5184 = vdwg.mxu0
    %s5185 = scalar_lea.vmem [#allocation14], 384
    %v5186 = vld [vmem:[%s5185] sm:$0xf]
    %v5187 = vld [vmem:[%s5185 + $0x4] sm:$0xf]
    %v5188 = vld [vmem:[%s5185 + $0x8] sm:$0xf]
    %v5189 = vld [vmem:[%s5185 + $0xc] sm:$0xf]
    %v5190 = vld [vmem:[%s5185 + $0x10] sm:$0xf]
    %v5191 = vld [vmem:[%s5185 + $0x14] sm:$0xf]
    %v5192 = vld [vmem:[%s5185 + $0x18] sm:$0xf]
    %v5193 = vld [vmem:[%s5185 + $0x1c] sm:$0xf]
    %v5194 = vld [vmem:[%s5185 + $0x20] sm:$0xf]
    %v5195 = vld [vmem:[%s5185 + $0x24] sm:$0xf]
    %v5196 = vld [vmem:[%s5185 + $0x28] sm:$0xf]
    %v5197 = vld [vmem:[%s5185 + $0x2c] sm:$0xf]
    %v5198 = vld [vmem:[%s5185 + $0x30] sm:$0xf]
    %v5199 = vld [vmem:[%s5185 + $0x34] sm:$0xf]
    %v5200 = vld [vmem:[%s5185 + $0x38] sm:$0xf]
    %v5201 = vld [vmem:[%s5185 + $0x3c] sm:$0xf]
    %s5202 = scalar_lea.vmem [#allocation16], 6
    %v5203 = vld [vmem:[%s5202] sm:$0x1]
    %v5205 = vlaneseq
    %v5206 = vshrl.u32 %v5205, 7
    %v5207 = vsub.s32 0, %v5206
    %v5208 = vrot.slane %v5203, %v5207
    %v5226 = vunpack.c.l.b16 %v5186
    %v5227 = vunpack.c.l.b16 %v5187
    %v5228 = vunpack.c.l.b16 %v5188
    %v5229 = vunpack.c.l.b16 %v5189
    %v5230 = vunpack.c.l.b16 %v5190
    %v5231 = vunpack.c.l.b16 %v5191
    %v5232 = vunpack.c.l.b16 %v5192
    %v5233 = vunpack.c.l.b16 %v5193
    %v5234 = vunpack.c.l.b16 %v5194
    %v5235 = vunpack.c.l.b16 %v5195
    %v5236 = vunpack.c.l.b16 %v5196
    %v5237 = vunpack.c.l.b16 %v5197
    %v5238 = vunpack.c.l.b16 %v5198
    %v5239 = vunpack.c.l.b16 %v5199
    %v5240 = vunpack.c.l.b16 %v5200
    %v5241 = vunpack.c.l.b16 %v5201
    %v5242 = vpack.c.b16 %v5227, %v5226
    %v5243 = vpack.c.b16 %v5229, %v5228
    %v5244 = vpack.c.b16 %v5231, %v5230
    %v5245 = vpack.c.b16 %v5233, %v5232
    %v5246 = vpack.c.b16 %v5235, %v5234
    %v5247 = vpack.c.b16 %v5237, %v5236
    %v5248 = vpack.c.b16 %v5239, %v5238
    %v5249 = vpack.c.b16 %v5241, %v5240
    %5258 = vmatprep.subr.bf16.mxu0 0
    %5259 = vmatpush1.bf16.msra.mxu0 %v5249
    %5260 = vmatprep.subr.bf16.mxu0 0
    %5261 = vmatpush1.bf16.msra.mxu0 %v5248
    %5262 = vmatprep.subr.bf16.mxu0 0
    %5263 = vmatpush1.bf16.msra.mxu0 %v5247
    %5264 = vmatprep.subr.bf16.mxu0 0
    %5265 = vmatpush1.bf16.msra.mxu0 %v5246
    %5266 = vmatprep.subr.bf16.mxu0 0
    %5267 = vmatpush1.bf16.msra.mxu0 %v5245
    %5268 = vmatprep.subr.bf16.mxu0 0
    %5269 = vmatpush1.bf16.msra.mxu0 %v5244
    %5270 = vmatprep.subr.bf16.mxu0 0
    %5271 = vmatpush1.bf16.msra.mxu0 %v5243
    %5272 = vmatprep.subr.bf16.mxu0 0
    %5273 = vmatpush1.bf16.msra.mxu0 %v5242
    %5274 = vmatprep.subr.bf16.mxu0 0
    %5275 = vmatpush2.bf16.msra.mxu0 0
    %5276 = vmatprep.subr.bf16.mxu0 0
    %5277 = vmatpush2.bf16.msra.mxu0 0
    %5278 = vmatprep.subr.bf16.mxu0 0
    %5279 = vmatpush2.bf16.msra.mxu0 0
    %5280 = vmatprep.subr.bf16.mxu0 0
    %5281 = vmatpush2.bf16.msra.mxu0 0
    %5282 = vmatprep.subr.bf16.mxu0 0
    %5283 = vmatpush2.bf16.msra.mxu0 0
    %5284 = vmatprep.subr.bf16.mxu0 0
    %5285 = vmatpush2.bf16.msra.mxu0 0
    %5286 = vmatprep.subr.bf16.mxu0 0
    %5287 = vmatpush2.bf16.msra.mxu0 0
    %5288 = vmatprep.subr.bf16.mxu0 0
    %5289 = vmatpush2.bf16.msra.mxu0 0
    %5290 = vmatprep.mubr.bf16.mxu0 0
    %5291 = vmatmul.mubr.bf16.gmra.mxu0 %v3656
    %v5292 = vpop.f32.mrf.mxu0
    %v5293 = vadd.f32 %v5208, %v5292
    %v5294 = vpop.f32.mrf.mxu0
    %v5295 = vpop.f32.mrf.mxu0
    %v5296 = vadd.f32 %v5208, %v5295
    %v5297 = vpop.f32.mrf.mxu0
    %5298 = vdwg.mxu0
    %5299 = vmatprep.subr.mxu0 0.0
    %5300 = vmatpush1.xpose.msra.mxu0 0.0
    %5301 = vmatprep.subr.mxu0 0.0
    %5302 = vmatpush1.xpose.msra.mxu0 0.0
    %5303 = vmatprep.subr.mxu0 0.0
    %5304 = vmatpush1.xpose.msra.mxu0 0.0
    %5305 = vmatprep.subr.mxu0 0.0
    %5306 = vmatpush1.xpose.msra.mxu0 0.0
    %5307 = vmatprep.subr.mxu0 0.0
    %5308 = vmatpush1.xpose.msra.mxu0 0.0
    %5309 = vmatprep.subr.mxu0 0.0
    %5310 = vmatpush1.xpose.msra.mxu0 0.0
    %5311 = vmatprep.subr.mxu0 0.0
    %5312 = vmatpush1.xpose.msra.mxu0 0.0
    %5313 = vmatprep.subr.mxu0 0.0
    %5314 = vmatpush1.xpose.msra.mxu0 0.0
    %5315 = vmatprep.subr.mxu0 0.0
    %5316 = vmatpush1.xpose.msra.mxu0 0.0
    %5317 = vmatprep.subr.mxu0 0.0
    %5318 = vmatpush1.xpose.msra.mxu0 0.0
    %5319 = vmatprep.subr.mxu0 0.0
    %5320 = vmatpush1.xpose.msra.mxu0 0.0
    %5321 = vmatprep.subr.mxu0 0.0
    %5322 = vmatpush1.xpose.msra.mxu0 0.0
    %5323 = vmatprep.subr.mxu0 0.0
    %5324 = vmatpush1.xpose.msra.mxu0 0.0
    %5325 = vmatprep.subr.mxu0 0.0
    %5326 = vmatpush1.xpose.msra.mxu0 0.0
    %5327 = vmatprep.subr.mxu0 0.0
    %5328 = vmatpush1.xpose.msra.mxu0 0.0
    %5329 = vmatprep.subr.mxu0 0.0
    %5330 = vmatpush1.xpose.msra.mxu0 %v5179
    %5331 = vmatprep.subr.mxu0 0.0
    %5332 = vmatpush2.xpose.msra.mxu0 0.0
    %5333 = vmatprep.subr.mxu0 0.0
    %5334 = vmatpush2.xpose.msra.mxu0 0.0
    %5335 = vmatprep.subr.mxu0 0.0
    %5336 = vmatpush2.xpose.msra.mxu0 0.0
    %5337 = vmatprep.subr.mxu0 0.0
    %5338 = vmatpush2.xpose.msra.mxu0 0.0
    %5339 = vmatprep.subr.mxu0 0.0
    %5340 = vmatpush2.xpose.msra.mxu0 0.0
    %5341 = vmatprep.subr.mxu0 0.0
    %5342 = vmatpush2.xpose.msra.mxu0 0.0
    %5343 = vmatprep.subr.mxu0 0.0
    %5344 = vmatpush2.xpose.msra.mxu0 0.0
    %5345 = vmatprep.subr.mxu0 0.0
    %5346 = vmatpush2.xpose.msra.mxu0 0.0
    %5347 = vmatprep.subr.mxu0 0.0
    %5348 = vmatpush2.xpose.msra.mxu0 0.0
    %5349 = vmatprep.subr.mxu0 0.0
    %5350 = vmatpush2.xpose.msra.mxu0 0.0
    %5351 = vmatprep.subr.mxu0 0.0
    %5352 = vmatpush2.xpose.msra.mxu0 0.0
    %5353 = vmatprep.subr.mxu0 0.0
    %5354 = vmatpush2.xpose.msra.mxu0 0.0
    %5355 = vmatprep.subr.mxu0 0.0
    %5356 = vmatpush2.xpose.msra.mxu0 0.0
    %5357 = vmatprep.subr.mxu0 0.0
    %5358 = vmatpush2.xpose.msra.mxu0 0.0
    %5359 = vmatprep.subr.mxu0 0.0
    %5360 = vmatpush2.xpose.msra.mxu0 0.0
    %5361 = vmatprep.subr.mxu0 0.0
    %5362 = vmatpush2.xpose.msra.mxu0 0.0
    %5363 = vmatprep.mubr.f32.mxu0 0.0
    %5364 = vmatmul.mubr.f32.gmra.mxu0 %v5065
    %v5365 = vpop.f32.mrf.mxu0
    %v5366 = vadd.f32 0.0, %v5365
    %v5367 = vpop.f32.mrf.mxu0
    %5368 = vdwg.mxu0
    %5369 = vmatprep.subr.mxu0 0.0
    %5370 = vmatpush1.xpose.msra.mxu0 0.0
    %5371 = vmatprep.subr.mxu0 0.0
    %5372 = vmatpush1.xpose.msra.mxu0 0.0
    %5373 = vmatprep.subr.mxu0 0.0
    %5374 = vmatpush1.xpose.msra.mxu0 0.0
    %5375 = vmatprep.subr.mxu0 0.0
    %5376 = vmatpush1.xpose.msra.mxu0 0.0
    %5377 = vmatprep.subr.mxu0 0.0
    %5378 = vmatpush1.xpose.msra.mxu0 0.0
    %5379 = vmatprep.subr.mxu0 0.0
    %5380 = vmatpush1.xpose.msra.mxu0 0.0
    %5381 = vmatprep.subr.mxu0 0.0
    %5382 = vmatpush1.xpose.msra.mxu0 0.0
    %5383 = vmatprep.subr.mxu0 0.0
    %5384 = vmatpush1.xpose.msra.mxu0 0.0
    %5385 = vmatprep.subr.mxu0 0.0
    %5386 = vmatpush1.xpose.msra.mxu0 0.0
    %5387 = vmatprep.subr.mxu0 0.0
    %5388 = vmatpush1.xpose.msra.mxu0 0.0
    %5389 = vmatprep.subr.mxu0 0.0
    %5390 = vmatpush1.xpose.msra.mxu0 0.0
    %5391 = vmatprep.subr.mxu0 0.0
    %5392 = vmatpush1.xpose.msra.mxu0 0.0
    %5393 = vmatprep.subr.mxu0 0.0
    %5394 = vmatpush1.xpose.msra.mxu0 0.0
    %5395 = vmatprep.subr.mxu0 0.0
    %5396 = vmatpush1.xpose.msra.mxu0 0.0
    %5397 = vmatprep.subr.mxu0 0.0
    %5398 = vmatpush1.xpose.msra.mxu0 0.0
    %5399 = vmatprep.subr.mxu0 0.0
    %5400 = vmatpush1.xpose.msra.mxu0 %v5182
    %5401 = vmatprep.subr.mxu0 0.0
    %5402 = vmatpush2.xpose.msra.mxu0 0.0
    %5403 = vmatprep.subr.mxu0 0.0
    %5404 = vmatpush2.xpose.msra.mxu0 0.0
    %5405 = vmatprep.subr.mxu0 0.0
    %5406 = vmatpush2.xpose.msra.mxu0 0.0
    %5407 = vmatprep.subr.mxu0 0.0
    %5408 = vmatpush2.xpose.msra.mxu0 0.0
    %5409 = vmatprep.subr.mxu0 0.0
    %5410 = vmatpush2.xpose.msra.mxu0 0.0
    %5411 = vmatprep.subr.mxu0 0.0
    %5412 = vmatpush2.xpose.msra.mxu0 0.0
    %5413 = vmatprep.subr.mxu0 0.0
    %5414 = vmatpush2.xpose.msra.mxu0 0.0
    %5415 = vmatprep.subr.mxu0 0.0
    %5416 = vmatpush2.xpose.msra.mxu0 0.0
    %5417 = vmatprep.subr.mxu0 0.0
    %5418 = vmatpush2.xpose.msra.mxu0 0.0
    %5419 = vmatprep.subr.mxu0 0.0
    %5420 = vmatpush2.xpose.msra.mxu0 0.0
    %5421 = vmatprep.subr.mxu0 0.0
    %5422 = vmatpush2.xpose.msra.mxu0 0.0
    %5423 = vmatprep.subr.mxu0 0.0
    %5424 = vmatpush2.xpose.msra.mxu0 0.0
    %5425 = vmatprep.subr.mxu0 0.0
    %5426 = vmatpush2.xpose.msra.mxu0 0.0
    %5427 = vmatprep.subr.mxu0 0.0
    %5428 = vmatpush2.xpose.msra.mxu0 0.0
    %5429 = vmatprep.subr.mxu0 0.0
    %5430 = vmatpush2.xpose.msra.mxu0 0.0
    %5431 = vmatprep.subr.mxu0 0.0
    %5432 = vmatpush2.xpose.msra.mxu0 0.0
    %5433 = vmatprep.mubr.f32.mxu0 0.0
    %5434 = vmatmul.mubr.f32.gmra.mxu0 %v5068
    %v5435 = vpop.f32.mrf.mxu0
    %v5436 = vadd.f32 0.0, %v5435
    %v5437 = vpop.f32.mrf.mxu0
    %5438 = vdwg.mxu0
    %v5439 = vsel %vm868, %v5366, -inf
    %5440 = vmax.xlane.f32.xlu0 %v5439
    %v5441 = vpop.xlane.xlu0 %5440
    %v5442 = vsel %vm868, %v5436, -inf
    %5443 = vmax.xlane.f32.xlu0 %v5442
    %v5444 = vpop.xlane.xlu0 %5443
    %v5445 = vsub.f32 %v5366, %v5441
    %v5446 = vsub.f32 %v5436, %v5444
    %v5447 = vmul.f32 %v5445, 1.442695
    %v5448 = vpow.pop %v5447
    %v5449 = vmul.f32 %v5446, 1.442695
    %v5450 = vpow.pop %v5449
    %v5451 = vsel %vm868, %v5448, 0.0
    %5452 = vadd.xlane.f32.xlu0 %v5451
    %v5453 = vpop.xlane.xlu0 %5452
    %v5454 = vsel %vm868, %v5450, 0.0
    %5455 = vadd.xlane.f32.xlu0 %v5454
    %v5456 = vpop.xlane.xlu0 %5455
    %v5457 = vrcp.pop %v5453
    %v5458 = vrcp.pop %v5456
    %v5459 = vmul.f32 %v5448, %v5457
    %v5460 = vmul.f32 %v5450, %v5458
    %v5462 = vsel %vm868, %v5459, 0
    %5464 = vmatprep.subr.mxu0 0.0
    %5465 = vmatpush1.msra.mxu0 0.0
    %5466 = vmatprep.subr.mxu0 0.0
    %5467 = vmatpush1.msra.mxu0 0.0
    %5468 = vmatprep.subr.mxu0 0.0
    %5469 = vmatpush1.msra.mxu0 0.0
    %5470 = vmatprep.subr.mxu0 0.0
    %5471 = vmatpush1.msra.mxu0 0.0
    %5472 = vmatprep.subr.mxu0 0.0
    %5473 = vmatpush1.msra.mxu0 0.0
    %5474 = vmatprep.subr.mxu0 0.0
    %5475 = vmatpush1.msra.mxu0 0.0
    %5476 = vmatprep.subr.mxu0 0.0
    %5477 = vmatpush1.msra.mxu0 0.0
    %5478 = vmatprep.subr.mxu0 0.0
    %5479 = vmatpush1.msra.mxu0 0.0
    %5480 = vmatprep.subr.mxu0 0.0
    %5481 = vmatpush1.msra.mxu0 0.0
    %5482 = vmatprep.subr.mxu0 0.0
    %5483 = vmatpush1.msra.mxu0 0.0
    %5484 = vmatprep.subr.mxu0 0.0
    %5485 = vmatpush1.msra.mxu0 0.0
    %5486 = vmatprep.subr.mxu0 0.0
    %5487 = vmatpush1.msra.mxu0 0.0
    %5488 = vmatprep.subr.mxu0 0.0
    %5489 = vmatpush1.msra.mxu0 0.0
    %5490 = vmatprep.subr.mxu0 0.0
    %5491 = vmatpush1.msra.mxu0 0.0
    %5492 = vmatprep.subr.mxu0 0.0
    %5493 = vmatpush1.msra.mxu0 0.0
    %5494 = vmatprep.subr.mxu0 0.0
    %5495 = vmatpush1.msra.mxu0 %v5293
    %5496 = vmatprep.subr.mxu0 0.0
    %5497 = vmatpush2.msra.mxu0 0.0
    %5498 = vmatprep.subr.mxu0 0.0
    %5499 = vmatpush2.msra.mxu0 0.0
    %5500 = vmatprep.subr.mxu0 0.0
    %5501 = vmatpush2.msra.mxu0 0.0
    %5502 = vmatprep.subr.mxu0 0.0
    %5503 = vmatpush2.msra.mxu0 0.0
    %5504 = vmatprep.subr.mxu0 0.0
    %5505 = vmatpush2.msra.mxu0 0.0
    %5506 = vmatprep.subr.mxu0 0.0
    %5507 = vmatpush2.msra.mxu0 0.0
    %5508 = vmatprep.subr.mxu0 0.0
    %5509 = vmatpush2.msra.mxu0 0.0
    %5510 = vmatprep.subr.mxu0 0.0
    %5511 = vmatpush2.msra.mxu0 0.0
    %5512 = vmatprep.subr.mxu0 0.0
    %5513 = vmatpush2.msra.mxu0 0.0
    %5514 = vmatprep.subr.mxu0 0.0
    %5515 = vmatpush2.msra.mxu0 0.0
    %5516 = vmatprep.subr.mxu0 0.0
    %5517 = vmatpush2.msra.mxu0 0.0
    %5518 = vmatprep.subr.mxu0 0.0
    %5519 = vmatpush2.msra.mxu0 0.0
    %5520 = vmatprep.subr.mxu0 0.0
    %5521 = vmatpush2.msra.mxu0 0.0
    %5522 = vmatprep.subr.mxu0 0.0
    %5523 = vmatpush2.msra.mxu0 0.0
    %5524 = vmatprep.subr.mxu0 0.0
    %5525 = vmatpush2.msra.mxu0 0.0
    %5526 = vmatprep.subr.mxu0 0.0
    %5527 = vmatpush2.msra.mxu0 0.0
    %5528 = vmatprep.mubr.f32.mxu0 0.0
    %5529 = vmatmul.mubr.f32.gmra.mxu0 %v5462
    %v5530 = vpop.f32.mrf.mxu0
    %v5531 = vadd.f32 0.0, %v5530
    %v5532 = vpop.f32.mrf.mxu0
    %5533 = vdwg.mxu0
    %v5535 = vsel %vm868, %v5460, 0
    %5537 = vmatprep.subr.mxu0 0.0
    %5538 = vmatpush1.msra.mxu0 0.0
    %5539 = vmatprep.subr.mxu0 0.0
    %5540 = vmatpush1.msra.mxu0 0.0
    %5541 = vmatprep.subr.mxu0 0.0
    %5542 = vmatpush1.msra.mxu0 0.0
    %5543 = vmatprep.subr.mxu0 0.0
    %5544 = vmatpush1.msra.mxu0 0.0
    %5545 = vmatprep.subr.mxu0 0.0
    %5546 = vmatpush1.msra.mxu0 0.0
    %5547 = vmatprep.subr.mxu0 0.0
    %5548 = vmatpush1.msra.mxu0 0.0
    %5549 = vmatprep.subr.mxu0 0.0
    %5550 = vmatpush1.msra.mxu0 0.0
    %5551 = vmatprep.subr.mxu0 0.0
    %5552 = vmatpush1.msra.mxu0 0.0
    %5553 = vmatprep.subr.mxu0 0.0
    %5554 = vmatpush1.msra.mxu0 0.0
    %5555 = vmatprep.subr.mxu0 0.0
    %5556 = vmatpush1.msra.mxu0 0.0
    %5557 = vmatprep.subr.mxu0 0.0
    %5558 = vmatpush1.msra.mxu0 0.0
    %5559 = vmatprep.subr.mxu0 0.0
    %5560 = vmatpush1.msra.mxu0 0.0
    %5561 = vmatprep.subr.mxu0 0.0
    %5562 = vmatpush1.msra.mxu0 0.0
    %5563 = vmatprep.subr.mxu0 0.0
    %5564 = vmatpush1.msra.mxu0 0.0
    %5565 = vmatprep.subr.mxu0 0.0
    %5566 = vmatpush1.msra.mxu0 0.0
    %5567 = vmatprep.subr.mxu0 0.0
    %5568 = vmatpush1.msra.mxu0 %v5296
    %5569 = vmatprep.subr.mxu0 0.0
    %5570 = vmatpush2.msra.mxu0 0.0
    %5571 = vmatprep.subr.mxu0 0.0
    %5572 = vmatpush2.msra.mxu0 0.0
    %5573 = vmatprep.subr.mxu0 0.0
    %5574 = vmatpush2.msra.mxu0 0.0
    %5575 = vmatprep.subr.mxu0 0.0
    %5576 = vmatpush2.msra.mxu0 0.0
    %5577 = vmatprep.subr.mxu0 0.0
    %5578 = vmatpush2.msra.mxu0 0.0
    %5579 = vmatprep.subr.mxu0 0.0
    %5580 = vmatpush2.msra.mxu0 0.0
    %5581 = vmatprep.subr.mxu0 0.0
    %5582 = vmatpush2.msra.mxu0 0.0
    %5583 = vmatprep.subr.mxu0 0.0
    %5584 = vmatpush2.msra.mxu0 0.0
    %5585 = vmatprep.subr.mxu0 0.0
    %5586 = vmatpush2.msra.mxu0 0.0
    %5587 = vmatprep.subr.mxu0 0.0
    %5588 = vmatpush2.msra.mxu0 0.0
    %5589 = vmatprep.subr.mxu0 0.0
    %5590 = vmatpush2.msra.mxu0 0.0
    %5591 = vmatprep.subr.mxu0 0.0
    %5592 = vmatpush2.msra.mxu0 0.0
    %5593 = vmatprep.subr.mxu0 0.0
    %5594 = vmatpush2.msra.mxu0 0.0
    %5595 = vmatprep.subr.mxu0 0.0
    %5596 = vmatpush2.msra.mxu0 0.0
    %5597 = vmatprep.subr.mxu0 0.0
    %5598 = vmatpush2.msra.mxu0 0.0
    %5599 = vmatprep.subr.mxu0 0.0
    %5600 = vmatpush2.msra.mxu0 0.0
    %5601 = vmatprep.mubr.f32.mxu0 0.0
    %5602 = vmatmul.mubr.f32.gmra.mxu0 %v5535
    %v5603 = vpop.f32.mrf.mxu0
    %v5604 = vadd.f32 0.0, %v5603
    %v5605 = vpop.f32.mrf.mxu0
    %5606 = vdwg.mxu0
    %s5607 = scalar_lea.vmem [#allocation11], 448
    %v5608 = vld [vmem:[%s5607] sm:$0xf]
    %v5609 = vld [vmem:[%s5607 + $0x4] sm:$0xf]
    %v5610 = vld [vmem:[%s5607 + $0x8] sm:$0xf]
    %v5611 = vld [vmem:[%s5607 + $0xc] sm:$0xf]
    %v5612 = vld [vmem:[%s5607 + $0x10] sm:$0xf]
    %v5613 = vld [vmem:[%s5607 + $0x14] sm:$0xf]
    %v5614 = vld [vmem:[%s5607 + $0x18] sm:$0xf]
    %v5615 = vld [vmem:[%s5607 + $0x1c] sm:$0xf]
    %v5616 = vld [vmem:[%s5607 + $0x20] sm:$0xf]
    %v5617 = vld [vmem:[%s5607 + $0x24] sm:$0xf]
    %v5618 = vld [vmem:[%s5607 + $0x28] sm:$0xf]
    %v5619 = vld [vmem:[%s5607 + $0x2c] sm:$0xf]
    %v5620 = vld [vmem:[%s5607 + $0x30] sm:$0xf]
    %v5621 = vld [vmem:[%s5607 + $0x34] sm:$0xf]
    %v5622 = vld [vmem:[%s5607 + $0x38] sm:$0xf]
    %v5623 = vld [vmem:[%s5607 + $0x3c] sm:$0xf]
    %s5624 = scalar_lea.vmem %s8, 7
    %v5625 = vld [vmem:[%s5624] sm:$0x1]
    %v5627 = vlaneseq
    %v5628 = vshrl.u32 %v5627, 7
    %v5629 = vsub.s32 0, %v5628
    %v5630 = vrot.slane %v5625, %v5629
    %v5648 = vunpack.c.l.b16 %v5608
    %v5649 = vunpack.c.l.b16 %v5609
    %v5650 = vunpack.c.l.b16 %v5610
    %v5651 = vunpack.c.l.b16 %v5611
    %v5652 = vunpack.c.l.b16 %v5612
    %v5653 = vunpack.c.l.b16 %v5613
    %v5654 = vunpack.c.l.b16 %v5614
    %v5655 = vunpack.c.l.b16 %v5615
    %v5656 = vunpack.c.l.b16 %v5616
    %v5657 = vunpack.c.l.b16 %v5617
    %v5658 = vunpack.c.l.b16 %v5618
    %v5659 = vunpack.c.l.b16 %v5619
    %v5660 = vunpack.c.l.b16 %v5620
    %v5661 = vunpack.c.l.b16 %v5621
    %v5662 = vunpack.c.l.b16 %v5622
    %v5663 = vunpack.c.l.b16 %v5623
    %v5664 = vpack.c.b16 %v5649, %v5648
    %v5665 = vpack.c.b16 %v5651, %v5650
    %v5666 = vpack.c.b16 %v5653, %v5652
    %v5667 = vpack.c.b16 %v5655, %v5654
    %v5668 = vpack.c.b16 %v5657, %v5656
    %v5669 = vpack.c.b16 %v5659, %v5658
    %v5670 = vpack.c.b16 %v5661, %v5660
    %v5671 = vpack.c.b16 %v5663, %v5662
    %5680 = vmatprep.subr.bf16.mxu0 0
    %5681 = vmatpush1.bf16.msra.mxu0 %v5671
    %5682 = vmatprep.subr.bf16.mxu0 0
    %5683 = vmatpush1.bf16.msra.mxu0 %v5670
    %5684 = vmatprep.subr.bf16.mxu0 0
    %5685 = vmatpush1.bf16.msra.mxu0 %v5669
    %5686 = vmatprep.subr.bf16.mxu0 0
    %5687 = vmatpush1.bf16.msra.mxu0 %v5668
    %5688 = vmatprep.subr.bf16.mxu0 0
    %5689 = vmatpush1.bf16.msra.mxu0 %v5667
    %5690 = vmatprep.subr.bf16.mxu0 0
    %5691 = vmatpush1.bf16.msra.mxu0 %v5666
    %5692 = vmatprep.subr.bf16.mxu0 0
    %5693 = vmatpush1.bf16.msra.mxu0 %v5665
    %5694 = vmatprep.subr.bf16.mxu0 0
    %5695 = vmatpush1.bf16.msra.mxu0 %v5664
    %5696 = vmatprep.subr.bf16.mxu0 0
    %5697 = vmatpush2.bf16.msra.mxu0 0
    %5698 = vmatprep.subr.bf16.mxu0 0
    %5699 = vmatpush2.bf16.msra.mxu0 0
    %5700 = vmatprep.subr.bf16.mxu0 0
    %5701 = vmatpush2.bf16.msra.mxu0 0
    %5702 = vmatprep.subr.bf16.mxu0 0
    %5703 = vmatpush2.bf16.msra.mxu0 0
    %5704 = vmatprep.subr.bf16.mxu0 0
    %5705 = vmatpush2.bf16.msra.mxu0 0
    %5706 = vmatprep.subr.bf16.mxu0 0
    %5707 = vmatpush2.bf16.msra.mxu0 0
    %5708 = vmatprep.subr.bf16.mxu0 0
    %5709 = vmatpush2.bf16.msra.mxu0 0
    %5710 = vmatprep.subr.bf16.mxu0 0
    %5711 = vmatpush2.bf16.msra.mxu0 0
    %5712 = vmatprep.mubr.bf16.mxu0 0
    %5713 = vmatmul.mubr.bf16.gmra.mxu0 %v3656
    %v5714 = vpop.f32.mrf.mxu0
    %v5715 = vadd.f32 %v5630, %v5714
    %v5716 = vpop.f32.mrf.mxu0
    %v5717 = vpop.f32.mrf.mxu0
    %v5718 = vadd.f32 %v5630, %v5717
    %v5719 = vpop.f32.mrf.mxu0
    %5720 = vdwg.mxu0
    %s5721 = scalar_lea.vmem [#allocation13], 448
    %v5722 = vld [vmem:[%s5721] sm:$0xf]
    %v5723 = vld [vmem:[%s5721 + $0x4] sm:$0xf]
    %v5724 = vld [vmem:[%s5721 + $0x8] sm:$0xf]
    %v5725 = vld [vmem:[%s5721 + $0xc] sm:$0xf]
    %v5726 = vld [vmem:[%s5721 + $0x10] sm:$0xf]
    %v5727 = vld [vmem:[%s5721 + $0x14] sm:$0xf]
    %v5728 = vld [vmem:[%s5721 + $0x18] sm:$0xf]
    %v5729 = vld [vmem:[%s5721 + $0x1c] sm:$0xf]
    %v5730 = vld [vmem:[%s5721 + $0x20] sm:$0xf]
    %v5731 = vld [vmem:[%s5721 + $0x24] sm:$0xf]
    %v5732 = vld [vmem:[%s5721 + $0x28] sm:$0xf]
    %v5733 = vld [vmem:[%s5721 + $0x2c] sm:$0xf]
    %v5734 = vld [vmem:[%s5721 + $0x30] sm:$0xf]
    %v5735 = vld [vmem:[%s5721 + $0x34] sm:$0xf]
    %v5736 = vld [vmem:[%s5721 + $0x38] sm:$0xf]
    %v5737 = vld [vmem:[%s5721 + $0x3c] sm:$0xf]
    %s5738 = scalar_lea.vmem %s9, 7
    %v5739 = vld [vmem:[%s5738] sm:$0x1]
    %v5741 = vlaneseq
    %v5742 = vshrl.u32 %v5741, 7
    %v5743 = vsub.s32 0, %v5742
    %v5744 = vrot.slane %v5739, %v5743
    %v5762 = vunpack.c.l.b16 %v5722
    %v5763 = vunpack.c.l.b16 %v5723
    %v5764 = vunpack.c.l.b16 %v5724
    %v5765 = vunpack.c.l.b16 %v5725
    %v5766 = vunpack.c.l.b16 %v5726
    %v5767 = vunpack.c.l.b16 %v5727
    %v5768 = vunpack.c.l.b16 %v5728
    %v5769 = vunpack.c.l.b16 %v5729
    %v5770 = vunpack.c.l.b16 %v5730
    %v5771 = vunpack.c.l.b16 %v5731
    %v5772 = vunpack.c.l.b16 %v5732
    %v5773 = vunpack.c.l.b16 %v5733
    %v5774 = vunpack.c.l.b16 %v5734
    %v5775 = vunpack.c.l.b16 %v5735
    %v5776 = vunpack.c.l.b16 %v5736
    %v5777 = vunpack.c.l.b16 %v5737
    %v5778 = vpack.c.b16 %v5763, %v5762
    %v5779 = vpack.c.b16 %v5765, %v5764
    %v5780 = vpack.c.b16 %v5767, %v5766
    %v5781 = vpack.c.b16 %v5769, %v5768
    %v5782 = vpack.c.b16 %v5771, %v5770
    %v5783 = vpack.c.b16 %v5773, %v5772
    %v5784 = vpack.c.b16 %v5775, %v5774
    %v5785 = vpack.c.b16 %v5777, %v5776
    %5794 = vmatprep.subr.bf16.mxu0 0
    %5795 = vmatpush1.bf16.msra.mxu0 %v5785
    %5796 = vmatprep.subr.bf16.mxu0 0
    %5797 = vmatpush1.bf16.msra.mxu0 %v5784
    %5798 = vmatprep.subr.bf16.mxu0 0
    %5799 = vmatpush1.bf16.msra.mxu0 %v5783
    %5800 = vmatprep.subr.bf16.mxu0 0
    %5801 = vmatpush1.bf16.msra.mxu0 %v5782
    %5802 = vmatprep.subr.bf16.mxu0 0
    %5803 = vmatpush1.bf16.msra.mxu0 %v5781
    %5804 = vmatprep.subr.bf16.mxu0 0
    %5805 = vmatpush1.bf16.msra.mxu0 %v5780
    %5806 = vmatprep.subr.bf16.mxu0 0
    %5807 = vmatpush1.bf16.msra.mxu0 %v5779
    %5808 = vmatprep.subr.bf16.mxu0 0
    %5809 = vmatpush1.bf16.msra.mxu0 %v5778
    %5810 = vmatprep.subr.bf16.mxu0 0
    %5811 = vmatpush2.bf16.msra.mxu0 0
    %5812 = vmatprep.subr.bf16.mxu0 0
    %5813 = vmatpush2.bf16.msra.mxu0 0
    %5814 = vmatprep.subr.bf16.mxu0 0
    %5815 = vmatpush2.bf16.msra.mxu0 0
    %5816 = vmatprep.subr.bf16.mxu0 0
    %5817 = vmatpush2.bf16.msra.mxu0 0
    %5818 = vmatprep.subr.bf16.mxu0 0
    %5819 = vmatpush2.bf16.msra.mxu0 0
    %5820 = vmatprep.subr.bf16.mxu0 0
    %5821 = vmatpush2.bf16.msra.mxu0 0
    %5822 = vmatprep.subr.bf16.mxu0 0
    %5823 = vmatpush2.bf16.msra.mxu0 0
    %5824 = vmatprep.subr.bf16.mxu0 0
    %5825 = vmatpush2.bf16.msra.mxu0 0
    %5826 = vmatprep.mubr.bf16.mxu0 0
    %5827 = vmatmul.mubr.bf16.gmra.mxu0 %v3656
    %v5828 = vpop.f32.mrf.mxu0
    %v5829 = vadd.f32 %v5744, %v5828
    %v5830 = vpop.f32.mrf.mxu0
    %v5831 = vpop.f32.mrf.mxu0
    %v5832 = vadd.f32 %v5744, %v5831
    %v5833 = vpop.f32.mrf.mxu0
    %5834 = vdwg.mxu0
    %s5835 = scalar_lea.vmem [#allocation14], 448
    %v5836 = vld [vmem:[%s5835] sm:$0xf]
    %v5837 = vld [vmem:[%s5835 + $0x4] sm:$0xf]
    %v5838 = vld [vmem:[%s5835 + $0x8] sm:$0xf]
    %v5839 = vld [vmem:[%s5835 + $0xc] sm:$0xf]
    %v5840 = vld [vmem:[%s5835 + $0x10] sm:$0xf]
    %v5841 = vld [vmem:[%s5835 + $0x14] sm:$0xf]
    %v5842 = vld [vmem:[%s5835 + $0x18] sm:$0xf]
    %v5843 = vld [vmem:[%s5835 + $0x1c] sm:$0xf]
    %v5844 = vld [vmem:[%s5835 + $0x20] sm:$0xf]
    %v5845 = vld [vmem:[%s5835 + $0x24] sm:$0xf]
    %v5846 = vld [vmem:[%s5835 + $0x28] sm:$0xf]
    %v5847 = vld [vmem:[%s5835 + $0x2c] sm:$0xf]
    %v5848 = vld [vmem:[%s5835 + $0x30] sm:$0xf]
    %v5849 = vld [vmem:[%s5835 + $0x34] sm:$0xf]
    %v5850 = vld [vmem:[%s5835 + $0x38] sm:$0xf]
    %v5851 = vld [vmem:[%s5835 + $0x3c] sm:$0xf]
    %s5852 = scalar_lea.vmem [#allocation16], 7
    %v5853 = vld [vmem:[%s5852] sm:$0x1]
    %v5855 = vlaneseq
    %v5856 = vshrl.u32 %v5855, 7
    %v5857 = vsub.s32 0, %v5856
    %v5858 = vrot.slane %v5853, %v5857
    %v5876 = vunpack.c.l.b16 %v5836
    %v5877 = vunpack.c.l.b16 %v5837
    %v5878 = vunpack.c.l.b16 %v5838
    %v5879 = vunpack.c.l.b16 %v5839
    %v5880 = vunpack.c.l.b16 %v5840
    %v5881 = vunpack.c.l.b16 %v5841
    %v5882 = vunpack.c.l.b16 %v5842
    %v5883 = vunpack.c.l.b16 %v5843
    %v5884 = vunpack.c.l.b16 %v5844
    %v5885 = vunpack.c.l.b16 %v5845
    %v5886 = vunpack.c.l.b16 %v5846
    %v5887 = vunpack.c.l.b16 %v5847
    %v5888 = vunpack.c.l.b16 %v5848
    %v5889 = vunpack.c.l.b16 %v5849
    %v5890 = vunpack.c.l.b16 %v5850
    %v5891 = vunpack.c.l.b16 %v5851
    %v5892 = vpack.c.b16 %v5877, %v5876
    %v5893 = vpack.c.b16 %v5879, %v5878
    %v5894 = vpack.c.b16 %v5881, %v5880
    %v5895 = vpack.c.b16 %v5883, %v5882
    %v5896 = vpack.c.b16 %v5885, %v5884
    %v5897 = vpack.c.b16 %v5887, %v5886
    %v5898 = vpack.c.b16 %v5889, %v5888
    %v5899 = vpack.c.b16 %v5891, %v5890
    %5908 = vmatprep.subr.bf16.mxu0 0
    %5909 = vmatpush1.bf16.msra.mxu0 %v5899
    %5910 = vmatprep.subr.bf16.mxu0 0
    %5911 = vmatpush1.bf16.msra.mxu0 %v5898
    %5912 = vmatprep.subr.bf16.mxu0 0
    %5913 = vmatpush1.bf16.msra.mxu0 %v5897
    %5914 = vmatprep.subr.bf16.mxu0 0
    %5915 = vmatpush1.bf16.msra.mxu0 %v5896
    %5916 = vmatprep.subr.bf16.mxu0 0
    %5917 = vmatpush1.bf16.msra.mxu0 %v5895
    %5918 = vmatprep.subr.bf16.mxu0 0
    %5919 = vmatpush1.bf16.msra.mxu0 %v5894
    %5920 = vmatprep.subr.bf16.mxu0 0
    %5921 = vmatpush1.bf16.msra.mxu0 %v5893
    %5922 = vmatprep.subr.bf16.mxu0 0
    %5923 = vmatpush1.bf16.msra.mxu0 %v5892
    %5924 = vmatprep.subr.bf16.mxu0 0
    %5925 = vmatpush2.bf16.msra.mxu0 0
    %5926 = vmatprep.subr.bf16.mxu0 0
    %5927 = vmatpush2.bf16.msra.mxu0 0
    %5928 = vmatprep.subr.bf16.mxu0 0
    %5929 = vmatpush2.bf16.msra.mxu0 0
    %5930 = vmatprep.subr.bf16.mxu0 0
    %5931 = vmatpush2.bf16.msra.mxu0 0
    %5932 = vmatprep.subr.bf16.mxu0 0
    %5933 = vmatpush2.bf16.msra.mxu0 0
    %5934 = vmatprep.subr.bf16.mxu0 0
    %5935 = vmatpush2.bf16.msra.mxu0 0
    %5936 = vmatprep.subr.bf16.mxu0 0
    %5937 = vmatpush2.bf16.msra.mxu0 0
    %5938 = vmatprep.subr.bf16.mxu0 0
    %5939 = vmatpush2.bf16.msra.mxu0 0
    %5940 = vmatprep.mubr.bf16.mxu0 0
    %5941 = vmatmul.mubr.bf16.gmra.mxu0 %v3656
    %v5942 = vpop.f32.mrf.mxu0
    %v5943 = vadd.f32 %v5858, %v5942
    %v5944 = vpop.f32.mrf.mxu0
    %v5945 = vpop.f32.mrf.mxu0
    %v5946 = vadd.f32 %v5858, %v5945
    %v5947 = vpop.f32.mrf.mxu0
    %5948 = vdwg.mxu0
    %5949 = vmatprep.subr.mxu0 0.0
    %5950 = vmatpush1.xpose.msra.mxu0 0.0
    %5951 = vmatprep.subr.mxu0 0.0
    %5952 = vmatpush1.xpose.msra.mxu0 0.0
    %5953 = vmatprep.subr.mxu0 0.0
    %5954 = vmatpush1.xpose.msra.mxu0 0.0
    %5955 = vmatprep.subr.mxu0 0.0
    %5956 = vmatpush1.xpose.msra.mxu0 0.0
    %5957 = vmatprep.subr.mxu0 0.0
    %5958 = vmatpush1.xpose.msra.mxu0 0.0
    %5959 = vmatprep.subr.mxu0 0.0
    %5960 = vmatpush1.xpose.msra.mxu0 0.0
    %5961 = vmatprep.subr.mxu0 0.0
    %5962 = vmatpush1.xpose.msra.mxu0 0.0
    %5963 = vmatprep.subr.mxu0 0.0
    %5964 = vmatpush1.xpose.msra.mxu0 0.0
    %5965 = vmatprep.subr.mxu0 0.0
    %5966 = vmatpush1.xpose.msra.mxu0 0.0
    %5967 = vmatprep.subr.mxu0 0.0
    %5968 = vmatpush1.xpose.msra.mxu0 0.0
    %5969 = vmatprep.subr.mxu0 0.0
    %5970 = vmatpush1.xpose.msra.mxu0 0.0
    %5971 = vmatprep.subr.mxu0 0.0
    %5972 = vmatpush1.xpose.msra.mxu0 0.0
    %5973 = vmatprep.subr.mxu0 0.0
    %5974 = vmatpush1.xpose.msra.mxu0 0.0
    %5975 = vmatprep.subr.mxu0 0.0
    %5976 = vmatpush1.xpose.msra.mxu0 0.0
    %5977 = vmatprep.subr.mxu0 0.0
    %5978 = vmatpush1.xpose.msra.mxu0 0.0
    %5979 = vmatprep.subr.mxu0 0.0
    %5980 = vmatpush1.xpose.msra.mxu0 %v5829
    %5981 = vmatprep.subr.mxu0 0.0
    %5982 = vmatpush2.xpose.msra.mxu0 0.0
    %5983 = vmatprep.subr.mxu0 0.0
    %5984 = vmatpush2.xpose.msra.mxu0 0.0
    %5985 = vmatprep.subr.mxu0 0.0
    %5986 = vmatpush2.xpose.msra.mxu0 0.0
    %5987 = vmatprep.subr.mxu0 0.0
    %5988 = vmatpush2.xpose.msra.mxu0 0.0
    %5989 = vmatprep.subr.mxu0 0.0
    %5990 = vmatpush2.xpose.msra.mxu0 0.0
    %5991 = vmatprep.subr.mxu0 0.0
    %5992 = vmatpush2.xpose.msra.mxu0 0.0
    %5993 = vmatprep.subr.mxu0 0.0
    %5994 = vmatpush2.xpose.msra.mxu0 0.0
    %5995 = vmatprep.subr.mxu0 0.0
    %5996 = vmatpush2.xpose.msra.mxu0 0.0
    %5997 = vmatprep.subr.mxu0 0.0
    %5998 = vmatpush2.xpose.msra.mxu0 0.0
    %5999 = vmatprep.subr.mxu0 0.0
    %6000 = vmatpush2.xpose.msra.mxu0 0.0
    %6001 = vmatprep.subr.mxu0 0.0
    %6002 = vmatpush2.xpose.msra.mxu0 0.0
    %6003 = vmatprep.subr.mxu0 0.0
    %6004 = vmatpush2.xpose.msra.mxu0 0.0
    %6005 = vmatprep.subr.mxu0 0.0
    %6006 = vmatpush2.xpose.msra.mxu0 0.0
    %6007 = vmatprep.subr.mxu0 0.0
    %6008 = vmatpush2.xpose.msra.mxu0 0.0
    %6009 = vmatprep.subr.mxu0 0.0
    %6010 = vmatpush2.xpose.msra.mxu0 0.0
    %6011 = vmatprep.subr.mxu0 0.0
    %6012 = vmatpush2.xpose.msra.mxu0 0.0
    %6013 = vmatprep.mubr.f32.mxu0 0.0
    %6014 = vmatmul.mubr.f32.gmra.mxu0 %v5715
    %v6015 = vpop.f32.mrf.mxu0
    %v6016 = vadd.f32 0.0, %v6015
    %v6017 = vpop.f32.mrf.mxu0
    %6018 = vdwg.mxu0
    %6019 = vmatprep.subr.mxu0 0.0
    %6020 = vmatpush1.xpose.msra.mxu0 0.0
    %6021 = vmatprep.subr.mxu0 0.0
    %6022 = vmatpush1.xpose.msra.mxu0 0.0
    %6023 = vmatprep.subr.mxu0 0.0
    %6024 = vmatpush1.xpose.msra.mxu0 0.0
    %6025 = vmatprep.subr.mxu0 0.0
    %6026 = vmatpush1.xpose.msra.mxu0 0.0
    %6027 = vmatprep.subr.mxu0 0.0
    %6028 = vmatpush1.xpose.msra.mxu0 0.0
    %6029 = vmatprep.subr.mxu0 0.0
    %6030 = vmatpush1.xpose.msra.mxu0 0.0
    %6031 = vmatprep.subr.mxu0 0.0
    %6032 = vmatpush1.xpose.msra.mxu0 0.0
    %6033 = vmatprep.subr.mxu0 0.0
    %6034 = vmatpush1.xpose.msra.mxu0 0.0
    %6035 = vmatprep.subr.mxu0 0.0
    %6036 = vmatpush1.xpose.msra.mxu0 0.0
    %6037 = vmatprep.subr.mxu0 0.0
    %6038 = vmatpush1.xpose.msra.mxu0 0.0
    %6039 = vmatprep.subr.mxu0 0.0
    %6040 = vmatpush1.xpose.msra.mxu0 0.0
    %6041 = vmatprep.subr.mxu0 0.0
    %6042 = vmatpush1.xpose.msra.mxu0 0.0
    %6043 = vmatprep.subr.mxu0 0.0
    %6044 = vmatpush1.xpose.msra.mxu0 0.0
    %6045 = vmatprep.subr.mxu0 0.0
    %6046 = vmatpush1.xpose.msra.mxu0 0.0
    %6047 = vmatprep.subr.mxu0 0.0
    %6048 = vmatpush1.xpose.msra.mxu0 0.0
    %6049 = vmatprep.subr.mxu0 0.0
    %6050 = vmatpush1.xpose.msra.mxu0 %v5832
    %6051 = vmatprep.subr.mxu0 0.0
    %6052 = vmatpush2.xpose.msra.mxu0 0.0
    %6053 = vmatprep.subr.mxu0 0.0
    %6054 = vmatpush2.xpose.msra.mxu0 0.0
    %6055 = vmatprep.subr.mxu0 0.0
    %6056 = vmatpush2.xpose.msra.mxu0 0.0
    %6057 = vmatprep.subr.mxu0 0.0
    %6058 = vmatpush2.xpose.msra.mxu0 0.0
    %6059 = vmatprep.subr.mxu0 0.0
    %6060 = vmatpush2.xpose.msra.mxu0 0.0
    %6061 = vmatprep.subr.mxu0 0.0
    %6062 = vmatpush2.xpose.msra.mxu0 0.0
    %6063 = vmatprep.subr.mxu0 0.0
    %6064 = vmatpush2.xpose.msra.mxu0 0.0
    %6065 = vmatprep.subr.mxu0 0.0
    %6066 = vmatpush2.xpose.msra.mxu0 0.0
    %6067 = vmatprep.subr.mxu0 0.0
    %6068 = vmatpush2.xpose.msra.mxu0 0.0
    %6069 = vmatprep.subr.mxu0 0.0
    %6070 = vmatpush2.xpose.msra.mxu0 0.0
    %6071 = vmatprep.subr.mxu0 0.0
    %6072 = vmatpush2.xpose.msra.mxu0 0.0
    %6073 = vmatprep.subr.mxu0 0.0
    %6074 = vmatpush2.xpose.msra.mxu0 0.0
    %6075 = vmatprep.subr.mxu0 0.0
    %6076 = vmatpush2.xpose.msra.mxu0 0.0
    %6077 = vmatprep.subr.mxu0 0.0
    %6078 = vmatpush2.xpose.msra.mxu0 0.0
    %6079 = vmatprep.subr.mxu0 0.0
    %6080 = vmatpush2.xpose.msra.mxu0 0.0
    %6081 = vmatprep.subr.mxu0 0.0
    %6082 = vmatpush2.xpose.msra.mxu0 0.0
    %6083 = vmatprep.mubr.f32.mxu0 0.0
    %6084 = vmatmul.mubr.f32.gmra.mxu0 %v5718
    %v6085 = vpop.f32.mrf.mxu0
    %v6086 = vadd.f32 0.0, %v6085
    %v6087 = vpop.f32.mrf.mxu0
    %6088 = vdwg.mxu0
    %v6089 = vsel %vm868, %v6016, -inf
    %6090 = vmax.xlane.f32.xlu0 %v6089
    %v6091 = vpop.xlane.xlu0 %6090
    %v6092 = vsel %vm868, %v6086, -inf
    %6093 = vmax.xlane.f32.xlu0 %v6092
    %v6094 = vpop.xlane.xlu0 %6093
    %v6095 = vsub.f32 %v6016, %v6091
    %v6096 = vsub.f32 %v6086, %v6094
    %v6097 = vmul.f32 %v6095, 1.442695
    %v6098 = vpow.pop %v6097
    %v6099 = vmul.f32 %v6096, 1.442695
    %v6100 = vpow.pop %v6099
    %v6101 = vsel %vm868, %v6098, 0.0
    %6102 = vadd.xlane.f32.xlu0 %v6101
    %v6103 = vpop.xlane.xlu0 %6102
    %v6104 = vsel %vm868, %v6100, 0.0
    %6105 = vadd.xlane.f32.xlu0 %v6104
    %v6106 = vpop.xlane.xlu0 %6105
    %v6107 = vrcp.pop %v6103
    %v6108 = vrcp.pop %v6106
    %v6109 = vmul.f32 %v6098, %v6107
    %v6110 = vmul.f32 %v6100, %v6108
    %v6112 = vsel %vm868, %v6109, 0
    %6114 = vmatprep.subr.mxu0 0.0
    %6115 = vmatpush1.msra.mxu0 0.0
    %6116 = vmatprep.subr.mxu0 0.0
    %6117 = vmatpush1.msra.mxu0 0.0
    %6118 = vmatprep.subr.mxu0 0.0
    %6119 = vmatpush1.msra.mxu0 0.0
    %6120 = vmatprep.subr.mxu0 0.0
    %6121 = vmatpush1.msra.mxu0 0.0
    %6122 = vmatprep.subr.mxu0 0.0
    %6123 = vmatpush1.msra.mxu0 0.0
    %6124 = vmatprep.subr.mxu0 0.0
    %6125 = vmatpush1.msra.mxu0 0.0
    %6126 = vmatprep.subr.mxu0 0.0
    %6127 = vmatpush1.msra.mxu0 0.0
    %6128 = vmatprep.subr.mxu0 0.0
    %6129 = vmatpush1.msra.mxu0 0.0
    %6130 = vmatprep.subr.mxu0 0.0
    %6131 = vmatpush1.msra.mxu0 0.0
    %6132 = vmatprep.subr.mxu0 0.0
    %6133 = vmatpush1.msra.mxu0 0.0
    %6134 = vmatprep.subr.mxu0 0.0
    %6135 = vmatpush1.msra.mxu0 0.0
    %6136 = vmatprep.subr.mxu0 0.0
    %6137 = vmatpush1.msra.mxu0 0.0
    %6138 = vmatprep.subr.mxu0 0.0
    %6139 = vmatpush1.msra.mxu0 0.0
    %6140 = vmatprep.subr.mxu0 0.0
    %6141 = vmatpush1.msra.mxu0 0.0
    %6142 = vmatprep.subr.mxu0 0.0
    %6143 = vmatpush1.msra.mxu0 0.0
    %6144 = vmatprep.subr.mxu0 0.0
    %6145 = vmatpush1.msra.mxu0 %v5943
    %6146 = vmatprep.subr.mxu0 0.0
    %6147 = vmatpush2.msra.mxu0 0.0
    %6148 = vmatprep.subr.mxu0 0.0
    %6149 = vmatpush2.msra.mxu0 0.0
    %6150 = vmatprep.subr.mxu0 0.0
    %6151 = vmatpush2.msra.mxu0 0.0
    %6152 = vmatprep.subr.mxu0 0.0
    %6153 = vmatpush2.msra.mxu0 0.0
    %6154 = vmatprep.subr.mxu0 0.0
    %6155 = vmatpush2.msra.mxu0 0.0
    %6156 = vmatprep.subr.mxu0 0.0
    %6157 = vmatpush2.msra.mxu0 0.0
    %6158 = vmatprep.subr.mxu0 0.0
    %6159 = vmatpush2.msra.mxu0 0.0
    %6160 = vmatprep.subr.mxu0 0.0
    %6161 = vmatpush2.msra.mxu0 0.0
    %6162 = vmatprep.subr.mxu0 0.0
    %6163 = vmatpush2.msra.mxu0 0.0
    %6164 = vmatprep.subr.mxu0 0.0
    %6165 = vmatpush2.msra.mxu0 0.0
    %6166 = vmatprep.subr.mxu0 0.0
    %6167 = vmatpush2.msra.mxu0 0.0
    %6168 = vmatprep.subr.mxu0 0.0
    %6169 = vmatpush2.msra.mxu0 0.0
    %6170 = vmatprep.subr.mxu0 0.0
    %6171 = vmatpush2.msra.mxu0 0.0
    %6172 = vmatprep.subr.mxu0 0.0
    %6173 = vmatpush2.msra.mxu0 0.0
    %6174 = vmatprep.subr.mxu0 0.0
    %6175 = vmatpush2.msra.mxu0 0.0
    %6176 = vmatprep.subr.mxu0 0.0
    %6177 = vmatpush2.msra.mxu0 0.0
    %6178 = vmatprep.mubr.f32.mxu0 0.0
    %6179 = vmatmul.mubr.f32.gmra.mxu0 %v6112
    %v6180 = vpop.f32.mrf.mxu0
    %v6181 = vadd.f32 0.0, %v6180
    %v6182 = vpop.f32.mrf.mxu0
    %6183 = vdwg.mxu0
    %v6185 = vsel %vm868, %v6110, 0
    %6187 = vmatprep.subr.mxu0 0.0
    %6188 = vmatpush1.msra.mxu0 0.0
    %6189 = vmatprep.subr.mxu0 0.0
    %6190 = vmatpush1.msra.mxu0 0.0
    %6191 = vmatprep.subr.mxu0 0.0
    %6192 = vmatpush1.msra.mxu0 0.0
    %6193 = vmatprep.subr.mxu0 0.0
    %6194 = vmatpush1.msra.mxu0 0.0
    %6195 = vmatprep.subr.mxu0 0.0
    %6196 = vmatpush1.msra.mxu0 0.0
    %6197 = vmatprep.subr.mxu0 0.0
    %6198 = vmatpush1.msra.mxu0 0.0
    %6199 = vmatprep.subr.mxu0 0.0
    %6200 = vmatpush1.msra.mxu0 0.0
    %6201 = vmatprep.subr.mxu0 0.0
    %6202 = vmatpush1.msra.mxu0 0.0
    %6203 = vmatprep.subr.mxu0 0.0
    %6204 = vmatpush1.msra.mxu0 0.0
    %6205 = vmatprep.subr.mxu0 0.0
    %6206 = vmatpush1.msra.mxu0 0.0
    %6207 = vmatprep.subr.mxu0 0.0
    %6208 = vmatpush1.msra.mxu0 0.0
    %6209 = vmatprep.subr.mxu0 0.0
    %6210 = vmatpush1.msra.mxu0 0.0
    %6211 = vmatprep.subr.mxu0 0.0
    %6212 = vmatpush1.msra.mxu0 0.0
    %6213 = vmatprep.subr.mxu0 0.0
    %6214 = vmatpush1.msra.mxu0 0.0
    %6215 = vmatprep.subr.mxu0 0.0
    %6216 = vmatpush1.msra.mxu0 0.0
    %6217 = vmatprep.subr.mxu0 0.0
    %6218 = vmatpush1.msra.mxu0 %v5946
    %6219 = vmatprep.subr.mxu0 0.0
    %6220 = vmatpush2.msra.mxu0 0.0
    %6221 = vmatprep.subr.mxu0 0.0
    %6222 = vmatpush2.msra.mxu0 0.0
    %6223 = vmatprep.subr.mxu0 0.0
    %6224 = vmatpush2.msra.mxu0 0.0
    %6225 = vmatprep.subr.mxu0 0.0
    %6226 = vmatpush2.msra.mxu0 0.0
    %6227 = vmatprep.subr.mxu0 0.0
    %6228 = vmatpush2.msra.mxu0 0.0
    %6229 = vmatprep.subr.mxu0 0.0
    %6230 = vmatpush2.msra.mxu0 0.0
    %6231 = vmatprep.subr.mxu0 0.0
    %6232 = vmatpush2.msra.mxu0 0.0
    %6233 = vmatprep.subr.mxu0 0.0
    %6234 = vmatpush2.msra.mxu0 0.0
    %6235 = vmatprep.subr.mxu0 0.0
    %6236 = vmatpush2.msra.mxu0 0.0
    %6237 = vmatprep.subr.mxu0 0.0
    %6238 = vmatpush2.msra.mxu0 0.0
    %6239 = vmatprep.subr.mxu0 0.0
    %6240 = vmatpush2.msra.mxu0 0.0
    %6241 = vmatprep.subr.mxu0 0.0
    %6242 = vmatpush2.msra.mxu0 0.0
    %6243 = vmatprep.subr.mxu0 0.0
    %6244 = vmatpush2.msra.mxu0 0.0
    %6245 = vmatprep.subr.mxu0 0.0
    %6246 = vmatpush2.msra.mxu0 0.0
    %6247 = vmatprep.subr.mxu0 0.0
    %6248 = vmatpush2.msra.mxu0 0.0
    %6249 = vmatprep.subr.mxu0 0.0
    %6250 = vmatpush2.msra.mxu0 0.0
    %6251 = vmatprep.mubr.f32.mxu0 0.0
    %6252 = vmatmul.mubr.f32.gmra.mxu0 %v6185
    %v6253 = vpop.f32.mrf.mxu0
    %v6254 = vadd.f32 0.0, %v6253
    %v6255 = vpop.f32.mrf.mxu0
    %6256 = vdwg.mxu0
    %v6257 = vpack.c.bf16 %v4304, %v4231
    %v6258 = vpack.c.bf16 %v4954, %v4881
    %v6259 = vpack.c.bf16 %v5604, %v5531
    %v6260 = vpack.c.bf16 %v6254, %v6181
    %s6261 = scalar_lea.vmem [#allocation17], 256
    %v6262 = vld [vmem:[%s6261] sm:$0xf]
    %v6263 = vld [vmem:[%s6261 + $0x4] sm:$0xf]
    %v6264 = vld [vmem:[%s6261 + $0x8] sm:$0xf]
    %v6265 = vld [vmem:[%s6261 + $0xc] sm:$0xf]
    %v6266 = vld [vmem:[%s6261 + $0x10] sm:$0xf]
    %v6267 = vld [vmem:[%s6261 + $0x14] sm:$0xf]
    %v6268 = vld [vmem:[%s6261 + $0x18] sm:$0xf]
    %v6269 = vld [vmem:[%s6261 + $0x1c] sm:$0xf]
    %v6270 = vld [vmem:[%s6261 + $0x20] sm:$0xf]
    %v6271 = vld [vmem:[%s6261 + $0x24] sm:$0xf]
    %v6272 = vld [vmem:[%s6261 + $0x28] sm:$0xf]
    %v6273 = vld [vmem:[%s6261 + $0x2c] sm:$0xf]
    %v6274 = vld [vmem:[%s6261 + $0x30] sm:$0xf]
    %v6275 = vld [vmem:[%s6261 + $0x34] sm:$0xf]
    %v6276 = vld [vmem:[%s6261 + $0x38] sm:$0xf]
    %v6277 = vld [vmem:[%s6261 + $0x3c] sm:$0xf]
    %v6278 = vld [vmem:[%s6261 + $0x40] sm:$0xf]
    %v6279 = vld [vmem:[%s6261 + $0x44] sm:$0xf]
    %v6280 = vld [vmem:[%s6261 + $0x48] sm:$0xf]
    %v6281 = vld [vmem:[%s6261 + $0x4c] sm:$0xf]
    %v6282 = vld [vmem:[%s6261 + $0x50] sm:$0xf]
    %v6283 = vld [vmem:[%s6261 + $0x54] sm:$0xf]
    %v6284 = vld [vmem:[%s6261 + $0x58] sm:$0xf]
    %v6285 = vld [vmem:[%s6261 + $0x5c] sm:$0xf]
    %v6286 = vld [vmem:[%s6261 + $0x60] sm:$0xf]
    %v6287 = vld [vmem:[%s6261 + $0x64] sm:$0xf]
    %v6288 = vld [vmem:[%s6261 + $0x68] sm:$0xf]
    %v6289 = vld [vmem:[%s6261 + $0x6c] sm:$0xf]
    %v6290 = vld [vmem:[%s6261 + $0x70] sm:$0xf]
    %v6291 = vld [vmem:[%s6261 + $0x74] sm:$0xf]
    %v6292 = vld [vmem:[%s6261 + $0x78] sm:$0xf]
    %v6293 = vld [vmem:[%s6261 + $0x7c] sm:$0xf]
    %v6294 = vld [vmem:[%s6261 + $0x80] sm:$0xf]
    %v6295 = vld [vmem:[%s6261 + $0x84] sm:$0xf]
    %v6296 = vld [vmem:[%s6261 + $0x88] sm:$0xf]
    %v6297 = vld [vmem:[%s6261 + $0x8c] sm:$0xf]
    %v6298 = vld [vmem:[%s6261 + $0x90] sm:$0xf]
    %v6299 = vld [vmem:[%s6261 + $0x94] sm:$0xf]
    %v6300 = vld [vmem:[%s6261 + $0x98] sm:$0xf]
    %v6301 = vld [vmem:[%s6261 + $0x9c] sm:$0xf]
    %v6302 = vld [vmem:[%s6261 + $0xa0] sm:$0xf]
    %v6303 = vld [vmem:[%s6261 + $0xa4] sm:$0xf]
    %v6304 = vld [vmem:[%s6261 + $0xa8] sm:$0xf]
    %v6305 = vld [vmem:[%s6261 + $0xac] sm:$0xf]
    %v6306 = vld [vmem:[%s6261 + $0xb0] sm:$0xf]
    %v6307 = vld [vmem:[%s6261 + $0xb4] sm:$0xf]
    %v6308 = vld [vmem:[%s6261 + $0xb8] sm:$0xf]
    %v6309 = vld [vmem:[%s6261 + $0xbc] sm:$0xf]
    %v6310 = vld [vmem:[%s6261 + $0xc0] sm:$0xf]
    %v6311 = vld [vmem:[%s6261 + $0xc4] sm:$0xf]
    %v6312 = vld [vmem:[%s6261 + $0xc8] sm:$0xf]
    %v6313 = vld [vmem:[%s6261 + $0xcc] sm:$0xf]
    %v6314 = vld [vmem:[%s6261 + $0xd0] sm:$0xf]
    %v6315 = vld [vmem:[%s6261 + $0xd4] sm:$0xf]
    %v6316 = vld [vmem:[%s6261 + $0xd8] sm:$0xf]
    %v6317 = vld [vmem:[%s6261 + $0xdc] sm:$0xf]
    %v6318 = vld [vmem:[%s6261 + $0xe0] sm:$0xf]
    %v6319 = vld [vmem:[%s6261 + $0xe4] sm:$0xf]
    %v6320 = vld [vmem:[%s6261 + $0xe8] sm:$0xf]
    %v6321 = vld [vmem:[%s6261 + $0xec] sm:$0xf]
    %v6322 = vld [vmem:[%s6261 + $0xf0] sm:$0xf]
    %v6323 = vld [vmem:[%s6261 + $0xf4] sm:$0xf]
    %v6324 = vld [vmem:[%s6261 + $0xf8] sm:$0xf]
    %v6325 = vld [vmem:[%s6261 + $0xfc] sm:$0xf]
    %s6326 = scalar_lea.vmem %s12, 1
    %v6327 = vld [vmem:[%s6326] sm:$0x1]
    %v6329 = vlaneseq
    %v6330 = vshrl.u32 %v6329, 7
    %v6331 = vsub.s32 0, %v6330
    %v6332 = vrot.slane %v6327, %v6331
    %v6398 = vunpack.c.l.b16 %v6262
    %v6399 = vunpack.c.l.b16 %v6263
    %v6400 = vunpack.c.l.b16 %v6264
    %v6401 = vunpack.c.l.b16 %v6265
    %v6402 = vunpack.c.l.b16 %v6266
    %v6403 = vunpack.c.l.b16 %v6267
    %v6404 = vunpack.c.l.b16 %v6268
    %v6405 = vunpack.c.l.b16 %v6269
    %v6406 = vunpack.c.l.b16 %v6270
    %v6407 = vunpack.c.l.b16 %v6271
    %v6408 = vunpack.c.l.b16 %v6272
    %v6409 = vunpack.c.l.b16 %v6273
    %v6410 = vunpack.c.l.b16 %v6274
    %v6411 = vunpack.c.l.b16 %v6275
    %v6412 = vunpack.c.l.b16 %v6276
    %v6413 = vunpack.c.l.b16 %v6277
    %v6414 = vunpack.c.l.b16 %v6278
    %v6415 = vunpack.c.l.b16 %v6279
    %v6416 = vunpack.c.l.b16 %v6280
    %v6417 = vunpack.c.l.b16 %v6281
    %v6418 = vunpack.c.l.b16 %v6282
    %v6419 = vunpack.c.l.b16 %v6283
    %v6420 = vunpack.c.l.b16 %v6284
    %v6421 = vunpack.c.l.b16 %v6285
    %v6422 = vunpack.c.l.b16 %v6286
    %v6423 = vunpack.c.l.b16 %v6287
    %v6424 = vunpack.c.l.b16 %v6288
    %v6425 = vunpack.c.l.b16 %v6289
    %v6426 = vunpack.c.l.b16 %v6290
    %v6427 = vunpack.c.l.b16 %v6291
    %v6428 = vunpack.c.l.b16 %v6292
    %v6429 = vunpack.c.l.b16 %v6293
    %v6430 = vunpack.c.l.b16 %v6294
    %v6431 = vunpack.c.l.b16 %v6295
    %v6432 = vunpack.c.l.b16 %v6296
    %v6433 = vunpack.c.l.b16 %v6297
    %v6434 = vunpack.c.l.b16 %v6298
    %v6435 = vunpack.c.l.b16 %v6299
    %v6436 = vunpack.c.l.b16 %v6300
    %v6437 = vunpack.c.l.b16 %v6301
    %v6438 = vunpack.c.l.b16 %v6302
    %v6439 = vunpack.c.l.b16 %v6303
    %v6440 = vunpack.c.l.b16 %v6304
    %v6441 = vunpack.c.l.b16 %v6305
    %v6442 = vunpack.c.l.b16 %v6306
    %v6443 = vunpack.c.l.b16 %v6307
    %v6444 = vunpack.c.l.b16 %v6308
    %v6445 = vunpack.c.l.b16 %v6309
    %v6446 = vunpack.c.l.b16 %v6310
    %v6447 = vunpack.c.l.b16 %v6311
    %v6448 = vunpack.c.l.b16 %v6312
    %v6449 = vunpack.c.l.b16 %v6313
    %v6450 = vunpack.c.l.b16 %v6314
    %v6451 = vunpack.c.l.b16 %v6315
    %v6452 = vunpack.c.l.b16 %v6316
    %v6453 = vunpack.c.l.b16 %v6317
    %v6454 = vunpack.c.l.b16 %v6318
    %v6455 = vunpack.c.l.b16 %v6319
    %v6456 = vunpack.c.l.b16 %v6320
    %v6457 = vunpack.c.l.b16 %v6321
    %v6458 = vunpack.c.l.b16 %v6322
    %v6459 = vunpack.c.l.b16 %v6323
    %v6460 = vunpack.c.l.b16 %v6324
    %v6461 = vunpack.c.l.b16 %v6325
    %v6462 = vpack.c.b16 %v6399, %v6398
    %v6463 = vpack.c.b16 %v6401, %v6400
    %v6464 = vpack.c.b16 %v6403, %v6402
    %v6465 = vpack.c.b16 %v6405, %v6404
    %v6466 = vpack.c.b16 %v6407, %v6406
    %v6467 = vpack.c.b16 %v6409, %v6408
    %v6468 = vpack.c.b16 %v6411, %v6410
    %v6469 = vpack.c.b16 %v6413, %v6412
    %v6470 = vpack.c.b16 %v6415, %v6414
    %v6471 = vpack.c.b16 %v6417, %v6416
    %v6472 = vpack.c.b16 %v6419, %v6418
    %v6473 = vpack.c.b16 %v6421, %v6420
    %v6474 = vpack.c.b16 %v6423, %v6422
    %v6475 = vpack.c.b16 %v6425, %v6424
    %v6476 = vpack.c.b16 %v6427, %v6426
    %v6477 = vpack.c.b16 %v6429, %v6428
    %v6478 = vpack.c.b16 %v6431, %v6430
    %v6479 = vpack.c.b16 %v6433, %v6432
    %v6480 = vpack.c.b16 %v6435, %v6434
    %v6481 = vpack.c.b16 %v6437, %v6436
    %v6482 = vpack.c.b16 %v6439, %v6438
    %v6483 = vpack.c.b16 %v6441, %v6440
    %v6484 = vpack.c.b16 %v6443, %v6442
    %v6485 = vpack.c.b16 %v6445, %v6444
    %v6486 = vpack.c.b16 %v6447, %v6446
    %v6487 = vpack.c.b16 %v6449, %v6448
    %v6488 = vpack.c.b16 %v6451, %v6450
    %v6489 = vpack.c.b16 %v6453, %v6452
    %v6490 = vpack.c.b16 %v6455, %v6454
    %v6491 = vpack.c.b16 %v6457, %v6456
    %v6492 = vpack.c.b16 %v6459, %v6458
    %v6493 = vpack.c.b16 %v6461, %v6460
    %6526 = vmatprep.subr.bf16.mxu0 0
    %6527 = vmatpush1.bf16.msra.mxu0 %v6469
    %6528 = vmatprep.subr.bf16.mxu0 0
    %6529 = vmatpush1.bf16.msra.mxu0 %v6468
    %6530 = vmatprep.subr.bf16.mxu0 0
    %6531 = vmatpush1.bf16.msra.mxu0 %v6467
    %6532 = vmatprep.subr.bf16.mxu0 0
    %6533 = vmatpush1.bf16.msra.mxu0 %v6466
    %6534 = vmatprep.subr.bf16.mxu0 0
    %6535 = vmatpush1.bf16.msra.mxu0 %v6465
    %6536 = vmatprep.subr.bf16.mxu0 0
    %6537 = vmatpush1.bf16.msra.mxu0 %v6464
    %6538 = vmatprep.subr.bf16.mxu0 0
    %6539 = vmatpush1.bf16.msra.mxu0 %v6463
    %6540 = vmatprep.subr.bf16.mxu0 0
    %6541 = vmatpush1.bf16.msra.mxu0 %v6462
    %6542 = vmatprep.subr.bf16.mxu0 0
    %6543 = vmatpush2.bf16.msra.mxu0 %v6477
    %6544 = vmatprep.subr.bf16.mxu0 0
    %6545 = vmatpush2.bf16.msra.mxu0 %v6476
    %6546 = vmatprep.subr.bf16.mxu0 0
    %6547 = vmatpush2.bf16.msra.mxu0 %v6475
    %6548 = vmatprep.subr.bf16.mxu0 0
    %6549 = vmatpush2.bf16.msra.mxu0 %v6474
    %6550 = vmatprep.subr.bf16.mxu0 0
    %6551 = vmatpush2.bf16.msra.mxu0 %v6473
    %6552 = vmatprep.subr.bf16.mxu0 0
    %6553 = vmatpush2.bf16.msra.mxu0 %v6472
    %6554 = vmatprep.subr.bf16.mxu0 0
    %6555 = vmatpush2.bf16.msra.mxu0 %v6471
    %6556 = vmatprep.subr.bf16.mxu0 0
    %6557 = vmatpush2.bf16.msra.mxu0 %v6470
    %6558 = vmatprep.mubr.bf16.mxu0 %v6258
    %6559 = vmatmul.mubr.bf16.gmra.mxu0 %v6257
    %v6560 = vpop.f32.mrf.mxu0
    %v6561 = vadd.f32 %v6332, %v6560
    %v6562 = vpop.f32.mrf.mxu0
    %v6563 = vpop.f32.mrf.mxu0
    %v6564 = vadd.f32 %v6332, %v6563
    %v6565 = vpop.f32.mrf.mxu0
    %6566 = vdwg.mxu0
    %6567 = vmatprep.subr.bf16.mxu0 0
    %6568 = vmatpush1.bf16.msra.mxu0 %v6485
    %6569 = vmatprep.subr.bf16.mxu0 0
    %6570 = vmatpush1.bf16.msra.mxu0 %v6484
    %6571 = vmatprep.subr.bf16.mxu0 0
    %6572 = vmatpush1.bf16.msra.mxu0 %v6483
    %6573 = vmatprep.subr.bf16.mxu0 0
    %6574 = vmatpush1.bf16.msra.mxu0 %v6482
    %6575 = vmatprep.subr.bf16.mxu0 0
    %6576 = vmatpush1.bf16.msra.mxu0 %v6481
    %6577 = vmatprep.subr.bf16.mxu0 0
    %6578 = vmatpush1.bf16.msra.mxu0 %v6480
    %6579 = vmatprep.subr.bf16.mxu0 0
    %6580 = vmatpush1.bf16.msra.mxu0 %v6479
    %6581 = vmatprep.subr.bf16.mxu0 0
    %6582 = vmatpush1.bf16.msra.mxu0 %v6478
    %6583 = vmatprep.subr.bf16.mxu0 0
    %6584 = vmatpush2.bf16.msra.mxu0 %v6493
    %6585 = vmatprep.subr.bf16.mxu0 0
    %6586 = vmatpush2.bf16.msra.mxu0 %v6492
    %6587 = vmatprep.subr.bf16.mxu0 0
    %6588 = vmatpush2.bf16.msra.mxu0 %v6491
    %6589 = vmatprep.subr.bf16.mxu0 0
    %6590 = vmatpush2.bf16.msra.mxu0 %v6490
    %6591 = vmatprep.subr.bf16.mxu0 0
    %6592 = vmatpush2.bf16.msra.mxu0 %v6489
    %6593 = vmatprep.subr.bf16.mxu0 0
    %6594 = vmatpush2.bf16.msra.mxu0 %v6488
    %6595 = vmatprep.subr.bf16.mxu0 0
    %6596 = vmatpush2.bf16.msra.mxu0 %v6487
    %6597 = vmatprep.subr.bf16.mxu0 0
    %6598 = vmatpush2.bf16.msra.mxu0 %v6486
    %6599 = vmatprep.mubr.bf16.mxu0 %v6260
    %6600 = vmatmul.mubr.bf16.gmra.mxu0 %v6259
    %v6601 = vpop.f32.mrf.mxu0
    %v6602 = vadd.f32 %v6561, %v6601
    %v6603 = vpop.f32.mrf.mxu0
    %v6604 = vpop.f32.mrf.mxu0
    %v6605 = vadd.f32 %v6564, %v6604
    %v6606 = vpop.f32.mrf.mxu0
    %6607 = vdwg.mxu0
    %v6608 = vadd.f32 %v3654, %v6602
    %v6609 = vadd.f32 %v3655, %v6605
    %s6610 = scalar_lea.vmem %s17, 1
    %v6611 = vld [vmem:[%s6610] sm:$0x1]
    %s6612 = scalar_lea.vmem %s18, 1
    %v6613 = vld [vmem:[%s6612] sm:$0x1]
    %v6614 = vmul.f32 %v6608, %v231
    %v6615 = vmul.f32 %v6609, %v231
    %6616 = vadd.xlane.f32.xlu0 %v6614
    %v6617 = vpop.xlane.xlu0 %6616
    %6618 = vadd.xlane.f32.xlu0 %v6615
    %v6619 = vpop.xlane.xlu0 %6618
    %v6620 = vmul.f32 %v6617, 0.03125
    %v6621 = vmul.f32 %v6619, 0.03125
    %v6622 = vsub.f32 %v6608, %v6620
    %v6623 = vsub.f32 %v6609, %v6621
    %v6624 = vmul.f32 %v6622, %v231
    %v6625 = vmul.f32 %v6623, %v231
    %v6626 = vmul.f32 %v6624, %v6624
    %v6627 = vmul.f32 %v6625, %v6625
    %6628 = vadd.xlane.f32.xlu0 %v6626
    %v6629 = vpop.xlane.xlu0 %6628
    %6630 = vadd.xlane.f32.xlu0 %v6627
    %v6631 = vpop.xlane.xlu0 %6630
    %v6632 = vmul.f32 %v6629, 0.03125
    %v6633 = vmul.f32 %v6631, 0.03125
    %v6634 = vadd.f32 %v6632, 1e-05
    %v6635 = vadd.f32 %v6633, 1e-05
    %v6636 = vrsqrt.pop %v6634
    %v6637 = vrsqrt.pop %v6635
    %v6638 = vmul.f32 %v6624, %v6636
    %v6639 = vmul.f32 %v6625, %v6637
    %v6641 = vlaneseq
    %v6642 = vshrl.u32 %v6641, 7
    %v6643 = vsub.s32 0, %v6642
    %v6644 = vrot.slane %v6611, %v6643
    %v6646 = vmul.f32 %v6638, %v6644
    %v6647 = vmul.f32 %v6639, %v6644
    %v6649 = vlaneseq
    %v6650 = vshrl.u32 %v6649, 7
    %v6651 = vsub.s32 0, %v6650
    %v6652 = vrot.slane %v6613, %v6651
    %v6654 = vadd.f32 %v6646, %v6652
    %v6655 = vadd.f32 %v6647, %v6652
    %v6656 = vpack.c.bf16 %v6655, %v6654
    %s6657 = scalar_lea.vmem [#allocation19], 64
    %v6658 = vld [vmem:[%s6657] sm:$0xf]
    %v6659 = vld [vmem:[%s6657 + $0x4] sm:$0xf]
    %v6660 = vld [vmem:[%s6657 + $0x8] sm:$0xf]
    %v6661 = vld [vmem:[%s6657 + $0xc] sm:$0xf]
    %v6662 = vld [vmem:[%s6657 + $0x10] sm:$0xf]
    %v6663 = vld [vmem:[%s6657 + $0x14] sm:$0xf]
    %v6664 = vld [vmem:[%s6657 + $0x18] sm:$0xf]
    %v6665 = vld [vmem:[%s6657 + $0x1c] sm:$0xf]
    %v6666 = vld [vmem:[%s6657 + $0x20] sm:$0xf]
    %v6667 = vld [vmem:[%s6657 + $0x24] sm:$0xf]
    %v6668 = vld [vmem:[%s6657 + $0x28] sm:$0xf]
    %v6669 = vld [vmem:[%s6657 + $0x2c] sm:$0xf]
    %v6670 = vld [vmem:[%s6657 + $0x30] sm:$0xf]
    %v6671 = vld [vmem:[%s6657 + $0x34] sm:$0xf]
    %v6672 = vld [vmem:[%s6657 + $0x38] sm:$0xf]
    %v6673 = vld [vmem:[%s6657 + $0x3c] sm:$0xf]
    %s6674 = scalar_lea.vmem %s14, 1
    %v6675 = vld [vmem:[%s6674] sm:$0x1]
    %v6677 = vlaneseq
    %v6678 = vshrl.u32 %v6677, 7
    %v6679 = vsub.s32 0, %v6678
    %v6680 = vrot.slane %v6675, %v6679
    %v6698 = vunpack.c.l.b16 %v6658
    %v6699 = vunpack.c.l.b16 %v6659
    %v6700 = vunpack.c.l.b16 %v6660
    %v6701 = vunpack.c.l.b16 %v6661
    %v6702 = vunpack.c.l.b16 %v6662
    %v6703 = vunpack.c.l.b16 %v6663
    %v6704 = vunpack.c.l.b16 %v6664
    %v6705 = vunpack.c.l.b16 %v6665
    %v6706 = vunpack.c.l.b16 %v6666
    %v6707 = vunpack.c.l.b16 %v6667
    %v6708 = vunpack.c.l.b16 %v6668
    %v6709 = vunpack.c.l.b16 %v6669
    %v6710 = vunpack.c.l.b16 %v6670
    %v6711 = vunpack.c.l.b16 %v6671
    %v6712 = vunpack.c.l.b16 %v6672
    %v6713 = vunpack.c.l.b16 %v6673
    %v6714 = vpack.c.b16 %v6699, %v6698
    %v6715 = vpack.c.b16 %v6701, %v6700
    %v6716 = vpack.c.b16 %v6703, %v6702
    %v6717 = vpack.c.b16 %v6705, %v6704
    %v6718 = vpack.c.b16 %v6707, %v6706
    %v6719 = vpack.c.b16 %v6709, %v6708
    %v6720 = vpack.c.b16 %v6711, %v6710
    %v6721 = vpack.c.b16 %v6713, %v6712
    %6730 = vmatprep.subr.bf16.mxu0 0
    %6731 = vmatpush1.bf16.msra.mxu0 %v6721
    %6732 = vmatprep.subr.bf16.mxu0 0
    %6733 = vmatpush1.bf16.msra.mxu0 %v6720
    %6734 = vmatprep.subr.bf16.mxu0 0
    %6735 = vmatpush1.bf16.msra.mxu0 %v6719
    %6736 = vmatprep.subr.bf16.mxu0 0
    %6737 = vmatpush1.bf16.msra.mxu0 %v6718
    %6738 = vmatprep.subr.bf16.mxu0 0
    %6739 = vmatpush1.bf16.msra.mxu0 %v6717
    %6740 = vmatprep.subr.bf16.mxu0 0
    %6741 = vmatpush1.bf16.msra.mxu0 %v6716
    %6742 = vmatprep.subr.bf16.mxu0 0
    %6743 = vmatpush1.bf16.msra.mxu0 %v6715
    %6744 = vmatprep.subr.bf16.mxu0 0
    %6745 = vmatpush1.bf16.msra.mxu0 %v6714
    %6746 = vmatprep.subr.bf16.mxu0 0
    %6747 = vmatpush2.bf16.msra.mxu0 0
    %6748 = vmatprep.subr.bf16.mxu0 0
    %6749 = vmatpush2.bf16.msra.mxu0 0
    %6750 = vmatprep.subr.bf16.mxu0 0
    %6751 = vmatpush2.bf16.msra.mxu0 0
    %6752 = vmatprep.subr.bf16.mxu0 0
    %6753 = vmatpush2.bf16.msra.mxu0 0
    %6754 = vmatprep.subr.bf16.mxu0 0
    %6755 = vmatpush2.bf16.msra.mxu0 0
    %6756 = vmatprep.subr.bf16.mxu0 0
    %6757 = vmatpush2.bf16.msra.mxu0 0
    %6758 = vmatprep.subr.bf16.mxu0 0
    %6759 = vmatpush2.bf16.msra.mxu0 0
    %6760 = vmatprep.subr.bf16.mxu0 0
    %6761 = vmatpush2.bf16.msra.mxu0 0
    %6762 = vmatprep.mubr.bf16.mxu0 0
    %6763 = vmatmul.mubr.bf16.gmra.mxu0 %v6656
    %v6764 = vpop.f32.mrf.mxu0
    %v6765 = vadd.f32 %v6680, %v6764
    %v6766 = vpop.f32.mrf.mxu0
    %v6767 = vpop.f32.mrf.mxu0
    %v6768 = vadd.f32 %v6680, %v6767
    %v6769 = vpop.f32.mrf.mxu0
    %6770 = vdwg.mxu0
    %v6771 = vmax.f32 %v6765, 0.0
    %v6772 = vmax.f32 %v6768, 0.0
    %v6773 = vpack.c.bf16 %v6772, %v6771
    %s6774 = scalar_lea.vmem [#allocation20], 64
    %v6775 = vld [vmem:[%s6774] sm:$0xf]
    %v6776 = vld [vmem:[%s6774 + $0x4] sm:$0xf]
    %v6777 = vld [vmem:[%s6774 + $0x8] sm:$0xf]
    %v6778 = vld [vmem:[%s6774 + $0xc] sm:$0xf]
    %v6779 = vld [vmem:[%s6774 + $0x10] sm:$0xf]
    %v6780 = vld [vmem:[%s6774 + $0x14] sm:$0xf]
    %v6781 = vld [vmem:[%s6774 + $0x18] sm:$0xf]
    %v6782 = vld [vmem:[%s6774 + $0x1c] sm:$0xf]
    %v6783 = vld [vmem:[%s6774 + $0x20] sm:$0xf]
    %v6784 = vld [vmem:[%s6774 + $0x24] sm:$0xf]
    %v6785 = vld [vmem:[%s6774 + $0x28] sm:$0xf]
    %v6786 = vld [vmem:[%s6774 + $0x2c] sm:$0xf]
    %v6787 = vld [vmem:[%s6774 + $0x30] sm:$0xf]
    %v6788 = vld [vmem:[%s6774 + $0x34] sm:$0xf]
    %v6789 = vld [vmem:[%s6774 + $0x38] sm:$0xf]
    %v6790 = vld [vmem:[%s6774 + $0x3c] sm:$0xf]
    %s6791 = scalar_lea.vmem %s16, 1
    %v6792 = vld [vmem:[%s6791] sm:$0x1]
    %v6794 = vlaneseq
    %v6795 = vshrl.u32 %v6794, 7
    %v6796 = vsub.s32 0, %v6795
    %v6797 = vrot.slane %v6792, %v6796
    %v6815 = vunpack.c.l.b16 %v6775
    %v6816 = vunpack.c.l.b16 %v6776
    %v6817 = vunpack.c.l.b16 %v6777
    %v6818 = vunpack.c.l.b16 %v6778
    %v6819 = vunpack.c.l.b16 %v6779
    %v6820 = vunpack.c.l.b16 %v6780
    %v6821 = vunpack.c.l.b16 %v6781
    %v6822 = vunpack.c.l.b16 %v6782
    %v6823 = vunpack.c.l.b16 %v6783
    %v6824 = vunpack.c.l.b16 %v6784
    %v6825 = vunpack.c.l.b16 %v6785
    %v6826 = vunpack.c.l.b16 %v6786
    %v6827 = vunpack.c.l.b16 %v6787
    %v6828 = vunpack.c.l.b16 %v6788
    %v6829 = vunpack.c.l.b16 %v6789
    %v6830 = vunpack.c.l.b16 %v6790
    %v6831 = vpack.c.b16 %v6816, %v6815
    %v6832 = vpack.c.b16 %v6818, %v6817
    %v6833 = vpack.c.b16 %v6820, %v6819
    %v6834 = vpack.c.b16 %v6822, %v6821
    %v6835 = vpack.c.b16 %v6824, %v6823
    %v6836 = vpack.c.b16 %v6826, %v6825
    %v6837 = vpack.c.b16 %v6828, %v6827
    %v6838 = vpack.c.b16 %v6830, %v6829
    %6847 = vmatprep.subr.bf16.mxu0 0
    %6848 = vmatpush1.bf16.msra.mxu0 %v6838
    %6849 = vmatprep.subr.bf16.mxu0 0
    %6850 = vmatpush1.bf16.msra.mxu0 %v6837
    %6851 = vmatprep.subr.bf16.mxu0 0
    %6852 = vmatpush1.bf16.msra.mxu0 %v6836
    %6853 = vmatprep.subr.bf16.mxu0 0
    %6854 = vmatpush1.bf16.msra.mxu0 %v6835
    %6855 = vmatprep.subr.bf16.mxu0 0
    %6856 = vmatpush1.bf16.msra.mxu0 %v6834
    %6857 = vmatprep.subr.bf16.mxu0 0
    %6858 = vmatpush1.bf16.msra.mxu0 %v6833
    %6859 = vmatprep.subr.bf16.mxu0 0
    %6860 = vmatpush1.bf16.msra.mxu0 %v6832
    %6861 = vmatprep.subr.bf16.mxu0 0
    %6862 = vmatpush1.bf16.msra.mxu0 %v6831
    %6863 = vmatprep.subr.bf16.mxu0 0
    %6864 = vmatpush2.bf16.msra.mxu0 0
    %6865 = vmatprep.subr.bf16.mxu0 0
    %6866 = vmatpush2.bf16.msra.mxu0 0
    %6867 = vmatprep.subr.bf16.mxu0 0
    %6868 = vmatpush2.bf16.msra.mxu0 0
    %6869 = vmatprep.subr.bf16.mxu0 0
    %6870 = vmatpush2.bf16.msra.mxu0 0
    %6871 = vmatprep.subr.bf16.mxu0 0
    %6872 = vmatpush2.bf16.msra.mxu0 0
    %6873 = vmatprep.subr.bf16.mxu0 0
    %6874 = vmatpush2.bf16.msra.mxu0 0
    %6875 = vmatprep.subr.bf16.mxu0 0
    %6876 = vmatpush2.bf16.msra.mxu0 0
    %6877 = vmatprep.subr.bf16.mxu0 0
    %6878 = vmatpush2.bf16.msra.mxu0 0
    %6879 = vmatprep.mubr.bf16.mxu0 0
    %6880 = vmatmul.mubr.bf16.gmra.mxu0 %v6773
    %v6881 = vpop.f32.mrf.mxu0
    %v6882 = vadd.f32 %v6797, %v6881
    %v6883 = vpop.f32.mrf.mxu0
    %v6884 = vpop.f32.mrf.mxu0
    %v6885 = vadd.f32 %v6797, %v6884
    %v6886 = vpop.f32.mrf.mxu0
    %6887 = vdwg.mxu0
    %v6888 = vadd.f32 %v6654, %v6882
    %v6889 = vadd.f32 %v6655, %v6885
    %s6890 = scalar_lea.vmem %s19, 1
    %v6891 = vld [vmem:[%s6890] sm:$0x1]
    %s6892 = scalar_lea.vmem %s20, 1
    %v6893 = vld [vmem:[%s6892] sm:$0x1]
    %v6894 = vmul.f32 %v6888, %v231
    %v6895 = vmul.f32 %v6889, %v231
    %6896 = vadd.xlane.f32.xlu0 %v6894
    %v6897 = vpop.xlane.xlu0 %6896
    %6898 = vadd.xlane.f32.xlu0 %v6895
    %v6899 = vpop.xlane.xlu0 %6898
    %v6900 = vmul.f32 %v6897, 0.03125
    %v6901 = vmul.f32 %v6899, 0.03125
    %v6902 = vsub.f32 %v6888, %v6900
    %v6903 = vsub.f32 %v6889, %v6901
    %v6904 = vmul.f32 %v6902, %v231
    %v6905 = vmul.f32 %v6903, %v231
    %v6906 = vmul.f32 %v6904, %v6904
    %v6907 = vmul.f32 %v6905, %v6905
    %6908 = vadd.xlane.f32.xlu0 %v6906
    %v6909 = vpop.xlane.xlu0 %6908
    %6910 = vadd.xlane.f32.xlu0 %v6907
    %v6911 = vpop.xlane.xlu0 %6910
    %v6912 = vmul.f32 %v6909, 0.03125
    %v6913 = vmul.f32 %v6911, 0.03125
    %v6914 = vadd.f32 %v6912, 1e-05
    %v6915 = vadd.f32 %v6913, 1e-05
    %v6916 = vrsqrt.pop %v6914
    %v6917 = vrsqrt.pop %v6915
    %v6918 = vmul.f32 %v6904, %v6916
    %v6919 = vmul.f32 %v6905, %v6917
    %v6921 = vlaneseq
    %v6922 = vshrl.u32 %v6921, 7
    %v6923 = vsub.s32 0, %v6922
    %v6924 = vrot.slane %v6891, %v6923
    %v6926 = vmul.f32 %v6918, %v6924
    %v6927 = vmul.f32 %v6919, %v6924
    %v6929 = vlaneseq
    %v6930 = vshrl.u32 %v6929, 7
    %v6931 = vsub.s32 0, %v6930
    %v6932 = vrot.slane %v6893, %v6931
    %v6934 = vadd.f32 %v6926, %v6932
    %v6935 = vadd.f32 %v6927, %v6932
    %6936 = vst [vmem:[#allocation22] sm:$0xff] %v6934
    %6937 = vst [vmem:[#allocation22 + $0x8] sm:$0xff] %v6935
    // Predicated region
    $region134: #{tpu_custom_call.1} parent=1 // pred_check
      _
    $region135: #{tpu_custom_call.1} parent=1 // pred_check_branch
      %6939 = sbr.rel (0) target = $region137
    $region136: #{tpu_custom_call.1} parent=1 // pred_region
      %s6941 = ssub.s32 256, 256
      %6942 = vsyncadd [#allocation4], %s6941
      %s6943 = sshll.u32 [#allocation22], 4
      %s6944 = int_to_ptr.vmem [resolvable:$true] %s6943
      %6949 = dma.vmem_to_hbm [thread:$0]  %s6944, 256, %s21, [#allocation4], 128, 128, 8
    $region137: #{tpu_custom_call.1} parent=1 // pred_fallthru
      _
    // Predicated region
    $region138: #{tpu_custom_call.1} parent=1 // pred_check
      _
    $region139: #{tpu_custom_call.1} parent=1 // pred_check_branch
      %6951 = sbr.rel (0) target = $region141
    $region140: #{tpu_custom_call.1} parent=1 // pred_region
      %6952 = dma.done [#allocation4], 256
    $region141: #{tpu_custom_call.1} parent=1 // pred_fallthru
      _
    %6953 = vsyncpa [#allocation3], 1
    %6954 = vsyncpa [#allocation6], 1
    %6955 = vsyncpa [#allocation9], 1
    %6956 = vsyncpa [#allocation12], 1
    %6957 = vsyncpa [#allocation15], 1
    %6958 = vsyncpa [#allocation18], 1
    %6959 = vsyncpa [#allocation21], 1
    %6960 = vsyncpa [#allocation4], 1

</llo_original>
